<compile_context>
chip_gen: v7x
topology: tpu7x:2x2x1
jax: 0.10.0
libtpu: 0.0.40
codegen_flags: <defaults>
</compile_context>

<pallas_src>
import numpy as np
import jax
import jax.numpy as jnp
from jax import lax
from jax.experimental import pallas as pl
from jax.experimental.pallas import tpu as pltpu


# ----------------------------------------------------------------------------
# Model configuration
# ----------------------------------------------------------------------------
_N, _H, _W = 2, 8, 8                 # batch / latent spatial size
_M = _N * _H * _W                    # 128 rows: batch folded into matmul M
_EPS = 1e-5
_KMAX, _CMAX = 576, 128              # weight-blob tile (max K = 9 taps x 64 ch)

# (cin, cout, stride, has_bn) for the 7 ConvTranspose2d layers
_LAYERS = [
    (32, 32, 1, True),
    (32, 32, 1, True),
    (32, 64, 1, True),
    (64, 64, 1, True),
    (64, 64, 1, True),
    (64, 32, 2, True),               # stride 2, output_padding 1
    (32, 3, 2, False),               # stride 2, output_padding 1
]


def _tap_s2(parity, shift):
    """Kernel tap index of a stride-2 / k=3 / p=1 / op=1 ConvT output phase.

    With g = spatially-flipped (correlation) kernel:
        y[2a + 0] = x[a]   * g[1]
        y[2a + 1] = x[a]   * g[0] + x[a+1] * g[2]
    Returns the tap index used by output parity `parity` when reading the
    input at offset `shift`, or None if that (parity, shift) does not occur.
    """
    if shift == 0:
        return 1 if parity == 0 else 0
    if shift == 1 and parity == 1:
        return 2
    return None


# ----------------------------------------------------------------------------
# Fused decoder kernel
# ----------------------------------------------------------------------------
def _decoder_kernel(x_ref, w_ref, v_ref, out_ref, pad_ref, pq_ref):
    f32 = jnp.float32

    # Zero the padded-activation scratch ONCE.  The [1:9,1:9,:cin] interior is
    # fully rewritten by every layer; the halo ring and the upper channel
    # block (used as implicit zeros by the 32-channel layers) stay zero.
    pad_ref[...] = jnp.zeros((_N, _H + 2, _W + 2, 64), f32)

    # ---- layers 1..5: stride-1 ConvT + bias + ReLU + BN, ONE matmul each ----
    act = x_ref[...].reshape(_M, 32)
    for li in range(5):
        cin, cout = _LAYERS[li][0], _LAYERS[li][1]
        pad_ref[:, 1:1 + _H, 1:1 + _W, 0:cin] = act.reshape(_N, _H, _W, cin)
        # im2col: 9 taps concatenated along K (64 channels per tap; unused
        # upper channels of 32-ch layers are zeros x zero weight rows).
        lhs = jnp.concatenate(
            [pad_ref[:, ty:ty + _H, tx:tx + _W, 0:64].reshape(_M, 64)
             for ty in range(3) for tx in range(3)], axis=-1)      # (128, 576)
        acc = jnp.dot(lhs, w_ref[li, 0:_KMAX, 0:cout],
                      preferred_element_type=jnp.float32)
        acc = jnp.maximum(acc + v_ref[li, 0:1, 0:cout], 0.0)       # bias + ReLU
        # fused training-mode BatchNorm2d (batch stats, biased var, eps=1e-5)
        s1 = acc.sum(axis=0, keepdims=True)
        s2 = (acc * acc).sum(axis=0, keepdims=True)
        mean = s1 * (1.0 / _M)
        var = jnp.maximum(s2 * (1.0 / _M) - mean * mean, 0.0)
        scale = lax.rsqrt(var + _EPS) * v_ref[li, 1:2, 0:cout]
        shift = v_ref[li, 2:3, 0:cout] - mean * scale
        act = acc * scale + shift

    # ---- layer 6: stride-2 ConvT(64->32) as ONE phase-blocked matmul --------
    pad_ref[:, 1:1 + _H, 1:1 + _W, 0:64] = act.reshape(_N, _H, _W, 64)
    lhs6 = jnp.concatenate(
        [pad_ref[:, 1 + sy:1 + sy + _H, 1 + sx:1 + sx + _W, 0:64]
         .reshape(_M, 64) for sy in range(2) for sx in range(2)],
        axis=-1)                                                   # (128, 256)
    y6 = jnp.dot(lhs6, w_ref[5, 0:256, 0:128],
                 preferred_element_type=jnp.float32)               # 4 phases x 32ch
    y6 = jnp.maximum(y6 + v_ref[5, 0:1, 0:128], 0.0)               # bias pre-tiled
    # BN stats per channel over all 4 spatial phases (N*16*16 pixels): fold
    # the per-(phase,channel) sums with the constant 0/1 fold matrix (slot 7).
    s = jnp.concatenate([y6.sum(axis=0, keepdims=True),
                         (y6 * y6).sum(axis=0, keepdims=True)], axis=0)
    s = jnp.dot(s, w_ref[7, 0:128, 0:128], preferred_element_type=jnp.float32)
    mean = s[0:1] * (1.0 / (4.0 * _M))
    var = jnp.maximum(s[1:2] * (1.0 / (4.0 * _M)) - mean * mean, 0.0)
    scale = lax.rsqrt(var + _EPS) * v_ref[5, 1:2, 0:128]           # gamma pre-tiled
    shift = v_ref[5, 2:3, 0:128] - mean * scale                    # beta  pre-tiled
    y6 = y6 * scale + shift

    # Phase-packed, end-padded layer-6 output: zero ONLY the halo (row/col 8).
    pq_ref[:, _H:_H + 1, :, :] = jnp.zeros((_N, 1, _W + 1, 128), f32)
    pq_ref[:, 0:_H, _W:_W + 1, :] = jnp.zeros((_N, _H, 1, 128), f32)
    pq_ref[:, 0:_H, 0:_W, :] = y6.reshape(_N, _H, _W, 128)

    # ---- layer 7: stride-2 ConvT(32->3) + bias + ReLU, ONE matmul -----------
    lhs7 = jnp.concatenate(
        [pq_ref[:, ay:ay + _H, ax:ax + _W, :].reshape(_M, 128)
         for ay in range(2) for ax in range(2)], axis=-1)          # (128, 512)
    y7 = jnp.dot(lhs7, w_ref[6, 0:512, 0:48],
                 preferred_element_type=jnp.float32)               # (128, 16*3)
    out_ref[...] = jnp.maximum(y7 + v_ref[6, 0:1, 0:48], 0.0)      # lane-dense


def _full_spec(shape):
    rank = len(shape)
    return pl.BlockSpec(shape, lambda i, _r=rank: (0,) * _r)


@jax.jit
def decoder_forward(x_nchw, w_blob, v_blob):
    """x_nchw: (2, 32, 8, 8) f32 -> (2, 3, 32, 32) f32 (NCHW)."""
    x = jnp.transpose(x_nchw, (0, 2, 3, 1)).astype(jnp.float32)   # NCHW -> NHWC
    out = pl.pallas_call(
        _decoder_kernel,
        out_shape=jax.ShapeDtypeStruct((_M, 48), jnp.float32),
        grid=(1,),
        in_specs=[_full_spec(x.shape), _full_spec(w_blob.shape),
                  _full_spec(v_blob.shape)],
        out_specs=_full_spec((_M, 48)),
        scratch_shapes=[
            pltpu.VMEM((_N, _H + 2, _W + 2, 64), jnp.float32),    # padded act
            pltpu.VMEM((_N, _H + 1, _W + 1, 128), jnp.float32),   # L6 phases
        ],
        compiler_params=pltpu.CompilerParams(
            dimension_semantics=("arbitrary",)),
    )(x, w_blob, v_blob)
    # out[n*64 + a*8 + b, (4*ry + rx)*3 + c] == y[n, c, 4a + ry, 4b + rx]
    out = out.reshape(_N, _H, _W, 4, 4, 3)
    return out.transpose(0, 5, 1, 3, 2, 4).reshape(_N, 3, 4 * _H, 4 * _W)


# ----------------------------------------------------------------------------
# Parameters (PyTorch-layout raw params + kernel-ready packed blobs)
# ----------------------------------------------------------------------------
def init_raw_params(key):
    params = []
    for cin, cout, _s, has_bn in _LAYERS:
        key, kw, kb = jax.random.split(key, 3)
        bound = 1.0 / float((cin * 9) ** 0.5)
        params.append(dict(
            w=jax.random.uniform(kw, (cin, cout, 3, 3), jnp.float32,
                                 -bound, bound),                  # ConvT layout
            b=jax.random.uniform(kb, (cout,), jnp.float32, -bound, bound),
            gamma=jnp.ones((cout,), jnp.float32) if has_bn else None,
            beta=jnp.zeros((cout,), jnp.float32) if has_bn else None,
        ))
    return params


def prepare_kernel_params(raw_params):
    """Hoisted prep: flip/transpose ConvT weights to correlation layout and
    pack them into one im2col / phase-blocked weight blob + one bias/gamma/beta
    table (2 input DMAs instead of 26)."""
    w_blob = np.zeros((8, _KMAX, _CMAX), np.float32)
    v_blob = np.zeros((7, 3, _CMAX), np.float32)

    corr = []
    for p in raw_params:
        w = np.asarray(p["w"])[:, :, ::-1, ::-1]          # spatial flip
        corr.append(np.transpose(w, (2, 3, 0, 1)))        # (3,3,cin,cout)

    # layers 1..5: im2col packing, 64 K-rows reserved per tap
    for li in range(5):
        cin, cout = _LAYERS[li][0], _LAYERS[li][1]
        g = corr[li]
        for t, (ty, tx) in enumerate([(a, b) for a in range(3)
                                      for b in range(3)]):
            w_blob[li, t * 64:t * 64 + cin, 0:cout] = g[ty, tx]
        v_blob[li, 0, 0:cout] = np.asarray(raw_params[li]["b"])
        v_blob[li, 1, 0:cout] = np.asarray(raw_params[li]["gamma"])
        v_blob[li, 2, 0:cout] = np.asarray(raw_params[li]["beta"])

    # layer 6: shift-major rows (4 x 64), output-phase-blocked cols (4 x 32)
    g6 = corr[5]
    for si, (sy, sx) in enumerate([(a, b) for a in range(2) for b in range(2)]):
        for dy in range(2):
            for dx in range(2):
                ty, tx = _tap_s2(dy, sy), _tap_s2(dx, sx)
                if ty is None or tx is None:
                    continue
                c0 = 32 * (2 * dy + dx)
                w_blob[5, si * 64:si * 64 + 64, c0:c0 + 32] = g6[ty, tx]
    v_blob[5, 0, 0:128] = np.tile(np.asarray(raw_params[5]["b"]), 4)
    v_blob[5, 1, 0:128] = np.tile(np.asarray(raw_params[5]["gamma"]), 4)
    v_blob[5, 2, 0:128] = np.tile(np.asarray(raw_params[5]["beta"]), 4)

    # layer 7: offset-major rows (4 x [4 input phases x 32]),
    #          output-phase-blocked cols (16 x 3)
    g7 = corr[6]
    for oi, (ay, ax) in enumerate([(a, b) for a in range(2) for b in range(2)]):
        for qy in range(2):
            for qx in range(2):
                for ry in range(4):
                    for rx in range(4):
                        dy, py = ry // 2, ry % 2
                        dx, px = rx // 2, rx % 2
                        ty = _tap_s2(py, 2 * ay + qy - dy)
                        tx = _tap_s2(px, 2 * ax + qx - dx)
                        if ty is None or tx is None:
                            continue
                        r0 = oi * 128 + 32 * (2 * qy + qx)
                        c0 = 3 * (4 * ry + rx)
                        w_blob[6, r0:r0 + 32, c0:c0 + 3] = g7[ty, tx]
    v_blob[6, 0, 0:48] = np.tile(np.asarray(raw_params[6]["b"]), 16)

    # slot 7: constant phase-fold matrix for layer-6 BN (F[i,j] = i%32 == j%32)
    idx = np.arange(128)
    w_blob[7, 0:128, 0:128] = (idx[:, None] % 32 ==
                               idx[None, :] % 32).astype(np.float32)

    return jnp.asarray(w_blob), jnp.asarray(v_blob)


# ----------------------------------------------------------------------------
# Pure-JAX reference (XLA convs) for end-to-end validation
# ----------------------------------------------------------------------------
def reference_forward(x_nchw, raw_params):
    x = jnp.transpose(x_nchw, (0, 2, 3, 1)).astype(jnp.float32)
    for (cin, cout, stride, has_bn), p in zip(_LAYERS, raw_params):
        w_corr = jnp.transpose(p["w"][:, :, ::-1, ::-1], (2, 3, 0, 1))
        op = 1 if stride == 2 else 0
        x = lax.conv_general_dilated(
            x, w_corr, window_strides=(1, 1),
            padding=[(1, 1 + op), (1, 1 + op)],
            lhs_dilation=(stride, stride),
            dimension_numbers=("NHWC", "HWIO", "NHWC"),
            precision=lax.Precision.HIGHEST)
        x = jnp.maximum(x + p["b"], 0.0)
        if has_bn:
            mean = x.mean(axis=(0, 1, 2), keepdims=True)
            var = ((x - mean) ** 2).mean(axis=(0, 1, 2), keepdims=True)
            x = (x - mean) * lax.rsqrt(var + _EPS) * p["gamma"] + p["beta"]
    return jnp.transpose(x, (0, 3, 1, 2))


# ----------------------------------------------------------------------------
if __name__ == "__main__":
    key = jax.random.PRNGKey(0)
    key, kx = jax.random.split(key)
    x = jax.random.normal(kx, (_N, 32, _H, _W), jnp.float32)   # (2, 32, 8, 8)

    raw = init_raw_params(key)
    w_blob, v_blob = prepare_kernel_params(raw)

    out = jax.block_until_ready(decoder_forward(x, w_blob, v_blob))
    assert out.shape == (_N, 3, 4 * _H, 4 * _W), out.shape     # (2, 3, 32, 32)
    assert out.dtype == jnp.float32
    assert bool(jnp.all(out >= 0.0))                           # final ReLU

    ref = jax.block_until_ready(reference_forward(x, raw))
    max_err = float(jnp.max(jnp.abs(out - ref)))
    assert max_err < 5e-2, f"mismatch vs reference: {max_err}"

    print("KERNEL_OK")
</pallas_src>

<mosaic_0001>
module attributes {stable_mosaic.version = 11 : i64} {
  func.func @_decoder_kernel(%arg0: i32, %arg1: memref<2x8x8x32xf32, #tpu.memory_space<vmem>>, %arg2: memref<8x576x128xf32, #tpu.memory_space<vmem>>, %arg3: memref<7x3x128xf32, #tpu.memory_space<vmem>>, %arg4: memref<128x48xf32, #tpu.memory_space<vmem>>, %arg5: memref<2x10x10x64xf32, #tpu.memory_space<vmem>>, %arg6: memref<2x9x9x128xf32, #tpu.memory_space<vmem>>) attributes {dimension_semantics = [#tpu.dimension_semantics<arbitrary>], iteration_bounds = array<i64: 1>, scalar_prefetch = 0 : i64, scratch_operands = 2 : i64, tpu.core_type = #tpu.core_type<tc>, window_params = [{pipeline_mode = #tpu.pipeline_mode<synchronous>, transform_indices = @transform_0, window_bounds = array<i64: 2, 8, 8, 32>}, {pipeline_mode = #tpu.pipeline_mode<synchronous>, transform_indices = @transform_1, window_bounds = array<i64: 8, 576, 128>}, {pipeline_mode = #tpu.pipeline_mode<synchronous>, transform_indices = @transform_2, window_bounds = array<i64: 7, 3, 128>}, {pipeline_mode = #tpu.pipeline_mode<synchronous>, transform_indices = @transform_3, window_bounds = array<i64: 128, 48>}]} {
    %cst = arith.constant 0.000000e+00 : f32
    %0 = vector.broadcast %cst : f32 to vector<2x10x10x64xf32>
    %c0 = arith.constant 0 : index
    %c0_0 = arith.constant 0 : index
    %c0_1 = arith.constant 0 : index
    %c0_2 = arith.constant 0 : index
    %1 = vector.load %arg5[%c0, %c0_0, %c0_1, %c0_2] : memref<2x10x10x64xf32, #tpu.memory_space<vmem>>, vector<2x10x10x64xf32>
    tpu.vector_store %arg5[%c0, %c0_0, %c0_1, %c0_2], %0 {strides = array<i32>} : memref<2x10x10x64xf32, #tpu.memory_space<vmem>>, vector<2x10x10x64xf32>,
    %c0_3 = arith.constant 0 : index
    %c0_4 = arith.constant 0 : index
    %c0_5 = arith.constant 0 : index
    %c0_6 = arith.constant 0 : index
    %2 = vector.load %arg1[%c0_3, %c0_4, %c0_5, %c0_6] : memref<2x8x8x32xf32, #tpu.memory_space<vmem>>, vector<2x8x8x32xf32>
    %3 = vector.shape_cast %2 : vector<2x8x8x32xf32> to vector<128x32xf32>
    %4 = vector.shape_cast %3 : vector<128x32xf32> to vector<2x8x8x32xf32>
    %c0_7 = arith.constant 0 : index
    %c1 = arith.constant 1 : index
    %c1_8 = arith.constant 1 : index
    %c0_9 = arith.constant 0 : index
    %5 = vector.load %arg5[%c0_7, %c1, %c1_8, %c0_9] : memref<2x10x10x64xf32, #tpu.memory_space<vmem>>, vector<2x8x8x32xf32>
    tpu.vector_store %arg5[%c0_7, %c1, %c1_8, %c0_9], %4 {strides = array<i32>} : memref<2x10x10x64xf32, #tpu.memory_space<vmem>>, vector<2x8x8x32xf32>,
    %c0_10 = arith.constant 0 : index
    %c0_11 = arith.constant 0 : index
    %c0_12 = arith.constant 0 : index
    %c0_13 = arith.constant 0 : index
    %6 = vector.load %arg5[%c0_10, %c0_11, %c0_12, %c0_13] : memref<2x10x10x64xf32, #tpu.memory_space<vmem>>, vector<2x8x8x64xf32>
    %7 = vector.shape_cast %6 : vector<2x8x8x64xf32> to vector<128x64xf32>
    %c0_14 = arith.constant 0 : index
    %c0_15 = arith.constant 0 : index
    %c1_16 = arith.constant 1 : index
    %c0_17 = arith.constant 0 : index
    %8 = vector.load %arg5[%c0_14, %c0_15, %c1_16, %c0_17] : memref<2x10x10x64xf32, #tpu.memory_space<vmem>>, vector<2x8x8x64xf32>
    %9 = vector.shape_cast %8 : vector<2x8x8x64xf32> to vector<128x64xf32>
    %c0_18 = arith.constant 0 : index
    %c0_19 = arith.constant 0 : index
    %c2 = arith.constant 2 : index
    %c0_20 = arith.constant 0 : index
    %10 = vector.load %arg5[%c0_18, %c0_19, %c2, %c0_20] : memref<2x10x10x64xf32, #tpu.memory_space<vmem>>, vector<2x8x8x64xf32>
    %11 = vector.shape_cast %10 : vector<2x8x8x64xf32> to vector<128x64xf32>
    %c0_21 = arith.constant 0 : index
    %c1_22 = arith.constant 1 : index
    %c0_23 = arith.constant 0 : index
    %c0_24 = arith.constant 0 : index
    %12 = vector.load %arg5[%c0_21, %c1_22, %c0_23, %c0_24] : memref<2x10x10x64xf32, #tpu.memory_space<vmem>>, vector<2x8x8x64xf32>
    %13 = vector.shape_cast %12 : vector<2x8x8x64xf32> to vector<128x64xf32>
    %c0_25 = arith.constant 0 : index
    %c1_26 = arith.constant 1 : index
    %c1_27 = arith.constant 1 : index
    %c0_28 = arith.constant 0 : index
    %14 = vector.load %arg5[%c0_25, %c1_26, %c1_27, %c0_28] : memref<2x10x10x64xf32, #tpu.memory_space<vmem>>, vector<2x8x8x64xf32>
    %15 = vector.shape_cast %14 : vector<2x8x8x64xf32> to vector<128x64xf32>
    %c0_29 = arith.constant 0 : index
    %c1_30 = arith.constant 1 : index
    %c2_31 = arith.constant 2 : index
    %c0_32 = arith.constant 0 : index
    %16 = vector.load %arg5[%c0_29, %c1_30, %c2_31, %c0_32] : memref<2x10x10x64xf32, #tpu.memory_space<vmem>>, vector<2x8x8x64xf32>
    %17 = vector.shape_cast %16 : vector<2x8x8x64xf32> to vector<128x64xf32>
    %c0_33 = arith.constant 0 : index
    %c2_34 = arith.constant 2 : index
    %c0_35 = arith.constant 0 : index
    %c0_36 = arith.constant 0 : index
    %18 = vector.load %arg5[%c0_33, %c2_34, %c0_35, %c0_36] : memref<2x10x10x64xf32, #tpu.memory_space<vmem>>, vector<2x8x8x64xf32>
    %19 = vector.shape_cast %18 : vector<2x8x8x64xf32> to vector<128x64xf32>
    %c0_37 = arith.constant 0 : index
    %c2_38 = arith.constant 2 : index
    %c1_39 = arith.constant 1 : index
    %c0_40 = arith.constant 0 : index
    %20 = vector.load %arg5[%c0_37, %c2_38, %c1_39, %c0_40] : memref<2x10x10x64xf32, #tpu.memory_space<vmem>>, vector<2x8x8x64xf32>
    %21 = vector.shape_cast %20 : vector<2x8x8x64xf32> to vector<128x64xf32>
    %c0_41 = arith.constant 0 : index
    %c2_42 = arith.constant 2 : index
    %c2_43 = arith.constant 2 : index
    %c0_44 = arith.constant 0 : index
    %22 = vector.load %arg5[%c0_41, %c2_42, %c2_43, %c0_44] : memref<2x10x10x64xf32, #tpu.memory_space<vmem>>, vector<2x8x8x64xf32>
    %23 = vector.shape_cast %22 : vector<2x8x8x64xf32> to vector<128x64xf32>
    %24 = tpu.concatenate %7, %9, %11, %13, %15, %17, %19, %21, %23 in 1 : vector<128x64xf32>, vector<128x64xf32>, vector<128x64xf32>, vector<128x64xf32>, vector<128x64xf32>, vector<128x64xf32>, vector<128x64xf32>, vector<128x64xf32>, vector<128x64xf32> -> vector<128x576xf32>
    %c0_45 = arith.constant 0 : index
    %c0_46 = arith.constant 0 : index
    %c0_47 = arith.constant 0 : index
    %25 = vector.load %arg2[%c0_45, %c0_46, %c0_47] : memref<8x576x128xf32, #tpu.memory_space<vmem>>, vector<1x576x32xf32>
    %26 = vector.shape_cast %25 : vector<1x576x32xf32> to vector<576x32xf32>
    %cst_48 = arith.constant dense<0.000000e+00> : vector<128x32xf32>
    %27 = tpu.matmul %24, %26, %cst_48 {dimension_numbers = #tpu.dot_dimension_numbers<[1], [0], [0], [1], [0, 0, 1, 1], [], []>} : vector<128x576xf32>, vector<576x32xf32>, vector<128x32xf32> -> vector<128x32xf32>
    %c0_49 = arith.constant 0 : index
    %c0_50 = arith.constant 0 : index
    %c0_51 = arith.constant 0 : index
    %28 = vector.load %arg3[%c0_49, %c0_50, %c0_51] : memref<7x3x128xf32, #tpu.memory_space<vmem>>, vector<1x1x32xf32>
    %29 = vector.shape_cast %28 : vector<1x1x32xf32> to vector<1x32xf32>
    %30 = vector.broadcast %29 : vector<1x32xf32> to vector<128x32xf32>
    %31 = arith.addf %27, %30 : vector<128x32xf32>
    %cst_52 = arith.constant 0.000000e+00 : f32
    %32 = vector.broadcast %cst_52 : f32 to vector<128x32xf32>
    %33 = arith.maximumf %31, %32 : vector<128x32xf32>
    %cst_53 = arith.constant dense<0.000000e+00> : vector<32xf32>
    %34 = vector.multi_reduction <add>, %33, %cst_53 [0] : vector<128x32xf32> to vector<32xf32>
    %35 = vector.shape_cast %34 : vector<32xf32> to vector<1x32xf32>
    %36 = arith.mulf %33, %33 : vector<128x32xf32>
    %cst_54 = arith.constant dense<0.000000e+00> : vector<32xf32>
    %37 = vector.multi_reduction <add>, %36, %cst_54 [0] : vector<128x32xf32> to vector<32xf32>
    %38 = vector.shape_cast %37 : vector<32xf32> to vector<1x32xf32>
    %cst_55 = arith.constant 7.812500e-03 : f32
    %39 = vector.broadcast %cst_55 : f32 to vector<1x32xf32>
    %40 = arith.mulf %35, %39 : vector<1x32xf32>
    %cst_56 = arith.constant 7.812500e-03 : f32
    %41 = vector.broadcast %cst_56 : f32 to vector<1x32xf32>
    %42 = arith.mulf %38, %41 : vector<1x32xf32>
    %43 = arith.mulf %40, %40 : vector<1x32xf32>
    %44 = arith.subf %42, %43 : vector<1x32xf32>
    %cst_57 = arith.constant 0.000000e+00 : f32
    %45 = vector.broadcast %cst_57 : f32 to vector<1x32xf32>
    %46 = arith.maximumf %44, %45 : vector<1x32xf32>
    %cst_58 = arith.constant 9.99999974E-6 : f32
    %47 = vector.broadcast %cst_58 : f32 to vector<1x32xf32>
    %48 = arith.addf %46, %47 : vector<1x32xf32>
    %49 = math.rsqrt %48 : vector<1x32xf32>
    %c0_59 = arith.constant 0 : index
    %c1_60 = arith.constant 1 : index
    %c0_61 = arith.constant 0 : index
    %50 = vector.load %arg3[%c0_59, %c1_60, %c0_61] : memref<7x3x128xf32, #tpu.memory_space<vmem>>, vector<1x1x32xf32>
    %51 = vector.shape_cast %50 : vector<1x1x32xf32> to vector<1x32xf32>
    %52 = arith.mulf %49, %51 : vector<1x32xf32>
    %c0_62 = arith.constant 0 : index
    %c2_63 = arith.constant 2 : index
    %c0_64 = arith.constant 0 : index
    %53 = vector.load %arg3[%c0_62, %c2_63, %c0_64] : memref<7x3x128xf32, #tpu.memory_space<vmem>>, vector<1x1x32xf32>
    %54 = vector.shape_cast %53 : vector<1x1x32xf32> to vector<1x32xf32>
    %55 = arith.mulf %40, %52 : vector<1x32xf32>
    %56 = arith.subf %54, %55 : vector<1x32xf32>
    %57 = vector.broadcast %52 : vector<1x32xf32> to vector<128x32xf32>
    %58 = arith.mulf %33, %57 : vector<128x32xf32>
    %59 = vector.broadcast %56 : vector<1x32xf32> to vector<128x32xf32>
    %60 = arith.addf %58, %59 : vector<128x32xf32>
    %61 = vector.shape_cast %60 : vector<128x32xf32> to vector<2x8x8x32xf32>
    %c0_65 = arith.constant 0 : index
    %c1_66 = arith.constant 1 : index
    %c1_67 = arith.constant 1 : index
    %c0_68 = arith.constant 0 : index
    %62 = vector.load %arg5[%c0_65, %c1_66, %c1_67, %c0_68] : memref<2x10x10x64xf32, #tpu.memory_space<vmem>>, vector<2x8x8x32xf32>
    tpu.vector_store %arg5[%c0_65, %c1_66, %c1_67, %c0_68], %61 {strides = array<i32>} : memref<2x10x10x64xf32, #tpu.memory_space<vmem>>, vector<2x8x8x32xf32>,
    %c0_69 = arith.constant 0 : index
    %c0_70 = arith.constant 0 : index
    %c0_71 = arith.constant 0 : index
    %c0_72 = arith.constant 0 : index
    %63 = vector.load %arg5[%c0_69, %c0_70, %c0_71, %c0_72] : memref<2x10x10x64xf32, #tpu.memory_space<vmem>>, vector<2x8x8x64xf32>
    %64 = vector.shape_cast %63 : vector<2x8x8x64xf32> to vector<128x64xf32>
    %c0_73 = arith.constant 0 : index
    %c0_74 = arith.constant 0 : index
    %c1_75 = arith.constant 1 : index
    %c0_76 = arith.constant 0 : index
    %65 = vector.load %arg5[%c0_73, %c0_74, %c1_75, %c0_76] : memref<2x10x10x64xf32, #tpu.memory_space<vmem>>, vector<2x8x8x64xf32>
    %66 = vector.shape_cast %65 : vector<2x8x8x64xf32> to vector<128x64xf32>
    %c0_77 = arith.constant 0 : index
    %c0_78 = arith.constant 0 : index
    %c2_79 = arith.constant 2 : index
    %c0_80 = arith.constant 0 : index
    %67 = vector.load %arg5[%c0_77, %c0_78, %c2_79, %c0_80] : memref<2x10x10x64xf32, #tpu.memory_space<vmem>>, vector<2x8x8x64xf32>
    %68 = vector.shape_cast %67 : vector<2x8x8x64xf32> to vector<128x64xf32>
    %c0_81 = arith.constant 0 : index
    %c1_82 = arith.constant 1 : index
    %c0_83 = arith.constant 0 : index
    %c0_84 = arith.constant 0 : index
    %69 = vector.load %arg5[%c0_81, %c1_82, %c0_83, %c0_84] : memref<2x10x10x64xf32, #tpu.memory_space<vmem>>, vector<2x8x8x64xf32>
    %70 = vector.shape_cast %69 : vector<2x8x8x64xf32> to vector<128x64xf32>
    %c0_85 = arith.constant 0 : index
    %c1_86 = arith.constant 1 : index
    %c1_87 = arith.constant 1 : index
    %c0_88 = arith.constant 0 : index
    %71 = vector.load %arg5[%c0_85, %c1_86, %c1_87, %c0_88] : memref<2x10x10x64xf32, #tpu.memory_space<vmem>>, vector<2x8x8x64xf32>
    %72 = vector.shape_cast %71 : vector<2x8x8x64xf32> to vector<128x64xf32>
    %c0_89 = arith.constant 0 : index
    %c1_90 = arith.constant 1 : index
    %c2_91 = arith.constant 2 : index
    %c0_92 = arith.constant 0 : index
    %73 = vector.load %arg5[%c0_89, %c1_90, %c2_91, %c0_92] : memref<2x10x10x64xf32, #tpu.memory_space<vmem>>, vector<2x8x8x64xf32>
    %74 = vector.shape_cast %73 : vector<2x8x8x64xf32> to vector<128x64xf32>
    %c0_93 = arith.constant 0 : index
    %c2_94 = arith.constant 2 : index
    %c0_95 = arith.constant 0 : index
    %c0_96 = arith.constant 0 : index
    %75 = vector.load %arg5[%c0_93, %c2_94, %c0_95, %c0_96] : memref<2x10x10x64xf32, #tpu.memory_space<vmem>>, vector<2x8x8x64xf32>
    %76 = vector.shape_cast %75 : vector<2x8x8x64xf32> to vector<128x64xf32>
    %c0_97 = arith.constant 0 : index
    %c2_98 = arith.constant 2 : index
    %c1_99 = arith.constant 1 : index
    %c0_100 = arith.constant 0 : index
    %77 = vector.load %arg5[%c0_97, %c2_98, %c1_99, %c0_100] : memref<2x10x10x64xf32, #tpu.memory_space<vmem>>, vector<2x8x8x64xf32>
    %78 = vector.shape_cast %77 : vector<2x8x8x64xf32> to vector<128x64xf32>
    %c0_101 = arith.constant 0 : index
    %c2_102 = arith.constant 2 : index
    %c2_103 = arith.constant 2 : index
    %c0_104 = arith.constant 0 : index
    %79 = vector.load %arg5[%c0_101, %c2_102, %c2_103, %c0_104] : memref<2x10x10x64xf32, #tpu.memory_space<vmem>>, vector<2x8x8x64xf32>
    %80 = vector.shape_cast %79 : vector<2x8x8x64xf32> to vector<128x64xf32>
    %81 = tpu.concatenate %64, %66, %68, %70, %72, %74, %76, %78, %80 in 1 : vector<128x64xf32>, vector<128x64xf32>, vector<128x64xf32>, vector<128x64xf32>, vector<128x64xf32>, vector<128x64xf32>, vector<128x64xf32>, vector<128x64xf32>, vector<128x64xf32> -> vector<128x576xf32>
    %c1_105 = arith.constant 1 : index
    %c0_106 = arith.constant 0 : index
    %c0_107 = arith.constant 0 : index
    %82 = vector.load %arg2[%c1_105, %c0_106, %c0_107] : memref<8x576x128xf32, #tpu.memory_space<vmem>>, vector<1x576x32xf32>
    %83 = vector.shape_cast %82 : vector<1x576x32xf32> to vector<576x32xf32>
    %cst_108 = arith.constant dense<0.000000e+00> : vector<128x32xf32>
    %84 = tpu.matmul %81, %83, %cst_108 {dimension_numbers = #tpu.dot_dimension_numbers<[1], [0], [0], [1], [0, 0, 1, 1], [], []>} : vector<128x576xf32>, vector<576x32xf32>, vector<128x32xf32> -> vector<128x32xf32>
    %c1_109 = arith.constant 1 : index
    %c0_110 = arith.constant 0 : index
    %c0_111 = arith.constant 0 : index
    %85 = vector.load %arg3[%c1_109, %c0_110, %c0_111] : memref<7x3x128xf32, #tpu.memory_space<vmem>>, vector<1x1x32xf32>
    %86 = vector.shape_cast %85 : vector<1x1x32xf32> to vector<1x32xf32>
    %87 = vector.broadcast %86 : vector<1x32xf32> to vector<128x32xf32>
    %88 = arith.addf %84, %87 : vector<128x32xf32>
    %cst_112 = arith.constant 0.000000e+00 : f32
    %89 = vector.broadcast %cst_112 : f32 to vector<128x32xf32>
    %90 = arith.maximumf %88, %89 : vector<128x32xf32>
    %cst_113 = arith.constant dense<0.000000e+00> : vector<32xf32>
    %91 = vector.multi_reduction <add>, %90, %cst_113 [0] : vector<128x32xf32> to vector<32xf32>
    %92 = vector.shape_cast %91 : vector<32xf32> to vector<1x32xf32>
    %93 = arith.mulf %90, %90 : vector<128x32xf32>
    %cst_114 = arith.constant dense<0.000000e+00> : vector<32xf32>
    %94 = vector.multi_reduction <add>, %93, %cst_114 [0] : vector<128x32xf32> to vector<32xf32>
    %95 = vector.shape_cast %94 : vector<32xf32> to vector<1x32xf32>
    %cst_115 = arith.constant 7.812500e-03 : f32
    %96 = vector.broadcast %cst_115 : f32 to vector<1x32xf32>
    %97 = arith.mulf %92, %96 : vector<1x32xf32>
    %cst_116 = arith.constant 7.812500e-03 : f32
    %98 = vector.broadcast %cst_116 : f32 to vector<1x32xf32>
    %99 = arith.mulf %95, %98 : vector<1x32xf32>
    %100 = arith.mulf %97, %97 : vector<1x32xf32>
    %101 = arith.subf %99, %100 : vector<1x32xf32>
    %cst_117 = arith.constant 0.000000e+00 : f32
    %102 = vector.broadcast %cst_117 : f32 to vector<1x32xf32>
    %103 = arith.maximumf %101, %102 : vector<1x32xf32>
    %cst_118 = arith.constant 9.99999974E-6 : f32
    %104 = vector.broadcast %cst_118 : f32 to vector<1x32xf32>
    %105 = arith.addf %103, %104 : vector<1x32xf32>
    %106 = math.rsqrt %105 : vector<1x32xf32>
    %c1_119 = arith.constant 1 : index
    %c1_120 = arith.constant 1 : index
    %c0_121 = arith.constant 0 : index
    %107 = vector.load %arg3[%c1_119, %c1_120, %c0_121] : memref<7x3x128xf32, #tpu.memory_space<vmem>>, vector<1x1x32xf32>
    %108 = vector.shape_cast %107 : vector<1x1x32xf32> to vector<1x32xf32>
    %109 = arith.mulf %106, %108 : vector<1x32xf32>
    %c1_122 = arith.constant 1 : index
    %c2_123 = arith.constant 2 : index
    %c0_124 = arith.constant 0 : index
    %110 = vector.load %arg3[%c1_122, %c2_123, %c0_124] : memref<7x3x128xf32, #tpu.memory_space<vmem>>, vector<1x1x32xf32>
    %111 = vector.shape_cast %110 : vector<1x1x32xf32> to vector<1x32xf32>
    %112 = arith.mulf %97, %109 : vector<1x32xf32>
    %113 = arith.subf %111, %112 : vector<1x32xf32>
    %114 = vector.broadcast %109 : vector<1x32xf32> to vector<128x32xf32>
    %115 = arith.mulf %90, %114 : vector<128x32xf32>
    %116 = vector.broadcast %113 : vector<1x32xf32> to vector<128x32xf32>
    %117 = arith.addf %115, %116 : vector<128x32xf32>
    %118 = vector.shape_cast %117 : vector<128x32xf32> to vector<2x8x8x32xf32>
    %c0_125 = arith.constant 0 : index
    %c1_126 = arith.constant 1 : index
    %c1_127 = arith.constant 1 : index
    %c0_128 = arith.constant 0 : index
    %119 = vector.load %arg5[%c0_125, %c1_126, %c1_127, %c0_128] : memref<2x10x10x64xf32, #tpu.memory_space<vmem>>, vector<2x8x8x32xf32>
    tpu.vector_store %arg5[%c0_125, %c1_126, %c1_127, %c0_128], %118 {strides = array<i32>} : memref<2x10x10x64xf32, #tpu.memory_space<vmem>>, vector<2x8x8x32xf32>,
    %c0_129 = arith.constant 0 : index
    %c0_130 = arith.constant 0 : index
    %c0_131 = arith.constant 0 : index
    %c0_132 = arith.constant 0 : index
    %120 = vector.load %arg5[%c0_129, %c0_130, %c0_131, %c0_132] : memref<2x10x10x64xf32, #tpu.memory_space<vmem>>, vector<2x8x8x64xf32>
    %121 = vector.shape_cast %120 : vector<2x8x8x64xf32> to vector<128x64xf32>
    %c0_133 = arith.constant 0 : index
    %c0_134 = arith.constant 0 : index
    %c1_135 = arith.constant 1 : index
    %c0_136 = arith.constant 0 : index
    %122 = vector.load %arg5[%c0_133, %c0_134, %c1_135, %c0_136] : memref<2x10x10x64xf32, #tpu.memory_space<vmem>>, vector<2x8x8x64xf32>
    %123 = vector.shape_cast %122 : vector<2x8x8x64xf32> to vector<128x64xf32>
    %c0_137 = arith.constant 0 : index
    %c0_138 = arith.constant 0 : index
    %c2_139 = arith.constant 2 : index
    %c0_140 = arith.constant 0 : index
    %124 = vector.load %arg5[%c0_137, %c0_138, %c2_139, %c0_140] : memref<2x10x10x64xf32, #tpu.memory_space<vmem>>, vector<2x8x8x64xf32>
    %125 = vector.shape_cast %124 : vector<2x8x8x64xf32> to vector<128x64xf32>
    %c0_141 = arith.constant 0 : index
    %c1_142 = arith.constant 1 : index
    %c0_143 = arith.constant 0 : index
    %c0_144 = arith.constant 0 : index
    %126 = vector.load %arg5[%c0_141, %c1_142, %c0_143, %c0_144] : memref<2x10x10x64xf32, #tpu.memory_space<vmem>>, vector<2x8x8x64xf32>
    %127 = vector.shape_cast %126 : vector<2x8x8x64xf32> to vector<128x64xf32>
    %c0_145 = arith.constant 0 : index
    %c1_146 = arith.constant 1 : index
    %c1_147 = arith.constant 1 : index
    %c0_148 = arith.constant 0 : index
    %128 = vector.load %arg5[%c0_145, %c1_146, %c1_147, %c0_148] : memref<2x10x10x64xf32, #tpu.memory_space<vmem>>, vector<2x8x8x64xf32>
    %129 = vector.shape_cast %128 : vector<2x8x8x64xf32> to vector<128x64xf32>
    %c0_149 = arith.constant 0 : index
    %c1_150 = arith.constant 1 : index
    %c2_151 = arith.constant 2 : index
    %c0_152 = arith.constant 0 : index
    %130 = vector.load %arg5[%c0_149, %c1_150, %c2_151, %c0_152] : memref<2x10x10x64xf32, #tpu.memory_space<vmem>>, vector<2x8x8x64xf32>
    %131 = vector.shape_cast %130 : vector<2x8x8x64xf32> to vector<128x64xf32>
    %c0_153 = arith.constant 0 : index
    %c2_154 = arith.constant 2 : index
    %c0_155 = arith.constant 0 : index
    %c0_156 = arith.constant 0 : index
    %132 = vector.load %arg5[%c0_153, %c2_154, %c0_155, %c0_156] : memref<2x10x10x64xf32, #tpu.memory_space<vmem>>, vector<2x8x8x64xf32>
    %133 = vector.shape_cast %132 : vector<2x8x8x64xf32> to vector<128x64xf32>
    %c0_157 = arith.constant 0 : index
    %c2_158 = arith.constant 2 : index
    %c1_159 = arith.constant 1 : index
    %c0_160 = arith.constant 0 : index
    %134 = vector.load %arg5[%c0_157, %c2_158, %c1_159, %c0_160] : memref<2x10x10x64xf32, #tpu.memory_space<vmem>>, vector<2x8x8x64xf32>
    %135 = vector.shape_cast %134 : vector<2x8x8x64xf32> to vector<128x64xf32>
    %c0_161 = arith.constant 0 : index
    %c2_162 = arith.constant 2 : index
    %c2_163 = arith.constant 2 : index
    %c0_164 = arith.constant 0 : index
    %136 = vector.load %arg5[%c0_161, %c2_162, %c2_163, %c0_164] : memref<2x10x10x64xf32, #tpu.memory_space<vmem>>, vector<2x8x8x64xf32>
    %137 = vector.shape_cast %136 : vector<2x8x8x64xf32> to vector<128x64xf32>
    %138 = tpu.concatenate %121, %123, %125, %127, %129, %131, %133, %135, %137 in 1 : vector<128x64xf32>, vector<128x64xf32>, vector<128x64xf32>, vector<128x64xf32>, vector<128x64xf32>, vector<128x64xf32>, vector<128x64xf32>, vector<128x64xf32>, vector<128x64xf32> -> vector<128x576xf32>
    %c2_165 = arith.constant 2 : index
    %c0_166 = arith.constant 0 : index
    %c0_167 = arith.constant 0 : index
    %139 = vector.load %arg2[%c2_165, %c0_166, %c0_167] : memref<8x576x128xf32, #tpu.memory_space<vmem>>, vector<1x576x64xf32>
    %140 = vector.shape_cast %139 : vector<1x576x64xf32> to vector<576x64xf32>
    %cst_168 = arith.constant dense<0.000000e+00> : vector<128x64xf32>
    %141 = tpu.matmul %138, %140, %cst_168 {dimension_numbers = #tpu.dot_dimension_numbers<[1], [0], [0], [1], [0, 0, 1, 1], [], []>} : vector<128x576xf32>, vector<576x64xf32>, vector<128x64xf32> -> vector<128x64xf32>
    %c2_169 = arith.constant 2 : index
    %c0_170 = arith.constant 0 : index
    %c0_171 = arith.constant 0 : index
    %142 = vector.load %arg3[%c2_169, %c0_170, %c0_171] : memref<7x3x128xf32, #tpu.memory_space<vmem>>, vector<1x1x64xf32>
    %143 = vector.shape_cast %142 : vector<1x1x64xf32> to vector<1x64xf32>
    %144 = vector.broadcast %143 : vector<1x64xf32> to vector<128x64xf32>
    %145 = arith.addf %141, %144 : vector<128x64xf32>
    %cst_172 = arith.constant 0.000000e+00 : f32
    %146 = vector.broadcast %cst_172 : f32 to vector<128x64xf32>
    %147 = arith.maximumf %145, %146 : vector<128x64xf32>
    %cst_173 = arith.constant dense<0.000000e+00> : vector<64xf32>
    %148 = vector.multi_reduction <add>, %147, %cst_173 [0] : vector<128x64xf32> to vector<64xf32>
    %149 = vector.shape_cast %148 : vector<64xf32> to vector<1x64xf32>
    %150 = arith.mulf %147, %147 : vector<128x64xf32>
    %cst_174 = arith.constant dense<0.000000e+00> : vector<64xf32>
    %151 = vector.multi_reduction <add>, %150, %cst_174 [0] : vector<128x64xf32> to vector<64xf32>
    %152 = vector.shape_cast %151 : vector<64xf32> to vector<1x64xf32>
    %cst_175 = arith.constant 7.812500e-03 : f32
    %153 = vector.broadcast %cst_175 : f32 to vector<1x64xf32>
    %154 = arith.mulf %149, %153 : vector<1x64xf32>
    %cst_176 = arith.constant 7.812500e-03 : f32
    %155 = vector.broadcast %cst_176 : f32 to vector<1x64xf32>
    %156 = arith.mulf %152, %155 : vector<1x64xf32>
    %157 = arith.mulf %154, %154 : vector<1x64xf32>
    %158 = arith.subf %156, %157 : vector<1x64xf32>
    %cst_177 = arith.constant 0.000000e+00 : f32
    %159 = vector.broadcast %cst_177 : f32 to vector<1x64xf32>
    %160 = arith.maximumf %158, %159 : vector<1x64xf32>
    %cst_178 = arith.constant 9.99999974E-6 : f32
    %161 = vector.broadcast %cst_178 : f32 to vector<1x64xf32>
    %162 = arith.addf %160, %161 : vector<1x64xf32>
    %163 = math.rsqrt %162 : vector<1x64xf32>
    %c2_179 = arith.constant 2 : index
    %c1_180 = arith.constant 1 : index
    %c0_181 = arith.constant 0 : index
    %164 = vector.load %arg3[%c2_179, %c1_180, %c0_181] : memref<7x3x128xf32, #tpu.memory_space<vmem>>, vector<1x1x64xf32>
    %165 = vector.shape_cast %164 : vector<1x1x64xf32> to vector<1x64xf32>
    %166 = arith.mulf %163, %165 : vector<1x64xf32>
    %c2_182 = arith.constant 2 : index
    %c2_183 = arith.constant 2 : index
    %c0_184 = arith.constant 0 : index
    %167 = vector.load %arg3[%c2_182, %c2_183, %c0_184] : memref<7x3x128xf32, #tpu.memory_space<vmem>>, vector<1x1x64xf32>
    %168 = vector.shape_cast %167 : vector<1x1x64xf32> to vector<1x64xf32>
    %169 = arith.mulf %154, %166 : vector<1x64xf32>
    %170 = arith.subf %168, %169 : vector<1x64xf32>
    %171 = vector.broadcast %166 : vector<1x64xf32> to vector<128x64xf32>
    %172 = arith.mulf %147, %171 : vector<128x64xf32>
    %173 = vector.broadcast %170 : vector<1x64xf32> to vector<128x64xf32>
    %174 = arith.addf %172, %173 : vector<128x64xf32>
    %175 = vector.shape_cast %174 : vector<128x64xf32> to vector<2x8x8x64xf32>
    %c0_185 = arith.constant 0 : index
    %c1_186 = arith.constant 1 : index
    %c1_187 = arith.constant 1 : index
    %c0_188 = arith.constant 0 : index
    %176 = vector.load %arg5[%c0_185, %c1_186, %c1_187, %c0_188] : memref<2x10x10x64xf32, #tpu.memory_space<vmem>>, vector<2x8x8x64xf32>
    tpu.vector_store %arg5[%c0_185, %c1_186, %c1_187, %c0_188], %175 {strides = array<i32>} : memref<2x10x10x64xf32, #tpu.memory_space<vmem>>, vector<2x8x8x64xf32>,
    %c0_189 = arith.constant 0 : index
    %c0_190 = arith.constant 0 : index
    %c0_191 = arith.constant 0 : index
    %c0_192 = arith.constant 0 : index
    %177 = vector.load %arg5[%c0_189, %c0_190, %c0_191, %c0_192] : memref<2x10x10x64xf32, #tpu.memory_space<vmem>>, vector<2x8x8x64xf32>
    %178 = vector.shape_cast %177 : vector<2x8x8x64xf32> to vector<128x64xf32>
    %c0_193 = arith.constant 0 : index
    %c0_194 = arith.constant 0 : index
    %c1_195 = arith.constant 1 : index
    %c0_196 = arith.constant 0 : index
    %179 = vector.load %arg5[%c0_193, %c0_194, %c1_195, %c0_196] : memref<2x10x10x64xf32, #tpu.memory_space<vmem>>, vector<2x8x8x64xf32>
    %180 = vector.shape_cast %179 : vector<2x8x8x64xf32> to vector<128x64xf32>
    %c0_197 = arith.constant 0 : index
    %c0_198 = arith.constant 0 : index
    %c2_199 = arith.constant 2 : index
    %c0_200 = arith.constant 0 : index
    %181 = vector.load %arg5[%c0_197, %c0_198, %c2_199, %c0_200] : memref<2x10x10x64xf32, #tpu.memory_space<vmem>>, vector<2x8x8x64xf32>
    %182 = vector.shape_cast %181 : vector<2x8x8x64xf32> to vector<128x64xf32>
    %c0_201 = arith.constant 0 : index
    %c1_202 = arith.constant 1 : index
    %c0_203 = arith.constant 0 : index
    %c0_204 = arith.constant 0 : index
    %183 = vector.load %arg5[%c0_201, %c1_202, %c0_203, %c0_204] : memref<2x10x10x64xf32, #tpu.memory_space<vmem>>, vector<2x8x8x64xf32>
    %184 = vector.shape_cast %183 : vector<2x8x8x64xf32> to vector<128x64xf32>
    %c0_205 = arith.constant 0 : index
    %c1_206 = arith.constant 1 : index
    %c1_207 = arith.constant 1 : index
    %c0_208 = arith.constant 0 : index
    %185 = vector.load %arg5[%c0_205, %c1_206, %c1_207, %c0_208] : memref<2x10x10x64xf32, #tpu.memory_space<vmem>>, vector<2x8x8x64xf32>
    %186 = vector.shape_cast %185 : vector<2x8x8x64xf32> to vector<128x64xf32>
    %c0_209 = arith.constant 0 : index
    %c1_210 = arith.constant 1 : index
    %c2_211 = arith.constant 2 : index
    %c0_212 = arith.constant 0 : index
    %187 = vector.load %arg5[%c0_209, %c1_210, %c2_211, %c0_212] : memref<2x10x10x64xf32, #tpu.memory_space<vmem>>, vector<2x8x8x64xf32>
    %188 = vector.shape_cast %187 : vector<2x8x8x64xf32> to vector<128x64xf32>
    %c0_213 = arith.constant 0 : index
    %c2_214 = arith.constant 2 : index
    %c0_215 = arith.constant 0 : index
    %c0_216 = arith.constant 0 : index
    %189 = vector.load %arg5[%c0_213, %c2_214, %c0_215, %c0_216] : memref<2x10x10x64xf32, #tpu.memory_space<vmem>>, vector<2x8x8x64xf32>
    %190 = vector.shape_cast %189 : vector<2x8x8x64xf32> to vector<128x64xf32>
    %c0_217 = arith.constant 0 : index
    %c2_218 = arith.constant 2 : index
    %c1_219 = arith.constant 1 : index
    %c0_220 = arith.constant 0 : index
    %191 = vector.load %arg5[%c0_217, %c2_218, %c1_219, %c0_220] : memref<2x10x10x64xf32, #tpu.memory_space<vmem>>, vector<2x8x8x64xf32>
    %192 = vector.shape_cast %191 : vector<2x8x8x64xf32> to vector<128x64xf32>
    %c0_221 = arith.constant 0 : index
    %c2_222 = arith.constant 2 : index
    %c2_223 = arith.constant 2 : index
    %c0_224 = arith.constant 0 : index
    %193 = vector.load %arg5[%c0_221, %c2_222, %c2_223, %c0_224] : memref<2x10x10x64xf32, #tpu.memory_space<vmem>>, vector<2x8x8x64xf32>
    %194 = vector.shape_cast %193 : vector<2x8x8x64xf32> to vector<128x64xf32>
    %195 = tpu.concatenate %178, %180, %182, %184, %186, %188, %190, %192, %194 in 1 : vector<128x64xf32>, vector<128x64xf32>, vector<128x64xf32>, vector<128x64xf32>, vector<128x64xf32>, vector<128x64xf32>, vector<128x64xf32>, vector<128x64xf32>, vector<128x64xf32> -> vector<128x576xf32>
    %c3 = arith.constant 3 : index
    %c0_225 = arith.constant 0 : index
    %c0_226 = arith.constant 0 : index
    %196 = vector.load %arg2[%c3, %c0_225, %c0_226] : memref<8x576x128xf32, #tpu.memory_space<vmem>>, vector<1x576x64xf32>
    %197 = vector.shape_cast %196 : vector<1x576x64xf32> to vector<576x64xf32>
    %cst_227 = arith.constant dense<0.000000e+00> : vector<128x64xf32>
    %198 = tpu.matmul %195, %197, %cst_227 {dimension_numbers = #tpu.dot_dimension_numbers<[1], [0], [0], [1], [0, 0, 1, 1], [], []>} : vector<128x576xf32>, vector<576x64xf32>, vector<128x64xf32> -> vector<128x64xf32>
    %c3_228 = arith.constant 3 : index
    %c0_229 = arith.constant 0 : index
    %c0_230 = arith.constant 0 : index
    %199 = vector.load %arg3[%c3_228, %c0_229, %c0_230] : memref<7x3x128xf32, #tpu.memory_space<vmem>>, vector<1x1x64xf32>
    %200 = vector.shape_cast %199 : vector<1x1x64xf32> to vector<1x64xf32>
    %201 = vector.broadcast %200 : vector<1x64xf32> to vector<128x64xf32>
    %202 = arith.addf %198, %201 : vector<128x64xf32>
    %cst_231 = arith.constant 0.000000e+00 : f32
    %203 = vector.broadcast %cst_231 : f32 to vector<128x64xf32>
    %204 = arith.maximumf %202, %203 : vector<128x64xf32>
    %cst_232 = arith.constant dense<0.000000e+00> : vector<64xf32>
    %205 = vector.multi_reduction <add>, %204, %cst_232 [0] : vector<128x64xf32> to vector<64xf32>
    %206 = vector.shape_cast %205 : vector<64xf32> to vector<1x64xf32>
    %207 = arith.mulf %204, %204 : vector<128x64xf32>
    %cst_233 = arith.constant dense<0.000000e+00> : vector<64xf32>
    %208 = vector.multi_reduction <add>, %207, %cst_233 [0] : vector<128x64xf32> to vector<64xf32>
    %209 = vector.shape_cast %208 : vector<64xf32> to vector<1x64xf32>
    %cst_234 = arith.constant 7.812500e-03 : f32
    %210 = vector.broadcast %cst_234 : f32 to vector<1x64xf32>
    %211 = arith.mulf %206, %210 : vector<1x64xf32>
    %cst_235 = arith.constant 7.812500e-03 : f32
    %212 = vector.broadcast %cst_235 : f32 to vector<1x64xf32>
    %213 = arith.mulf %209, %212 : vector<1x64xf32>
    %214 = arith.mulf %211, %211 : vector<1x64xf32>
    %215 = arith.subf %213, %214 : vector<1x64xf32>
    %cst_236 = arith.constant 0.000000e+00 : f32
    %216 = vector.broadcast %cst_236 : f32 to vector<1x64xf32>
    %217 = arith.maximumf %215, %216 : vector<1x64xf32>
    %cst_237 = arith.constant 9.99999974E-6 : f32
    %218 = vector.broadcast %cst_237 : f32 to vector<1x64xf32>
    %219 = arith.addf %217, %218 : vector<1x64xf32>
    %220 = math.rsqrt %219 : vector<1x64xf32>
    %c3_238 = arith.constant 3 : index
    %c1_239 = arith.constant 1 : index
    %c0_240 = arith.constant 0 : index
    %221 = vector.load %arg3[%c3_238, %c1_239, %c0_240] : memref<7x3x128xf32, #tpu.memory_space<vmem>>, vector<1x1x64xf32>
    %222 = vector.shape_cast %221 : vector<1x1x64xf32> to vector<1x64xf32>
    %223 = arith.mulf %220, %222 : vector<1x64xf32>
    %c3_241 = arith.constant 3 : index
    %c2_242 = arith.constant 2 : index
    %c0_243 = arith.constant 0 : index
    %224 = vector.load %arg3[%c3_241, %c2_242, %c0_243] : memref<7x3x128xf32, #tpu.memory_space<vmem>>, vector<1x1x64xf32>
    %225 = vector.shape_cast %224 : vector<1x1x64xf32> to vector<1x64xf32>
    %226 = arith.mulf %211, %223 : vector<1x64xf32>
    %227 = arith.subf %225, %226 : vector<1x64xf32>
    %228 = vector.broadcast %223 : vector<1x64xf32> to vector<128x64xf32>
    %229 = arith.mulf %204, %228 : vector<128x64xf32>
    %230 = vector.broadcast %227 : vector<1x64xf32> to vector<128x64xf32>
    %231 = arith.addf %229, %230 : vector<128x64xf32>
    %232 = vector.shape_cast %231 : vector<128x64xf32> to vector<2x8x8x64xf32>
    %c0_244 = arith.constant 0 : index
    %c1_245 = arith.constant 1 : index
    %c1_246 = arith.constant 1 : index
    %c0_247 = arith.constant 0 : index
    %233 = vector.load %arg5[%c0_244, %c1_245, %c1_246, %c0_247] : memref<2x10x10x64xf32, #tpu.memory_space<vmem>>, vector<2x8x8x64xf32>
    tpu.vector_store %arg5[%c0_244, %c1_245, %c1_246, %c0_247], %232 {strides = array<i32>} : memref<2x10x10x64xf32, #tpu.memory_space<vmem>>, vector<2x8x8x64xf32>,
    %c0_248 = arith.constant 0 : index
    %c0_249 = arith.constant 0 : index
    %c0_250 = arith.constant 0 : index
    %c0_251 = arith.constant 0 : index
    %234 = vector.load %arg5[%c0_248, %c0_249, %c0_250, %c0_251] : memref<2x10x10x64xf32, #tpu.memory_space<vmem>>, vector<2x8x8x64xf32>
    %235 = vector.shape_cast %234 : vector<2x8x8x64xf32> to vector<128x64xf32>
    %c0_252 = arith.constant 0 : index
    %c0_253 = arith.constant 0 : index
    %c1_254 = arith.constant 1 : index
    %c0_255 = arith.constant 0 : index
    %236 = vector.load %arg5[%c0_252, %c0_253, %c1_254, %c0_255] : memref<2x10x10x64xf32, #tpu.memory_space<vmem>>, vector<2x8x8x64xf32>
    %237 = vector.shape_cast %236 : vector<2x8x8x64xf32> to vector<128x64xf32>
    %c0_256 = arith.constant 0 : index
    %c0_257 = arith.constant 0 : index
    %c2_258 = arith.constant 2 : index
    %c0_259 = arith.constant 0 : index
    %238 = vector.load %arg5[%c0_256, %c0_257, %c2_258, %c0_259] : memref<2x10x10x64xf32, #tpu.memory_space<vmem>>, vector<2x8x8x64xf32>
    %239 = vector.shape_cast %238 : vector<2x8x8x64xf32> to vector<128x64xf32>
    %c0_260 = arith.constant 0 : index
    %c1_261 = arith.constant 1 : index
    %c0_262 = arith.constant 0 : index
    %c0_263 = arith.constant 0 : index
    %240 = vector.load %arg5[%c0_260, %c1_261, %c0_262, %c0_263] : memref<2x10x10x64xf32, #tpu.memory_space<vmem>>, vector<2x8x8x64xf32>
    %241 = vector.shape_cast %240 : vector<2x8x8x64xf32> to vector<128x64xf32>
    %c0_264 = arith.constant 0 : index
    %c1_265 = arith.constant 1 : index
    %c1_266 = arith.constant 1 : index
    %c0_267 = arith.constant 0 : index
    %242 = vector.load %arg5[%c0_264, %c1_265, %c1_266, %c0_267] : memref<2x10x10x64xf32, #tpu.memory_space<vmem>>, vector<2x8x8x64xf32>
    %243 = vector.shape_cast %242 : vector<2x8x8x64xf32> to vector<128x64xf32>
    %c0_268 = arith.constant 0 : index
    %c1_269 = arith.constant 1 : index
    %c2_270 = arith.constant 2 : index
    %c0_271 = arith.constant 0 : index
    %244 = vector.load %arg5[%c0_268, %c1_269, %c2_270, %c0_271] : memref<2x10x10x64xf32, #tpu.memory_space<vmem>>, vector<2x8x8x64xf32>
    %245 = vector.shape_cast %244 : vector<2x8x8x64xf32> to vector<128x64xf32>
    %c0_272 = arith.constant 0 : index
    %c2_273 = arith.constant 2 : index
    %c0_274 = arith.constant 0 : index
    %c0_275 = arith.constant 0 : index
    %246 = vector.load %arg5[%c0_272, %c2_273, %c0_274, %c0_275] : memref<2x10x10x64xf32, #tpu.memory_space<vmem>>, vector<2x8x8x64xf32>
    %247 = vector.shape_cast %246 : vector<2x8x8x64xf32> to vector<128x64xf32>
    %c0_276 = arith.constant 0 : index
    %c2_277 = arith.constant 2 : index
    %c1_278 = arith.constant 1 : index
    %c0_279 = arith.constant 0 : index
    %248 = vector.load %arg5[%c0_276, %c2_277, %c1_278, %c0_279] : memref<2x10x10x64xf32, #tpu.memory_space<vmem>>, vector<2x8x8x64xf32>
    %249 = vector.shape_cast %248 : vector<2x8x8x64xf32> to vector<128x64xf32>
    %c0_280 = arith.constant 0 : index
    %c2_281 = arith.constant 2 : index
    %c2_282 = arith.constant 2 : index
    %c0_283 = arith.constant 0 : index
    %250 = vector.load %arg5[%c0_280, %c2_281, %c2_282, %c0_283] : memref<2x10x10x64xf32, #tpu.memory_space<vmem>>, vector<2x8x8x64xf32>
    %251 = vector.shape_cast %250 : vector<2x8x8x64xf32> to vector<128x64xf32>
    %252 = tpu.concatenate %235, %237, %239, %241, %243, %245, %247, %249, %251 in 1 : vector<128x64xf32>, vector<128x64xf32>, vector<128x64xf32>, vector<128x64xf32>, vector<128x64xf32>, vector<128x64xf32>, vector<128x64xf32>, vector<128x64xf32>, vector<128x64xf32> -> vector<128x576xf32>
    %c4 = arith.constant 4 : index
    %c0_284 = arith.constant 0 : index
    %c0_285 = arith.constant 0 : index
    %253 = vector.load %arg2[%c4, %c0_284, %c0_285] : memref<8x576x128xf32, #tpu.memory_space<vmem>>, vector<1x576x64xf32>
    %254 = vector.shape_cast %253 : vector<1x576x64xf32> to vector<576x64xf32>
    %cst_286 = arith.constant dense<0.000000e+00> : vector<128x64xf32>
    %255 = tpu.matmul %252, %254, %cst_286 {dimension_numbers = #tpu.dot_dimension_numbers<[1], [0], [0], [1], [0, 0, 1, 1], [], []>} : vector<128x576xf32>, vector<576x64xf32>, vector<128x64xf32> -> vector<128x64xf32>
    %c4_287 = arith.constant 4 : index
    %c0_288 = arith.constant 0 : index
    %c0_289 = arith.constant 0 : index
    %256 = vector.load %arg3[%c4_287, %c0_288, %c0_289] : memref<7x3x128xf32, #tpu.memory_space<vmem>>, vector<1x1x64xf32>
    %257 = vector.shape_cast %256 : vector<1x1x64xf32> to vector<1x64xf32>
    %258 = vector.broadcast %257 : vector<1x64xf32> to vector<128x64xf32>
    %259 = arith.addf %255, %258 : vector<128x64xf32>
    %cst_290 = arith.constant 0.000000e+00 : f32
    %260 = vector.broadcast %cst_290 : f32 to vector<128x64xf32>
    %261 = arith.maximumf %259, %260 : vector<128x64xf32>
    %cst_291 = arith.constant dense<0.000000e+00> : vector<64xf32>
    %262 = vector.multi_reduction <add>, %261, %cst_291 [0] : vector<128x64xf32> to vector<64xf32>
    %263 = vector.shape_cast %262 : vector<64xf32> to vector<1x64xf32>
    %264 = arith.mulf %261, %261 : vector<128x64xf32>
    %cst_292 = arith.constant dense<0.000000e+00> : vector<64xf32>
    %265 = vector.multi_reduction <add>, %264, %cst_292 [0] : vector<128x64xf32> to vector<64xf32>
    %266 = vector.shape_cast %265 : vector<64xf32> to vector<1x64xf32>
    %cst_293 = arith.constant 7.812500e-03 : f32
    %267 = vector.broadcast %cst_293 : f32 to vector<1x64xf32>
    %268 = arith.mulf %263, %267 : vector<1x64xf32>
    %cst_294 = arith.constant 7.812500e-03 : f32
    %269 = vector.broadcast %cst_294 : f32 to vector<1x64xf32>
    %270 = arith.mulf %266, %269 : vector<1x64xf32>
    %271 = arith.mulf %268, %268 : vector<1x64xf32>
    %272 = arith.subf %270, %271 : vector<1x64xf32>
    %cst_295 = arith.constant 0.000000e+00 : f32
    %273 = vector.broadcast %cst_295 : f32 to vector<1x64xf32>
    %274 = arith.maximumf %272, %273 : vector<1x64xf32>
    %cst_296 = arith.constant 9.99999974E-6 : f32
    %275 = vector.broadcast %cst_296 : f32 to vector<1x64xf32>
    %276 = arith.addf %274, %275 : vector<1x64xf32>
    %277 = math.rsqrt %276 : vector<1x64xf32>
    %c4_297 = arith.constant 4 : index
    %c1_298 = arith.constant 1 : index
    %c0_299 = arith.constant 0 : index
    %278 = vector.load %arg3[%c4_297, %c1_298, %c0_299] : memref<7x3x128xf32, #tpu.memory_space<vmem>>, vector<1x1x64xf32>
    %279 = vector.shape_cast %278 : vector<1x1x64xf32> to vector<1x64xf32>
    %280 = arith.mulf %277, %279 : vector<1x64xf32>
    %c4_300 = arith.constant 4 : index
    %c2_301 = arith.constant 2 : index
    %c0_302 = arith.constant 0 : index
    %281 = vector.load %arg3[%c4_300, %c2_301, %c0_302] : memref<7x3x128xf32, #tpu.memory_space<vmem>>, vector<1x1x64xf32>
    %282 = vector.shape_cast %281 : vector<1x1x64xf32> to vector<1x64xf32>
    %283 = arith.mulf %268, %280 : vector<1x64xf32>
    %284 = arith.subf %282, %283 : vector<1x64xf32>
    %285 = vector.broadcast %280 : vector<1x64xf32> to vector<128x64xf32>
    %286 = arith.mulf %261, %285 : vector<128x64xf32>
    %287 = vector.broadcast %284 : vector<1x64xf32> to vector<128x64xf32>
    %288 = arith.addf %286, %287 : vector<128x64xf32>
    %289 = vector.shape_cast %288 : vector<128x64xf32> to vector<2x8x8x64xf32>
    %c0_303 = arith.constant 0 : index
    %c1_304 = arith.constant 1 : index
    %c1_305 = arith.constant 1 : index
    %c0_306 = arith.constant 0 : index
    %290 = vector.load %arg5[%c0_303, %c1_304, %c1_305, %c0_306] : memref<2x10x10x64xf32, #tpu.memory_space<vmem>>, vector<2x8x8x64xf32>
    tpu.vector_store %arg5[%c0_303, %c1_304, %c1_305, %c0_306], %289 {strides = array<i32>} : memref<2x10x10x64xf32, #tpu.memory_space<vmem>>, vector<2x8x8x64xf32>,
    %c0_307 = arith.constant 0 : index
    %c1_308 = arith.constant 1 : index
    %c1_309 = arith.constant 1 : index
    %c0_310 = arith.constant 0 : index
    %291 = vector.load %arg5[%c0_307, %c1_308, %c1_309, %c0_310] : memref<2x10x10x64xf32, #tpu.memory_space<vmem>>, vector<2x8x8x64xf32>
    %292 = vector.shape_cast %291 : vector<2x8x8x64xf32> to vector<128x64xf32>
    %c0_311 = arith.constant 0 : index
    %c1_312 = arith.constant 1 : index
    %c2_313 = arith.constant 2 : index
    %c0_314 = arith.constant 0 : index
    %293 = vector.load %arg5[%c0_311, %c1_312, %c2_313, %c0_314] : memref<2x10x10x64xf32, #tpu.memory_space<vmem>>, vector<2x8x8x64xf32>
    %294 = vector.shape_cast %293 : vector<2x8x8x64xf32> to vector<128x64xf32>
    %c0_315 = arith.constant 0 : index
    %c2_316 = arith.constant 2 : index
    %c1_317 = arith.constant 1 : index
    %c0_318 = arith.constant 0 : index
    %295 = vector.load %arg5[%c0_315, %c2_316, %c1_317, %c0_318] : memref<2x10x10x64xf32, #tpu.memory_space<vmem>>, vector<2x8x8x64xf32>
    %296 = vector.shape_cast %295 : vector<2x8x8x64xf32> to vector<128x64xf32>
    %c0_319 = arith.constant 0 : index
    %c2_320 = arith.constant 2 : index
    %c2_321 = arith.constant 2 : index
    %c0_322 = arith.constant 0 : index
    %297 = vector.load %arg5[%c0_319, %c2_320, %c2_321, %c0_322] : memref<2x10x10x64xf32, #tpu.memory_space<vmem>>, vector<2x8x8x64xf32>
    %298 = vector.shape_cast %297 : vector<2x8x8x64xf32> to vector<128x64xf32>
    %299 = tpu.concatenate %292, %294, %296, %298 in 1 : vector<128x64xf32>, vector<128x64xf32>, vector<128x64xf32>, vector<128x64xf32> -> vector<128x256xf32>
    %c5 = arith.constant 5 : index
    %c0_323 = arith.constant 0 : index
    %c0_324 = arith.constant 0 : index
    %300 = vector.load %arg2[%c5, %c0_323, %c0_324] : memref<8x576x128xf32, #tpu.memory_space<vmem>>, vector<1x256x128xf32>
    %301 = vector.shape_cast %300 : vector<1x256x128xf32> to vector<256x128xf32>
    %cst_325 = arith.constant dense<0.000000e+00> : vector<128x128xf32>
    %302 = tpu.matmul %299, %301, %cst_325 {dimension_numbers = #tpu.dot_dimension_numbers<[1], [0], [0], [1], [0, 0, 1, 1], [], []>} : vector<128x256xf32>, vector<256x128xf32>, vector<128x128xf32> -> vector<128x128xf32>
    %c5_326 = arith.constant 5 : index
    %c0_327 = arith.constant 0 : index
    %c0_328 = arith.constant 0 : index
    %303 = vector.load %arg3[%c5_326, %c0_327, %c0_328] : memref<7x3x128xf32, #tpu.memory_space<vmem>>, vector<1x1x128xf32>
    %304 = vector.shape_cast %303 : vector<1x1x128xf32> to vector<1x128xf32>
    %305 = vector.broadcast %304 : vector<1x128xf32> to vector<128x128xf32>
    %306 = arith.addf %302, %305 : vector<128x128xf32>
    %cst_329 = arith.constant 0.000000e+00 : f32
    %307 = vector.broadcast %cst_329 : f32 to vector<128x128xf32>
    %308 = arith.maximumf %306, %307 : vector<128x128xf32>
    %cst_330 = arith.constant dense<0.000000e+00> : vector<128xf32>
    %309 = vector.multi_reduction <add>, %308, %cst_330 [0] : vector<128x128xf32> to vector<128xf32>
    %310 = vector.shape_cast %309 : vector<128xf32> to vector<1x128xf32>
    %311 = arith.mulf %308, %308 : vector<128x128xf32>
    %cst_331 = arith.constant dense<0.000000e+00> : vector<128xf32>
    %312 = vector.multi_reduction <add>, %311, %cst_331 [0] : vector<128x128xf32> to vector<128xf32>
    %313 = vector.shape_cast %312 : vector<128xf32> to vector<1x128xf32>
    %314 = tpu.concatenate %310, %313 in 0 : vector<1x128xf32>, vector<1x128xf32> -> vector<2x128xf32>
    %c7 = arith.constant 7 : index
    %c0_332 = arith.constant 0 : index
    %c0_333 = arith.constant 0 : index
    %315 = vector.load %arg2[%c7, %c0_332, %c0_333] : memref<8x576x128xf32, #tpu.memory_space<vmem>>, vector<1x128x128xf32>
    %316 = vector.shape_cast %315 : vector<1x128x128xf32> to vector<128x128xf32>
    %cst_334 = arith.constant dense<0.000000e+00> : vector<2x128xf32>
    %317 = tpu.matmul %314, %316, %cst_334 {dimension_numbers = #tpu.dot_dimension_numbers<[1], [0], [0], [1], [0, 0, 1, 1], [], []>} : vector<2x128xf32>, vector<128x128xf32>, vector<2x128xf32> -> vector<2x128xf32>
    %318 = vector.extract_strided_slice %317 {offsets = [0, 0], sizes = [1, 128], strides = [1, 1]} : vector<2x128xf32> to vector<1x128xf32>
    %cst_335 = arith.constant 0.001953125 : f32
    %319 = vector.broadcast %cst_335 : f32 to vector<1x128xf32>
    %320 = arith.mulf %318, %319 : vector<1x128xf32>
    %321 = vector.extract_strided_slice %317 {offsets = [1, 0], sizes = [1, 128], strides = [1, 1]} : vector<2x128xf32> to vector<1x128xf32>
    %cst_336 = arith.constant 0.001953125 : f32
    %322 = vector.broadcast %cst_336 : f32 to vector<1x128xf32>
    %323 = arith.mulf %321, %322 : vector<1x128xf32>
    %324 = arith.mulf %320, %320 : vector<1x128xf32>
    %325 = arith.subf %323, %324 : vector<1x128xf32>
    %cst_337 = arith.constant 0.000000e+00 : f32
    %326 = vector.broadcast %cst_337 : f32 to vector<1x128xf32>
    %327 = arith.maximumf %325, %326 : vector<1x128xf32>
    %cst_338 = arith.constant 9.99999974E-6 : f32
    %328 = vector.broadcast %cst_338 : f32 to vector<1x128xf32>
    %329 = arith.addf %327, %328 : vector<1x128xf32>
    %330 = math.rsqrt %329 : vector<1x128xf32>
    %c5_339 = arith.constant 5 : index
    %c1_340 = arith.constant 1 : index
    %c0_341 = arith.constant 0 : index
    %331 = vector.load %arg3[%c5_339, %c1_340, %c0_341] : memref<7x3x128xf32, #tpu.memory_space<vmem>>, vector<1x1x128xf32>
    %332 = vector.shape_cast %331 : vector<1x1x128xf32> to vector<1x128xf32>
    %333 = arith.mulf %330, %332 : vector<1x128xf32>
    %c5_342 = arith.constant 5 : index
    %c2_343 = arith.constant 2 : index
    %c0_344 = arith.constant 0 : index
    %334 = vector.load %arg3[%c5_342, %c2_343, %c0_344] : memref<7x3x128xf32, #tpu.memory_space<vmem>>, vector<1x1x128xf32>
    %335 = vector.shape_cast %334 : vector<1x1x128xf32> to vector<1x128xf32>
    %336 = arith.mulf %320, %333 : vector<1x128xf32>
    %337 = arith.subf %335, %336 : vector<1x128xf32>
    %338 = vector.broadcast %333 : vector<1x128xf32> to vector<128x128xf32>
    %339 = arith.mulf %308, %338 : vector<128x128xf32>
    %340 = vector.broadcast %337 : vector<1x128xf32> to vector<128x128xf32>
    %341 = arith.addf %339, %340 : vector<128x128xf32>
    %cst_345 = arith.constant 0.000000e+00 : f32
    %342 = vector.broadcast %cst_345 : f32 to vector<2x1x9x128xf32>
    %c0_346 = arith.constant 0 : index
    %c8 = arith.constant 8 : index
    %c0_347 = arith.constant 0 : index
    %c0_348 = arith.constant 0 : index
    %343 = vector.load %arg6[%c0_346, %c8, %c0_347, %c0_348] : memref<2x9x9x128xf32, #tpu.memory_space<vmem>>, vector<2x1x9x128xf32>
    tpu.vector_store %arg6[%c0_346, %c8, %c0_347, %c0_348], %342 {strides = array<i32>} : memref<2x9x9x128xf32, #tpu.memory_space<vmem>>, vector<2x1x9x128xf32>,
    %cst_349 = arith.constant 0.000000e+00 : f32
    %344 = vector.broadcast %cst_349 : f32 to vector<2x8x1x128xf32>
    %c0_350 = arith.constant 0 : index
    %c0_351 = arith.constant 0 : index
    %c8_352 = arith.constant 8 : index
    %c0_353 = arith.constant 0 : index
    %345 = vector.load %arg6[%c0_350, %c0_351, %c8_352, %c0_353] : memref<2x9x9x128xf32, #tpu.memory_space<vmem>>, vector<2x8x1x128xf32>
    tpu.vector_store %arg6[%c0_350, %c0_351, %c8_352, %c0_353], %344 {strides = array<i32>} : memref<2x9x9x128xf32, #tpu.memory_space<vmem>>, vector<2x8x1x128xf32>,
    %346 = vector.shape_cast %341 : vector<128x128xf32> to vector<2x8x8x128xf32>
    %c0_354 = arith.constant 0 : index
    %c0_355 = arith.constant 0 : index
    %c0_356 = arith.constant 0 : index
    %c0_357 = arith.constant 0 : index
    %347 = vector.load %arg6[%c0_354, %c0_355, %c0_356, %c0_357] : memref<2x9x9x128xf32, #tpu.memory_space<vmem>>, vector<2x8x8x128xf32>
    tpu.vector_store %arg6[%c0_354, %c0_355, %c0_356, %c0_357], %346 {strides = array<i32>} : memref<2x9x9x128xf32, #tpu.memory_space<vmem>>, vector<2x8x8x128xf32>,
    %c0_358 = arith.constant 0 : index
    %c0_359 = arith.constant 0 : index
    %c0_360 = arith.constant 0 : index
    %c0_361 = arith.constant 0 : index
    %348 = vector.load %arg6[%c0_358, %c0_359, %c0_360, %c0_361] : memref<2x9x9x128xf32, #tpu.memory_space<vmem>>, vector<2x8x8x128xf32>
    %349 = vector.shape_cast %348 : vector<2x8x8x128xf32> to vector<128x128xf32>
    %c0_362 = arith.constant 0 : index
    %c0_363 = arith.constant 0 : index
    %c1_364 = arith.constant 1 : index
    %c0_365 = arith.constant 0 : index
    %350 = vector.load %arg6[%c0_362, %c0_363, %c1_364, %c0_365] : memref<2x9x9x128xf32, #tpu.memory_space<vmem>>, vector<2x8x8x128xf32>
    %351 = vector.shape_cast %350 : vector<2x8x8x128xf32> to vector<128x128xf32>
    %c0_366 = arith.constant 0 : index
    %c1_367 = arith.constant 1 : index
    %c0_368 = arith.constant 0 : index
    %c0_369 = arith.constant 0 : index
    %352 = vector.load %arg6[%c0_366, %c1_367, %c0_368, %c0_369] : memref<2x9x9x128xf32, #tpu.memory_space<vmem>>, vector<2x8x8x128xf32>
    %353 = vector.shape_cast %352 : vector<2x8x8x128xf32> to vector<128x128xf32>
    %c0_370 = arith.constant 0 : index
    %c1_371 = arith.constant 1 : index
    %c1_372 = arith.constant 1 : index
    %c0_373 = arith.constant 0 : index
    %354 = vector.load %arg6[%c0_370, %c1_371, %c1_372, %c0_373] : memref<2x9x9x128xf32, #tpu.memory_space<vmem>>, vector<2x8x8x128xf32>
    %355 = vector.shape_cast %354 : vector<2x8x8x128xf32> to vector<128x128xf32>
    %356 = tpu.concatenate %349, %351, %353, %355 in 1 : vector<128x128xf32>, vector<128x128xf32>, vector<128x128xf32>, vector<128x128xf32> -> vector<128x512xf32>
    %c6 = arith.constant 6 : index
    %c0_374 = arith.constant 0 : index
    %c0_375 = arith.constant 0 : index
    %357 = vector.load %arg2[%c6, %c0_374, %c0_375] : memref<8x576x128xf32, #tpu.memory_space<vmem>>, vector<1x512x48xf32>
    %358 = vector.shape_cast %357 : vector<1x512x48xf32> to vector<512x48xf32>
    %cst_376 = arith.constant dense<0.000000e+00> : vector<128x48xf32>
    %359 = tpu.matmul %356, %358, %cst_376 {dimension_numbers = #tpu.dot_dimension_numbers<[1], [0], [0], [1], [0, 0, 1, 1], [], []>} : vector<128x512xf32>, vector<512x48xf32>, vector<128x48xf32> -> vector<128x48xf32>
    %c6_377 = arith.constant 6 : index
    %c0_378 = arith.constant 0 : index
    %c0_379 = arith.constant 0 : index
    %360 = vector.load %arg3[%c6_377, %c0_378, %c0_379] : memref<7x3x128xf32, #tpu.memory_space<vmem>>, vector<1x1x48xf32>
    %361 = vector.shape_cast %360 : vector<1x1x48xf32> to vector<1x48xf32>
    %362 = vector.broadcast %361 : vector<1x48xf32> to vector<128x48xf32>
    %363 = arith.addf %359, %362 : vector<128x48xf32>
    %cst_380 = arith.constant 0.000000e+00 : f32
    %364 = vector.broadcast %cst_380 : f32 to vector<128x48xf32>
    %365 = arith.maximumf %363, %364 : vector<128x48xf32>
    %c0_381 = arith.constant 0 : index
    %c0_382 = arith.constant 0 : index
    %366 = vector.load %arg4[%c0_381, %c0_382] : memref<128x48xf32, #tpu.memory_space<vmem>>, vector<128x48xf32>
    tpu.vector_store %arg4[%c0_381, %c0_382], %365 {strides = array<i32>} : memref<128x48xf32, #tpu.memory_space<vmem>>, vector<128x48xf32>,
    return
  }
  func.func @transform_0(%arg0: i32) -> (i32, i32, i32, i32) {
    %c0_i32 = arith.constant 0 : i32
    %c0_i32_0 = arith.constant 0 : i32
    %c0_i32_1 = arith.constant 0 : i32
    %c0_i32_2 = arith.constant 0 : i32
    %c0_i32_3 = arith.constant 0 : i32
    return %c0_i32, %c0_i32_0, %c0_i32_1, %c0_i32_2 : i32, i32, i32, i32
  }
  func.func @transform_1(%arg0: i32) -> (i32, i32, i32) {
    %c0_i32 = arith.constant 0 : i32
    %c0_i32_0 = arith.constant 0 : i32
    %c0_i32_1 = arith.constant 0 : i32
    %c0_i32_2 = arith.constant 0 : i32
    return %c0_i32, %c0_i32_0, %c0_i32_1 : i32, i32, i32
  }
  func.func @transform_2(%arg0: i32) -> (i32, i32, i32) {
    %c0_i32 = arith.constant 0 : i32
    %c0_i32_0 = arith.constant 0 : i32
    %c0_i32_1 = arith.constant 0 : i32
    %c0_i32_2 = arith.constant 0 : i32
    return %c0_i32, %c0_i32_0, %c0_i32_1 : i32, i32, i32
  }
  func.func @transform_3(%arg0: i32) -> (i32, i32) {
    %c0_i32 = arith.constant 0 : i32
    %c0_i32_0 = arith.constant 0 : i32
    %c0_i32_1 = arith.constant 0 : i32
    return %c0_i32, %c0_i32_0 : i32, i32
  }
}

</mosaic_0001>

<llo_original>
// kernel: decoder_forward.1
$region0: #{decoder_forward.1}
  #allocation0 [shape = 'u32[]', space=smem, size = 0x4, offset = 0x4, fixed_abs, tag = 'smem constant byte address 0x4 - core index']
  #allocation1 [shape = 'u32[144,128]{1,0:T(1,128)}', space=vmem, size = 0x12000, scoped, tag = 'internal scratch']
  #allocation2 [shape = 'f32[2,10,10,64]{3,2,1,0:T(8,128)}', space=vmem, size = 0x28000, scoped, tag = 'scratch operand']
  #allocation3 [shape = 'f32[2,9,9,128]{3,2,1,0:T(8,128)}', space=vmem, size = 0x24000, scoped, tag = 'scratch operand']
  %s0 = inlined_call_operand.hbm [shape: f32[2,8,8,32], index: 0, kind: input, shape index: {}]
  %s1 = inlined_call_operand.hbm [shape: f32[8,576,128], index: 1, kind: input, shape index: {}]
  %s2 = inlined_call_operand.vmem [shape: f32[7,3,128], index: 2, kind: input, shape index: {}]
  %s3 = inlined_call_operand.vmem [shape: f32[128,48], index: 3, kind: output, shape index: {}]
  %s4 = sld [smem:[#allocation0]]
  $region30: #{decoder_forward.1} parent=0
    _
  %s6 = ssub.s32 1, %s4
  %s7 = scalar_select 0, %s6, %s4
  $region1: #{decoder_forward.1} parent=0
    #allocation4 [shape = 'u8[65536]{0}', space=vmem, size = 0x10000, scoped, tag = 'input window, operand 0, single buffered']
    #allocation5 [shape = 's32[1]{0}', space=sflag, size = 0x4, scoped, tag = 'scoped memory for decoder_forward.1']
    #allocation6 [shape = 'u8[2359296]{0}', space=vmem, size = 0x240000, scoped, tag = 'input window, operand 1, single buffered']
    #allocation7 [shape = 's32[1]{0}', space=sflag, size = 0x4, scoped, tag = 'scoped memory for decoder_forward.1']
    %8 = vsyncpa [#allocation5], 0
    %9 = vsyncpa [#allocation7], 0
    // Predicated region
    $region2: #{decoder_forward.1} parent=1 // pred_check
      _
    $region3: #{decoder_forward.1} parent=1 // pred_check_branch
      %11 = sbr.rel (0) target = $region5
    $region4: #{decoder_forward.1} parent=1 // pred_region
      %s13 = ssub.s32 2048, 2048
      %14 = vsyncadd [#allocation5], %s13
      %s15 = sshll.u32 [#allocation4], 4
      %s16 = int_to_ptr.vmem [resolvable:$true] %s15
      %21 = dma.hbm_to_vmem [thread:$0]  %s0, 2048, %s16, [#allocation5], 128, 128, 8
    $region5: #{decoder_forward.1} parent=1 // pred_fallthru
      _
    // Predicated region
    $region6: #{decoder_forward.1} parent=1 // pred_check
      _
    $region7: #{decoder_forward.1} parent=1 // pred_check_branch
      %23 = sbr.rel (0) target = $region9
    $region8: #{decoder_forward.1} parent=1 // pred_region
      %s25 = ssub.s32 73728, 73728
      %26 = vsyncadd [#allocation7], %s25
      %s27 = sshll.u32 [#allocation6], 4
      %s28 = int_to_ptr.vmem [resolvable:$true] %s27
      %33 = dma.hbm_to_vmem [thread:$0]  %s1, 73728, %s28, [#allocation7], 128, 128, 8
    $region9: #{decoder_forward.1} parent=1 // pred_fallthru
      _
    // Predicated region
    $region10: #{decoder_forward.1} parent=1 // pred_check
      _
    $region11: #{decoder_forward.1} parent=1 // pred_check_branch
      %35 = sbr.rel (0) target = $region13
    $region12: #{decoder_forward.1} parent=1 // pred_region
      _
    $region13: #{decoder_forward.1} parent=1 // pred_fallthru
      _
    // Predicated region
    $region14: #{decoder_forward.1} parent=1 // pred_check
      _
    $region15: #{decoder_forward.1} parent=1 // pred_check_branch
      %37 = sbr.rel (0) target = $region17
    $region16: #{decoder_forward.1} parent=1 // pred_region
      %38 = dma.done [#allocation5], 2048
    $region17: #{decoder_forward.1} parent=1 // pred_fallthru
      _
    // Predicated region
    $region18: #{decoder_forward.1} parent=1 // pred_check
      _
    $region19: #{decoder_forward.1} parent=1 // pred_check_branch
      %40 = sbr.rel (0) target = $region21
    $region20: #{decoder_forward.1} parent=1 // pred_region
      %41 = dma.done [#allocation7], 73728
    $region21: #{decoder_forward.1} parent=1 // pred_fallthru
      _
    %vm42 = vcmask 523264
    %43 = vst.msk [vmem:[#allocation2] sm:$0xff] %vm42, 0.0
    %vm44 = vcmask 517120
    %45 = vst.msk [vmem:[#allocation2 + $0x8] sm:$0x3] %vm44, 0.0
    %46 = vst.msk [vmem:[#allocation2 + $0x10] sm:$0xff] %vm42, 0.0
    %47 = vst.msk [vmem:[#allocation2 + $0x18] sm:$0x3] %vm44, 0.0
    %48 = vst.msk [vmem:[#allocation2 + $0x20] sm:$0xff] %vm42, 0.0
    %49 = vst.msk [vmem:[#allocation2 + $0x28] sm:$0x3] %vm44, 0.0
    %50 = vst.msk [vmem:[#allocation2 + $0x30] sm:$0xff] %vm42, 0.0
    %51 = vst.msk [vmem:[#allocation2 + $0x38] sm:$0x3] %vm44, 0.0
    %52 = vst.msk [vmem:[#allocation2 + $0x40] sm:$0xff] %vm42, 0.0
    %53 = vst.msk [vmem:[#allocation2 + $0x48] sm:$0x3] %vm44, 0.0
    %54 = vst.msk [vmem:[#allocation2 + $0x50] sm:$0xff] %vm42, 0.0
    %55 = vst.msk [vmem:[#allocation2 + $0x58] sm:$0x3] %vm44, 0.0
    %56 = vst.msk [vmem:[#allocation2 + $0x60] sm:$0xff] %vm42, 0.0
    %57 = vst.msk [vmem:[#allocation2 + $0x68] sm:$0x3] %vm44, 0.0
    %58 = vst.msk [vmem:[#allocation2 + $0x70] sm:$0xff] %vm42, 0.0
    %59 = vst.msk [vmem:[#allocation2 + $0x78] sm:$0x3] %vm44, 0.0
    %60 = vst.msk [vmem:[#allocation2 + $0x80] sm:$0xff] %vm42, 0.0
    %61 = vst.msk [vmem:[#allocation2 + $0x88] sm:$0x3] %vm44, 0.0
    %62 = vst.msk [vmem:[#allocation2 + $0x90] sm:$0xff] %vm42, 0.0
    %63 = vst.msk [vmem:[#allocation2 + $0x98] sm:$0x3] %vm44, 0.0
    %64 = vst.msk [vmem:[#allocation2 + $0xa0] sm:$0xff] %vm42, 0.0
    %65 = vst.msk [vmem:[#allocation2 + $0xa8] sm:$0x3] %vm44, 0.0
    %66 = vst.msk [vmem:[#allocation2 + $0xb0] sm:$0xff] %vm42, 0.0
    %67 = vst.msk [vmem:[#allocation2 + $0xb8] sm:$0x3] %vm44, 0.0
    %68 = vst.msk [vmem:[#allocation2 + $0xc0] sm:$0xff] %vm42, 0.0
    %69 = vst.msk [vmem:[#allocation2 + $0xc8] sm:$0x3] %vm44, 0.0
    %70 = vst.msk [vmem:[#allocation2 + $0xd0] sm:$0xff] %vm42, 0.0
    %71 = vst.msk [vmem:[#allocation2 + $0xd8] sm:$0x3] %vm44, 0.0
    %72 = vst.msk [vmem:[#allocation2 + $0xe0] sm:$0xff] %vm42, 0.0
    %73 = vst.msk [vmem:[#allocation2 + $0xe8] sm:$0x3] %vm44, 0.0
    %74 = vst.msk [vmem:[#allocation2 + $0xf0] sm:$0xff] %vm42, 0.0
    %75 = vst.msk [vmem:[#allocation2 + $0xf8] sm:$0x3] %vm44, 0.0
    %76 = vst.msk [vmem:[#allocation2 + $0x100] sm:$0xff] %vm42, 0.0
    %77 = vst.msk [vmem:[#allocation2 + $0x108] sm:$0x3] %vm44, 0.0
    %78 = vst.msk [vmem:[#allocation2 + $0x110] sm:$0xff] %vm42, 0.0
    %79 = vst.msk [vmem:[#allocation2 + $0x118] sm:$0x3] %vm44, 0.0
    %80 = vst.msk [vmem:[#allocation2 + $0x120] sm:$0xff] %vm42, 0.0
    %81 = vst.msk [vmem:[#allocation2 + $0x128] sm:$0x3] %vm44, 0.0
    %82 = vst.msk [vmem:[#allocation2 + $0x130] sm:$0xff] %vm42, 0.0
    %83 = vst.msk [vmem:[#allocation2 + $0x138] sm:$0x3] %vm44, 0.0
    %v84 = vld [vmem:[#allocation4] sm:$0xff]
    %v85 = vld [vmem:[#allocation4 + $0x8] sm:$0xff]
    %v86 = vld [vmem:[#allocation4 + $0x10] sm:$0xff]
    %v87 = vld [vmem:[#allocation4 + $0x18] sm:$0xff]
    %v88 = vld [vmem:[#allocation4 + $0x20] sm:$0xff]
    %v89 = vld [vmem:[#allocation4 + $0x28] sm:$0xff]
    %v90 = vld [vmem:[#allocation4 + $0x30] sm:$0xff]
    %v91 = vld [vmem:[#allocation4 + $0x38] sm:$0xff]
    %v92 = vld [vmem:[#allocation4 + $0x40] sm:$0xff]
    %v93 = vld [vmem:[#allocation4 + $0x48] sm:$0xff]
    %v94 = vld [vmem:[#allocation4 + $0x50] sm:$0xff]
    %v95 = vld [vmem:[#allocation4 + $0x58] sm:$0xff]
    %v96 = vld [vmem:[#allocation4 + $0x60] sm:$0xff]
    %v97 = vld [vmem:[#allocation4 + $0x68] sm:$0xff]
    %v98 = vld [vmem:[#allocation4 + $0x70] sm:$0xff]
    %v99 = vld [vmem:[#allocation4 + $0x78] sm:$0xff]
    %s100 = scalar_lea.vmem [#allocation2], 16
    %vm101 = vcmask 261120
    %102 = vst.msk [vmem:[%s100 + $0x1] sm:$0xff] %vm101, %v84
    %103 = vst.msk [vmem:[%s100 + $0x11] sm:$0xff] %vm101, %v85
    %104 = vst.msk [vmem:[%s100 + $0x21] sm:$0xff] %vm101, %v86
    %105 = vst.msk [vmem:[%s100 + $0x31] sm:$0xff] %vm101, %v87
    %106 = vst.msk [vmem:[%s100 + $0x41] sm:$0xff] %vm101, %v88
    %107 = vst.msk [vmem:[%s100 + $0x51] sm:$0xff] %vm101, %v89
    %108 = vst.msk [vmem:[%s100 + $0x61] sm:$0xff] %vm101, %v90
    %109 = vst.msk [vmem:[%s100 + $0x71] sm:$0xff] %vm101, %v91
    %110 = vst.msk [vmem:[%s100 + $0xa1] sm:$0xff] %vm101, %v92
    %111 = vst.msk [vmem:[%s100 + $0xb1] sm:$0xff] %vm101, %v93
    %112 = vst.msk [vmem:[%s100 + $0xc1] sm:$0xff] %vm101, %v94
    %113 = vst.msk [vmem:[%s100 + $0xd1] sm:$0xff] %vm101, %v95
    %114 = vst.msk [vmem:[%s100 + $0xe1] sm:$0xff] %vm101, %v96
    %115 = vst.msk [vmem:[%s100 + $0xf1] sm:$0xff] %vm101, %v97
    %116 = vst.msk [vmem:[%s100 + $0x101] sm:$0xff] %vm101, %v98
    %117 = vst.msk [vmem:[%s100 + $0x111] sm:$0xff] %vm101, %v99
    %v118 = vld [vmem:[#allocation2] sm:$0xff]
    %v119 = vld [vmem:[#allocation2 + $0x10] sm:$0xff]
    %v120 = vld [vmem:[#allocation2 + $0x20] sm:$0xff]
    %v121 = vld [vmem:[#allocation2 + $0x30] sm:$0xff]
    %v122 = vld [vmem:[#allocation2 + $0x40] sm:$0xff]
    %v123 = vld [vmem:[#allocation2 + $0x50] sm:$0xff]
    %v124 = vld [vmem:[#allocation2 + $0x60] sm:$0xff]
    %v125 = vld [vmem:[#allocation2 + $0x70] sm:$0xff]
    %v126 = vld [vmem:[#allocation2 + $0xa0] sm:$0xff]
    %v127 = vld [vmem:[#allocation2 + $0xb0] sm:$0xff]
    %v128 = vld [vmem:[#allocation2 + $0xc0] sm:$0xff]
    %v129 = vld [vmem:[#allocation2 + $0xd0] sm:$0xff]
    %v130 = vld [vmem:[#allocation2 + $0xe0] sm:$0xff]
    %v131 = vld [vmem:[#allocation2 + $0xf0] sm:$0xff]
    %v132 = vld [vmem:[#allocation2 + $0x100] sm:$0xff]
    %v133 = vld [vmem:[#allocation2 + $0x110] sm:$0xff]
    %v134 = vld [vmem:[#allocation2 + $0x1] sm:$0xff]
    %v135 = vld [vmem:[#allocation2 + $0x11] sm:$0xff]
    %v136 = vld [vmem:[#allocation2 + $0x21] sm:$0xff]
    %v137 = vld [vmem:[#allocation2 + $0x31] sm:$0xff]
    %v138 = vld [vmem:[#allocation2 + $0x41] sm:$0xff]
    %v139 = vld [vmem:[#allocation2 + $0x51] sm:$0xff]
    %v140 = vld [vmem:[#allocation2 + $0x61] sm:$0xff]
    %v141 = vld [vmem:[#allocation2 + $0x71] sm:$0xff]
    %v142 = vld [vmem:[#allocation2 + $0xa1] sm:$0xff]
    %v143 = vld [vmem:[#allocation2 + $0xb1] sm:$0xff]
    %v144 = vld [vmem:[#allocation2 + $0xc1] sm:$0xff]
    %v145 = vld [vmem:[#allocation2 + $0xd1] sm:$0xff]
    %v146 = vld [vmem:[#allocation2 + $0xe1] sm:$0xff]
    %v147 = vld [vmem:[#allocation2 + $0xf1] sm:$0xff]
    %v148 = vld [vmem:[#allocation2 + $0x101] sm:$0xff]
    %v149 = vld [vmem:[#allocation2 + $0x111] sm:$0xff]
    %v150 = vld [vmem:[#allocation2 + $0x2] sm:$0xff]
    %v151 = vld [vmem:[#allocation2 + $0x12] sm:$0xff]
    %v152 = vld [vmem:[#allocation2 + $0x22] sm:$0xff]
    %v153 = vld [vmem:[#allocation2 + $0x32] sm:$0xff]
    %v154 = vld [vmem:[#allocation2 + $0x42] sm:$0xff]
    %v155 = vld [vmem:[#allocation2 + $0x52] sm:$0xff]
    %v156 = vld [vmem:[#allocation2 + $0x62] sm:$0xff]
    %v157 = vld [vmem:[#allocation2 + $0x72] sm:$0xff]
    %v158 = vld [vmem:[#allocation2 + $0xa2] sm:$0xff]
    %v159 = vld [vmem:[#allocation2 + $0xb2] sm:$0xff]
    %v160 = vld [vmem:[#allocation2 + $0xc2] sm:$0xff]
    %v161 = vld [vmem:[#allocation2 + $0xd2] sm:$0xff]
    %v162 = vld [vmem:[#allocation2 + $0xe2] sm:$0xff]
    %v163 = vld [vmem:[#allocation2 + $0xf2] sm:$0xff]
    %v164 = vld [vmem:[#allocation2 + $0x102] sm:$0xff]
    %v165 = vld [vmem:[#allocation2 + $0x112] sm:$0xff]
    %v166 = vld [vmem:[%s100] sm:$0xff]
    %v167 = vld [vmem:[%s100 + $0x10] sm:$0xff]
    %v168 = vld [vmem:[%s100 + $0x20] sm:$0xff]
    %v169 = vld [vmem:[%s100 + $0x30] sm:$0xff]
    %v170 = vld [vmem:[%s100 + $0x40] sm:$0xff]
    %v171 = vld [vmem:[%s100 + $0x50] sm:$0xff]
    %v172 = vld [vmem:[%s100 + $0x60] sm:$0xff]
    %v173 = vld [vmem:[%s100 + $0x70] sm:$0xff]
    %v174 = vld [vmem:[%s100 + $0xa0] sm:$0xff]
    %v175 = vld [vmem:[%s100 + $0xb0] sm:$0xff]
    %v176 = vld [vmem:[%s100 + $0xc0] sm:$0xff]
    %v177 = vld [vmem:[%s100 + $0xd0] sm:$0xff]
    %v178 = vld [vmem:[%s100 + $0xe0] sm:$0xff]
    %v179 = vld [vmem:[%s100 + $0xf0] sm:$0xff]
    %v180 = vld [vmem:[%s100 + $0x100] sm:$0xff]
    %v181 = vld [vmem:[%s100 + $0x110] sm:$0xff]
    %v182 = vld [vmem:[%s100 + $0x1] sm:$0xff]
    %v183 = vld [vmem:[%s100 + $0x11] sm:$0xff]
    %v184 = vld [vmem:[%s100 + $0x21] sm:$0xff]
    %v185 = vld [vmem:[%s100 + $0x31] sm:$0xff]
    %v186 = vld [vmem:[%s100 + $0x41] sm:$0xff]
    %v187 = vld [vmem:[%s100 + $0x51] sm:$0xff]
    %v188 = vld [vmem:[%s100 + $0x61] sm:$0xff]
    %v189 = vld [vmem:[%s100 + $0x71] sm:$0xff]
    %v190 = vld [vmem:[%s100 + $0xa1] sm:$0xff]
    %v191 = vld [vmem:[%s100 + $0xb1] sm:$0xff]
    %v192 = vld [vmem:[%s100 + $0xc1] sm:$0xff]
    %v193 = vld [vmem:[%s100 + $0xd1] sm:$0xff]
    %v194 = vld [vmem:[%s100 + $0xe1] sm:$0xff]
    %v195 = vld [vmem:[%s100 + $0xf1] sm:$0xff]
    %v196 = vld [vmem:[%s100 + $0x101] sm:$0xff]
    %v197 = vld [vmem:[%s100 + $0x111] sm:$0xff]
    %v198 = vld [vmem:[%s100 + $0x2] sm:$0xff]
    %v199 = vld [vmem:[%s100 + $0x12] sm:$0xff]
    %v200 = vld [vmem:[%s100 + $0x22] sm:$0xff]
    %v201 = vld [vmem:[%s100 + $0x32] sm:$0xff]
    %v202 = vld [vmem:[%s100 + $0x42] sm:$0xff]
    %v203 = vld [vmem:[%s100 + $0x52] sm:$0xff]
    %v204 = vld [vmem:[%s100 + $0x62] sm:$0xff]
    %v205 = vld [vmem:[%s100 + $0x72] sm:$0xff]
    %v206 = vld [vmem:[%s100 + $0xa2] sm:$0xff]
    %v207 = vld [vmem:[%s100 + $0xb2] sm:$0xff]
    %v208 = vld [vmem:[%s100 + $0xc2] sm:$0xff]
    %v209 = vld [vmem:[%s100 + $0xd2] sm:$0xff]
    %v210 = vld [vmem:[%s100 + $0xe2] sm:$0xff]
    %v211 = vld [vmem:[%s100 + $0xf2] sm:$0xff]
    %v212 = vld [vmem:[%s100 + $0x102] sm:$0xff]
    %v213 = vld [vmem:[%s100 + $0x112] sm:$0xff]
    %s214 = scalar_lea.vmem [#allocation2], 32
    %v215 = vld [vmem:[%s214] sm:$0xff]
    %v216 = vld [vmem:[%s214 + $0x10] sm:$0xff]
    %v217 = vld [vmem:[%s214 + $0x20] sm:$0xff]
    %v218 = vld [vmem:[%s214 + $0x30] sm:$0xff]
    %v219 = vld [vmem:[%s214 + $0x40] sm:$0xff]
    %v220 = vld [vmem:[%s214 + $0x50] sm:$0xff]
    %v221 = vld [vmem:[%s214 + $0x60] sm:$0xff]
    %v222 = vld [vmem:[%s214 + $0x70] sm:$0xff]
    %v223 = vld [vmem:[%s214 + $0xa0] sm:$0xff]
    %v224 = vld [vmem:[%s214 + $0xb0] sm:$0xff]
    %v225 = vld [vmem:[%s214 + $0xc0] sm:$0xff]
    %v226 = vld [vmem:[%s214 + $0xd0] sm:$0xff]
    %v227 = vld [vmem:[%s214 + $0xe0] sm:$0xff]
    %v228 = vld [vmem:[%s214 + $0xf0] sm:$0xff]
    %v229 = vld [vmem:[%s214 + $0x100] sm:$0xff]
    %v230 = vld [vmem:[%s214 + $0x110] sm:$0xff]
    %v231 = vld [vmem:[%s214 + $0x1] sm:$0xff]
    %v232 = vld [vmem:[%s214 + $0x11] sm:$0xff]
    %v233 = vld [vmem:[%s214 + $0x21] sm:$0xff]
    %v234 = vld [vmem:[%s214 + $0x31] sm:$0xff]
    %v235 = vld [vmem:[%s214 + $0x41] sm:$0xff]
    %v236 = vld [vmem:[%s214 + $0x51] sm:$0xff]
    %v237 = vld [vmem:[%s214 + $0x61] sm:$0xff]
    %v238 = vld [vmem:[%s214 + $0x71] sm:$0xff]
    %v239 = vld [vmem:[%s214 + $0xa1] sm:$0xff]
    %v240 = vld [vmem:[%s214 + $0xb1] sm:$0xff]
    %v241 = vld [vmem:[%s214 + $0xc1] sm:$0xff]
    %v242 = vld [vmem:[%s214 + $0xd1] sm:$0xff]
    %v243 = vld [vmem:[%s214 + $0xe1] sm:$0xff]
    %v244 = vld [vmem:[%s214 + $0xf1] sm:$0xff]
    %v245 = vld [vmem:[%s214 + $0x101] sm:$0xff]
    %v246 = vld [vmem:[%s214 + $0x111] sm:$0xff]
    %v247 = vld [vmem:[%s214 + $0x2] sm:$0xff]
    %v248 = vld [vmem:[%s214 + $0x12] sm:$0xff]
    %v249 = vld [vmem:[%s214 + $0x22] sm:$0xff]
    %v250 = vld [vmem:[%s214 + $0x32] sm:$0xff]
    %v251 = vld [vmem:[%s214 + $0x42] sm:$0xff]
    %v252 = vld [vmem:[%s214 + $0x52] sm:$0xff]
    %v253 = vld [vmem:[%s214 + $0x62] sm:$0xff]
    %v254 = vld [vmem:[%s214 + $0x72] sm:$0xff]
    %v255 = vld [vmem:[%s214 + $0xa2] sm:$0xff]
    %v256 = vld [vmem:[%s214 + $0xb2] sm:$0xff]
    %v257 = vld [vmem:[%s214 + $0xc2] sm:$0xff]
    %v258 = vld [vmem:[%s214 + $0xd2] sm:$0xff]
    %v259 = vld [vmem:[%s214 + $0xe2] sm:$0xff]
    %v260 = vld [vmem:[%s214 + $0xf2] sm:$0xff]
    %v261 = vld [vmem:[%s214 + $0x102] sm:$0xff]
    %v262 = vld [vmem:[%s214 + $0x112] sm:$0xff]
    %279 = vrot.lane.b32.xlu0 %v134, 64
    %v280 = vpop.permute.xlu0 %279
    %281 = vrot.lane.b32.xlu0 %v135, 64
    %v282 = vpop.permute.xlu0 %281
    %283 = vrot.lane.b32.xlu0 %v136, 64
    %v284 = vpop.permute.xlu0 %283
    %285 = vrot.lane.b32.xlu0 %v137, 64
    %v286 = vpop.permute.xlu0 %285
    %287 = vrot.lane.b32.xlu0 %v138, 64
    %v288 = vpop.permute.xlu0 %287
    %289 = vrot.lane.b32.xlu0 %v139, 64
    %v290 = vpop.permute.xlu0 %289
    %291 = vrot.lane.b32.xlu0 %v140, 64
    %v292 = vpop.permute.xlu0 %291
    %293 = vrot.lane.b32.xlu0 %v141, 64
    %v294 = vpop.permute.xlu0 %293
    %295 = vrot.lane.b32.xlu0 %v142, 64
    %v296 = vpop.permute.xlu0 %295
    %297 = vrot.lane.b32.xlu0 %v143, 64
    %v298 = vpop.permute.xlu0 %297
    %299 = vrot.lane.b32.xlu0 %v144, 64
    %v300 = vpop.permute.xlu0 %299
    %301 = vrot.lane.b32.xlu0 %v145, 64
    %v302 = vpop.permute.xlu0 %301
    %303 = vrot.lane.b32.xlu0 %v146, 64
    %v304 = vpop.permute.xlu0 %303
    %305 = vrot.lane.b32.xlu0 %v147, 64
    %v306 = vpop.permute.xlu0 %305
    %307 = vrot.lane.b32.xlu0 %v148, 64
    %v308 = vpop.permute.xlu0 %307
    %309 = vrot.lane.b32.xlu0 %v149, 64
    %v310 = vpop.permute.xlu0 %309
    %343 = vrot.lane.b32.xlu0 %v166, 64
    %v344 = vpop.permute.xlu0 %343
    %345 = vrot.lane.b32.xlu0 %v167, 64
    %v346 = vpop.permute.xlu0 %345
    %347 = vrot.lane.b32.xlu0 %v168, 64
    %v348 = vpop.permute.xlu0 %347
    %349 = vrot.lane.b32.xlu0 %v169, 64
    %v350 = vpop.permute.xlu0 %349
    %351 = vrot.lane.b32.xlu0 %v170, 64
    %v352 = vpop.permute.xlu0 %351
    %353 = vrot.lane.b32.xlu0 %v171, 64
    %v354 = vpop.permute.xlu0 %353
    %355 = vrot.lane.b32.xlu0 %v172, 64
    %v356 = vpop.permute.xlu0 %355
    %357 = vrot.lane.b32.xlu0 %v173, 64
    %v358 = vpop.permute.xlu0 %357
    %359 = vrot.lane.b32.xlu0 %v174, 64
    %v360 = vpop.permute.xlu0 %359
    %361 = vrot.lane.b32.xlu0 %v175, 64
    %v362 = vpop.permute.xlu0 %361
    %363 = vrot.lane.b32.xlu0 %v176, 64
    %v364 = vpop.permute.xlu0 %363
    %365 = vrot.lane.b32.xlu0 %v177, 64
    %v366 = vpop.permute.xlu0 %365
    %367 = vrot.lane.b32.xlu0 %v178, 64
    %v368 = vpop.permute.xlu0 %367
    %369 = vrot.lane.b32.xlu0 %v179, 64
    %v370 = vpop.permute.xlu0 %369
    %371 = vrot.lane.b32.xlu0 %v180, 64
    %v372 = vpop.permute.xlu0 %371
    %373 = vrot.lane.b32.xlu0 %v181, 64
    %v374 = vpop.permute.xlu0 %373
    %407 = vrot.lane.b32.xlu0 %v198, 64
    %v408 = vpop.permute.xlu0 %407
    %409 = vrot.lane.b32.xlu0 %v199, 64
    %v410 = vpop.permute.xlu0 %409
    %411 = vrot.lane.b32.xlu0 %v200, 64
    %v412 = vpop.permute.xlu0 %411
    %413 = vrot.lane.b32.xlu0 %v201, 64
    %v414 = vpop.permute.xlu0 %413
    %415 = vrot.lane.b32.xlu0 %v202, 64
    %v416 = vpop.permute.xlu0 %415
    %417 = vrot.lane.b32.xlu0 %v203, 64
    %v418 = vpop.permute.xlu0 %417
    %419 = vrot.lane.b32.xlu0 %v204, 64
    %v420 = vpop.permute.xlu0 %419
    %421 = vrot.lane.b32.xlu0 %v205, 64
    %v422 = vpop.permute.xlu0 %421
    %423 = vrot.lane.b32.xlu0 %v206, 64
    %v424 = vpop.permute.xlu0 %423
    %425 = vrot.lane.b32.xlu0 %v207, 64
    %v426 = vpop.permute.xlu0 %425
    %427 = vrot.lane.b32.xlu0 %v208, 64
    %v428 = vpop.permute.xlu0 %427
    %429 = vrot.lane.b32.xlu0 %v209, 64
    %v430 = vpop.permute.xlu0 %429
    %431 = vrot.lane.b32.xlu0 %v210, 64
    %v432 = vpop.permute.xlu0 %431
    %433 = vrot.lane.b32.xlu0 %v211, 64
    %v434 = vpop.permute.xlu0 %433
    %435 = vrot.lane.b32.xlu0 %v212, 64
    %v436 = vpop.permute.xlu0 %435
    %437 = vrot.lane.b32.xlu0 %v213, 64
    %v438 = vpop.permute.xlu0 %437
    %471 = vrot.lane.b32.xlu0 %v231, 64
    %v472 = vpop.permute.xlu0 %471
    %473 = vrot.lane.b32.xlu0 %v232, 64
    %v474 = vpop.permute.xlu0 %473
    %475 = vrot.lane.b32.xlu0 %v233, 64
    %v476 = vpop.permute.xlu0 %475
    %477 = vrot.lane.b32.xlu0 %v234, 64
    %v478 = vpop.permute.xlu0 %477
    %479 = vrot.lane.b32.xlu0 %v235, 64
    %v480 = vpop.permute.xlu0 %479
    %481 = vrot.lane.b32.xlu0 %v236, 64
    %v482 = vpop.permute.xlu0 %481
    %483 = vrot.lane.b32.xlu0 %v237, 64
    %v484 = vpop.permute.xlu0 %483
    %485 = vrot.lane.b32.xlu0 %v238, 64
    %v486 = vpop.permute.xlu0 %485
    %487 = vrot.lane.b32.xlu0 %v239, 64
    %v488 = vpop.permute.xlu0 %487
    %489 = vrot.lane.b32.xlu0 %v240, 64
    %v490 = vpop.permute.xlu0 %489
    %491 = vrot.lane.b32.xlu0 %v241, 64
    %v492 = vpop.permute.xlu0 %491
    %493 = vrot.lane.b32.xlu0 %v242, 64
    %v494 = vpop.permute.xlu0 %493
    %495 = vrot.lane.b32.xlu0 %v243, 64
    %v496 = vpop.permute.xlu0 %495
    %497 = vrot.lane.b32.xlu0 %v244, 64
    %v498 = vpop.permute.xlu0 %497
    %499 = vrot.lane.b32.xlu0 %v245, 64
    %v500 = vpop.permute.xlu0 %499
    %501 = vrot.lane.b32.xlu0 %v246, 64
    %v502 = vpop.permute.xlu0 %501
    %v519 = vsel %vm42, %v118, %v280
    %v520 = vsel %vm42, %v119, %v282
    %v521 = vsel %vm42, %v120, %v284
    %v522 = vsel %vm42, %v121, %v286
    %v523 = vsel %vm42, %v122, %v288
    %v524 = vsel %vm42, %v123, %v290
    %v525 = vsel %vm42, %v124, %v292
    %v526 = vsel %vm42, %v125, %v294
    %v527 = vsel %vm42, %v126, %v296
    %v528 = vsel %vm42, %v127, %v298
    %v529 = vsel %vm42, %v128, %v300
    %v530 = vsel %vm42, %v129, %v302
    %v531 = vsel %vm42, %v130, %v304
    %v532 = vsel %vm42, %v131, %v306
    %v533 = vsel %vm42, %v132, %v308
    %v534 = vsel %vm42, %v133, %v310
    %v535 = vsel %vm42, %v150, %v344
    %v536 = vsel %vm42, %v151, %v346
    %v537 = vsel %vm42, %v152, %v348
    %v538 = vsel %vm42, %v153, %v350
    %v539 = vsel %vm42, %v154, %v352
    %v540 = vsel %vm42, %v155, %v354
    %v541 = vsel %vm42, %v156, %v356
    %v542 = vsel %vm42, %v157, %v358
    %v543 = vsel %vm42, %v158, %v360
    %v544 = vsel %vm42, %v159, %v362
    %v545 = vsel %vm42, %v160, %v364
    %v546 = vsel %vm42, %v161, %v366
    %v547 = vsel %vm42, %v162, %v368
    %v548 = vsel %vm42, %v163, %v370
    %v549 = vsel %vm42, %v164, %v372
    %v550 = vsel %vm42, %v165, %v374
    %v551 = vsel %vm42, %v182, %v408
    %v552 = vsel %vm42, %v183, %v410
    %v553 = vsel %vm42, %v184, %v412
    %v554 = vsel %vm42, %v185, %v414
    %v555 = vsel %vm42, %v186, %v416
    %v556 = vsel %vm42, %v187, %v418
    %v557 = vsel %vm42, %v188, %v420
    %v558 = vsel %vm42, %v189, %v422
    %v559 = vsel %vm42, %v190, %v424
    %v560 = vsel %vm42, %v191, %v426
    %v561 = vsel %vm42, %v192, %v428
    %v562 = vsel %vm42, %v193, %v430
    %v563 = vsel %vm42, %v194, %v432
    %v564 = vsel %vm42, %v195, %v434
    %v565 = vsel %vm42, %v196, %v436
    %v566 = vsel %vm42, %v197, %v438
    %v567 = vsel %vm42, %v215, %v472
    %v568 = vsel %vm42, %v216, %v474
    %v569 = vsel %vm42, %v217, %v476
    %v570 = vsel %vm42, %v218, %v478
    %v571 = vsel %vm42, %v219, %v480
    %v572 = vsel %vm42, %v220, %v482
    %v573 = vsel %vm42, %v221, %v484
    %v574 = vsel %vm42, %v222, %v486
    %v575 = vsel %vm42, %v223, %v488
    %v576 = vsel %vm42, %v224, %v490
    %v577 = vsel %vm42, %v225, %v492
    %v578 = vsel %vm42, %v226, %v494
    %v579 = vsel %vm42, %v227, %v496
    %v580 = vsel %vm42, %v228, %v498
    %v581 = vsel %vm42, %v229, %v500
    %v582 = vsel %vm42, %v230, %v502
    %v583 = vld [vmem:[#allocation6] sm:$0xff]
    %v584 = vld [vmem:[#allocation6 + $0x8] sm:$0xff]
    %v585 = vld [vmem:[#allocation6 + $0x10] sm:$0xff]
    %v586 = vld [vmem:[#allocation6 + $0x18] sm:$0xff]
    %v587 = vld [vmem:[#allocation6 + $0x20] sm:$0xff]
    %v588 = vld [vmem:[#allocation6 + $0x28] sm:$0xff]
    %v589 = vld [vmem:[#allocation6 + $0x30] sm:$0xff]
    %v590 = vld [vmem:[#allocation6 + $0x38] sm:$0xff]
    %v591 = vld [vmem:[#allocation6 + $0x40] sm:$0xff]
    %v592 = vld [vmem:[#allocation6 + $0x48] sm:$0xff]
    %v593 = vld [vmem:[#allocation6 + $0x50] sm:$0xff]
    %v594 = vld [vmem:[#allocation6 + $0x58] sm:$0xff]
    %v595 = vld [vmem:[#allocation6 + $0x60] sm:$0xff]
    %v596 = vld [vmem:[#allocation6 + $0x68] sm:$0xff]
    %v597 = vld [vmem:[#allocation6 + $0x70] sm:$0xff]
    %v598 = vld [vmem:[#allocation6 + $0x78] sm:$0xff]
    %v599 = vld [vmem:[#allocation6 + $0x80] sm:$0xff]
    %v600 = vld [vmem:[#allocation6 + $0x88] sm:$0xff]
    %v601 = vld [vmem:[#allocation6 + $0x90] sm:$0xff]
    %v602 = vld [vmem:[#allocation6 + $0x98] sm:$0xff]
    %v603 = vld [vmem:[#allocation6 + $0xa0] sm:$0xff]
    %v604 = vld [vmem:[#allocation6 + $0xa8] sm:$0xff]
    %v605 = vld [vmem:[#allocation6 + $0xb0] sm:$0xff]
    %v606 = vld [vmem:[#allocation6 + $0xb8] sm:$0xff]
    %v607 = vld [vmem:[#allocation6 + $0xc0] sm:$0xff]
    %v608 = vld [vmem:[#allocation6 + $0xc8] sm:$0xff]
    %v609 = vld [vmem:[#allocation6 + $0xd0] sm:$0xff]
    %v610 = vld [vmem:[#allocation6 + $0xd8] sm:$0xff]
    %v611 = vld [vmem:[#allocation6 + $0xe0] sm:$0xff]
    %v612 = vld [vmem:[#allocation6 + $0xe8] sm:$0xff]
    %v613 = vld [vmem:[#allocation6 + $0xf0] sm:$0xff]
    %v614 = vld [vmem:[#allocation6 + $0xf8] sm:$0xff]
    %v615 = vld [vmem:[#allocation6 + $0x100] sm:$0xff]
    %v616 = vld [vmem:[#allocation6 + $0x108] sm:$0xff]
    %v617 = vld [vmem:[#allocation6 + $0x110] sm:$0xff]
    %v618 = vld [vmem:[#allocation6 + $0x118] sm:$0xff]
    %v619 = vld [vmem:[#allocation6 + $0x120] sm:$0xff]
    %v620 = vld [vmem:[#allocation6 + $0x128] sm:$0xff]
    %v621 = vld [vmem:[#allocation6 + $0x130] sm:$0xff]
    %v622 = vld [vmem:[#allocation6 + $0x138] sm:$0xff]
    %v623 = vld [vmem:[#allocation6 + $0x140] sm:$0xff]
    %v624 = vld [vmem:[#allocation6 + $0x148] sm:$0xff]
    %v625 = vld [vmem:[#allocation6 + $0x150] sm:$0xff]
    %v626 = vld [vmem:[#allocation6 + $0x158] sm:$0xff]
    %v627 = vld [vmem:[#allocation6 + $0x160] sm:$0xff]
    %v628 = vld [vmem:[#allocation6 + $0x168] sm:$0xff]
    %v629 = vld [vmem:[#allocation6 + $0x170] sm:$0xff]
    %v630 = vld [vmem:[#allocation6 + $0x178] sm:$0xff]
    %v631 = vld [vmem:[#allocation6 + $0x180] sm:$0xff]
    %v632 = vld [vmem:[#allocation6 + $0x188] sm:$0xff]
    %v633 = vld [vmem:[#allocation6 + $0x190] sm:$0xff]
    %v634 = vld [vmem:[#allocation6 + $0x198] sm:$0xff]
    %v635 = vld [vmem:[#allocation6 + $0x1a0] sm:$0xff]
    %v636 = vld [vmem:[#allocation6 + $0x1a8] sm:$0xff]
    %v637 = vld [vmem:[#allocation6 + $0x1b0] sm:$0xff]
    %v638 = vld [vmem:[#allocation6 + $0x1b8] sm:$0xff]
    %v639 = vld [vmem:[#allocation6 + $0x1c0] sm:$0xff]
    %v640 = vld [vmem:[#allocation6 + $0x1c8] sm:$0xff]
    %v641 = vld [vmem:[#allocation6 + $0x1d0] sm:$0xff]
    %v642 = vld [vmem:[#allocation6 + $0x1d8] sm:$0xff]
    %v643 = vld [vmem:[#allocation6 + $0x1e0] sm:$0xff]
    %v644 = vld [vmem:[#allocation6 + $0x1e8] sm:$0xff]
    %v645 = vld [vmem:[#allocation6 + $0x1f0] sm:$0xff]
    %v646 = vld [vmem:[#allocation6 + $0x1f8] sm:$0xff]
    %v647 = vld [vmem:[#allocation6 + $0x200] sm:$0xff]
    %v648 = vld [vmem:[#allocation6 + $0x208] sm:$0xff]
    %v649 = vld [vmem:[#allocation6 + $0x210] sm:$0xff]
    %v650 = vld [vmem:[#allocation6 + $0x218] sm:$0xff]
    %v651 = vld [vmem:[#allocation6 + $0x220] sm:$0xff]
    %v652 = vld [vmem:[#allocation6 + $0x228] sm:$0xff]
    %v653 = vld [vmem:[#allocation6 + $0x230] sm:$0xff]
    %v654 = vld [vmem:[#allocation6 + $0x238] sm:$0xff]
    %v655 = vld [vmem:[%s2] sm:$0x1]
    %v656 = vlaneseq
    %v657 = vshrl.u32 %v656, 7
    %v658 = vsub.s32 0, %v657
    %v659 = vrot.slane %v655, %v658
    %v661 = vsel %vm42, %v247, 0
    %v664 = vsel %vm42, %v248, 0
    %v667 = vsel %vm42, %v249, 0
    %v670 = vsel %vm42, %v250, 0
    %v673 = vsel %vm42, %v251, 0
    %v676 = vsel %vm42, %v252, 0
    %v679 = vsel %vm42, %v253, 0
    %v682 = vsel %vm42, %v254, 0
    %v685 = vsel %vm42, %v255, 0
    %v688 = vsel %vm42, %v256, 0
    %v691 = vsel %vm42, %v257, 0
    %v694 = vsel %vm42, %v258, 0
    %v697 = vsel %vm42, %v259, 0
    %v700 = vsel %vm42, %v260, 0
    %v703 = vsel %vm42, %v261, 0
    %v706 = vsel %vm42, %v262, 0
    %708 = vmatprep.subr.mxu0 0.0
    %709 = vmatpush1.msra.mxu0 %v583
    %710 = vmatprep.subr.mxu0 0.0
    %711 = vmatpush1.msra.mxu0 %v584
    %712 = vmatprep.subr.mxu0 0.0
    %713 = vmatpush1.msra.mxu0 %v585
    %714 = vmatprep.subr.mxu0 0.0
    %715 = vmatpush1.msra.mxu0 %v586
    %716 = vmatprep.subr.mxu0 0.0
    %717 = vmatpush1.msra.mxu0 %v587
    %718 = vmatprep.subr.mxu0 0.0
    %719 = vmatpush1.msra.mxu0 %v588
    %720 = vmatprep.subr.mxu0 0.0
    %721 = vmatpush1.msra.mxu0 %v589
    %722 = vmatprep.subr.mxu0 0.0
    %723 = vmatpush1.msra.mxu0 %v590
    %724 = vmatprep.subr.mxu0 0.0
    %725 = vmatpush1.msra.mxu0 %v591
    %726 = vmatprep.subr.mxu0 0.0
    %727 = vmatpush1.msra.mxu0 %v592
    %728 = vmatprep.subr.mxu0 0.0
    %729 = vmatpush1.msra.mxu0 %v593
    %730 = vmatprep.subr.mxu0 0.0
    %731 = vmatpush1.msra.mxu0 %v594
    %732 = vmatprep.subr.mxu0 0.0
    %733 = vmatpush1.msra.mxu0 %v595
    %734 = vmatprep.subr.mxu0 0.0
    %735 = vmatpush1.msra.mxu0 %v596
    %736 = vmatprep.subr.mxu0 0.0
    %737 = vmatpush1.msra.mxu0 %v597
    %738 = vmatprep.subr.mxu0 0.0
    %739 = vmatpush1.msra.mxu0 %v598
    %740 = vmatprep.subr.mxu0 0.0
    %741 = vmatpush1.msra.mxu0 %v599
    %742 = vmatprep.subr.mxu0 0.0
    %743 = vmatpush1.msra.mxu0 %v600
    %744 = vmatprep.subr.mxu0 0.0
    %745 = vmatpush1.msra.mxu0 %v601
    %746 = vmatprep.subr.mxu0 0.0
    %747 = vmatpush1.msra.mxu0 %v602
    %748 = vmatprep.subr.mxu0 0.0
    %749 = vmatpush1.msra.mxu0 %v603
    %750 = vmatprep.subr.mxu0 0.0
    %751 = vmatpush1.msra.mxu0 %v604
    %752 = vmatprep.subr.mxu0 0.0
    %753 = vmatpush1.msra.mxu0 %v605
    %754 = vmatprep.subr.mxu0 0.0
    %755 = vmatpush1.msra.mxu0 %v606
    %756 = vmatprep.subr.mxu0 0.0
    %757 = vmatpush1.msra.mxu0 %v607
    %758 = vmatprep.subr.mxu0 0.0
    %759 = vmatpush1.msra.mxu0 %v608
    %760 = vmatprep.subr.mxu0 0.0
    %761 = vmatpush1.msra.mxu0 %v609
    %762 = vmatprep.subr.mxu0 0.0
    %763 = vmatpush1.msra.mxu0 %v610
    %764 = vmatprep.subr.mxu0 0.0
    %765 = vmatpush1.msra.mxu0 %v611
    %766 = vmatprep.subr.mxu0 0.0
    %767 = vmatpush1.msra.mxu0 %v612
    %768 = vmatprep.subr.mxu0 0.0
    %769 = vmatpush1.msra.mxu0 %v613
    %770 = vmatprep.subr.mxu0 0.0
    %771 = vmatpush1.msra.mxu0 %v614
    %772 = vmatprep.mubr.f32.mxu0 %v535
    %773 = vmatmul.mubr.f32.gmra.mrb[0].mxu0 %v519
    %v774 = vpop.f32.mrb[0].mxu0
    %v775 = vadd.f32 %v659, %v774
    %v776 = vpop.f32.mrb[0].mxu0
    %777 = vmatprep.mubr.f32.mxu0 %v536
    %778 = vmatmul.mubr.f32.gmra.mrb[0].mxu0 %v520
    %v779 = vpop.f32.mrb[0].mxu0
    %v780 = vadd.f32 %v659, %v779
    %v781 = vpop.f32.mrb[0].mxu0
    %782 = vmatprep.mubr.f32.mxu0 %v537
    %783 = vmatmul.mubr.f32.gmra.mrb[0].mxu0 %v521
    %v784 = vpop.f32.mrb[0].mxu0
    %v785 = vadd.f32 %v659, %v784
    %v786 = vpop.f32.mrb[0].mxu0
    %787 = vmatprep.mubr.f32.mxu0 %v538
    %788 = vmatmul.mubr.f32.gmra.mrb[0].mxu0 %v522
    %v789 = vpop.f32.mrb[0].mxu0
    %v790 = vadd.f32 %v659, %v789
    %v791 = vpop.f32.mrb[0].mxu0
    %792 = vmatprep.mubr.f32.mxu0 %v539
    %793 = vmatmul.mubr.f32.gmra.mrb[0].mxu0 %v523
    %v794 = vpop.f32.mrb[0].mxu0
    %v795 = vadd.f32 %v659, %v794
    %v796 = vpop.f32.mrb[0].mxu0
    %797 = vmatprep.mubr.f32.mxu0 %v540
    %798 = vmatmul.mubr.f32.gmra.mrb[0].mxu0 %v524
    %v799 = vpop.f32.mrb[0].mxu0
    %v800 = vadd.f32 %v659, %v799
    %v801 = vpop.f32.mrb[0].mxu0
    %802 = vmatprep.mubr.f32.mxu0 %v541
    %803 = vmatmul.mubr.f32.gmra.mrb[0].mxu0 %v525
    %v804 = vpop.f32.mrb[0].mxu0
    %v805 = vadd.f32 %v659, %v804
    %v806 = vpop.f32.mrb[0].mxu0
    %807 = vmatprep.mubr.f32.mxu0 %v542
    %808 = vmatmul.mubr.f32.gmra.mrb[0].mxu0 %v526
    %v809 = vpop.f32.mrb[0].mxu0
    %v810 = vadd.f32 %v659, %v809
    %v811 = vpop.f32.mrb[0].mxu0
    %812 = vmatprep.mubr.f32.mxu0 %v543
    %813 = vmatmul.mubr.f32.gmra.mrb[0].mxu0 %v527
    %v814 = vpop.f32.mrb[0].mxu0
    %v815 = vadd.f32 %v659, %v814
    %v816 = vpop.f32.mrb[0].mxu0
    %817 = vmatprep.mubr.f32.mxu0 %v544
    %818 = vmatmul.mubr.f32.gmra.mrb[0].mxu0 %v528
    %v819 = vpop.f32.mrb[0].mxu0
    %v820 = vadd.f32 %v659, %v819
    %v821 = vpop.f32.mrb[0].mxu0
    %822 = vmatprep.mubr.f32.mxu0 %v545
    %823 = vmatmul.mubr.f32.gmra.mrb[0].mxu0 %v529
    %v824 = vpop.f32.mrb[0].mxu0
    %v825 = vadd.f32 %v659, %v824
    %v826 = vpop.f32.mrb[0].mxu0
    %827 = vmatprep.mubr.f32.mxu0 %v546
    %828 = vmatmul.mubr.f32.gmra.mrb[0].mxu0 %v530
    %v829 = vpop.f32.mrb[0].mxu0
    %v830 = vadd.f32 %v659, %v829
    %v831 = vpop.f32.mrb[0].mxu0
    %832 = vmatprep.mubr.f32.mxu0 %v547
    %833 = vmatmul.mubr.f32.gmra.mrb[0].mxu0 %v531
    %v834 = vpop.f32.mrb[0].mxu0
    %v835 = vadd.f32 %v659, %v834
    %v836 = vpop.f32.mrb[0].mxu0
    %837 = vmatprep.mubr.f32.mxu0 %v548
    %838 = vmatmul.mubr.f32.gmra.mrb[0].mxu0 %v532
    %v839 = vpop.f32.mrb[0].mxu0
    %v840 = vadd.f32 %v659, %v839
    %v841 = vpop.f32.mrb[0].mxu0
    %842 = vmatprep.mubr.f32.mxu0 %v549
    %843 = vmatmul.mubr.f32.gmra.mrb[0].mxu0 %v533
    %v844 = vpop.f32.mrb[0].mxu0
    %v845 = vadd.f32 %v659, %v844
    %v846 = vpop.f32.mrb[0].mxu0
    %847 = vmatprep.mubr.f32.mxu0 %v550
    %848 = vmatmul.mubr.f32.gmra.mrb[0].mxu0 %v534
    %v849 = vpop.f32.mrb[0].mxu0
    %v850 = vadd.f32 %v659, %v849
    %v851 = vpop.f32.mrb[0].mxu0
    %852 = vdwg.mxu0
    %853 = vmatprep.subr.mxu0 0.0
    %854 = vmatpush1.msra.mxu0 %v615
    %855 = vmatprep.subr.mxu0 0.0
    %856 = vmatpush1.msra.mxu0 %v616
    %857 = vmatprep.subr.mxu0 0.0
    %858 = vmatpush1.msra.mxu0 %v617
    %859 = vmatprep.subr.mxu0 0.0
    %860 = vmatpush1.msra.mxu0 %v618
    %861 = vmatprep.subr.mxu0 0.0
    %862 = vmatpush1.msra.mxu0 %v619
    %863 = vmatprep.subr.mxu0 0.0
    %864 = vmatpush1.msra.mxu0 %v620
    %865 = vmatprep.subr.mxu0 0.0
    %866 = vmatpush1.msra.mxu0 %v621
    %867 = vmatprep.subr.mxu0 0.0
    %868 = vmatpush1.msra.mxu0 %v622
    %869 = vmatprep.subr.mxu0 0.0
    %870 = vmatpush1.msra.mxu0 %v623
    %871 = vmatprep.subr.mxu0 0.0
    %872 = vmatpush1.msra.mxu0 %v624
    %873 = vmatprep.subr.mxu0 0.0
    %874 = vmatpush1.msra.mxu0 %v625
    %875 = vmatprep.subr.mxu0 0.0
    %876 = vmatpush1.msra.mxu0 %v626
    %877 = vmatprep.subr.mxu0 0.0
    %878 = vmatpush1.msra.mxu0 %v627
    %879 = vmatprep.subr.mxu0 0.0
    %880 = vmatpush1.msra.mxu0 %v628
    %881 = vmatprep.subr.mxu0 0.0
    %882 = vmatpush1.msra.mxu0 %v629
    %883 = vmatprep.subr.mxu0 0.0
    %884 = vmatpush1.msra.mxu0 %v630
    %885 = vmatprep.subr.mxu0 0.0
    %886 = vmatpush1.msra.mxu0 %v631
    %887 = vmatprep.subr.mxu0 0.0
    %888 = vmatpush1.msra.mxu0 %v632
    %889 = vmatprep.subr.mxu0 0.0
    %890 = vmatpush1.msra.mxu0 %v633
    %891 = vmatprep.subr.mxu0 0.0
    %892 = vmatpush1.msra.mxu0 %v634
    %893 = vmatprep.subr.mxu0 0.0
    %894 = vmatpush1.msra.mxu0 %v635
    %895 = vmatprep.subr.mxu0 0.0
    %896 = vmatpush1.msra.mxu0 %v636
    %897 = vmatprep.subr.mxu0 0.0
    %898 = vmatpush1.msra.mxu0 %v637
    %899 = vmatprep.subr.mxu0 0.0
    %900 = vmatpush1.msra.mxu0 %v638
    %901 = vmatprep.subr.mxu0 0.0
    %902 = vmatpush1.msra.mxu0 %v639
    %903 = vmatprep.subr.mxu0 0.0
    %904 = vmatpush1.msra.mxu0 %v640
    %905 = vmatprep.subr.mxu0 0.0
    %906 = vmatpush1.msra.mxu0 %v641
    %907 = vmatprep.subr.mxu0 0.0
    %908 = vmatpush1.msra.mxu0 %v642
    %909 = vmatprep.subr.mxu0 0.0
    %910 = vmatpush1.msra.mxu0 %v643
    %911 = vmatprep.subr.mxu0 0.0
    %912 = vmatpush1.msra.mxu0 %v644
    %913 = vmatprep.subr.mxu0 0.0
    %914 = vmatpush1.msra.mxu0 %v645
    %915 = vmatprep.subr.mxu0 0.0
    %916 = vmatpush1.msra.mxu0 %v646
    %917 = vmatprep.mubr.f32.mxu0 %v567
    %918 = vmatmul.mubr.f32.gmra.mrb[0].mxu0 %v551
    %v919 = vpop.f32.mrb[0].mxu0
    %v920 = vadd.f32 %v775, %v919
    %v921 = vpop.f32.mrb[0].mxu0
    %922 = vmatprep.mubr.f32.mxu0 %v568
    %923 = vmatmul.mubr.f32.gmra.mrb[0].mxu0 %v552
    %v924 = vpop.f32.mrb[0].mxu0
    %v925 = vadd.f32 %v780, %v924
    %v926 = vpop.f32.mrb[0].mxu0
    %927 = vmatprep.mubr.f32.mxu0 %v569
    %928 = vmatmul.mubr.f32.gmra.mrb[0].mxu0 %v553
    %v929 = vpop.f32.mrb[0].mxu0
    %v930 = vadd.f32 %v785, %v929
    %v931 = vpop.f32.mrb[0].mxu0
    %932 = vmatprep.mubr.f32.mxu0 %v570
    %933 = vmatmul.mubr.f32.gmra.mrb[0].mxu0 %v554
    %v934 = vpop.f32.mrb[0].mxu0
    %v935 = vadd.f32 %v790, %v934
    %v936 = vpop.f32.mrb[0].mxu0
    %937 = vmatprep.mubr.f32.mxu0 %v571
    %938 = vmatmul.mubr.f32.gmra.mrb[0].mxu0 %v555
    %v939 = vpop.f32.mrb[0].mxu0
    %v940 = vadd.f32 %v795, %v939
    %v941 = vpop.f32.mrb[0].mxu0
    %942 = vmatprep.mubr.f32.mxu0 %v572
    %943 = vmatmul.mubr.f32.gmra.mrb[0].mxu0 %v556
    %v944 = vpop.f32.mrb[0].mxu0
    %v945 = vadd.f32 %v800, %v944
    %v946 = vpop.f32.mrb[0].mxu0
    %947 = vmatprep.mubr.f32.mxu0 %v573
    %948 = vmatmul.mubr.f32.gmra.mrb[0].mxu0 %v557
    %v949 = vpop.f32.mrb[0].mxu0
    %v950 = vadd.f32 %v805, %v949
    %v951 = vpop.f32.mrb[0].mxu0
    %952 = vmatprep.mubr.f32.mxu0 %v574
    %953 = vmatmul.mubr.f32.gmra.mrb[0].mxu0 %v558
    %v954 = vpop.f32.mrb[0].mxu0
    %v955 = vadd.f32 %v810, %v954
    %v956 = vpop.f32.mrb[0].mxu0
    %957 = vmatprep.mubr.f32.mxu0 %v575
    %958 = vmatmul.mubr.f32.gmra.mrb[0].mxu0 %v559
    %v959 = vpop.f32.mrb[0].mxu0
    %v960 = vadd.f32 %v815, %v959
    %v961 = vpop.f32.mrb[0].mxu0
    %962 = vmatprep.mubr.f32.mxu0 %v576
    %963 = vmatmul.mubr.f32.gmra.mrb[0].mxu0 %v560
    %v964 = vpop.f32.mrb[0].mxu0
    %v965 = vadd.f32 %v820, %v964
    %v966 = vpop.f32.mrb[0].mxu0
    %967 = vmatprep.mubr.f32.mxu0 %v577
    %968 = vmatmul.mubr.f32.gmra.mrb[0].mxu0 %v561
    %v969 = vpop.f32.mrb[0].mxu0
    %v970 = vadd.f32 %v825, %v969
    %v971 = vpop.f32.mrb[0].mxu0
    %972 = vmatprep.mubr.f32.mxu0 %v578
    %973 = vmatmul.mubr.f32.gmra.mrb[0].mxu0 %v562
    %v974 = vpop.f32.mrb[0].mxu0
    %v975 = vadd.f32 %v830, %v974
    %v976 = vpop.f32.mrb[0].mxu0
    %977 = vmatprep.mubr.f32.mxu0 %v579
    %978 = vmatmul.mubr.f32.gmra.mrb[0].mxu0 %v563
    %v979 = vpop.f32.mrb[0].mxu0
    %v980 = vadd.f32 %v835, %v979
    %v981 = vpop.f32.mrb[0].mxu0
    %982 = vmatprep.mubr.f32.mxu0 %v580
    %983 = vmatmul.mubr.f32.gmra.mrb[0].mxu0 %v564
    %v984 = vpop.f32.mrb[0].mxu0
    %v985 = vadd.f32 %v840, %v984
    %v986 = vpop.f32.mrb[0].mxu0
    %987 = vmatprep.mubr.f32.mxu0 %v581
    %988 = vmatmul.mubr.f32.gmra.mrb[0].mxu0 %v565
    %v989 = vpop.f32.mrb[0].mxu0
    %v990 = vadd.f32 %v845, %v989
    %v991 = vpop.f32.mrb[0].mxu0
    %992 = vmatprep.mubr.f32.mxu0 %v582
    %993 = vmatmul.mubr.f32.gmra.mrb[0].mxu0 %v566
    %v994 = vpop.f32.mrb[0].mxu0
    %v995 = vadd.f32 %v850, %v994
    %v996 = vpop.f32.mrb[0].mxu0
    %997 = vdwg.mxu0
    %998 = vmatprep.subr.mxu0 0.0
    %999 = vmatpush1.msra.mxu0 %v647
    %1000 = vmatprep.subr.mxu0 0.0
    %1001 = vmatpush1.msra.mxu0 %v648
    %1002 = vmatprep.subr.mxu0 0.0
    %1003 = vmatpush1.msra.mxu0 %v649
    %1004 = vmatprep.subr.mxu0 0.0
    %1005 = vmatpush1.msra.mxu0 %v650
    %1006 = vmatprep.subr.mxu0 0.0
    %1007 = vmatpush1.msra.mxu0 %v651
    %1008 = vmatprep.subr.mxu0 0.0
    %1009 = vmatpush1.msra.mxu0 %v652
    %1010 = vmatprep.subr.mxu0 0.0
    %1011 = vmatpush1.msra.mxu0 %v653
    %1012 = vmatprep.subr.mxu0 0.0
    %1013 = vmatpush1.msra.mxu0 %v654
    %1014 = vmatprep.subr.mxu0 0.0
    %1015 = vmatpush1.msra.mxu0 0.0
    %1016 = vmatprep.subr.mxu0 0.0
    %1017 = vmatpush1.msra.mxu0 0.0
    %1018 = vmatprep.subr.mxu0 0.0
    %1019 = vmatpush1.msra.mxu0 0.0
    %1020 = vmatprep.subr.mxu0 0.0
    %1021 = vmatpush1.msra.mxu0 0.0
    %1022 = vmatprep.subr.mxu0 0.0
    %1023 = vmatpush1.msra.mxu0 0.0
    %1024 = vmatprep.subr.mxu0 0.0
    %1025 = vmatpush1.msra.mxu0 0.0
    %1026 = vmatprep.subr.mxu0 0.0
    %1027 = vmatpush1.msra.mxu0 0.0
    %1028 = vmatprep.subr.mxu0 0.0
    %1029 = vmatpush1.msra.mxu0 0.0
    %1030 = vmatprep.subr.mxu0 0.0
    %1031 = vmatpush1.msra.mxu0 0.0
    %1032 = vmatprep.subr.mxu0 0.0
    %1033 = vmatpush1.msra.mxu0 0.0
    %1034 = vmatprep.subr.mxu0 0.0
    %1035 = vmatpush1.msra.mxu0 0.0
    %1036 = vmatprep.subr.mxu0 0.0
    %1037 = vmatpush1.msra.mxu0 0.0
    %1038 = vmatprep.subr.mxu0 0.0
    %1039 = vmatpush1.msra.mxu0 0.0
    %1040 = vmatprep.subr.mxu0 0.0
    %1041 = vmatpush1.msra.mxu0 0.0
    %1042 = vmatprep.subr.mxu0 0.0
    %1043 = vmatpush1.msra.mxu0 0.0
    %1044 = vmatprep.subr.mxu0 0.0
    %1045 = vmatpush1.msra.mxu0 0.0
    %1046 = vmatprep.subr.mxu0 0.0
    %1047 = vmatpush1.msra.mxu0 0.0
    %1048 = vmatprep.subr.mxu0 0.0
    %1049 = vmatpush1.msra.mxu0 0.0
    %1050 = vmatprep.subr.mxu0 0.0
    %1051 = vmatpush1.msra.mxu0 0.0
    %1052 = vmatprep.subr.mxu0 0.0
    %1053 = vmatpush1.msra.mxu0 0.0
    %1054 = vmatprep.subr.mxu0 0.0
    %1055 = vmatpush1.msra.mxu0 0.0
    %1056 = vmatprep.subr.mxu0 0.0
    %1057 = vmatpush1.msra.mxu0 0.0
    %1058 = vmatprep.subr.mxu0 0.0
    %1059 = vmatpush1.msra.mxu0 0.0
    %1060 = vmatprep.subr.mxu0 0.0
    %1061 = vmatpush1.msra.mxu0 0.0
    %1062 = vmatprep.mubr.f32.mxu0 0.0
    %1063 = vmatmul.mubr.f32.gmra.mrb[0].mxu0 %v661
    %v1064 = vpop.f32.mrb[0].mxu0
    %v1065 = vadd.f32 %v920, %v1064
    %v1066 = vpop.f32.mrb[0].mxu0
    %1067 = vmatprep.mubr.f32.mxu0 0.0
    %1068 = vmatmul.mubr.f32.gmra.mrb[0].mxu0 %v664
    %v1069 = vpop.f32.mrb[0].mxu0
    %v1070 = vadd.f32 %v925, %v1069
    %v1071 = vpop.f32.mrb[0].mxu0
    %1072 = vmatprep.mubr.f32.mxu0 0.0
    %1073 = vmatmul.mubr.f32.gmra.mrb[0].mxu0 %v667
    %v1074 = vpop.f32.mrb[0].mxu0
    %v1075 = vadd.f32 %v930, %v1074
    %v1076 = vpop.f32.mrb[0].mxu0
    %1077 = vmatprep.mubr.f32.mxu0 0.0
    %1078 = vmatmul.mubr.f32.gmra.mrb[0].mxu0 %v670
    %v1079 = vpop.f32.mrb[0].mxu0
    %v1080 = vadd.f32 %v935, %v1079
    %v1081 = vpop.f32.mrb[0].mxu0
    %1082 = vmatprep.mubr.f32.mxu0 0.0
    %1083 = vmatmul.mubr.f32.gmra.mrb[0].mxu0 %v673
    %v1084 = vpop.f32.mrb[0].mxu0
    %v1085 = vadd.f32 %v940, %v1084
    %v1086 = vpop.f32.mrb[0].mxu0
    %1087 = vmatprep.mubr.f32.mxu0 0.0
    %1088 = vmatmul.mubr.f32.gmra.mrb[0].mxu0 %v676
    %v1089 = vpop.f32.mrb[0].mxu0
    %v1090 = vadd.f32 %v945, %v1089
    %v1091 = vpop.f32.mrb[0].mxu0
    %1092 = vmatprep.mubr.f32.mxu0 0.0
    %1093 = vmatmul.mubr.f32.gmra.mrb[0].mxu0 %v679
    %v1094 = vpop.f32.mrb[0].mxu0
    %v1095 = vadd.f32 %v950, %v1094
    %v1096 = vpop.f32.mrb[0].mxu0
    %1097 = vmatprep.mubr.f32.mxu0 0.0
    %1098 = vmatmul.mubr.f32.gmra.mrb[0].mxu0 %v682
    %v1099 = vpop.f32.mrb[0].mxu0
    %v1100 = vadd.f32 %v955, %v1099
    %v1101 = vpop.f32.mrb[0].mxu0
    %1102 = vmatprep.mubr.f32.mxu0 0.0
    %1103 = vmatmul.mubr.f32.gmra.mrb[0].mxu0 %v685
    %v1104 = vpop.f32.mrb[0].mxu0
    %v1105 = vadd.f32 %v960, %v1104
    %v1106 = vpop.f32.mrb[0].mxu0
    %1107 = vmatprep.mubr.f32.mxu0 0.0
    %1108 = vmatmul.mubr.f32.gmra.mrb[0].mxu0 %v688
    %v1109 = vpop.f32.mrb[0].mxu0
    %v1110 = vadd.f32 %v965, %v1109
    %v1111 = vpop.f32.mrb[0].mxu0
    %1112 = vmatprep.mubr.f32.mxu0 0.0
    %1113 = vmatmul.mubr.f32.gmra.mrb[0].mxu0 %v691
    %v1114 = vpop.f32.mrb[0].mxu0
    %v1115 = vadd.f32 %v970, %v1114
    %v1116 = vpop.f32.mrb[0].mxu0
    %1117 = vmatprep.mubr.f32.mxu0 0.0
    %1118 = vmatmul.mubr.f32.gmra.mrb[0].mxu0 %v694
    %v1119 = vpop.f32.mrb[0].mxu0
    %v1120 = vadd.f32 %v975, %v1119
    %v1121 = vpop.f32.mrb[0].mxu0
    %1122 = vmatprep.mubr.f32.mxu0 0.0
    %1123 = vmatmul.mubr.f32.gmra.mrb[0].mxu0 %v697
    %v1124 = vpop.f32.mrb[0].mxu0
    %v1125 = vadd.f32 %v980, %v1124
    %v1126 = vpop.f32.mrb[0].mxu0
    %1127 = vmatprep.mubr.f32.mxu0 0.0
    %1128 = vmatmul.mubr.f32.gmra.mrb[0].mxu0 %v700
    %v1129 = vpop.f32.mrb[0].mxu0
    %v1130 = vadd.f32 %v985, %v1129
    %v1131 = vpop.f32.mrb[0].mxu0
    %1132 = vmatprep.mubr.f32.mxu0 0.0
    %1133 = vmatmul.mubr.f32.gmra.mrb[0].mxu0 %v703
    %v1134 = vpop.f32.mrb[0].mxu0
    %v1135 = vadd.f32 %v990, %v1134
    %v1136 = vpop.f32.mrb[0].mxu0
    %1137 = vmatprep.mubr.f32.mxu0 0.0
    %1138 = vmatmul.mubr.f32.gmra.mrb[0].mxu0 %v706
    %v1139 = vpop.f32.mrb[0].mxu0
    %v1140 = vadd.f32 %v995, %v1139
    %v1141 = vpop.f32.mrb[0].mxu0
    %1142 = vdwg.mxu0
    %v1143 = vmax.f32 %v1065, 0.0
    %v1144 = vmax.f32 %v1070, 0.0
    %v1145 = vmax.f32 %v1075, 0.0
    %v1146 = vmax.f32 %v1080, 0.0
    %v1147 = vmax.f32 %v1085, 0.0
    %v1148 = vmax.f32 %v1090, 0.0
    %v1149 = vmax.f32 %v1095, 0.0
    %v1150 = vmax.f32 %v1100, 0.0
    %v1151 = vmax.f32 %v1105, 0.0
    %v1152 = vmax.f32 %v1110, 0.0
    %v1153 = vmax.f32 %v1115, 0.0
    %v1154 = vmax.f32 %v1120, 0.0
    %v1155 = vmax.f32 %v1125, 0.0
    %v1156 = vmax.f32 %v1130, 0.0
    %v1157 = vmax.f32 %v1135, 0.0
    %v1158 = vmax.f32 %v1140, 0.0
    %v1159 = vsel %vm101, %v1143, 0.0
    %v1160 = vsel %vm101, %v1144, 0.0
    %v1161 = vadd.f32 %v1159, %v1160
    %v1162 = vsel %vm101, %v1145, 0.0
    %v1163 = vadd.f32 %v1161, %v1162
    %v1164 = vsel %vm101, %v1146, 0.0
    %v1165 = vadd.f32 %v1163, %v1164
    %v1166 = vsel %vm101, %v1147, 0.0
    %v1167 = vadd.f32 %v1165, %v1166
    %v1168 = vsel %vm101, %v1148, 0.0
    %v1169 = vadd.f32 %v1167, %v1168
    %v1170 = vsel %vm101, %v1149, 0.0
    %v1171 = vadd.f32 %v1169, %v1170
    %v1172 = vsel %vm101, %v1150, 0.0
    %v1173 = vadd.f32 %v1171, %v1172
    %v1174 = vsel %vm101, %v1151, 0.0
    %v1175 = vadd.f32 %v1173, %v1174
    %v1176 = vsel %vm101, %v1152, 0.0
    %v1177 = vadd.f32 %v1175, %v1176
    %v1178 = vsel %vm101, %v1153, 0.0
    %v1179 = vadd.f32 %v1177, %v1178
    %v1180 = vsel %vm101, %v1154, 0.0
    %v1181 = vadd.f32 %v1179, %v1180
    %v1182 = vsel %vm101, %v1155, 0.0
    %v1183 = vadd.f32 %v1181, %v1182
    %v1184 = vsel %vm101, %v1156, 0.0
    %v1185 = vadd.f32 %v1183, %v1184
    %v1186 = vsel %vm101, %v1157, 0.0
    %v1187 = vadd.f32 %v1185, %v1186
    %v1188 = vsel %vm101, %v1158, 0.0
    %v1189 = vadd.f32 %v1187, %v1188
    %v1190 = vrot.slane %v1189, 4
    %v1191 = vadd.f32 %v1189, %v1190
    %v1192 = vrot.slane %v1191, 2
    %v1193 = vadd.f32 %v1191, %v1192
    %v1194 = vrot.slane %v1193, 1
    %v1195 = vadd.f32 %v1193, %v1194
    %v1196 = vmul.f32 %v1143, %v1143
    %v1197 = vmul.f32 %v1144, %v1144
    %v1198 = vmul.f32 %v1145, %v1145
    %v1199 = vmul.f32 %v1146, %v1146
    %v1200 = vmul.f32 %v1147, %v1147
    %v1201 = vmul.f32 %v1148, %v1148
    %v1202 = vmul.f32 %v1149, %v1149
    %v1203 = vmul.f32 %v1150, %v1150
    %v1204 = vmul.f32 %v1151, %v1151
    %v1205 = vmul.f32 %v1152, %v1152
    %v1206 = vmul.f32 %v1153, %v1153
    %v1207 = vmul.f32 %v1154, %v1154
    %v1208 = vmul.f32 %v1155, %v1155
    %v1209 = vmul.f32 %v1156, %v1156
    %v1210 = vmul.f32 %v1157, %v1157
    %v1211 = vmul.f32 %v1158, %v1158
    %v1212 = vsel %vm101, %v1196, 0.0
    %v1213 = vsel %vm101, %v1197, 0.0
    %v1214 = vadd.f32 %v1212, %v1213
    %v1215 = vsel %vm101, %v1198, 0.0
    %v1216 = vadd.f32 %v1214, %v1215
    %v1217 = vsel %vm101, %v1199, 0.0
    %v1218 = vadd.f32 %v1216, %v1217
    %v1219 = vsel %vm101, %v1200, 0.0
    %v1220 = vadd.f32 %v1218, %v1219
    %v1221 = vsel %vm101, %v1201, 0.0
    %v1222 = vadd.f32 %v1220, %v1221
    %v1223 = vsel %vm101, %v1202, 0.0
    %v1224 = vadd.f32 %v1222, %v1223
    %v1225 = vsel %vm101, %v1203, 0.0
    %v1226 = vadd.f32 %v1224, %v1225
    %v1227 = vsel %vm101, %v1204, 0.0
    %v1228 = vadd.f32 %v1226, %v1227
    %v1229 = vsel %vm101, %v1205, 0.0
    %v1230 = vadd.f32 %v1228, %v1229
    %v1231 = vsel %vm101, %v1206, 0.0
    %v1232 = vadd.f32 %v1230, %v1231
    %v1233 = vsel %vm101, %v1207, 0.0
    %v1234 = vadd.f32 %v1232, %v1233
    %v1235 = vsel %vm101, %v1208, 0.0
    %v1236 = vadd.f32 %v1234, %v1235
    %v1237 = vsel %vm101, %v1209, 0.0
    %v1238 = vadd.f32 %v1236, %v1237
    %v1239 = vsel %vm101, %v1210, 0.0
    %v1240 = vadd.f32 %v1238, %v1239
    %v1241 = vsel %vm101, %v1211, 0.0
    %v1242 = vadd.f32 %v1240, %v1241
    %v1243 = vrot.slane %v1242, 4
    %v1244 = vadd.f32 %v1242, %v1243
    %v1245 = vrot.slane %v1244, 2
    %v1246 = vadd.f32 %v1244, %v1245
    %v1247 = vrot.slane %v1246, 1
    %v1248 = vadd.f32 %v1246, %v1247
    %v1249 = vmul.f32 %v1195, 0.0078125
    %v1250 = vmul.f32 %v1248, 0.0078125
    %v1251 = vmul.f32 %v1249, %v1249
    %v1252 = vsub.f32 %v1250, %v1251
    %v1253 = vmax.f32 %v1252, 0.0
    %v1254 = vadd.f32 %v1253, 1e-05
    %v1255 = vrsqrt.pop %v1254
    %v1256 = vld [vmem:[%s2 + $0x1] sm:$0x1]
    %v1257 = vmul.f32 %v1255, %v1256
    %v1258 = vld [vmem:[%s2 + $0x2] sm:$0x1]
    %v1259 = vmul.f32 %v1249, %v1257
    %v1260 = vsub.f32 %v1258, %v1259
    %v1261 = vlaneseq
    %v1262 = vshrl.u32 %v1261, 7
    %v1263 = vsub.s32 0, %v1262
    %v1264 = vrot.slane %v1257, %v1263
    %v1265 = vmul.f32 %v1143, %v1264
    %v1266 = vmul.f32 %v1144, %v1264
    %v1267 = vmul.f32 %v1145, %v1264
    %v1268 = vmul.f32 %v1146, %v1264
    %v1269 = vmul.f32 %v1147, %v1264
    %v1270 = vmul.f32 %v1148, %v1264
    %v1271 = vmul.f32 %v1149, %v1264
    %v1272 = vmul.f32 %v1150, %v1264
    %v1273 = vmul.f32 %v1151, %v1264
    %v1274 = vmul.f32 %v1152, %v1264
    %v1275 = vmul.f32 %v1153, %v1264
    %v1276 = vmul.f32 %v1154, %v1264
    %v1277 = vmul.f32 %v1155, %v1264
    %v1278 = vmul.f32 %v1156, %v1264
    %v1279 = vmul.f32 %v1157, %v1264
    %v1280 = vmul.f32 %v1158, %v1264
    %v1281 = vlaneseq
    %v1282 = vshrl.u32 %v1281, 7
    %v1283 = vsub.s32 0, %v1282
    %v1284 = vrot.slane %v1260, %v1283
    %v1285 = vadd.f32 %v1265, %v1284
    %v1286 = vadd.f32 %v1266, %v1284
    %v1287 = vadd.f32 %v1267, %v1284
    %v1288 = vadd.f32 %v1268, %v1284
    %v1289 = vadd.f32 %v1269, %v1284
    %v1290 = vadd.f32 %v1270, %v1284
    %v1291 = vadd.f32 %v1271, %v1284
    %v1292 = vadd.f32 %v1272, %v1284
    %v1293 = vadd.f32 %v1273, %v1284
    %v1294 = vadd.f32 %v1274, %v1284
    %v1295 = vadd.f32 %v1275, %v1284
    %v1296 = vadd.f32 %v1276, %v1284
    %v1297 = vadd.f32 %v1277, %v1284
    %v1298 = vadd.f32 %v1278, %v1284
    %v1299 = vadd.f32 %v1279, %v1284
    %v1300 = vadd.f32 %v1280, %v1284
    %1301 = vst.msk [vmem:[%s100 + $0x1] sm:$0xff] %vm101, %v1285
    %1302 = vst.msk [vmem:[%s100 + $0x11] sm:$0xff] %vm101, %v1286
    %1303 = vst.msk [vmem:[%s100 + $0x21] sm:$0xff] %vm101, %v1287
    %1304 = vst.msk [vmem:[%s100 + $0x31] sm:$0xff] %vm101, %v1288
    %1305 = vst.msk [vmem:[%s100 + $0x41] sm:$0xff] %vm101, %v1289
    %1306 = vst.msk [vmem:[%s100 + $0x51] sm:$0xff] %vm101, %v1290
    %1307 = vst.msk [vmem:[%s100 + $0x61] sm:$0xff] %vm101, %v1291
    %1308 = vst.msk [vmem:[%s100 + $0x71] sm:$0xff] %vm101, %v1292
    %1309 = vst.msk [vmem:[%s100 + $0xa1] sm:$0xff] %vm101, %v1293
    %1310 = vst.msk [vmem:[%s100 + $0xb1] sm:$0xff] %vm101, %v1294
    %1311 = vst.msk [vmem:[%s100 + $0xc1] sm:$0xff] %vm101, %v1295
    %1312 = vst.msk [vmem:[%s100 + $0xd1] sm:$0xff] %vm101, %v1296
    %1313 = vst.msk [vmem:[%s100 + $0xe1] sm:$0xff] %vm101, %v1297
    %1314 = vst.msk [vmem:[%s100 + $0xf1] sm:$0xff] %vm101, %v1298
    %1315 = vst.msk [vmem:[%s100 + $0x101] sm:$0xff] %vm101, %v1299
    %1316 = vst.msk [vmem:[%s100 + $0x111] sm:$0xff] %vm101, %v1300
    %v1317 = vld [vmem:[#allocation2] sm:$0xff]
    %v1318 = vld [vmem:[#allocation2 + $0x10] sm:$0xff]
    %v1319 = vld [vmem:[#allocation2 + $0x20] sm:$0xff]
    %v1320 = vld [vmem:[#allocation2 + $0x30] sm:$0xff]
    %v1321 = vld [vmem:[#allocation2 + $0x40] sm:$0xff]
    %v1322 = vld [vmem:[#allocation2 + $0x50] sm:$0xff]
    %v1323 = vld [vmem:[#allocation2 + $0x60] sm:$0xff]
    %v1324 = vld [vmem:[#allocation2 + $0x70] sm:$0xff]
    %v1325 = vld [vmem:[#allocation2 + $0xa0] sm:$0xff]
    %v1326 = vld [vmem:[#allocation2 + $0xb0] sm:$0xff]
    %v1327 = vld [vmem:[#allocation2 + $0xc0] sm:$0xff]
    %v1328 = vld [vmem:[#allocation2 + $0xd0] sm:$0xff]
    %v1329 = vld [vmem:[#allocation2 + $0xe0] sm:$0xff]
    %v1330 = vld [vmem:[#allocation2 + $0xf0] sm:$0xff]
    %v1331 = vld [vmem:[#allocation2 + $0x100] sm:$0xff]
    %v1332 = vld [vmem:[#allocation2 + $0x110] sm:$0xff]
    %v1333 = vld [vmem:[#allocation2 + $0x1] sm:$0xff]
    %v1334 = vld [vmem:[#allocation2 + $0x11] sm:$0xff]
    %v1335 = vld [vmem:[#allocation2 + $0x21] sm:$0xff]
    %v1336 = vld [vmem:[#allocation2 + $0x31] sm:$0xff]
    %v1337 = vld [vmem:[#allocation2 + $0x41] sm:$0xff]
    %v1338 = vld [vmem:[#allocation2 + $0x51] sm:$0xff]
    %v1339 = vld [vmem:[#allocation2 + $0x61] sm:$0xff]
    %v1340 = vld [vmem:[#allocation2 + $0x71] sm:$0xff]
    %v1341 = vld [vmem:[#allocation2 + $0xa1] sm:$0xff]
    %v1342 = vld [vmem:[#allocation2 + $0xb1] sm:$0xff]
    %v1343 = vld [vmem:[#allocation2 + $0xc1] sm:$0xff]
    %v1344 = vld [vmem:[#allocation2 + $0xd1] sm:$0xff]
    %v1345 = vld [vmem:[#allocation2 + $0xe1] sm:$0xff]
    %v1346 = vld [vmem:[#allocation2 + $0xf1] sm:$0xff]
    %v1347 = vld [vmem:[#allocation2 + $0x101] sm:$0xff]
    %v1348 = vld [vmem:[#allocation2 + $0x111] sm:$0xff]
    %v1349 = vld [vmem:[#allocation2 + $0x2] sm:$0xff]
    %v1350 = vld [vmem:[#allocation2 + $0x12] sm:$0xff]
    %v1351 = vld [vmem:[#allocation2 + $0x22] sm:$0xff]
    %v1352 = vld [vmem:[#allocation2 + $0x32] sm:$0xff]
    %v1353 = vld [vmem:[#allocation2 + $0x42] sm:$0xff]
    %v1354 = vld [vmem:[#allocation2 + $0x52] sm:$0xff]
    %v1355 = vld [vmem:[#allocation2 + $0x62] sm:$0xff]
    %v1356 = vld [vmem:[#allocation2 + $0x72] sm:$0xff]
    %v1357 = vld [vmem:[#allocation2 + $0xa2] sm:$0xff]
    %v1358 = vld [vmem:[#allocation2 + $0xb2] sm:$0xff]
    %v1359 = vld [vmem:[#allocation2 + $0xc2] sm:$0xff]
    %v1360 = vld [vmem:[#allocation2 + $0xd2] sm:$0xff]
    %v1361 = vld [vmem:[#allocation2 + $0xe2] sm:$0xff]
    %v1362 = vld [vmem:[#allocation2 + $0xf2] sm:$0xff]
    %v1363 = vld [vmem:[#allocation2 + $0x102] sm:$0xff]
    %v1364 = vld [vmem:[#allocation2 + $0x112] sm:$0xff]
    %v1365 = vld [vmem:[%s100] sm:$0xff]
    %v1366 = vld [vmem:[%s100 + $0x10] sm:$0xff]
    %v1367 = vld [vmem:[%s100 + $0x20] sm:$0xff]
    %v1368 = vld [vmem:[%s100 + $0x30] sm:$0xff]
    %v1369 = vld [vmem:[%s100 + $0x40] sm:$0xff]
    %v1370 = vld [vmem:[%s100 + $0x50] sm:$0xff]
    %v1371 = vld [vmem:[%s100 + $0x60] sm:$0xff]
    %v1372 = vld [vmem:[%s100 + $0x70] sm:$0xff]
    %v1373 = vld [vmem:[%s100 + $0xa0] sm:$0xff]
    %v1374 = vld [vmem:[%s100 + $0xb0] sm:$0xff]
    %v1375 = vld [vmem:[%s100 + $0xc0] sm:$0xff]
    %v1376 = vld [vmem:[%s100 + $0xd0] sm:$0xff]
    %v1377 = vld [vmem:[%s100 + $0xe0] sm:$0xff]
    %v1378 = vld [vmem:[%s100 + $0xf0] sm:$0xff]
    %v1379 = vld [vmem:[%s100 + $0x100] sm:$0xff]
    %v1380 = vld [vmem:[%s100 + $0x110] sm:$0xff]
    %v1381 = vld [vmem:[%s100 + $0x1] sm:$0xff]
    %v1382 = vld [vmem:[%s100 + $0x11] sm:$0xff]
    %v1383 = vld [vmem:[%s100 + $0x21] sm:$0xff]
    %v1384 = vld [vmem:[%s100 + $0x31] sm:$0xff]
    %v1385 = vld [vmem:[%s100 + $0x41] sm:$0xff]
    %v1386 = vld [vmem:[%s100 + $0x51] sm:$0xff]
    %v1387 = vld [vmem:[%s100 + $0x61] sm:$0xff]
    %v1388 = vld [vmem:[%s100 + $0x71] sm:$0xff]
    %v1389 = vld [vmem:[%s100 + $0xa1] sm:$0xff]
    %v1390 = vld [vmem:[%s100 + $0xb1] sm:$0xff]
    %v1391 = vld [vmem:[%s100 + $0xc1] sm:$0xff]
    %v1392 = vld [vmem:[%s100 + $0xd1] sm:$0xff]
    %v1393 = vld [vmem:[%s100 + $0xe1] sm:$0xff]
    %v1394 = vld [vmem:[%s100 + $0xf1] sm:$0xff]
    %v1395 = vld [vmem:[%s100 + $0x101] sm:$0xff]
    %v1396 = vld [vmem:[%s100 + $0x111] sm:$0xff]
    %v1397 = vld [vmem:[%s100 + $0x2] sm:$0xff]
    %v1398 = vld [vmem:[%s100 + $0x12] sm:$0xff]
    %v1399 = vld [vmem:[%s100 + $0x22] sm:$0xff]
    %v1400 = vld [vmem:[%s100 + $0x32] sm:$0xff]
    %v1401 = vld [vmem:[%s100 + $0x42] sm:$0xff]
    %v1402 = vld [vmem:[%s100 + $0x52] sm:$0xff]
    %v1403 = vld [vmem:[%s100 + $0x62] sm:$0xff]
    %v1404 = vld [vmem:[%s100 + $0x72] sm:$0xff]
    %v1405 = vld [vmem:[%s100 + $0xa2] sm:$0xff]
    %v1406 = vld [vmem:[%s100 + $0xb2] sm:$0xff]
    %v1407 = vld [vmem:[%s100 + $0xc2] sm:$0xff]
    %v1408 = vld [vmem:[%s100 + $0xd2] sm:$0xff]
    %v1409 = vld [vmem:[%s100 + $0xe2] sm:$0xff]
    %v1410 = vld [vmem:[%s100 + $0xf2] sm:$0xff]
    %v1411 = vld [vmem:[%s100 + $0x102] sm:$0xff]
    %v1412 = vld [vmem:[%s100 + $0x112] sm:$0xff]
    %v1413 = vld [vmem:[%s214] sm:$0xff]
    %v1414 = vld [vmem:[%s214 + $0x10] sm:$0xff]
    %v1415 = vld [vmem:[%s214 + $0x20] sm:$0xff]
    %v1416 = vld [vmem:[%s214 + $0x30] sm:$0xff]
    %v1417 = vld [vmem:[%s214 + $0x40] sm:$0xff]
    %v1418 = vld [vmem:[%s214 + $0x50] sm:$0xff]
    %v1419 = vld [vmem:[%s214 + $0x60] sm:$0xff]
    %v1420 = vld [vmem:[%s214 + $0x70] sm:$0xff]
    %v1421 = vld [vmem:[%s214 + $0xa0] sm:$0xff]
    %v1422 = vld [vmem:[%s214 + $0xb0] sm:$0xff]
    %v1423 = vld [vmem:[%s214 + $0xc0] sm:$0xff]
    %v1424 = vld [vmem:[%s214 + $0xd0] sm:$0xff]
    %v1425 = vld [vmem:[%s214 + $0xe0] sm:$0xff]
    %v1426 = vld [vmem:[%s214 + $0xf0] sm:$0xff]
    %v1427 = vld [vmem:[%s214 + $0x100] sm:$0xff]
    %v1428 = vld [vmem:[%s214 + $0x110] sm:$0xff]
    %v1429 = vld [vmem:[%s214 + $0x1] sm:$0xff]
    %v1430 = vld [vmem:[%s214 + $0x11] sm:$0xff]
    %v1431 = vld [vmem:[%s214 + $0x21] sm:$0xff]
    %v1432 = vld [vmem:[%s214 + $0x31] sm:$0xff]
    %v1433 = vld [vmem:[%s214 + $0x41] sm:$0xff]
    %v1434 = vld [vmem:[%s214 + $0x51] sm:$0xff]
    %v1435 = vld [vmem:[%s214 + $0x61] sm:$0xff]
    %v1436 = vld [vmem:[%s214 + $0x71] sm:$0xff]
    %v1437 = vld [vmem:[%s214 + $0xa1] sm:$0xff]
    %v1438 = vld [vmem:[%s214 + $0xb1] sm:$0xff]
    %v1439 = vld [vmem:[%s214 + $0xc1] sm:$0xff]
    %v1440 = vld [vmem:[%s214 + $0xd1] sm:$0xff]
    %v1441 = vld [vmem:[%s214 + $0xe1] sm:$0xff]
    %v1442 = vld [vmem:[%s214 + $0xf1] sm:$0xff]
    %v1443 = vld [vmem:[%s214 + $0x101] sm:$0xff]
    %v1444 = vld [vmem:[%s214 + $0x111] sm:$0xff]
    %v1445 = vld [vmem:[%s214 + $0x2] sm:$0xff]
    %v1446 = vld [vmem:[%s214 + $0x12] sm:$0xff]
    %v1447 = vld [vmem:[%s214 + $0x22] sm:$0xff]
    %v1448 = vld [vmem:[%s214 + $0x32] sm:$0xff]
    %v1449 = vld [vmem:[%s214 + $0x42] sm:$0xff]
    %v1450 = vld [vmem:[%s214 + $0x52] sm:$0xff]
    %v1451 = vld [vmem:[%s214 + $0x62] sm:$0xff]
    %v1452 = vld [vmem:[%s214 + $0x72] sm:$0xff]
    %v1453 = vld [vmem:[%s214 + $0xa2] sm:$0xff]
    %v1454 = vld [vmem:[%s214 + $0xb2] sm:$0xff]
    %v1455 = vld [vmem:[%s214 + $0xc2] sm:$0xff]
    %v1456 = vld [vmem:[%s214 + $0xd2] sm:$0xff]
    %v1457 = vld [vmem:[%s214 + $0xe2] sm:$0xff]
    %v1458 = vld [vmem:[%s214 + $0xf2] sm:$0xff]
    %v1459 = vld [vmem:[%s214 + $0x102] sm:$0xff]
    %v1460 = vld [vmem:[%s214 + $0x112] sm:$0xff]
    %1477 = vrot.lane.b32.xlu0 %v1333, 64
    %v1478 = vpop.permute.xlu0 %1477
    %1479 = vrot.lane.b32.xlu0 %v1334, 64
    %v1480 = vpop.permute.xlu0 %1479
    %1481 = vrot.lane.b32.xlu0 %v1335, 64
    %v1482 = vpop.permute.xlu0 %1481
    %1483 = vrot.lane.b32.xlu0 %v1336, 64
    %v1484 = vpop.permute.xlu0 %1483
    %1485 = vrot.lane.b32.xlu0 %v1337, 64
    %v1486 = vpop.permute.xlu0 %1485
    %1487 = vrot.lane.b32.xlu0 %v1338, 64
    %v1488 = vpop.permute.xlu0 %1487
    %1489 = vrot.lane.b32.xlu0 %v1339, 64
    %v1490 = vpop.permute.xlu0 %1489
    %1491 = vrot.lane.b32.xlu0 %v1340, 64
    %v1492 = vpop.permute.xlu0 %1491
    %1493 = vrot.lane.b32.xlu0 %v1341, 64
    %v1494 = vpop.permute.xlu0 %1493
    %1495 = vrot.lane.b32.xlu0 %v1342, 64
    %v1496 = vpop.permute.xlu0 %1495
    %1497 = vrot.lane.b32.xlu0 %v1343, 64
    %v1498 = vpop.permute.xlu0 %1497
    %1499 = vrot.lane.b32.xlu0 %v1344, 64
    %v1500 = vpop.permute.xlu0 %1499
    %1501 = vrot.lane.b32.xlu0 %v1345, 64
    %v1502 = vpop.permute.xlu0 %1501
    %1503 = vrot.lane.b32.xlu0 %v1346, 64
    %v1504 = vpop.permute.xlu0 %1503
    %1505 = vrot.lane.b32.xlu0 %v1347, 64
    %v1506 = vpop.permute.xlu0 %1505
    %1507 = vrot.lane.b32.xlu0 %v1348, 64
    %v1508 = vpop.permute.xlu0 %1507
    %1541 = vrot.lane.b32.xlu0 %v1365, 64
    %v1542 = vpop.permute.xlu0 %1541
    %1543 = vrot.lane.b32.xlu0 %v1366, 64
    %v1544 = vpop.permute.xlu0 %1543
    %1545 = vrot.lane.b32.xlu0 %v1367, 64
    %v1546 = vpop.permute.xlu0 %1545
    %1547 = vrot.lane.b32.xlu0 %v1368, 64
    %v1548 = vpop.permute.xlu0 %1547
    %1549 = vrot.lane.b32.xlu0 %v1369, 64
    %v1550 = vpop.permute.xlu0 %1549
    %1551 = vrot.lane.b32.xlu0 %v1370, 64
    %v1552 = vpop.permute.xlu0 %1551
    %1553 = vrot.lane.b32.xlu0 %v1371, 64
    %v1554 = vpop.permute.xlu0 %1553
    %1555 = vrot.lane.b32.xlu0 %v1372, 64
    %v1556 = vpop.permute.xlu0 %1555
    %1557 = vrot.lane.b32.xlu0 %v1373, 64
    %v1558 = vpop.permute.xlu0 %1557
    %1559 = vrot.lane.b32.xlu0 %v1374, 64
    %v1560 = vpop.permute.xlu0 %1559
    %1561 = vrot.lane.b32.xlu0 %v1375, 64
    %v1562 = vpop.permute.xlu0 %1561
    %1563 = vrot.lane.b32.xlu0 %v1376, 64
    %v1564 = vpop.permute.xlu0 %1563
    %1565 = vrot.lane.b32.xlu0 %v1377, 64
    %v1566 = vpop.permute.xlu0 %1565
    %1567 = vrot.lane.b32.xlu0 %v1378, 64
    %v1568 = vpop.permute.xlu0 %1567
    %1569 = vrot.lane.b32.xlu0 %v1379, 64
    %v1570 = vpop.permute.xlu0 %1569
    %1571 = vrot.lane.b32.xlu0 %v1380, 64
    %v1572 = vpop.permute.xlu0 %1571
    %1605 = vrot.lane.b32.xlu0 %v1397, 64
    %v1606 = vpop.permute.xlu0 %1605
    %1607 = vrot.lane.b32.xlu0 %v1398, 64
    %v1608 = vpop.permute.xlu0 %1607
    %1609 = vrot.lane.b32.xlu0 %v1399, 64
    %v1610 = vpop.permute.xlu0 %1609
    %1611 = vrot.lane.b32.xlu0 %v1400, 64
    %v1612 = vpop.permute.xlu0 %1611
    %1613 = vrot.lane.b32.xlu0 %v1401, 64
    %v1614 = vpop.permute.xlu0 %1613
    %1615 = vrot.lane.b32.xlu0 %v1402, 64
    %v1616 = vpop.permute.xlu0 %1615
    %1617 = vrot.lane.b32.xlu0 %v1403, 64
    %v1618 = vpop.permute.xlu0 %1617
    %1619 = vrot.lane.b32.xlu0 %v1404, 64
    %v1620 = vpop.permute.xlu0 %1619
    %1621 = vrot.lane.b32.xlu0 %v1405, 64
    %v1622 = vpop.permute.xlu0 %1621
    %1623 = vrot.lane.b32.xlu0 %v1406, 64
    %v1624 = vpop.permute.xlu0 %1623
    %1625 = vrot.lane.b32.xlu0 %v1407, 64
    %v1626 = vpop.permute.xlu0 %1625
    %1627 = vrot.lane.b32.xlu0 %v1408, 64
    %v1628 = vpop.permute.xlu0 %1627
    %1629 = vrot.lane.b32.xlu0 %v1409, 64
    %v1630 = vpop.permute.xlu0 %1629
    %1631 = vrot.lane.b32.xlu0 %v1410, 64
    %v1632 = vpop.permute.xlu0 %1631
    %1633 = vrot.lane.b32.xlu0 %v1411, 64
    %v1634 = vpop.permute.xlu0 %1633
    %1635 = vrot.lane.b32.xlu0 %v1412, 64
    %v1636 = vpop.permute.xlu0 %1635
    %1669 = vrot.lane.b32.xlu0 %v1429, 64
    %v1670 = vpop.permute.xlu0 %1669
    %1671 = vrot.lane.b32.xlu0 %v1430, 64
    %v1672 = vpop.permute.xlu0 %1671
    %1673 = vrot.lane.b32.xlu0 %v1431, 64
    %v1674 = vpop.permute.xlu0 %1673
    %1675 = vrot.lane.b32.xlu0 %v1432, 64
    %v1676 = vpop.permute.xlu0 %1675
    %1677 = vrot.lane.b32.xlu0 %v1433, 64
    %v1678 = vpop.permute.xlu0 %1677
    %1679 = vrot.lane.b32.xlu0 %v1434, 64
    %v1680 = vpop.permute.xlu0 %1679
    %1681 = vrot.lane.b32.xlu0 %v1435, 64
    %v1682 = vpop.permute.xlu0 %1681
    %1683 = vrot.lane.b32.xlu0 %v1436, 64
    %v1684 = vpop.permute.xlu0 %1683
    %1685 = vrot.lane.b32.xlu0 %v1437, 64
    %v1686 = vpop.permute.xlu0 %1685
    %1687 = vrot.lane.b32.xlu0 %v1438, 64
    %v1688 = vpop.permute.xlu0 %1687
    %1689 = vrot.lane.b32.xlu0 %v1439, 64
    %v1690 = vpop.permute.xlu0 %1689
    %1691 = vrot.lane.b32.xlu0 %v1440, 64
    %v1692 = vpop.permute.xlu0 %1691
    %1693 = vrot.lane.b32.xlu0 %v1441, 64
    %v1694 = vpop.permute.xlu0 %1693
    %1695 = vrot.lane.b32.xlu0 %v1442, 64
    %v1696 = vpop.permute.xlu0 %1695
    %1697 = vrot.lane.b32.xlu0 %v1443, 64
    %v1698 = vpop.permute.xlu0 %1697
    %1699 = vrot.lane.b32.xlu0 %v1444, 64
    %v1700 = vpop.permute.xlu0 %1699
    %v1717 = vsel %vm42, %v1317, %v1478
    %v1718 = vsel %vm42, %v1318, %v1480
    %v1719 = vsel %vm42, %v1319, %v1482
    %v1720 = vsel %vm42, %v1320, %v1484
    %v1721 = vsel %vm42, %v1321, %v1486
    %v1722 = vsel %vm42, %v1322, %v1488
    %v1723 = vsel %vm42, %v1323, %v1490
    %v1724 = vsel %vm42, %v1324, %v1492
    %v1725 = vsel %vm42, %v1325, %v1494
    %v1726 = vsel %vm42, %v1326, %v1496
    %v1727 = vsel %vm42, %v1327, %v1498
    %v1728 = vsel %vm42, %v1328, %v1500
    %v1729 = vsel %vm42, %v1329, %v1502
    %v1730 = vsel %vm42, %v1330, %v1504
    %v1731 = vsel %vm42, %v1331, %v1506
    %v1732 = vsel %vm42, %v1332, %v1508
    %v1733 = vsel %vm42, %v1349, %v1542
    %v1734 = vsel %vm42, %v1350, %v1544
    %v1735 = vsel %vm42, %v1351, %v1546
    %v1736 = vsel %vm42, %v1352, %v1548
    %v1737 = vsel %vm42, %v1353, %v1550
    %v1738 = vsel %vm42, %v1354, %v1552
    %v1739 = vsel %vm42, %v1355, %v1554
    %v1740 = vsel %vm42, %v1356, %v1556
    %v1741 = vsel %vm42, %v1357, %v1558
    %v1742 = vsel %vm42, %v1358, %v1560
    %v1743 = vsel %vm42, %v1359, %v1562
    %v1744 = vsel %vm42, %v1360, %v1564
    %v1745 = vsel %vm42, %v1361, %v1566
    %v1746 = vsel %vm42, %v1362, %v1568
    %v1747 = vsel %vm42, %v1363, %v1570
    %v1748 = vsel %vm42, %v1364, %v1572
    %v1749 = vsel %vm42, %v1381, %v1606
    %v1750 = vsel %vm42, %v1382, %v1608
    %v1751 = vsel %vm42, %v1383, %v1610
    %v1752 = vsel %vm42, %v1384, %v1612
    %v1753 = vsel %vm42, %v1385, %v1614
    %v1754 = vsel %vm42, %v1386, %v1616
    %v1755 = vsel %vm42, %v1387, %v1618
    %v1756 = vsel %vm42, %v1388, %v1620
    %v1757 = vsel %vm42, %v1389, %v1622
    %v1758 = vsel %vm42, %v1390, %v1624
    %v1759 = vsel %vm42, %v1391, %v1626
    %v1760 = vsel %vm42, %v1392, %v1628
    %v1761 = vsel %vm42, %v1393, %v1630
    %v1762 = vsel %vm42, %v1394, %v1632
    %v1763 = vsel %vm42, %v1395, %v1634
    %v1764 = vsel %vm42, %v1396, %v1636
    %v1765 = vsel %vm42, %v1413, %v1670
    %v1766 = vsel %vm42, %v1414, %v1672
    %v1767 = vsel %vm42, %v1415, %v1674
    %v1768 = vsel %vm42, %v1416, %v1676
    %v1769 = vsel %vm42, %v1417, %v1678
    %v1770 = vsel %vm42, %v1418, %v1680
    %v1771 = vsel %vm42, %v1419, %v1682
    %v1772 = vsel %vm42, %v1420, %v1684
    %v1773 = vsel %vm42, %v1421, %v1686
    %v1774 = vsel %vm42, %v1422, %v1688
    %v1775 = vsel %vm42, %v1423, %v1690
    %v1776 = vsel %vm42, %v1424, %v1692
    %v1777 = vsel %vm42, %v1425, %v1694
    %v1778 = vsel %vm42, %v1426, %v1696
    %v1779 = vsel %vm42, %v1427, %v1698
    %v1780 = vsel %vm42, %v1428, %v1700
    %s1781 = scalar_lea.vmem [#allocation6], 576
    %v1782 = vld [vmem:[%s1781] sm:$0xff]
    %v1783 = vld [vmem:[%s1781 + $0x8] sm:$0xff]
    %v1784 = vld [vmem:[%s1781 + $0x10] sm:$0xff]
    %v1785 = vld [vmem:[%s1781 + $0x18] sm:$0xff]
    %v1786 = vld [vmem:[%s1781 + $0x20] sm:$0xff]
    %v1787 = vld [vmem:[%s1781 + $0x28] sm:$0xff]
    %v1788 = vld [vmem:[%s1781 + $0x30] sm:$0xff]
    %v1789 = vld [vmem:[%s1781 + $0x38] sm:$0xff]
    %v1790 = vld [vmem:[%s1781 + $0x40] sm:$0xff]
    %v1791 = vld [vmem:[%s1781 + $0x48] sm:$0xff]
    %v1792 = vld [vmem:[%s1781 + $0x50] sm:$0xff]
    %v1793 = vld [vmem:[%s1781 + $0x58] sm:$0xff]
    %v1794 = vld [vmem:[%s1781 + $0x60] sm:$0xff]
    %v1795 = vld [vmem:[%s1781 + $0x68] sm:$0xff]
    %v1796 = vld [vmem:[%s1781 + $0x70] sm:$0xff]
    %v1797 = vld [vmem:[%s1781 + $0x78] sm:$0xff]
    %v1798 = vld [vmem:[%s1781 + $0x80] sm:$0xff]
    %v1799 = vld [vmem:[%s1781 + $0x88] sm:$0xff]
    %v1800 = vld [vmem:[%s1781 + $0x90] sm:$0xff]
    %v1801 = vld [vmem:[%s1781 + $0x98] sm:$0xff]
    %v1802 = vld [vmem:[%s1781 + $0xa0] sm:$0xff]
    %v1803 = vld [vmem:[%s1781 + $0xa8] sm:$0xff]
    %v1804 = vld [vmem:[%s1781 + $0xb0] sm:$0xff]
    %v1805 = vld [vmem:[%s1781 + $0xb8] sm:$0xff]
    %v1806 = vld [vmem:[%s1781 + $0xc0] sm:$0xff]
    %v1807 = vld [vmem:[%s1781 + $0xc8] sm:$0xff]
    %v1808 = vld [vmem:[%s1781 + $0xd0] sm:$0xff]
    %v1809 = vld [vmem:[%s1781 + $0xd8] sm:$0xff]
    %v1810 = vld [vmem:[%s1781 + $0xe0] sm:$0xff]
    %v1811 = vld [vmem:[%s1781 + $0xe8] sm:$0xff]
    %v1812 = vld [vmem:[%s1781 + $0xf0] sm:$0xff]
    %v1813 = vld [vmem:[%s1781 + $0xf8] sm:$0xff]
    %v1814 = vld [vmem:[%s1781 + $0x100] sm:$0xff]
    %v1815 = vld [vmem:[%s1781 + $0x108] sm:$0xff]
    %v1816 = vld [vmem:[%s1781 + $0x110] sm:$0xff]
    %v1817 = vld [vmem:[%s1781 + $0x118] sm:$0xff]
    %v1818 = vld [vmem:[%s1781 + $0x120] sm:$0xff]
    %v1819 = vld [vmem:[%s1781 + $0x128] sm:$0xff]
    %v1820 = vld [vmem:[%s1781 + $0x130] sm:$0xff]
    %v1821 = vld [vmem:[%s1781 + $0x138] sm:$0xff]
    %v1822 = vld [vmem:[%s1781 + $0x140] sm:$0xff]
    %v1823 = vld [vmem:[%s1781 + $0x148] sm:$0xff]
    %v1824 = vld [vmem:[%s1781 + $0x150] sm:$0xff]
    %v1825 = vld [vmem:[%s1781 + $0x158] sm:$0xff]
    %v1826 = vld [vmem:[%s1781 + $0x160] sm:$0xff]
    %v1827 = vld [vmem:[%s1781 + $0x168] sm:$0xff]
    %v1828 = vld [vmem:[%s1781 + $0x170] sm:$0xff]
    %v1829 = vld [vmem:[%s1781 + $0x178] sm:$0xff]
    %v1830 = vld [vmem:[%s1781 + $0x180] sm:$0xff]
    %v1831 = vld [vmem:[%s1781 + $0x188] sm:$0xff]
    %v1832 = vld [vmem:[%s1781 + $0x190] sm:$0xff]
    %v1833 = vld [vmem:[%s1781 + $0x198] sm:$0xff]
    %v1834 = vld [vmem:[%s1781 + $0x1a0] sm:$0xff]
    %v1835 = vld [vmem:[%s1781 + $0x1a8] sm:$0xff]
    %v1836 = vld [vmem:[%s1781 + $0x1b0] sm:$0xff]
    %v1837 = vld [vmem:[%s1781 + $0x1b8] sm:$0xff]
    %v1838 = vld [vmem:[%s1781 + $0x1c0] sm:$0xff]
    %v1839 = vld [vmem:[%s1781 + $0x1c8] sm:$0xff]
    %v1840 = vld [vmem:[%s1781 + $0x1d0] sm:$0xff]
    %v1841 = vld [vmem:[%s1781 + $0x1d8] sm:$0xff]
    %v1842 = vld [vmem:[%s1781 + $0x1e0] sm:$0xff]
    %v1843 = vld [vmem:[%s1781 + $0x1e8] sm:$0xff]
    %v1844 = vld [vmem:[%s1781 + $0x1f0] sm:$0xff]
    %v1845 = vld [vmem:[%s1781 + $0x1f8] sm:$0xff]
    %v1846 = vld [vmem:[%s1781 + $0x200] sm:$0xff]
    %v1847 = vld [vmem:[%s1781 + $0x208] sm:$0xff]
    %v1848 = vld [vmem:[%s1781 + $0x210] sm:$0xff]
    %v1849 = vld [vmem:[%s1781 + $0x218] sm:$0xff]
    %v1850 = vld [vmem:[%s1781 + $0x220] sm:$0xff]
    %v1851 = vld [vmem:[%s1781 + $0x228] sm:$0xff]
    %v1852 = vld [vmem:[%s1781 + $0x230] sm:$0xff]
    %v1853 = vld [vmem:[%s1781 + $0x238] sm:$0xff]
    %s1854 = scalar_lea.vmem %s2, 4
    %v1855 = vld [vmem:[%s1854] sm:$0x1]
    %v1856 = vlaneseq
    %v1857 = vshrl.u32 %v1856, 7
    %v1858 = vsub.s32 0, %v1857
    %v1859 = vrot.slane %v1855, %v1858
    %v1861 = vsel %vm42, %v1445, 0
    %v1864 = vsel %vm42, %v1446, 0
    %v1867 = vsel %vm42, %v1447, 0
    %v1870 = vsel %vm42, %v1448, 0
    %v1873 = vsel %vm42, %v1449, 0
    %v1876 = vsel %vm42, %v1450, 0
    %v1879 = vsel %vm42, %v1451, 0
    %v1882 = vsel %vm42, %v1452, 0
    %v1885 = vsel %vm42, %v1453, 0
    %v1888 = vsel %vm42, %v1454, 0
    %v1891 = vsel %vm42, %v1455, 0
    %v1894 = vsel %vm42, %v1456, 0
    %v1897 = vsel %vm42, %v1457, 0
    %v1900 = vsel %vm42, %v1458, 0
    %v1903 = vsel %vm42, %v1459, 0
    %v1906 = vsel %vm42, %v1460, 0
    %1908 = vmatprep.subr.mxu0 0.0
    %1909 = vmatpush1.msra.mxu0 %v1782
    %1910 = vmatprep.subr.mxu0 0.0
    %1911 = vmatpush1.msra.mxu0 %v1783
    %1912 = vmatprep.subr.mxu0 0.0
    %1913 = vmatpush1.msra.mxu0 %v1784
    %1914 = vmatprep.subr.mxu0 0.0
    %1915 = vmatpush1.msra.mxu0 %v1785
    %1916 = vmatprep.subr.mxu0 0.0
    %1917 = vmatpush1.msra.mxu0 %v1786
    %1918 = vmatprep.subr.mxu0 0.0
    %1919 = vmatpush1.msra.mxu0 %v1787
    %1920 = vmatprep.subr.mxu0 0.0
    %1921 = vmatpush1.msra.mxu0 %v1788
    %1922 = vmatprep.subr.mxu0 0.0
    %1923 = vmatpush1.msra.mxu0 %v1789
    %1924 = vmatprep.subr.mxu0 0.0
    %1925 = vmatpush1.msra.mxu0 %v1790
    %1926 = vmatprep.subr.mxu0 0.0
    %1927 = vmatpush1.msra.mxu0 %v1791
    %1928 = vmatprep.subr.mxu0 0.0
    %1929 = vmatpush1.msra.mxu0 %v1792
    %1930 = vmatprep.subr.mxu0 0.0
    %1931 = vmatpush1.msra.mxu0 %v1793
    %1932 = vmatprep.subr.mxu0 0.0
    %1933 = vmatpush1.msra.mxu0 %v1794
    %1934 = vmatprep.subr.mxu0 0.0
    %1935 = vmatpush1.msra.mxu0 %v1795
    %1936 = vmatprep.subr.mxu0 0.0
    %1937 = vmatpush1.msra.mxu0 %v1796
    %1938 = vmatprep.subr.mxu0 0.0
    %1939 = vmatpush1.msra.mxu0 %v1797
    %1940 = vmatprep.subr.mxu0 0.0
    %1941 = vmatpush1.msra.mxu0 %v1798
    %1942 = vmatprep.subr.mxu0 0.0
    %1943 = vmatpush1.msra.mxu0 %v1799
    %1944 = vmatprep.subr.mxu0 0.0
    %1945 = vmatpush1.msra.mxu0 %v1800
    %1946 = vmatprep.subr.mxu0 0.0
    %1947 = vmatpush1.msra.mxu0 %v1801
    %1948 = vmatprep.subr.mxu0 0.0
    %1949 = vmatpush1.msra.mxu0 %v1802
    %1950 = vmatprep.subr.mxu0 0.0
    %1951 = vmatpush1.msra.mxu0 %v1803
    %1952 = vmatprep.subr.mxu0 0.0
    %1953 = vmatpush1.msra.mxu0 %v1804
    %1954 = vmatprep.subr.mxu0 0.0
    %1955 = vmatpush1.msra.mxu0 %v1805
    %1956 = vmatprep.subr.mxu0 0.0
    %1957 = vmatpush1.msra.mxu0 %v1806
    %1958 = vmatprep.subr.mxu0 0.0
    %1959 = vmatpush1.msra.mxu0 %v1807
    %1960 = vmatprep.subr.mxu0 0.0
    %1961 = vmatpush1.msra.mxu0 %v1808
    %1962 = vmatprep.subr.mxu0 0.0
    %1963 = vmatpush1.msra.mxu0 %v1809
    %1964 = vmatprep.subr.mxu0 0.0
    %1965 = vmatpush1.msra.mxu0 %v1810
    %1966 = vmatprep.subr.mxu0 0.0
    %1967 = vmatpush1.msra.mxu0 %v1811
    %1968 = vmatprep.subr.mxu0 0.0
    %1969 = vmatpush1.msra.mxu0 %v1812
    %1970 = vmatprep.subr.mxu0 0.0
    %1971 = vmatpush1.msra.mxu0 %v1813
    %1972 = vmatprep.mubr.f32.mxu0 %v1733
    %1973 = vmatmul.mubr.f32.gmra.mrb[0].mxu0 %v1717
    %v1974 = vpop.f32.mrb[0].mxu0
    %v1975 = vadd.f32 %v1859, %v1974
    %v1976 = vpop.f32.mrb[0].mxu0
    %1977 = vmatprep.mubr.f32.mxu0 %v1734
    %1978 = vmatmul.mubr.f32.gmra.mrb[0].mxu0 %v1718
    %v1979 = vpop.f32.mrb[0].mxu0
    %v1980 = vadd.f32 %v1859, %v1979
    %v1981 = vpop.f32.mrb[0].mxu0
    %1982 = vmatprep.mubr.f32.mxu0 %v1735
    %1983 = vmatmul.mubr.f32.gmra.mrb[0].mxu0 %v1719
    %v1984 = vpop.f32.mrb[0].mxu0
    %v1985 = vadd.f32 %v1859, %v1984
    %v1986 = vpop.f32.mrb[0].mxu0
    %1987 = vmatprep.mubr.f32.mxu0 %v1736
    %1988 = vmatmul.mubr.f32.gmra.mrb[0].mxu0 %v1720
    %v1989 = vpop.f32.mrb[0].mxu0
    %v1990 = vadd.f32 %v1859, %v1989
    %v1991 = vpop.f32.mrb[0].mxu0
    %1992 = vmatprep.mubr.f32.mxu0 %v1737
    %1993 = vmatmul.mubr.f32.gmra.mrb[0].mxu0 %v1721
    %v1994 = vpop.f32.mrb[0].mxu0
    %v1995 = vadd.f32 %v1859, %v1994
    %v1996 = vpop.f32.mrb[0].mxu0
    %1997 = vmatprep.mubr.f32.mxu0 %v1738
    %1998 = vmatmul.mubr.f32.gmra.mrb[0].mxu0 %v1722
    %v1999 = vpop.f32.mrb[0].mxu0
    %v2000 = vadd.f32 %v1859, %v1999
    %v2001 = vpop.f32.mrb[0].mxu0
    %2002 = vmatprep.mubr.f32.mxu0 %v1739
    %2003 = vmatmul.mubr.f32.gmra.mrb[0].mxu0 %v1723
    %v2004 = vpop.f32.mrb[0].mxu0
    %v2005 = vadd.f32 %v1859, %v2004
    %v2006 = vpop.f32.mrb[0].mxu0
    %2007 = vmatprep.mubr.f32.mxu0 %v1740
    %2008 = vmatmul.mubr.f32.gmra.mrb[0].mxu0 %v1724
    %v2009 = vpop.f32.mrb[0].mxu0
    %v2010 = vadd.f32 %v1859, %v2009
    %v2011 = vpop.f32.mrb[0].mxu0
    %2012 = vmatprep.mubr.f32.mxu0 %v1741
    %2013 = vmatmul.mubr.f32.gmra.mrb[0].mxu0 %v1725
    %v2014 = vpop.f32.mrb[0].mxu0
    %v2015 = vadd.f32 %v1859, %v2014
    %v2016 = vpop.f32.mrb[0].mxu0
    %2017 = vmatprep.mubr.f32.mxu0 %v1742
    %2018 = vmatmul.mubr.f32.gmra.mrb[0].mxu0 %v1726
    %v2019 = vpop.f32.mrb[0].mxu0
    %v2020 = vadd.f32 %v1859, %v2019
    %v2021 = vpop.f32.mrb[0].mxu0
    %2022 = vmatprep.mubr.f32.mxu0 %v1743
    %2023 = vmatmul.mubr.f32.gmra.mrb[0].mxu0 %v1727
    %v2024 = vpop.f32.mrb[0].mxu0
    %v2025 = vadd.f32 %v1859, %v2024
    %v2026 = vpop.f32.mrb[0].mxu0
    %2027 = vmatprep.mubr.f32.mxu0 %v1744
    %2028 = vmatmul.mubr.f32.gmra.mrb[0].mxu0 %v1728
    %v2029 = vpop.f32.mrb[0].mxu0
    %v2030 = vadd.f32 %v1859, %v2029
    %v2031 = vpop.f32.mrb[0].mxu0
    %2032 = vmatprep.mubr.f32.mxu0 %v1745
    %2033 = vmatmul.mubr.f32.gmra.mrb[0].mxu0 %v1729
    %v2034 = vpop.f32.mrb[0].mxu0
    %v2035 = vadd.f32 %v1859, %v2034
    %v2036 = vpop.f32.mrb[0].mxu0
    %2037 = vmatprep.mubr.f32.mxu0 %v1746
    %2038 = vmatmul.mubr.f32.gmra.mrb[0].mxu0 %v1730
    %v2039 = vpop.f32.mrb[0].mxu0
    %v2040 = vadd.f32 %v1859, %v2039
    %v2041 = vpop.f32.mrb[0].mxu0
    %2042 = vmatprep.mubr.f32.mxu0 %v1747
    %2043 = vmatmul.mubr.f32.gmra.mrb[0].mxu0 %v1731
    %v2044 = vpop.f32.mrb[0].mxu0
    %v2045 = vadd.f32 %v1859, %v2044
    %v2046 = vpop.f32.mrb[0].mxu0
    %2047 = vmatprep.mubr.f32.mxu0 %v1748
    %2048 = vmatmul.mubr.f32.gmra.mrb[0].mxu0 %v1732
    %v2049 = vpop.f32.mrb[0].mxu0
    %v2050 = vadd.f32 %v1859, %v2049
    %v2051 = vpop.f32.mrb[0].mxu0
    %2052 = vdwg.mxu0
    %2053 = vmatprep.subr.mxu0 0.0
    %2054 = vmatpush1.msra.mxu0 %v1814
    %2055 = vmatprep.subr.mxu0 0.0
    %2056 = vmatpush1.msra.mxu0 %v1815
    %2057 = vmatprep.subr.mxu0 0.0
    %2058 = vmatpush1.msra.mxu0 %v1816
    %2059 = vmatprep.subr.mxu0 0.0
    %2060 = vmatpush1.msra.mxu0 %v1817
    %2061 = vmatprep.subr.mxu0 0.0
    %2062 = vmatpush1.msra.mxu0 %v1818
    %2063 = vmatprep.subr.mxu0 0.0
    %2064 = vmatpush1.msra.mxu0 %v1819
    %2065 = vmatprep.subr.mxu0 0.0
    %2066 = vmatpush1.msra.mxu0 %v1820
    %2067 = vmatprep.subr.mxu0 0.0
    %2068 = vmatpush1.msra.mxu0 %v1821
    %2069 = vmatprep.subr.mxu0 0.0
    %2070 = vmatpush1.msra.mxu0 %v1822
    %2071 = vmatprep.subr.mxu0 0.0
    %2072 = vmatpush1.msra.mxu0 %v1823
    %2073 = vmatprep.subr.mxu0 0.0
    %2074 = vmatpush1.msra.mxu0 %v1824
    %2075 = vmatprep.subr.mxu0 0.0
    %2076 = vmatpush1.msra.mxu0 %v1825
    %2077 = vmatprep.subr.mxu0 0.0
    %2078 = vmatpush1.msra.mxu0 %v1826
    %2079 = vmatprep.subr.mxu0 0.0
    %2080 = vmatpush1.msra.mxu0 %v1827
    %2081 = vmatprep.subr.mxu0 0.0
    %2082 = vmatpush1.msra.mxu0 %v1828
    %2083 = vmatprep.subr.mxu0 0.0
    %2084 = vmatpush1.msra.mxu0 %v1829
    %2085 = vmatprep.subr.mxu0 0.0
    %2086 = vmatpush1.msra.mxu0 %v1830
    %2087 = vmatprep.subr.mxu0 0.0
    %2088 = vmatpush1.msra.mxu0 %v1831
    %2089 = vmatprep.subr.mxu0 0.0
    %2090 = vmatpush1.msra.mxu0 %v1832
    %2091 = vmatprep.subr.mxu0 0.0
    %2092 = vmatpush1.msra.mxu0 %v1833
    %2093 = vmatprep.subr.mxu0 0.0
    %2094 = vmatpush1.msra.mxu0 %v1834
    %2095 = vmatprep.subr.mxu0 0.0
    %2096 = vmatpush1.msra.mxu0 %v1835
    %2097 = vmatprep.subr.mxu0 0.0
    %2098 = vmatpush1.msra.mxu0 %v1836
    %2099 = vmatprep.subr.mxu0 0.0
    %2100 = vmatpush1.msra.mxu0 %v1837
    %2101 = vmatprep.subr.mxu0 0.0
    %2102 = vmatpush1.msra.mxu0 %v1838
    %2103 = vmatprep.subr.mxu0 0.0
    %2104 = vmatpush1.msra.mxu0 %v1839
    %2105 = vmatprep.subr.mxu0 0.0
    %2106 = vmatpush1.msra.mxu0 %v1840
    %2107 = vmatprep.subr.mxu0 0.0
    %2108 = vmatpush1.msra.mxu0 %v1841
    %2109 = vmatprep.subr.mxu0 0.0
    %2110 = vmatpush1.msra.mxu0 %v1842
    %2111 = vmatprep.subr.mxu0 0.0
    %2112 = vmatpush1.msra.mxu0 %v1843
    %2113 = vmatprep.subr.mxu0 0.0
    %2114 = vmatpush1.msra.mxu0 %v1844
    %2115 = vmatprep.subr.mxu0 0.0
    %2116 = vmatpush1.msra.mxu0 %v1845
    %2117 = vmatprep.mubr.f32.mxu0 %v1765
    %2118 = vmatmul.mubr.f32.gmra.mrb[0].mxu0 %v1749
    %v2119 = vpop.f32.mrb[0].mxu0
    %v2120 = vadd.f32 %v1975, %v2119
    %v2121 = vpop.f32.mrb[0].mxu0
    %2122 = vmatprep.mubr.f32.mxu0 %v1766
    %2123 = vmatmul.mubr.f32.gmra.mrb[0].mxu0 %v1750
    %v2124 = vpop.f32.mrb[0].mxu0
    %v2125 = vadd.f32 %v1980, %v2124
    %v2126 = vpop.f32.mrb[0].mxu0
    %2127 = vmatprep.mubr.f32.mxu0 %v1767
    %2128 = vmatmul.mubr.f32.gmra.mrb[0].mxu0 %v1751
    %v2129 = vpop.f32.mrb[0].mxu0
    %v2130 = vadd.f32 %v1985, %v2129
    %v2131 = vpop.f32.mrb[0].mxu0
    %2132 = vmatprep.mubr.f32.mxu0 %v1768
    %2133 = vmatmul.mubr.f32.gmra.mrb[0].mxu0 %v1752
    %v2134 = vpop.f32.mrb[0].mxu0
    %v2135 = vadd.f32 %v1990, %v2134
    %v2136 = vpop.f32.mrb[0].mxu0
    %2137 = vmatprep.mubr.f32.mxu0 %v1769
    %2138 = vmatmul.mubr.f32.gmra.mrb[0].mxu0 %v1753
    %v2139 = vpop.f32.mrb[0].mxu0
    %v2140 = vadd.f32 %v1995, %v2139
    %v2141 = vpop.f32.mrb[0].mxu0
    %2142 = vmatprep.mubr.f32.mxu0 %v1770
    %2143 = vmatmul.mubr.f32.gmra.mrb[0].mxu0 %v1754
    %v2144 = vpop.f32.mrb[0].mxu0
    %v2145 = vadd.f32 %v2000, %v2144
    %v2146 = vpop.f32.mrb[0].mxu0
    %2147 = vmatprep.mubr.f32.mxu0 %v1771
    %2148 = vmatmul.mubr.f32.gmra.mrb[0].mxu0 %v1755
    %v2149 = vpop.f32.mrb[0].mxu0
    %v2150 = vadd.f32 %v2005, %v2149
    %v2151 = vpop.f32.mrb[0].mxu0
    %2152 = vmatprep.mubr.f32.mxu0 %v1772
    %2153 = vmatmul.mubr.f32.gmra.mrb[0].mxu0 %v1756
    %v2154 = vpop.f32.mrb[0].mxu0
    %v2155 = vadd.f32 %v2010, %v2154
    %v2156 = vpop.f32.mrb[0].mxu0
    %2157 = vmatprep.mubr.f32.mxu0 %v1773
    %2158 = vmatmul.mubr.f32.gmra.mrb[0].mxu0 %v1757
    %v2159 = vpop.f32.mrb[0].mxu0
    %v2160 = vadd.f32 %v2015, %v2159
    %v2161 = vpop.f32.mrb[0].mxu0
    %2162 = vmatprep.mubr.f32.mxu0 %v1774
    %2163 = vmatmul.mubr.f32.gmra.mrb[0].mxu0 %v1758
    %v2164 = vpop.f32.mrb[0].mxu0
    %v2165 = vadd.f32 %v2020, %v2164
    %v2166 = vpop.f32.mrb[0].mxu0
    %2167 = vmatprep.mubr.f32.mxu0 %v1775
    %2168 = vmatmul.mubr.f32.gmra.mrb[0].mxu0 %v1759
    %v2169 = vpop.f32.mrb[0].mxu0
    %v2170 = vadd.f32 %v2025, %v2169
    %v2171 = vpop.f32.mrb[0].mxu0
    %2172 = vmatprep.mubr.f32.mxu0 %v1776
    %2173 = vmatmul.mubr.f32.gmra.mrb[0].mxu0 %v1760
    %v2174 = vpop.f32.mrb[0].mxu0
    %v2175 = vadd.f32 %v2030, %v2174
    %v2176 = vpop.f32.mrb[0].mxu0
    %2177 = vmatprep.mubr.f32.mxu0 %v1777
    %2178 = vmatmul.mubr.f32.gmra.mrb[0].mxu0 %v1761
    %v2179 = vpop.f32.mrb[0].mxu0
    %v2180 = vadd.f32 %v2035, %v2179
    %v2181 = vpop.f32.mrb[0].mxu0
    %2182 = vmatprep.mubr.f32.mxu0 %v1778
    %2183 = vmatmul.mubr.f32.gmra.mrb[0].mxu0 %v1762
    %v2184 = vpop.f32.mrb[0].mxu0
    %v2185 = vadd.f32 %v2040, %v2184
    %v2186 = vpop.f32.mrb[0].mxu0
    %2187 = vmatprep.mubr.f32.mxu0 %v1779
    %2188 = vmatmul.mubr.f32.gmra.mrb[0].mxu0 %v1763
    %v2189 = vpop.f32.mrb[0].mxu0
    %v2190 = vadd.f32 %v2045, %v2189
    %v2191 = vpop.f32.mrb[0].mxu0
    %2192 = vmatprep.mubr.f32.mxu0 %v1780
    %2193 = vmatmul.mubr.f32.gmra.mrb[0].mxu0 %v1764
    %v2194 = vpop.f32.mrb[0].mxu0
    %v2195 = vadd.f32 %v2050, %v2194
    %v2196 = vpop.f32.mrb[0].mxu0
    %2197 = vdwg.mxu0
    %2198 = vmatprep.subr.mxu0 0.0
    %2199 = vmatpush1.msra.mxu0 %v1846
    %2200 = vmatprep.subr.mxu0 0.0
    %2201 = vmatpush1.msra.mxu0 %v1847
    %2202 = vmatprep.subr.mxu0 0.0
    %2203 = vmatpush1.msra.mxu0 %v1848
    %2204 = vmatprep.subr.mxu0 0.0
    %2205 = vmatpush1.msra.mxu0 %v1849
    %2206 = vmatprep.subr.mxu0 0.0
    %2207 = vmatpush1.msra.mxu0 %v1850
    %2208 = vmatprep.subr.mxu0 0.0
    %2209 = vmatpush1.msra.mxu0 %v1851
    %2210 = vmatprep.subr.mxu0 0.0
    %2211 = vmatpush1.msra.mxu0 %v1852
    %2212 = vmatprep.subr.mxu0 0.0
    %2213 = vmatpush1.msra.mxu0 %v1853
    %2214 = vmatprep.subr.mxu0 0.0
    %2215 = vmatpush1.msra.mxu0 0.0
    %2216 = vmatprep.subr.mxu0 0.0
    %2217 = vmatpush1.msra.mxu0 0.0
    %2218 = vmatprep.subr.mxu0 0.0
    %2219 = vmatpush1.msra.mxu0 0.0
    %2220 = vmatprep.subr.mxu0 0.0
    %2221 = vmatpush1.msra.mxu0 0.0
    %2222 = vmatprep.subr.mxu0 0.0
    %2223 = vmatpush1.msra.mxu0 0.0
    %2224 = vmatprep.subr.mxu0 0.0
    %2225 = vmatpush1.msra.mxu0 0.0
    %2226 = vmatprep.subr.mxu0 0.0
    %2227 = vmatpush1.msra.mxu0 0.0
    %2228 = vmatprep.subr.mxu0 0.0
    %2229 = vmatpush1.msra.mxu0 0.0
    %2230 = vmatprep.subr.mxu0 0.0
    %2231 = vmatpush1.msra.mxu0 0.0
    %2232 = vmatprep.subr.mxu0 0.0
    %2233 = vmatpush1.msra.mxu0 0.0
    %2234 = vmatprep.subr.mxu0 0.0
    %2235 = vmatpush1.msra.mxu0 0.0
    %2236 = vmatprep.subr.mxu0 0.0
    %2237 = vmatpush1.msra.mxu0 0.0
    %2238 = vmatprep.subr.mxu0 0.0
    %2239 = vmatpush1.msra.mxu0 0.0
    %2240 = vmatprep.subr.mxu0 0.0
    %2241 = vmatpush1.msra.mxu0 0.0
    %2242 = vmatprep.subr.mxu0 0.0
    %2243 = vmatpush1.msra.mxu0 0.0
    %2244 = vmatprep.subr.mxu0 0.0
    %2245 = vmatpush1.msra.mxu0 0.0
    %2246 = vmatprep.subr.mxu0 0.0
    %2247 = vmatpush1.msra.mxu0 0.0
    %2248 = vmatprep.subr.mxu0 0.0
    %2249 = vmatpush1.msra.mxu0 0.0
    %2250 = vmatprep.subr.mxu0 0.0
    %2251 = vmatpush1.msra.mxu0 0.0
    %2252 = vmatprep.subr.mxu0 0.0
    %2253 = vmatpush1.msra.mxu0 0.0
    %2254 = vmatprep.subr.mxu0 0.0
    %2255 = vmatpush1.msra.mxu0 0.0
    %2256 = vmatprep.subr.mxu0 0.0
    %2257 = vmatpush1.msra.mxu0 0.0
    %2258 = vmatprep.subr.mxu0 0.0
    %2259 = vmatpush1.msra.mxu0 0.0
    %2260 = vmatprep.subr.mxu0 0.0
    %2261 = vmatpush1.msra.mxu0 0.0
    %2262 = vmatprep.mubr.f32.mxu0 0.0
    %2263 = vmatmul.mubr.f32.gmra.mrb[0].mxu0 %v1861
    %v2264 = vpop.f32.mrb[0].mxu0
    %v2265 = vadd.f32 %v2120, %v2264
    %v2266 = vpop.f32.mrb[0].mxu0
    %2267 = vmatprep.mubr.f32.mxu0 0.0
    %2268 = vmatmul.mubr.f32.gmra.mrb[0].mxu0 %v1864
    %v2269 = vpop.f32.mrb[0].mxu0
    %v2270 = vadd.f32 %v2125, %v2269
    %v2271 = vpop.f32.mrb[0].mxu0
    %2272 = vmatprep.mubr.f32.mxu0 0.0
    %2273 = vmatmul.mubr.f32.gmra.mrb[0].mxu0 %v1867
    %v2274 = vpop.f32.mrb[0].mxu0
    %v2275 = vadd.f32 %v2130, %v2274
    %v2276 = vpop.f32.mrb[0].mxu0
    %2277 = vmatprep.mubr.f32.mxu0 0.0
    %2278 = vmatmul.mubr.f32.gmra.mrb[0].mxu0 %v1870
    %v2279 = vpop.f32.mrb[0].mxu0
    %v2280 = vadd.f32 %v2135, %v2279
    %v2281 = vpop.f32.mrb[0].mxu0
    %2282 = vmatprep.mubr.f32.mxu0 0.0
    %2283 = vmatmul.mubr.f32.gmra.mrb[0].mxu0 %v1873
    %v2284 = vpop.f32.mrb[0].mxu0
    %v2285 = vadd.f32 %v2140, %v2284
    %v2286 = vpop.f32.mrb[0].mxu0
    %2287 = vmatprep.mubr.f32.mxu0 0.0
    %2288 = vmatmul.mubr.f32.gmra.mrb[0].mxu0 %v1876
    %v2289 = vpop.f32.mrb[0].mxu0
    %v2290 = vadd.f32 %v2145, %v2289
    %v2291 = vpop.f32.mrb[0].mxu0
    %2292 = vmatprep.mubr.f32.mxu0 0.0
    %2293 = vmatmul.mubr.f32.gmra.mrb[0].mxu0 %v1879
    %v2294 = vpop.f32.mrb[0].mxu0
    %v2295 = vadd.f32 %v2150, %v2294
    %v2296 = vpop.f32.mrb[0].mxu0
    %2297 = vmatprep.mubr.f32.mxu0 0.0
    %2298 = vmatmul.mubr.f32.gmra.mrb[0].mxu0 %v1882
    %v2299 = vpop.f32.mrb[0].mxu0
    %v2300 = vadd.f32 %v2155, %v2299
    %v2301 = vpop.f32.mrb[0].mxu0
    %2302 = vmatprep.mubr.f32.mxu0 0.0
    %2303 = vmatmul.mubr.f32.gmra.mrb[0].mxu0 %v1885
    %v2304 = vpop.f32.mrb[0].mxu0
    %v2305 = vadd.f32 %v2160, %v2304
    %v2306 = vpop.f32.mrb[0].mxu0
    %2307 = vmatprep.mubr.f32.mxu0 0.0
    %2308 = vmatmul.mubr.f32.gmra.mrb[0].mxu0 %v1888
    %v2309 = vpop.f32.mrb[0].mxu0
    %v2310 = vadd.f32 %v2165, %v2309
    %v2311 = vpop.f32.mrb[0].mxu0
    %2312 = vmatprep.mubr.f32.mxu0 0.0
    %2313 = vmatmul.mubr.f32.gmra.mrb[0].mxu0 %v1891
    %v2314 = vpop.f32.mrb[0].mxu0
    %v2315 = vadd.f32 %v2170, %v2314
    %v2316 = vpop.f32.mrb[0].mxu0
    %2317 = vmatprep.mubr.f32.mxu0 0.0
    %2318 = vmatmul.mubr.f32.gmra.mrb[0].mxu0 %v1894
    %v2319 = vpop.f32.mrb[0].mxu0
    %v2320 = vadd.f32 %v2175, %v2319
    %v2321 = vpop.f32.mrb[0].mxu0
    %2322 = vmatprep.mubr.f32.mxu0 0.0
    %2323 = vmatmul.mubr.f32.gmra.mrb[0].mxu0 %v1897
    %v2324 = vpop.f32.mrb[0].mxu0
    %v2325 = vadd.f32 %v2180, %v2324
    %v2326 = vpop.f32.mrb[0].mxu0
    %2327 = vmatprep.mubr.f32.mxu0 0.0
    %2328 = vmatmul.mubr.f32.gmra.mrb[0].mxu0 %v1900
    %v2329 = vpop.f32.mrb[0].mxu0
    %v2330 = vadd.f32 %v2185, %v2329
    %v2331 = vpop.f32.mrb[0].mxu0
    %2332 = vmatprep.mubr.f32.mxu0 0.0
    %2333 = vmatmul.mubr.f32.gmra.mrb[0].mxu0 %v1903
    %v2334 = vpop.f32.mrb[0].mxu0
    %v2335 = vadd.f32 %v2190, %v2334
    %v2336 = vpop.f32.mrb[0].mxu0
    %2337 = vmatprep.mubr.f32.mxu0 0.0
    %2338 = vmatmul.mubr.f32.gmra.mrb[0].mxu0 %v1906
    %v2339 = vpop.f32.mrb[0].mxu0
    %v2340 = vadd.f32 %v2195, %v2339
    %v2341 = vpop.f32.mrb[0].mxu0
    %2342 = vdwg.mxu0
    %v2343 = vmax.f32 %v2265, 0.0
    %v2344 = vmax.f32 %v2270, 0.0
    %v2345 = vmax.f32 %v2275, 0.0
    %v2346 = vmax.f32 %v2280, 0.0
    %v2347 = vmax.f32 %v2285, 0.0
    %v2348 = vmax.f32 %v2290, 0.0
    %v2349 = vmax.f32 %v2295, 0.0
    %v2350 = vmax.f32 %v2300, 0.0
    %v2351 = vmax.f32 %v2305, 0.0
    %v2352 = vmax.f32 %v2310, 0.0
    %v2353 = vmax.f32 %v2315, 0.0
    %v2354 = vmax.f32 %v2320, 0.0
    %v2355 = vmax.f32 %v2325, 0.0
    %v2356 = vmax.f32 %v2330, 0.0
    %v2357 = vmax.f32 %v2335, 0.0
    %v2358 = vmax.f32 %v2340, 0.0
    %v2359 = vsel %vm101, %v2343, 0.0
    %v2360 = vsel %vm101, %v2344, 0.0
    %v2361 = vadd.f32 %v2359, %v2360
    %v2362 = vsel %vm101, %v2345, 0.0
    %v2363 = vadd.f32 %v2361, %v2362
    %v2364 = vsel %vm101, %v2346, 0.0
    %v2365 = vadd.f32 %v2363, %v2364
    %v2366 = vsel %vm101, %v2347, 0.0
    %v2367 = vadd.f32 %v2365, %v2366
    %v2368 = vsel %vm101, %v2348, 0.0
    %v2369 = vadd.f32 %v2367, %v2368
    %v2370 = vsel %vm101, %v2349, 0.0
    %v2371 = vadd.f32 %v2369, %v2370
    %v2372 = vsel %vm101, %v2350, 0.0
    %v2373 = vadd.f32 %v2371, %v2372
    %v2374 = vsel %vm101, %v2351, 0.0
    %v2375 = vadd.f32 %v2373, %v2374
    %v2376 = vsel %vm101, %v2352, 0.0
    %v2377 = vadd.f32 %v2375, %v2376
    %v2378 = vsel %vm101, %v2353, 0.0
    %v2379 = vadd.f32 %v2377, %v2378
    %v2380 = vsel %vm101, %v2354, 0.0
    %v2381 = vadd.f32 %v2379, %v2380
    %v2382 = vsel %vm101, %v2355, 0.0
    %v2383 = vadd.f32 %v2381, %v2382
    %v2384 = vsel %vm101, %v2356, 0.0
    %v2385 = vadd.f32 %v2383, %v2384
    %v2386 = vsel %vm101, %v2357, 0.0
    %v2387 = vadd.f32 %v2385, %v2386
    %v2388 = vsel %vm101, %v2358, 0.0
    %v2389 = vadd.f32 %v2387, %v2388
    %v2390 = vrot.slane %v2389, 4
    %v2391 = vadd.f32 %v2389, %v2390
    %v2392 = vrot.slane %v2391, 2
    %v2393 = vadd.f32 %v2391, %v2392
    %v2394 = vrot.slane %v2393, 1
    %v2395 = vadd.f32 %v2393, %v2394
    %v2396 = vmul.f32 %v2343, %v2343
    %v2397 = vmul.f32 %v2344, %v2344
    %v2398 = vmul.f32 %v2345, %v2345
    %v2399 = vmul.f32 %v2346, %v2346
    %v2400 = vmul.f32 %v2347, %v2347
    %v2401 = vmul.f32 %v2348, %v2348
    %v2402 = vmul.f32 %v2349, %v2349
    %v2403 = vmul.f32 %v2350, %v2350
    %v2404 = vmul.f32 %v2351, %v2351
    %v2405 = vmul.f32 %v2352, %v2352
    %v2406 = vmul.f32 %v2353, %v2353
    %v2407 = vmul.f32 %v2354, %v2354
    %v2408 = vmul.f32 %v2355, %v2355
    %v2409 = vmul.f32 %v2356, %v2356
    %v2410 = vmul.f32 %v2357, %v2357
    %v2411 = vmul.f32 %v2358, %v2358
    %v2412 = vsel %vm101, %v2396, 0.0
    %v2413 = vsel %vm101, %v2397, 0.0
    %v2414 = vadd.f32 %v2412, %v2413
    %v2415 = vsel %vm101, %v2398, 0.0
    %v2416 = vadd.f32 %v2414, %v2415
    %v2417 = vsel %vm101, %v2399, 0.0
    %v2418 = vadd.f32 %v2416, %v2417
    %v2419 = vsel %vm101, %v2400, 0.0
    %v2420 = vadd.f32 %v2418, %v2419
    %v2421 = vsel %vm101, %v2401, 0.0
    %v2422 = vadd.f32 %v2420, %v2421
    %v2423 = vsel %vm101, %v2402, 0.0
    %v2424 = vadd.f32 %v2422, %v2423
    %v2425 = vsel %vm101, %v2403, 0.0
    %v2426 = vadd.f32 %v2424, %v2425
    %v2427 = vsel %vm101, %v2404, 0.0
    %v2428 = vadd.f32 %v2426, %v2427
    %v2429 = vsel %vm101, %v2405, 0.0
    %v2430 = vadd.f32 %v2428, %v2429
    %v2431 = vsel %vm101, %v2406, 0.0
    %v2432 = vadd.f32 %v2430, %v2431
    %v2433 = vsel %vm101, %v2407, 0.0
    %v2434 = vadd.f32 %v2432, %v2433
    %v2435 = vsel %vm101, %v2408, 0.0
    %v2436 = vadd.f32 %v2434, %v2435
    %v2437 = vsel %vm101, %v2409, 0.0
    %v2438 = vadd.f32 %v2436, %v2437
    %v2439 = vsel %vm101, %v2410, 0.0
    %v2440 = vadd.f32 %v2438, %v2439
    %v2441 = vsel %vm101, %v2411, 0.0
    %v2442 = vadd.f32 %v2440, %v2441
    %v2443 = vrot.slane %v2442, 4
    %v2444 = vadd.f32 %v2442, %v2443
    %v2445 = vrot.slane %v2444, 2
    %v2446 = vadd.f32 %v2444, %v2445
    %v2447 = vrot.slane %v2446, 1
    %v2448 = vadd.f32 %v2446, %v2447
    %v2449 = vmul.f32 %v2395, 0.0078125
    %v2450 = vmul.f32 %v2448, 0.0078125
    %v2451 = vmul.f32 %v2449, %v2449
    %v2452 = vsub.f32 %v2450, %v2451
    %v2453 = vmax.f32 %v2452, 0.0
    %v2454 = vadd.f32 %v2453, 1e-05
    %v2455 = vrsqrt.pop %v2454
    %v2456 = vld [vmem:[%s1854 + $0x1] sm:$0x1]
    %v2457 = vmul.f32 %v2455, %v2456
    %v2458 = vld [vmem:[%s1854 + $0x2] sm:$0x1]
    %v2459 = vmul.f32 %v2449, %v2457
    %v2460 = vsub.f32 %v2458, %v2459
    %v2461 = vlaneseq
    %v2462 = vshrl.u32 %v2461, 7
    %v2463 = vsub.s32 0, %v2462
    %v2464 = vrot.slane %v2457, %v2463
    %v2465 = vmul.f32 %v2343, %v2464
    %v2466 = vmul.f32 %v2344, %v2464
    %v2467 = vmul.f32 %v2345, %v2464
    %v2468 = vmul.f32 %v2346, %v2464
    %v2469 = vmul.f32 %v2347, %v2464
    %v2470 = vmul.f32 %v2348, %v2464
    %v2471 = vmul.f32 %v2349, %v2464
    %v2472 = vmul.f32 %v2350, %v2464
    %v2473 = vmul.f32 %v2351, %v2464
    %v2474 = vmul.f32 %v2352, %v2464
    %v2475 = vmul.f32 %v2353, %v2464
    %v2476 = vmul.f32 %v2354, %v2464
    %v2477 = vmul.f32 %v2355, %v2464
    %v2478 = vmul.f32 %v2356, %v2464
    %v2479 = vmul.f32 %v2357, %v2464
    %v2480 = vmul.f32 %v2358, %v2464
    %v2481 = vlaneseq
    %v2482 = vshrl.u32 %v2481, 7
    %v2483 = vsub.s32 0, %v2482
    %v2484 = vrot.slane %v2460, %v2483
    %v2485 = vadd.f32 %v2465, %v2484
    %v2486 = vadd.f32 %v2466, %v2484
    %v2487 = vadd.f32 %v2467, %v2484
    %v2488 = vadd.f32 %v2468, %v2484
    %v2489 = vadd.f32 %v2469, %v2484
    %v2490 = vadd.f32 %v2470, %v2484
    %v2491 = vadd.f32 %v2471, %v2484
    %v2492 = vadd.f32 %v2472, %v2484
    %v2493 = vadd.f32 %v2473, %v2484
    %v2494 = vadd.f32 %v2474, %v2484
    %v2495 = vadd.f32 %v2475, %v2484
    %v2496 = vadd.f32 %v2476, %v2484
    %v2497 = vadd.f32 %v2477, %v2484
    %v2498 = vadd.f32 %v2478, %v2484
    %v2499 = vadd.f32 %v2479, %v2484
    %v2500 = vadd.f32 %v2480, %v2484
    %2501 = vst.msk [vmem:[%s100 + $0x1] sm:$0xff] %vm101, %v2485
    %2502 = vst.msk [vmem:[%s100 + $0x11] sm:$0xff] %vm101, %v2486
    %2503 = vst.msk [vmem:[%s100 + $0x21] sm:$0xff] %vm101, %v2487
    %2504 = vst.msk [vmem:[%s100 + $0x31] sm:$0xff] %vm101, %v2488
    %2505 = vst.msk [vmem:[%s100 + $0x41] sm:$0xff] %vm101, %v2489
    %2506 = vst.msk [vmem:[%s100 + $0x51] sm:$0xff] %vm101, %v2490
    %2507 = vst.msk [vmem:[%s100 + $0x61] sm:$0xff] %vm101, %v2491
    %2508 = vst.msk [vmem:[%s100 + $0x71] sm:$0xff] %vm101, %v2492
    %2509 = vst.msk [vmem:[%s100 + $0xa1] sm:$0xff] %vm101, %v2493
    %2510 = vst.msk [vmem:[%s100 + $0xb1] sm:$0xff] %vm101, %v2494
    %2511 = vst.msk [vmem:[%s100 + $0xc1] sm:$0xff] %vm101, %v2495
    %2512 = vst.msk [vmem:[%s100 + $0xd1] sm:$0xff] %vm101, %v2496
    %2513 = vst.msk [vmem:[%s100 + $0xe1] sm:$0xff] %vm101, %v2497
    %2514 = vst.msk [vmem:[%s100 + $0xf1] sm:$0xff] %vm101, %v2498
    %2515 = vst.msk [vmem:[%s100 + $0x101] sm:$0xff] %vm101, %v2499
    %2516 = vst.msk [vmem:[%s100 + $0x111] sm:$0xff] %vm101, %v2500
    %v2517 = vld [vmem:[#allocation2] sm:$0xff]
    %v2518 = vld [vmem:[#allocation2 + $0x10] sm:$0xff]
    %v2519 = vld [vmem:[#allocation2 + $0x20] sm:$0xff]
    %v2520 = vld [vmem:[#allocation2 + $0x30] sm:$0xff]
    %v2521 = vld [vmem:[#allocation2 + $0x40] sm:$0xff]
    %v2522 = vld [vmem:[#allocation2 + $0x50] sm:$0xff]
    %v2523 = vld [vmem:[#allocation2 + $0x60] sm:$0xff]
    %v2524 = vld [vmem:[#allocation2 + $0x70] sm:$0xff]
    %v2525 = vld [vmem:[#allocation2 + $0xa0] sm:$0xff]
    %v2526 = vld [vmem:[#allocation2 + $0xb0] sm:$0xff]
    %v2527 = vld [vmem:[#allocation2 + $0xc0] sm:$0xff]
    %v2528 = vld [vmem:[#allocation2 + $0xd0] sm:$0xff]
    %v2529 = vld [vmem:[#allocation2 + $0xe0] sm:$0xff]
    %v2530 = vld [vmem:[#allocation2 + $0xf0] sm:$0xff]
    %v2531 = vld [vmem:[#allocation2 + $0x100] sm:$0xff]
    %v2532 = vld [vmem:[#allocation2 + $0x110] sm:$0xff]
    %v2533 = vld [vmem:[#allocation2 + $0x1] sm:$0xff]
    %v2534 = vld [vmem:[#allocation2 + $0x11] sm:$0xff]
    %v2535 = vld [vmem:[#allocation2 + $0x21] sm:$0xff]
    %v2536 = vld [vmem:[#allocation2 + $0x31] sm:$0xff]
    %v2537 = vld [vmem:[#allocation2 + $0x41] sm:$0xff]
    %v2538 = vld [vmem:[#allocation2 + $0x51] sm:$0xff]
    %v2539 = vld [vmem:[#allocation2 + $0x61] sm:$0xff]
    %v2540 = vld [vmem:[#allocation2 + $0x71] sm:$0xff]
    %v2541 = vld [vmem:[#allocation2 + $0xa1] sm:$0xff]
    %v2542 = vld [vmem:[#allocation2 + $0xb1] sm:$0xff]
    %v2543 = vld [vmem:[#allocation2 + $0xc1] sm:$0xff]
    %v2544 = vld [vmem:[#allocation2 + $0xd1] sm:$0xff]
    %v2545 = vld [vmem:[#allocation2 + $0xe1] sm:$0xff]
    %v2546 = vld [vmem:[#allocation2 + $0xf1] sm:$0xff]
    %v2547 = vld [vmem:[#allocation2 + $0x101] sm:$0xff]
    %v2548 = vld [vmem:[#allocation2 + $0x111] sm:$0xff]
    %v2549 = vld [vmem:[#allocation2 + $0x2] sm:$0xff]
    %v2550 = vld [vmem:[#allocation2 + $0x12] sm:$0xff]
    %v2551 = vld [vmem:[#allocation2 + $0x22] sm:$0xff]
    %v2552 = vld [vmem:[#allocation2 + $0x32] sm:$0xff]
    %v2553 = vld [vmem:[#allocation2 + $0x42] sm:$0xff]
    %v2554 = vld [vmem:[#allocation2 + $0x52] sm:$0xff]
    %v2555 = vld [vmem:[#allocation2 + $0x62] sm:$0xff]
    %v2556 = vld [vmem:[#allocation2 + $0x72] sm:$0xff]
    %v2557 = vld [vmem:[#allocation2 + $0xa2] sm:$0xff]
    %v2558 = vld [vmem:[#allocation2 + $0xb2] sm:$0xff]
    %v2559 = vld [vmem:[#allocation2 + $0xc2] sm:$0xff]
    %v2560 = vld [vmem:[#allocation2 + $0xd2] sm:$0xff]
    %v2561 = vld [vmem:[#allocation2 + $0xe2] sm:$0xff]
    %v2562 = vld [vmem:[#allocation2 + $0xf2] sm:$0xff]
    %v2563 = vld [vmem:[#allocation2 + $0x102] sm:$0xff]
    %v2564 = vld [vmem:[#allocation2 + $0x112] sm:$0xff]
    %v2565 = vld [vmem:[%s100] sm:$0xff]
    %v2566 = vld [vmem:[%s100 + $0x10] sm:$0xff]
    %v2567 = vld [vmem:[%s100 + $0x20] sm:$0xff]
    %v2568 = vld [vmem:[%s100 + $0x30] sm:$0xff]
    %v2569 = vld [vmem:[%s100 + $0x40] sm:$0xff]
    %v2570 = vld [vmem:[%s100 + $0x50] sm:$0xff]
    %v2571 = vld [vmem:[%s100 + $0x60] sm:$0xff]
    %v2572 = vld [vmem:[%s100 + $0x70] sm:$0xff]
    %v2573 = vld [vmem:[%s100 + $0xa0] sm:$0xff]
    %v2574 = vld [vmem:[%s100 + $0xb0] sm:$0xff]
    %v2575 = vld [vmem:[%s100 + $0xc0] sm:$0xff]
    %v2576 = vld [vmem:[%s100 + $0xd0] sm:$0xff]
    %v2577 = vld [vmem:[%s100 + $0xe0] sm:$0xff]
    %v2578 = vld [vmem:[%s100 + $0xf0] sm:$0xff]
    %v2579 = vld [vmem:[%s100 + $0x100] sm:$0xff]
    %v2580 = vld [vmem:[%s100 + $0x110] sm:$0xff]
    %v2581 = vld [vmem:[%s100 + $0x1] sm:$0xff]
    %v2582 = vld [vmem:[%s100 + $0x11] sm:$0xff]
    %v2583 = vld [vmem:[%s100 + $0x21] sm:$0xff]
    %v2584 = vld [vmem:[%s100 + $0x31] sm:$0xff]
    %v2585 = vld [vmem:[%s100 + $0x41] sm:$0xff]
    %v2586 = vld [vmem:[%s100 + $0x51] sm:$0xff]
    %v2587 = vld [vmem:[%s100 + $0x61] sm:$0xff]
    %v2588 = vld [vmem:[%s100 + $0x71] sm:$0xff]
    %v2589 = vld [vmem:[%s100 + $0xa1] sm:$0xff]
    %v2590 = vld [vmem:[%s100 + $0xb1] sm:$0xff]
    %v2591 = vld [vmem:[%s100 + $0xc1] sm:$0xff]
    %v2592 = vld [vmem:[%s100 + $0xd1] sm:$0xff]
    %v2593 = vld [vmem:[%s100 + $0xe1] sm:$0xff]
    %v2594 = vld [vmem:[%s100 + $0xf1] sm:$0xff]
    %v2595 = vld [vmem:[%s100 + $0x101] sm:$0xff]
    %v2596 = vld [vmem:[%s100 + $0x111] sm:$0xff]
    %v2597 = vld [vmem:[%s100 + $0x2] sm:$0xff]
    %v2598 = vld [vmem:[%s100 + $0x12] sm:$0xff]
    %v2599 = vld [vmem:[%s100 + $0x22] sm:$0xff]
    %v2600 = vld [vmem:[%s100 + $0x32] sm:$0xff]
    %v2601 = vld [vmem:[%s100 + $0x42] sm:$0xff]
    %v2602 = vld [vmem:[%s100 + $0x52] sm:$0xff]
    %v2603 = vld [vmem:[%s100 + $0x62] sm:$0xff]
    %v2604 = vld [vmem:[%s100 + $0x72] sm:$0xff]
    %v2605 = vld [vmem:[%s100 + $0xa2] sm:$0xff]
    %v2606 = vld [vmem:[%s100 + $0xb2] sm:$0xff]
    %v2607 = vld [vmem:[%s100 + $0xc2] sm:$0xff]
    %v2608 = vld [vmem:[%s100 + $0xd2] sm:$0xff]
    %v2609 = vld [vmem:[%s100 + $0xe2] sm:$0xff]
    %v2610 = vld [vmem:[%s100 + $0xf2] sm:$0xff]
    %v2611 = vld [vmem:[%s100 + $0x102] sm:$0xff]
    %v2612 = vld [vmem:[%s100 + $0x112] sm:$0xff]
    %v2613 = vld [vmem:[%s214] sm:$0xff]
    %v2614 = vld [vmem:[%s214 + $0x10] sm:$0xff]
    %v2615 = vld [vmem:[%s214 + $0x20] sm:$0xff]
    %v2616 = vld [vmem:[%s214 + $0x30] sm:$0xff]
    %v2617 = vld [vmem:[%s214 + $0x40] sm:$0xff]
    %v2618 = vld [vmem:[%s214 + $0x50] sm:$0xff]
    %v2619 = vld [vmem:[%s214 + $0x60] sm:$0xff]
    %v2620 = vld [vmem:[%s214 + $0x70] sm:$0xff]
    %v2621 = vld [vmem:[%s214 + $0xa0] sm:$0xff]
    %v2622 = vld [vmem:[%s214 + $0xb0] sm:$0xff]
    %v2623 = vld [vmem:[%s214 + $0xc0] sm:$0xff]
    %v2624 = vld [vmem:[%s214 + $0xd0] sm:$0xff]
    %v2625 = vld [vmem:[%s214 + $0xe0] sm:$0xff]
    %v2626 = vld [vmem:[%s214 + $0xf0] sm:$0xff]
    %v2627 = vld [vmem:[%s214 + $0x100] sm:$0xff]
    %v2628 = vld [vmem:[%s214 + $0x110] sm:$0xff]
    %v2629 = vld [vmem:[%s214 + $0x1] sm:$0xff]
    %v2630 = vld [vmem:[%s214 + $0x11] sm:$0xff]
    %v2631 = vld [vmem:[%s214 + $0x21] sm:$0xff]
    %v2632 = vld [vmem:[%s214 + $0x31] sm:$0xff]
    %v2633 = vld [vmem:[%s214 + $0x41] sm:$0xff]
    %v2634 = vld [vmem:[%s214 + $0x51] sm:$0xff]
    %v2635 = vld [vmem:[%s214 + $0x61] sm:$0xff]
    %v2636 = vld [vmem:[%s214 + $0x71] sm:$0xff]
    %v2637 = vld [vmem:[%s214 + $0xa1] sm:$0xff]
    %v2638 = vld [vmem:[%s214 + $0xb1] sm:$0xff]
    %v2639 = vld [vmem:[%s214 + $0xc1] sm:$0xff]
    %v2640 = vld [vmem:[%s214 + $0xd1] sm:$0xff]
    %v2641 = vld [vmem:[%s214 + $0xe1] sm:$0xff]
    %v2642 = vld [vmem:[%s214 + $0xf1] sm:$0xff]
    %v2643 = vld [vmem:[%s214 + $0x101] sm:$0xff]
    %v2644 = vld [vmem:[%s214 + $0x111] sm:$0xff]
    %v2645 = vld [vmem:[%s214 + $0x2] sm:$0xff]
    %v2646 = vld [vmem:[%s214 + $0x12] sm:$0xff]
    %v2647 = vld [vmem:[%s214 + $0x22] sm:$0xff]
    %v2648 = vld [vmem:[%s214 + $0x32] sm:$0xff]
    %v2649 = vld [vmem:[%s214 + $0x42] sm:$0xff]
    %v2650 = vld [vmem:[%s214 + $0x52] sm:$0xff]
    %v2651 = vld [vmem:[%s214 + $0x62] sm:$0xff]
    %v2652 = vld [vmem:[%s214 + $0x72] sm:$0xff]
    %v2653 = vld [vmem:[%s214 + $0xa2] sm:$0xff]
    %v2654 = vld [vmem:[%s214 + $0xb2] sm:$0xff]
    %v2655 = vld [vmem:[%s214 + $0xc2] sm:$0xff]
    %v2656 = vld [vmem:[%s214 + $0xd2] sm:$0xff]
    %v2657 = vld [vmem:[%s214 + $0xe2] sm:$0xff]
    %v2658 = vld [vmem:[%s214 + $0xf2] sm:$0xff]
    %v2659 = vld [vmem:[%s214 + $0x102] sm:$0xff]
    %v2660 = vld [vmem:[%s214 + $0x112] sm:$0xff]
    %2677 = vrot.lane.b32.xlu0 %v2533, 64
    %v2678 = vpop.permute.xlu0 %2677
    %2679 = vrot.lane.b32.xlu0 %v2534, 64
    %v2680 = vpop.permute.xlu0 %2679
    %2681 = vrot.lane.b32.xlu0 %v2535, 64
    %v2682 = vpop.permute.xlu0 %2681
    %2683 = vrot.lane.b32.xlu0 %v2536, 64
    %v2684 = vpop.permute.xlu0 %2683
    %2685 = vrot.lane.b32.xlu0 %v2537, 64
    %v2686 = vpop.permute.xlu0 %2685
    %2687 = vrot.lane.b32.xlu0 %v2538, 64
    %v2688 = vpop.permute.xlu0 %2687
    %2689 = vrot.lane.b32.xlu0 %v2539, 64
    %v2690 = vpop.permute.xlu0 %2689
    %2691 = vrot.lane.b32.xlu0 %v2540, 64
    %v2692 = vpop.permute.xlu0 %2691
    %2693 = vrot.lane.b32.xlu0 %v2541, 64
    %v2694 = vpop.permute.xlu0 %2693
    %2695 = vrot.lane.b32.xlu0 %v2542, 64
    %v2696 = vpop.permute.xlu0 %2695
    %2697 = vrot.lane.b32.xlu0 %v2543, 64
    %v2698 = vpop.permute.xlu0 %2697
    %2699 = vrot.lane.b32.xlu0 %v2544, 64
    %v2700 = vpop.permute.xlu0 %2699
    %2701 = vrot.lane.b32.xlu0 %v2545, 64
    %v2702 = vpop.permute.xlu0 %2701
    %2703 = vrot.lane.b32.xlu0 %v2546, 64
    %v2704 = vpop.permute.xlu0 %2703
    %2705 = vrot.lane.b32.xlu0 %v2547, 64
    %v2706 = vpop.permute.xlu0 %2705
    %2707 = vrot.lane.b32.xlu0 %v2548, 64
    %v2708 = vpop.permute.xlu0 %2707
    %2741 = vrot.lane.b32.xlu0 %v2565, 64
    %v2742 = vpop.permute.xlu0 %2741
    %2743 = vrot.lane.b32.xlu0 %v2566, 64
    %v2744 = vpop.permute.xlu0 %2743
    %2745 = vrot.lane.b32.xlu0 %v2567, 64
    %v2746 = vpop.permute.xlu0 %2745
    %2747 = vrot.lane.b32.xlu0 %v2568, 64
    %v2748 = vpop.permute.xlu0 %2747
    %2749 = vrot.lane.b32.xlu0 %v2569, 64
    %v2750 = vpop.permute.xlu0 %2749
    %2751 = vrot.lane.b32.xlu0 %v2570, 64
    %v2752 = vpop.permute.xlu0 %2751
    %2753 = vrot.lane.b32.xlu0 %v2571, 64
    %v2754 = vpop.permute.xlu0 %2753
    %2755 = vrot.lane.b32.xlu0 %v2572, 64
    %v2756 = vpop.permute.xlu0 %2755
    %2757 = vrot.lane.b32.xlu0 %v2573, 64
    %v2758 = vpop.permute.xlu0 %2757
    %2759 = vrot.lane.b32.xlu0 %v2574, 64
    %v2760 = vpop.permute.xlu0 %2759
    %2761 = vrot.lane.b32.xlu0 %v2575, 64
    %v2762 = vpop.permute.xlu0 %2761
    %2763 = vrot.lane.b32.xlu0 %v2576, 64
    %v2764 = vpop.permute.xlu0 %2763
    %2765 = vrot.lane.b32.xlu0 %v2577, 64
    %v2766 = vpop.permute.xlu0 %2765
    %2767 = vrot.lane.b32.xlu0 %v2578, 64
    %v2768 = vpop.permute.xlu0 %2767
    %2769 = vrot.lane.b32.xlu0 %v2579, 64
    %v2770 = vpop.permute.xlu0 %2769
    %2771 = vrot.lane.b32.xlu0 %v2580, 64
    %v2772 = vpop.permute.xlu0 %2771
    %2805 = vrot.lane.b32.xlu0 %v2597, 64
    %v2806 = vpop.permute.xlu0 %2805
    %2807 = vrot.lane.b32.xlu0 %v2598, 64
    %v2808 = vpop.permute.xlu0 %2807
    %2809 = vrot.lane.b32.xlu0 %v2599, 64
    %v2810 = vpop.permute.xlu0 %2809
    %2811 = vrot.lane.b32.xlu0 %v2600, 64
    %v2812 = vpop.permute.xlu0 %2811
    %2813 = vrot.lane.b32.xlu0 %v2601, 64
    %v2814 = vpop.permute.xlu0 %2813
    %2815 = vrot.lane.b32.xlu0 %v2602, 64
    %v2816 = vpop.permute.xlu0 %2815
    %2817 = vrot.lane.b32.xlu0 %v2603, 64
    %v2818 = vpop.permute.xlu0 %2817
    %2819 = vrot.lane.b32.xlu0 %v2604, 64
    %v2820 = vpop.permute.xlu0 %2819
    %2821 = vrot.lane.b32.xlu0 %v2605, 64
    %v2822 = vpop.permute.xlu0 %2821
    %2823 = vrot.lane.b32.xlu0 %v2606, 64
    %v2824 = vpop.permute.xlu0 %2823
    %2825 = vrot.lane.b32.xlu0 %v2607, 64
    %v2826 = vpop.permute.xlu0 %2825
    %2827 = vrot.lane.b32.xlu0 %v2608, 64
    %v2828 = vpop.permute.xlu0 %2827
    %2829 = vrot.lane.b32.xlu0 %v2609, 64
    %v2830 = vpop.permute.xlu0 %2829
    %2831 = vrot.lane.b32.xlu0 %v2610, 64
    %v2832 = vpop.permute.xlu0 %2831
    %2833 = vrot.lane.b32.xlu0 %v2611, 64
    %v2834 = vpop.permute.xlu0 %2833
    %2835 = vrot.lane.b32.xlu0 %v2612, 64
    %v2836 = vpop.permute.xlu0 %2835
    %2869 = vrot.lane.b32.xlu0 %v2629, 64
    %v2870 = vpop.permute.xlu0 %2869
    %2871 = vrot.lane.b32.xlu0 %v2630, 64
    %v2872 = vpop.permute.xlu0 %2871
    %2873 = vrot.lane.b32.xlu0 %v2631, 64
    %v2874 = vpop.permute.xlu0 %2873
    %2875 = vrot.lane.b32.xlu0 %v2632, 64
    %v2876 = vpop.permute.xlu0 %2875
    %2877 = vrot.lane.b32.xlu0 %v2633, 64
    %v2878 = vpop.permute.xlu0 %2877
    %2879 = vrot.lane.b32.xlu0 %v2634, 64
    %v2880 = vpop.permute.xlu0 %2879
    %2881 = vrot.lane.b32.xlu0 %v2635, 64
    %v2882 = vpop.permute.xlu0 %2881
    %2883 = vrot.lane.b32.xlu0 %v2636, 64
    %v2884 = vpop.permute.xlu0 %2883
    %2885 = vrot.lane.b32.xlu0 %v2637, 64
    %v2886 = vpop.permute.xlu0 %2885
    %2887 = vrot.lane.b32.xlu0 %v2638, 64
    %v2888 = vpop.permute.xlu0 %2887
    %2889 = vrot.lane.b32.xlu0 %v2639, 64
    %v2890 = vpop.permute.xlu0 %2889
    %2891 = vrot.lane.b32.xlu0 %v2640, 64
    %v2892 = vpop.permute.xlu0 %2891
    %2893 = vrot.lane.b32.xlu0 %v2641, 64
    %v2894 = vpop.permute.xlu0 %2893
    %2895 = vrot.lane.b32.xlu0 %v2642, 64
    %v2896 = vpop.permute.xlu0 %2895
    %2897 = vrot.lane.b32.xlu0 %v2643, 64
    %v2898 = vpop.permute.xlu0 %2897
    %2899 = vrot.lane.b32.xlu0 %v2644, 64
    %v2900 = vpop.permute.xlu0 %2899
    %v2917 = vsel %vm42, %v2517, %v2678
    %v2918 = vsel %vm42, %v2518, %v2680
    %v2919 = vsel %vm42, %v2519, %v2682
    %v2920 = vsel %vm42, %v2520, %v2684
    %v2921 = vsel %vm42, %v2521, %v2686
    %v2922 = vsel %vm42, %v2522, %v2688
    %v2923 = vsel %vm42, %v2523, %v2690
    %v2924 = vsel %vm42, %v2524, %v2692
    %v2925 = vsel %vm42, %v2525, %v2694
    %v2926 = vsel %vm42, %v2526, %v2696
    %v2927 = vsel %vm42, %v2527, %v2698
    %v2928 = vsel %vm42, %v2528, %v2700
    %v2929 = vsel %vm42, %v2529, %v2702
    %v2930 = vsel %vm42, %v2530, %v2704
    %v2931 = vsel %vm42, %v2531, %v2706
    %v2932 = vsel %vm42, %v2532, %v2708
    %v2933 = vsel %vm42, %v2549, %v2742
    %v2934 = vsel %vm42, %v2550, %v2744
    %v2935 = vsel %vm42, %v2551, %v2746
    %v2936 = vsel %vm42, %v2552, %v2748
    %v2937 = vsel %vm42, %v2553, %v2750
    %v2938 = vsel %vm42, %v2554, %v2752
    %v2939 = vsel %vm42, %v2555, %v2754
    %v2940 = vsel %vm42, %v2556, %v2756
    %v2941 = vsel %vm42, %v2557, %v2758
    %v2942 = vsel %vm42, %v2558, %v2760
    %v2943 = vsel %vm42, %v2559, %v2762
    %v2944 = vsel %vm42, %v2560, %v2764
    %v2945 = vsel %vm42, %v2561, %v2766
    %v2946 = vsel %vm42, %v2562, %v2768
    %v2947 = vsel %vm42, %v2563, %v2770
    %v2948 = vsel %vm42, %v2564, %v2772
    %v2949 = vsel %vm42, %v2581, %v2806
    %v2950 = vsel %vm42, %v2582, %v2808
    %v2951 = vsel %vm42, %v2583, %v2810
    %v2952 = vsel %vm42, %v2584, %v2812
    %v2953 = vsel %vm42, %v2585, %v2814
    %v2954 = vsel %vm42, %v2586, %v2816
    %v2955 = vsel %vm42, %v2587, %v2818
    %v2956 = vsel %vm42, %v2588, %v2820
    %v2957 = vsel %vm42, %v2589, %v2822
    %v2958 = vsel %vm42, %v2590, %v2824
    %v2959 = vsel %vm42, %v2591, %v2826
    %v2960 = vsel %vm42, %v2592, %v2828
    %v2961 = vsel %vm42, %v2593, %v2830
    %v2962 = vsel %vm42, %v2594, %v2832
    %v2963 = vsel %vm42, %v2595, %v2834
    %v2964 = vsel %vm42, %v2596, %v2836
    %v2965 = vsel %vm42, %v2613, %v2870
    %v2966 = vsel %vm42, %v2614, %v2872
    %v2967 = vsel %vm42, %v2615, %v2874
    %v2968 = vsel %vm42, %v2616, %v2876
    %v2969 = vsel %vm42, %v2617, %v2878
    %v2970 = vsel %vm42, %v2618, %v2880
    %v2971 = vsel %vm42, %v2619, %v2882
    %v2972 = vsel %vm42, %v2620, %v2884
    %v2973 = vsel %vm42, %v2621, %v2886
    %v2974 = vsel %vm42, %v2622, %v2888
    %v2975 = vsel %vm42, %v2623, %v2890
    %v2976 = vsel %vm42, %v2624, %v2892
    %v2977 = vsel %vm42, %v2625, %v2894
    %v2978 = vsel %vm42, %v2626, %v2896
    %v2979 = vsel %vm42, %v2627, %v2898
    %v2980 = vsel %vm42, %v2628, %v2900
    %s2981 = scalar_lea.vmem [#allocation6], 1152
    %v2982 = vld [vmem:[%s2981] sm:$0xff]
    %v2983 = vld [vmem:[%s2981 + $0x8] sm:$0xff]
    %v2984 = vld [vmem:[%s2981 + $0x10] sm:$0xff]
    %v2985 = vld [vmem:[%s2981 + $0x18] sm:$0xff]
    %v2986 = vld [vmem:[%s2981 + $0x20] sm:$0xff]
    %v2987 = vld [vmem:[%s2981 + $0x28] sm:$0xff]
    %v2988 = vld [vmem:[%s2981 + $0x30] sm:$0xff]
    %v2989 = vld [vmem:[%s2981 + $0x38] sm:$0xff]
    %v2990 = vld [vmem:[%s2981 + $0x40] sm:$0xff]
    %v2991 = vld [vmem:[%s2981 + $0x48] sm:$0xff]
    %v2992 = vld [vmem:[%s2981 + $0x50] sm:$0xff]
    %v2993 = vld [vmem:[%s2981 + $0x58] sm:$0xff]
    %v2994 = vld [vmem:[%s2981 + $0x60] sm:$0xff]
    %v2995 = vld [vmem:[%s2981 + $0x68] sm:$0xff]
    %v2996 = vld [vmem:[%s2981 + $0x70] sm:$0xff]
    %v2997 = vld [vmem:[%s2981 + $0x78] sm:$0xff]
    %v2998 = vld [vmem:[%s2981 + $0x80] sm:$0xff]
    %v2999 = vld [vmem:[%s2981 + $0x88] sm:$0xff]
    %v3000 = vld [vmem:[%s2981 + $0x90] sm:$0xff]
    %v3001 = vld [vmem:[%s2981 + $0x98] sm:$0xff]
    %v3002 = vld [vmem:[%s2981 + $0xa0] sm:$0xff]
    %v3003 = vld [vmem:[%s2981 + $0xa8] sm:$0xff]
    %v3004 = vld [vmem:[%s2981 + $0xb0] sm:$0xff]
    %v3005 = vld [vmem:[%s2981 + $0xb8] sm:$0xff]
    %v3006 = vld [vmem:[%s2981 + $0xc0] sm:$0xff]
    %v3007 = vld [vmem:[%s2981 + $0xc8] sm:$0xff]
    %v3008 = vld [vmem:[%s2981 + $0xd0] sm:$0xff]
    %v3009 = vld [vmem:[%s2981 + $0xd8] sm:$0xff]
    %v3010 = vld [vmem:[%s2981 + $0xe0] sm:$0xff]
    %v3011 = vld [vmem:[%s2981 + $0xe8] sm:$0xff]
    %v3012 = vld [vmem:[%s2981 + $0xf0] sm:$0xff]
    %v3013 = vld [vmem:[%s2981 + $0xf8] sm:$0xff]
    %v3014 = vld [vmem:[%s2981 + $0x100] sm:$0xff]
    %v3015 = vld [vmem:[%s2981 + $0x108] sm:$0xff]
    %v3016 = vld [vmem:[%s2981 + $0x110] sm:$0xff]
    %v3017 = vld [vmem:[%s2981 + $0x118] sm:$0xff]
    %v3018 = vld [vmem:[%s2981 + $0x120] sm:$0xff]
    %v3019 = vld [vmem:[%s2981 + $0x128] sm:$0xff]
    %v3020 = vld [vmem:[%s2981 + $0x130] sm:$0xff]
    %v3021 = vld [vmem:[%s2981 + $0x138] sm:$0xff]
    %v3022 = vld [vmem:[%s2981 + $0x140] sm:$0xff]
    %v3023 = vld [vmem:[%s2981 + $0x148] sm:$0xff]
    %v3024 = vld [vmem:[%s2981 + $0x150] sm:$0xff]
    %v3025 = vld [vmem:[%s2981 + $0x158] sm:$0xff]
    %v3026 = vld [vmem:[%s2981 + $0x160] sm:$0xff]
    %v3027 = vld [vmem:[%s2981 + $0x168] sm:$0xff]
    %v3028 = vld [vmem:[%s2981 + $0x170] sm:$0xff]
    %v3029 = vld [vmem:[%s2981 + $0x178] sm:$0xff]
    %v3030 = vld [vmem:[%s2981 + $0x180] sm:$0xff]
    %v3031 = vld [vmem:[%s2981 + $0x188] sm:$0xff]
    %v3032 = vld [vmem:[%s2981 + $0x190] sm:$0xff]
    %v3033 = vld [vmem:[%s2981 + $0x198] sm:$0xff]
    %v3034 = vld [vmem:[%s2981 + $0x1a0] sm:$0xff]
    %v3035 = vld [vmem:[%s2981 + $0x1a8] sm:$0xff]
    %v3036 = vld [vmem:[%s2981 + $0x1b0] sm:$0xff]
    %v3037 = vld [vmem:[%s2981 + $0x1b8] sm:$0xff]
    %v3038 = vld [vmem:[%s2981 + $0x1c0] sm:$0xff]
    %v3039 = vld [vmem:[%s2981 + $0x1c8] sm:$0xff]
    %v3040 = vld [vmem:[%s2981 + $0x1d0] sm:$0xff]
    %v3041 = vld [vmem:[%s2981 + $0x1d8] sm:$0xff]
    %v3042 = vld [vmem:[%s2981 + $0x1e0] sm:$0xff]
    %v3043 = vld [vmem:[%s2981 + $0x1e8] sm:$0xff]
    %v3044 = vld [vmem:[%s2981 + $0x1f0] sm:$0xff]
    %v3045 = vld [vmem:[%s2981 + $0x1f8] sm:$0xff]
    %v3046 = vld [vmem:[%s2981 + $0x200] sm:$0xff]
    %v3047 = vld [vmem:[%s2981 + $0x208] sm:$0xff]
    %v3048 = vld [vmem:[%s2981 + $0x210] sm:$0xff]
    %v3049 = vld [vmem:[%s2981 + $0x218] sm:$0xff]
    %v3050 = vld [vmem:[%s2981 + $0x220] sm:$0xff]
    %v3051 = vld [vmem:[%s2981 + $0x228] sm:$0xff]
    %v3052 = vld [vmem:[%s2981 + $0x230] sm:$0xff]
    %v3053 = vld [vmem:[%s2981 + $0x238] sm:$0xff]
    %s3054 = scalar_lea.vmem %s2, 8
    %v3055 = vld [vmem:[%s3054] sm:$0x1]
    %v3056 = vlaneseq
    %v3057 = vshrl.u32 %v3056, 7
    %v3058 = vsub.s32 0, %v3057
    %v3059 = vrot.slane %v3055, %v3058
    %v3061 = vsel %vm42, %v2645, 0
    %v3064 = vsel %vm42, %v2646, 0
    %v3067 = vsel %vm42, %v2647, 0
    %v3070 = vsel %vm42, %v2648, 0
    %v3073 = vsel %vm42, %v2649, 0
    %v3076 = vsel %vm42, %v2650, 0
    %v3079 = vsel %vm42, %v2651, 0
    %v3082 = vsel %vm42, %v2652, 0
    %v3085 = vsel %vm42, %v2653, 0
    %v3088 = vsel %vm42, %v2654, 0
    %v3091 = vsel %vm42, %v2655, 0
    %v3094 = vsel %vm42, %v2656, 0
    %v3097 = vsel %vm42, %v2657, 0
    %v3100 = vsel %vm42, %v2658, 0
    %v3103 = vsel %vm42, %v2659, 0
    %v3106 = vsel %vm42, %v2660, 0
    %3108 = vmatprep.subr.mxu0 0.0
    %3109 = vmatpush1.msra.mxu0 %v2982
    %3110 = vmatprep.subr.mxu0 0.0
    %3111 = vmatpush1.msra.mxu0 %v2983
    %3112 = vmatprep.subr.mxu0 0.0
    %3113 = vmatpush1.msra.mxu0 %v2984
    %3114 = vmatprep.subr.mxu0 0.0
    %3115 = vmatpush1.msra.mxu0 %v2985
    %3116 = vmatprep.subr.mxu0 0.0
    %3117 = vmatpush1.msra.mxu0 %v2986
    %3118 = vmatprep.subr.mxu0 0.0
    %3119 = vmatpush1.msra.mxu0 %v2987
    %3120 = vmatprep.subr.mxu0 0.0
    %3121 = vmatpush1.msra.mxu0 %v2988
    %3122 = vmatprep.subr.mxu0 0.0
    %3123 = vmatpush1.msra.mxu0 %v2989
    %3124 = vmatprep.subr.mxu0 0.0
    %3125 = vmatpush1.msra.mxu0 %v2990
    %3126 = vmatprep.subr.mxu0 0.0
    %3127 = vmatpush1.msra.mxu0 %v2991
    %3128 = vmatprep.subr.mxu0 0.0
    %3129 = vmatpush1.msra.mxu0 %v2992
    %3130 = vmatprep.subr.mxu0 0.0
    %3131 = vmatpush1.msra.mxu0 %v2993
    %3132 = vmatprep.subr.mxu0 0.0
    %3133 = vmatpush1.msra.mxu0 %v2994
    %3134 = vmatprep.subr.mxu0 0.0
    %3135 = vmatpush1.msra.mxu0 %v2995
    %3136 = vmatprep.subr.mxu0 0.0
    %3137 = vmatpush1.msra.mxu0 %v2996
    %3138 = vmatprep.subr.mxu0 0.0
    %3139 = vmatpush1.msra.mxu0 %v2997
    %3140 = vmatprep.subr.mxu0 0.0
    %3141 = vmatpush1.msra.mxu0 %v2998
    %3142 = vmatprep.subr.mxu0 0.0
    %3143 = vmatpush1.msra.mxu0 %v2999
    %3144 = vmatprep.subr.mxu0 0.0
    %3145 = vmatpush1.msra.mxu0 %v3000
    %3146 = vmatprep.subr.mxu0 0.0
    %3147 = vmatpush1.msra.mxu0 %v3001
    %3148 = vmatprep.subr.mxu0 0.0
    %3149 = vmatpush1.msra.mxu0 %v3002
    %3150 = vmatprep.subr.mxu0 0.0
    %3151 = vmatpush1.msra.mxu0 %v3003
    %3152 = vmatprep.subr.mxu0 0.0
    %3153 = vmatpush1.msra.mxu0 %v3004
    %3154 = vmatprep.subr.mxu0 0.0
    %3155 = vmatpush1.msra.mxu0 %v3005
    %3156 = vmatprep.subr.mxu0 0.0
    %3157 = vmatpush1.msra.mxu0 %v3006
    %3158 = vmatprep.subr.mxu0 0.0
    %3159 = vmatpush1.msra.mxu0 %v3007
    %3160 = vmatprep.subr.mxu0 0.0
    %3161 = vmatpush1.msra.mxu0 %v3008
    %3162 = vmatprep.subr.mxu0 0.0
    %3163 = vmatpush1.msra.mxu0 %v3009
    %3164 = vmatprep.subr.mxu0 0.0
    %3165 = vmatpush1.msra.mxu0 %v3010
    %3166 = vmatprep.subr.mxu0 0.0
    %3167 = vmatpush1.msra.mxu0 %v3011
    %3168 = vmatprep.subr.mxu0 0.0
    %3169 = vmatpush1.msra.mxu0 %v3012
    %3170 = vmatprep.subr.mxu0 0.0
    %3171 = vmatpush1.msra.mxu0 %v3013
    %3172 = vmatprep.mubr.f32.mxu0 %v2933
    %3173 = vmatmul.mubr.f32.gmra.mrb[0].mxu0 %v2917
    %v3174 = vpop.f32.mrb[0].mxu0
    %v3175 = vadd.f32 %v3059, %v3174
    %v3176 = vpop.f32.mrb[0].mxu0
    %3177 = vmatprep.mubr.f32.mxu0 %v2934
    %3178 = vmatmul.mubr.f32.gmra.mrb[0].mxu0 %v2918
    %v3179 = vpop.f32.mrb[0].mxu0
    %v3180 = vadd.f32 %v3059, %v3179
    %v3181 = vpop.f32.mrb[0].mxu0
    %3182 = vmatprep.mubr.f32.mxu0 %v2935
    %3183 = vmatmul.mubr.f32.gmra.mrb[0].mxu0 %v2919
    %v3184 = vpop.f32.mrb[0].mxu0
    %v3185 = vadd.f32 %v3059, %v3184
    %v3186 = vpop.f32.mrb[0].mxu0
    %3187 = vmatprep.mubr.f32.mxu0 %v2936
    %3188 = vmatmul.mubr.f32.gmra.mrb[0].mxu0 %v2920
    %v3189 = vpop.f32.mrb[0].mxu0
    %v3190 = vadd.f32 %v3059, %v3189
    %v3191 = vpop.f32.mrb[0].mxu0
    %3192 = vmatprep.mubr.f32.mxu0 %v2937
    %3193 = vmatmul.mubr.f32.gmra.mrb[0].mxu0 %v2921
    %v3194 = vpop.f32.mrb[0].mxu0
    %v3195 = vadd.f32 %v3059, %v3194
    %v3196 = vpop.f32.mrb[0].mxu0
    %3197 = vmatprep.mubr.f32.mxu0 %v2938
    %3198 = vmatmul.mubr.f32.gmra.mrb[0].mxu0 %v2922
    %v3199 = vpop.f32.mrb[0].mxu0
    %v3200 = vadd.f32 %v3059, %v3199
    %v3201 = vpop.f32.mrb[0].mxu0
    %3202 = vmatprep.mubr.f32.mxu0 %v2939
    %3203 = vmatmul.mubr.f32.gmra.mrb[0].mxu0 %v2923
    %v3204 = vpop.f32.mrb[0].mxu0
    %v3205 = vadd.f32 %v3059, %v3204
    %v3206 = vpop.f32.mrb[0].mxu0
    %3207 = vmatprep.mubr.f32.mxu0 %v2940
    %3208 = vmatmul.mubr.f32.gmra.mrb[0].mxu0 %v2924
    %v3209 = vpop.f32.mrb[0].mxu0
    %v3210 = vadd.f32 %v3059, %v3209
    %v3211 = vpop.f32.mrb[0].mxu0
    %3212 = vmatprep.mubr.f32.mxu0 %v2941
    %3213 = vmatmul.mubr.f32.gmra.mrb[0].mxu0 %v2925
    %v3214 = vpop.f32.mrb[0].mxu0
    %v3215 = vadd.f32 %v3059, %v3214
    %v3216 = vpop.f32.mrb[0].mxu0
    %3217 = vmatprep.mubr.f32.mxu0 %v2942
    %3218 = vmatmul.mubr.f32.gmra.mrb[0].mxu0 %v2926
    %v3219 = vpop.f32.mrb[0].mxu0
    %v3220 = vadd.f32 %v3059, %v3219
    %v3221 = vpop.f32.mrb[0].mxu0
    %3222 = vmatprep.mubr.f32.mxu0 %v2943
    %3223 = vmatmul.mubr.f32.gmra.mrb[0].mxu0 %v2927
    %v3224 = vpop.f32.mrb[0].mxu0
    %v3225 = vadd.f32 %v3059, %v3224
    %v3226 = vpop.f32.mrb[0].mxu0
    %3227 = vmatprep.mubr.f32.mxu0 %v2944
    %3228 = vmatmul.mubr.f32.gmra.mrb[0].mxu0 %v2928
    %v3229 = vpop.f32.mrb[0].mxu0
    %v3230 = vadd.f32 %v3059, %v3229
    %v3231 = vpop.f32.mrb[0].mxu0
    %3232 = vmatprep.mubr.f32.mxu0 %v2945
    %3233 = vmatmul.mubr.f32.gmra.mrb[0].mxu0 %v2929
    %v3234 = vpop.f32.mrb[0].mxu0
    %v3235 = vadd.f32 %v3059, %v3234
    %v3236 = vpop.f32.mrb[0].mxu0
    %3237 = vmatprep.mubr.f32.mxu0 %v2946
    %3238 = vmatmul.mubr.f32.gmra.mrb[0].mxu0 %v2930
    %v3239 = vpop.f32.mrb[0].mxu0
    %v3240 = vadd.f32 %v3059, %v3239
    %v3241 = vpop.f32.mrb[0].mxu0
    %3242 = vmatprep.mubr.f32.mxu0 %v2947
    %3243 = vmatmul.mubr.f32.gmra.mrb[0].mxu0 %v2931
    %v3244 = vpop.f32.mrb[0].mxu0
    %v3245 = vadd.f32 %v3059, %v3244
    %v3246 = vpop.f32.mrb[0].mxu0
    %3247 = vmatprep.mubr.f32.mxu0 %v2948
    %3248 = vmatmul.mubr.f32.gmra.mrb[0].mxu0 %v2932
    %v3249 = vpop.f32.mrb[0].mxu0
    %v3250 = vadd.f32 %v3059, %v3249
    %v3251 = vpop.f32.mrb[0].mxu0
    %3252 = vdwg.mxu0
    %3253 = vmatprep.subr.mxu0 0.0
    %3254 = vmatpush1.msra.mxu0 %v3014
    %3255 = vmatprep.subr.mxu0 0.0
    %3256 = vmatpush1.msra.mxu0 %v3015
    %3257 = vmatprep.subr.mxu0 0.0
    %3258 = vmatpush1.msra.mxu0 %v3016
    %3259 = vmatprep.subr.mxu0 0.0
    %3260 = vmatpush1.msra.mxu0 %v3017
    %3261 = vmatprep.subr.mxu0 0.0
    %3262 = vmatpush1.msra.mxu0 %v3018
    %3263 = vmatprep.subr.mxu0 0.0
    %3264 = vmatpush1.msra.mxu0 %v3019
    %3265 = vmatprep.subr.mxu0 0.0
    %3266 = vmatpush1.msra.mxu0 %v3020
    %3267 = vmatprep.subr.mxu0 0.0
    %3268 = vmatpush1.msra.mxu0 %v3021
    %3269 = vmatprep.subr.mxu0 0.0
    %3270 = vmatpush1.msra.mxu0 %v3022
    %3271 = vmatprep.subr.mxu0 0.0
    %3272 = vmatpush1.msra.mxu0 %v3023
    %3273 = vmatprep.subr.mxu0 0.0
    %3274 = vmatpush1.msra.mxu0 %v3024
    %3275 = vmatprep.subr.mxu0 0.0
    %3276 = vmatpush1.msra.mxu0 %v3025
    %3277 = vmatprep.subr.mxu0 0.0
    %3278 = vmatpush1.msra.mxu0 %v3026
    %3279 = vmatprep.subr.mxu0 0.0
    %3280 = vmatpush1.msra.mxu0 %v3027
    %3281 = vmatprep.subr.mxu0 0.0
    %3282 = vmatpush1.msra.mxu0 %v3028
    %3283 = vmatprep.subr.mxu0 0.0
    %3284 = vmatpush1.msra.mxu0 %v3029
    %3285 = vmatprep.subr.mxu0 0.0
    %3286 = vmatpush1.msra.mxu0 %v3030
    %3287 = vmatprep.subr.mxu0 0.0
    %3288 = vmatpush1.msra.mxu0 %v3031
    %3289 = vmatprep.subr.mxu0 0.0
    %3290 = vmatpush1.msra.mxu0 %v3032
    %3291 = vmatprep.subr.mxu0 0.0
    %3292 = vmatpush1.msra.mxu0 %v3033
    %3293 = vmatprep.subr.mxu0 0.0
    %3294 = vmatpush1.msra.mxu0 %v3034
    %3295 = vmatprep.subr.mxu0 0.0
    %3296 = vmatpush1.msra.mxu0 %v3035
    %3297 = vmatprep.subr.mxu0 0.0
    %3298 = vmatpush1.msra.mxu0 %v3036
    %3299 = vmatprep.subr.mxu0 0.0
    %3300 = vmatpush1.msra.mxu0 %v3037
    %3301 = vmatprep.subr.mxu0 0.0
    %3302 = vmatpush1.msra.mxu0 %v3038
    %3303 = vmatprep.subr.mxu0 0.0
    %3304 = vmatpush1.msra.mxu0 %v3039
    %3305 = vmatprep.subr.mxu0 0.0
    %3306 = vmatpush1.msra.mxu0 %v3040
    %3307 = vmatprep.subr.mxu0 0.0
    %3308 = vmatpush1.msra.mxu0 %v3041
    %3309 = vmatprep.subr.mxu0 0.0
    %3310 = vmatpush1.msra.mxu0 %v3042
    %3311 = vmatprep.subr.mxu0 0.0
    %3312 = vmatpush1.msra.mxu0 %v3043
    %3313 = vmatprep.subr.mxu0 0.0
    %3314 = vmatpush1.msra.mxu0 %v3044
    %3315 = vmatprep.subr.mxu0 0.0
    %3316 = vmatpush1.msra.mxu0 %v3045
    %3317 = vmatprep.mubr.f32.mxu0 %v2965
    %3318 = vmatmul.mubr.f32.gmra.mrb[0].mxu0 %v2949
    %v3319 = vpop.f32.mrb[0].mxu0
    %v3320 = vadd.f32 %v3175, %v3319
    %v3321 = vpop.f32.mrb[0].mxu0
    %3322 = vmatprep.mubr.f32.mxu0 %v2966
    %3323 = vmatmul.mubr.f32.gmra.mrb[0].mxu0 %v2950
    %v3324 = vpop.f32.mrb[0].mxu0
    %v3325 = vadd.f32 %v3180, %v3324
    %v3326 = vpop.f32.mrb[0].mxu0
    %3327 = vmatprep.mubr.f32.mxu0 %v2967
    %3328 = vmatmul.mubr.f32.gmra.mrb[0].mxu0 %v2951
    %v3329 = vpop.f32.mrb[0].mxu0
    %v3330 = vadd.f32 %v3185, %v3329
    %v3331 = vpop.f32.mrb[0].mxu0
    %3332 = vmatprep.mubr.f32.mxu0 %v2968
    %3333 = vmatmul.mubr.f32.gmra.mrb[0].mxu0 %v2952
    %v3334 = vpop.f32.mrb[0].mxu0
    %v3335 = vadd.f32 %v3190, %v3334
    %v3336 = vpop.f32.mrb[0].mxu0
    %3337 = vmatprep.mubr.f32.mxu0 %v2969
    %3338 = vmatmul.mubr.f32.gmra.mrb[0].mxu0 %v2953
    %v3339 = vpop.f32.mrb[0].mxu0
    %v3340 = vadd.f32 %v3195, %v3339
    %v3341 = vpop.f32.mrb[0].mxu0
    %3342 = vmatprep.mubr.f32.mxu0 %v2970
    %3343 = vmatmul.mubr.f32.gmra.mrb[0].mxu0 %v2954
    %v3344 = vpop.f32.mrb[0].mxu0
    %v3345 = vadd.f32 %v3200, %v3344
    %v3346 = vpop.f32.mrb[0].mxu0
    %3347 = vmatprep.mubr.f32.mxu0 %v2971
    %3348 = vmatmul.mubr.f32.gmra.mrb[0].mxu0 %v2955
    %v3349 = vpop.f32.mrb[0].mxu0
    %v3350 = vadd.f32 %v3205, %v3349
    %v3351 = vpop.f32.mrb[0].mxu0
    %3352 = vmatprep.mubr.f32.mxu0 %v2972
    %3353 = vmatmul.mubr.f32.gmra.mrb[0].mxu0 %v2956
    %v3354 = vpop.f32.mrb[0].mxu0
    %v3355 = vadd.f32 %v3210, %v3354
    %v3356 = vpop.f32.mrb[0].mxu0
    %3357 = vmatprep.mubr.f32.mxu0 %v2973
    %3358 = vmatmul.mubr.f32.gmra.mrb[0].mxu0 %v2957
    %v3359 = vpop.f32.mrb[0].mxu0
    %v3360 = vadd.f32 %v3215, %v3359
    %v3361 = vpop.f32.mrb[0].mxu0
    %3362 = vmatprep.mubr.f32.mxu0 %v2974
    %3363 = vmatmul.mubr.f32.gmra.mrb[0].mxu0 %v2958
    %v3364 = vpop.f32.mrb[0].mxu0
    %v3365 = vadd.f32 %v3220, %v3364
    %v3366 = vpop.f32.mrb[0].mxu0
    %3367 = vmatprep.mubr.f32.mxu0 %v2975
    %3368 = vmatmul.mubr.f32.gmra.mrb[0].mxu0 %v2959
    %v3369 = vpop.f32.mrb[0].mxu0
    %v3370 = vadd.f32 %v3225, %v3369
    %v3371 = vpop.f32.mrb[0].mxu0
    %3372 = vmatprep.mubr.f32.mxu0 %v2976
    %3373 = vmatmul.mubr.f32.gmra.mrb[0].mxu0 %v2960
    %v3374 = vpop.f32.mrb[0].mxu0
    %v3375 = vadd.f32 %v3230, %v3374
    %v3376 = vpop.f32.mrb[0].mxu0
    %3377 = vmatprep.mubr.f32.mxu0 %v2977
    %3378 = vmatmul.mubr.f32.gmra.mrb[0].mxu0 %v2961
    %v3379 = vpop.f32.mrb[0].mxu0
    %v3380 = vadd.f32 %v3235, %v3379
    %v3381 = vpop.f32.mrb[0].mxu0
    %3382 = vmatprep.mubr.f32.mxu0 %v2978
    %3383 = vmatmul.mubr.f32.gmra.mrb[0].mxu0 %v2962
    %v3384 = vpop.f32.mrb[0].mxu0
    %v3385 = vadd.f32 %v3240, %v3384
    %v3386 = vpop.f32.mrb[0].mxu0
    %3387 = vmatprep.mubr.f32.mxu0 %v2979
    %3388 = vmatmul.mubr.f32.gmra.mrb[0].mxu0 %v2963
    %v3389 = vpop.f32.mrb[0].mxu0
    %v3390 = vadd.f32 %v3245, %v3389
    %v3391 = vpop.f32.mrb[0].mxu0
    %3392 = vmatprep.mubr.f32.mxu0 %v2980
    %3393 = vmatmul.mubr.f32.gmra.mrb[0].mxu0 %v2964
    %v3394 = vpop.f32.mrb[0].mxu0
    %v3395 = vadd.f32 %v3250, %v3394
    %v3396 = vpop.f32.mrb[0].mxu0
    %3397 = vdwg.mxu0
    %3398 = vmatprep.subr.mxu0 0.0
    %3399 = vmatpush1.msra.mxu0 %v3046
    %3400 = vmatprep.subr.mxu0 0.0
    %3401 = vmatpush1.msra.mxu0 %v3047
    %3402 = vmatprep.subr.mxu0 0.0
    %3403 = vmatpush1.msra.mxu0 %v3048
    %3404 = vmatprep.subr.mxu0 0.0
    %3405 = vmatpush1.msra.mxu0 %v3049
    %3406 = vmatprep.subr.mxu0 0.0
    %3407 = vmatpush1.msra.mxu0 %v3050
    %3408 = vmatprep.subr.mxu0 0.0
    %3409 = vmatpush1.msra.mxu0 %v3051
    %3410 = vmatprep.subr.mxu0 0.0
    %3411 = vmatpush1.msra.mxu0 %v3052
    %3412 = vmatprep.subr.mxu0 0.0
    %3413 = vmatpush1.msra.mxu0 %v3053
    %3414 = vmatprep.subr.mxu0 0.0
    %3415 = vmatpush1.msra.mxu0 0.0
    %3416 = vmatprep.subr.mxu0 0.0
    %3417 = vmatpush1.msra.mxu0 0.0
    %3418 = vmatprep.subr.mxu0 0.0
    %3419 = vmatpush1.msra.mxu0 0.0
    %3420 = vmatprep.subr.mxu0 0.0
    %3421 = vmatpush1.msra.mxu0 0.0
    %3422 = vmatprep.subr.mxu0 0.0
    %3423 = vmatpush1.msra.mxu0 0.0
    %3424 = vmatprep.subr.mxu0 0.0
    %3425 = vmatpush1.msra.mxu0 0.0
    %3426 = vmatprep.subr.mxu0 0.0
    %3427 = vmatpush1.msra.mxu0 0.0
    %3428 = vmatprep.subr.mxu0 0.0
    %3429 = vmatpush1.msra.mxu0 0.0
    %3430 = vmatprep.subr.mxu0 0.0
    %3431 = vmatpush1.msra.mxu0 0.0
    %3432 = vmatprep.subr.mxu0 0.0
    %3433 = vmatpush1.msra.mxu0 0.0
    %3434 = vmatprep.subr.mxu0 0.0
    %3435 = vmatpush1.msra.mxu0 0.0
    %3436 = vmatprep.subr.mxu0 0.0
    %3437 = vmatpush1.msra.mxu0 0.0
    %3438 = vmatprep.subr.mxu0 0.0
    %3439 = vmatpush1.msra.mxu0 0.0
    %3440 = vmatprep.subr.mxu0 0.0
    %3441 = vmatpush1.msra.mxu0 0.0
    %3442 = vmatprep.subr.mxu0 0.0
    %3443 = vmatpush1.msra.mxu0 0.0
    %3444 = vmatprep.subr.mxu0 0.0
    %3445 = vmatpush1.msra.mxu0 0.0
    %3446 = vmatprep.subr.mxu0 0.0
    %3447 = vmatpush1.msra.mxu0 0.0
    %3448 = vmatprep.subr.mxu0 0.0
    %3449 = vmatpush1.msra.mxu0 0.0
    %3450 = vmatprep.subr.mxu0 0.0
    %3451 = vmatpush1.msra.mxu0 0.0
    %3452 = vmatprep.subr.mxu0 0.0
    %3453 = vmatpush1.msra.mxu0 0.0
    %3454 = vmatprep.subr.mxu0 0.0
    %3455 = vmatpush1.msra.mxu0 0.0
    %3456 = vmatprep.subr.mxu0 0.0
    %3457 = vmatpush1.msra.mxu0 0.0
    %3458 = vmatprep.subr.mxu0 0.0
    %3459 = vmatpush1.msra.mxu0 0.0
    %3460 = vmatprep.subr.mxu0 0.0
    %3461 = vmatpush1.msra.mxu0 0.0
    %3462 = vmatprep.mubr.f32.mxu0 0.0
    %3463 = vmatmul.mubr.f32.gmra.mrb[0].mxu0 %v3061
    %v3464 = vpop.f32.mrb[0].mxu0
    %v3465 = vadd.f32 %v3320, %v3464
    %v3466 = vpop.f32.mrb[0].mxu0
    %3467 = vmatprep.mubr.f32.mxu0 0.0
    %3468 = vmatmul.mubr.f32.gmra.mrb[0].mxu0 %v3064
    %v3469 = vpop.f32.mrb[0].mxu0
    %v3470 = vadd.f32 %v3325, %v3469
    %v3471 = vpop.f32.mrb[0].mxu0
    %3472 = vmatprep.mubr.f32.mxu0 0.0
    %3473 = vmatmul.mubr.f32.gmra.mrb[0].mxu0 %v3067
    %v3474 = vpop.f32.mrb[0].mxu0
    %v3475 = vadd.f32 %v3330, %v3474
    %v3476 = vpop.f32.mrb[0].mxu0
    %3477 = vmatprep.mubr.f32.mxu0 0.0
    %3478 = vmatmul.mubr.f32.gmra.mrb[0].mxu0 %v3070
    %v3479 = vpop.f32.mrb[0].mxu0
    %v3480 = vadd.f32 %v3335, %v3479
    %v3481 = vpop.f32.mrb[0].mxu0
    %3482 = vmatprep.mubr.f32.mxu0 0.0
    %3483 = vmatmul.mubr.f32.gmra.mrb[0].mxu0 %v3073
    %v3484 = vpop.f32.mrb[0].mxu0
    %v3485 = vadd.f32 %v3340, %v3484
    %v3486 = vpop.f32.mrb[0].mxu0
    %3487 = vmatprep.mubr.f32.mxu0 0.0
    %3488 = vmatmul.mubr.f32.gmra.mrb[0].mxu0 %v3076
    %v3489 = vpop.f32.mrb[0].mxu0
    %v3490 = vadd.f32 %v3345, %v3489
    %v3491 = vpop.f32.mrb[0].mxu0
    %3492 = vmatprep.mubr.f32.mxu0 0.0
    %3493 = vmatmul.mubr.f32.gmra.mrb[0].mxu0 %v3079
    %v3494 = vpop.f32.mrb[0].mxu0
    %v3495 = vadd.f32 %v3350, %v3494
    %v3496 = vpop.f32.mrb[0].mxu0
    %3497 = vmatprep.mubr.f32.mxu0 0.0
    %3498 = vmatmul.mubr.f32.gmra.mrb[0].mxu0 %v3082
    %v3499 = vpop.f32.mrb[0].mxu0
    %v3500 = vadd.f32 %v3355, %v3499
    %v3501 = vpop.f32.mrb[0].mxu0
    %3502 = vmatprep.mubr.f32.mxu0 0.0
    %3503 = vmatmul.mubr.f32.gmra.mrb[0].mxu0 %v3085
    %v3504 = vpop.f32.mrb[0].mxu0
    %v3505 = vadd.f32 %v3360, %v3504
    %v3506 = vpop.f32.mrb[0].mxu0
    %3507 = vmatprep.mubr.f32.mxu0 0.0
    %3508 = vmatmul.mubr.f32.gmra.mrb[0].mxu0 %v3088
    %v3509 = vpop.f32.mrb[0].mxu0
    %v3510 = vadd.f32 %v3365, %v3509
    %v3511 = vpop.f32.mrb[0].mxu0
    %3512 = vmatprep.mubr.f32.mxu0 0.0
    %3513 = vmatmul.mubr.f32.gmra.mrb[0].mxu0 %v3091
    %v3514 = vpop.f32.mrb[0].mxu0
    %v3515 = vadd.f32 %v3370, %v3514
    %v3516 = vpop.f32.mrb[0].mxu0
    %3517 = vmatprep.mubr.f32.mxu0 0.0
    %3518 = vmatmul.mubr.f32.gmra.mrb[0].mxu0 %v3094
    %v3519 = vpop.f32.mrb[0].mxu0
    %v3520 = vadd.f32 %v3375, %v3519
    %v3521 = vpop.f32.mrb[0].mxu0
    %3522 = vmatprep.mubr.f32.mxu0 0.0
    %3523 = vmatmul.mubr.f32.gmra.mrb[0].mxu0 %v3097
    %v3524 = vpop.f32.mrb[0].mxu0
    %v3525 = vadd.f32 %v3380, %v3524
    %v3526 = vpop.f32.mrb[0].mxu0
    %3527 = vmatprep.mubr.f32.mxu0 0.0
    %3528 = vmatmul.mubr.f32.gmra.mrb[0].mxu0 %v3100
    %v3529 = vpop.f32.mrb[0].mxu0
    %v3530 = vadd.f32 %v3385, %v3529
    %v3531 = vpop.f32.mrb[0].mxu0
    %3532 = vmatprep.mubr.f32.mxu0 0.0
    %3533 = vmatmul.mubr.f32.gmra.mrb[0].mxu0 %v3103
    %v3534 = vpop.f32.mrb[0].mxu0
    %v3535 = vadd.f32 %v3390, %v3534
    %v3536 = vpop.f32.mrb[0].mxu0
    %3537 = vmatprep.mubr.f32.mxu0 0.0
    %3538 = vmatmul.mubr.f32.gmra.mrb[0].mxu0 %v3106
    %v3539 = vpop.f32.mrb[0].mxu0
    %v3540 = vadd.f32 %v3395, %v3539
    %v3541 = vpop.f32.mrb[0].mxu0
    %3542 = vdwg.mxu0
    %v3543 = vmax.f32 %v3465, 0.0
    %v3544 = vmax.f32 %v3470, 0.0
    %v3545 = vmax.f32 %v3475, 0.0
    %v3546 = vmax.f32 %v3480, 0.0
    %v3547 = vmax.f32 %v3485, 0.0
    %v3548 = vmax.f32 %v3490, 0.0
    %v3549 = vmax.f32 %v3495, 0.0
    %v3550 = vmax.f32 %v3500, 0.0
    %v3551 = vmax.f32 %v3505, 0.0
    %v3552 = vmax.f32 %v3510, 0.0
    %v3553 = vmax.f32 %v3515, 0.0
    %v3554 = vmax.f32 %v3520, 0.0
    %v3555 = vmax.f32 %v3525, 0.0
    %v3556 = vmax.f32 %v3530, 0.0
    %v3557 = vmax.f32 %v3535, 0.0
    %v3558 = vmax.f32 %v3540, 0.0
    %v3559 = vsel %vm42, %v3543, 0.0
    %v3560 = vsel %vm42, %v3544, 0.0
    %v3561 = vadd.f32 %v3559, %v3560
    %v3562 = vsel %vm42, %v3545, 0.0
    %v3563 = vadd.f32 %v3561, %v3562
    %v3564 = vsel %vm42, %v3546, 0.0
    %v3565 = vadd.f32 %v3563, %v3564
    %v3566 = vsel %vm42, %v3547, 0.0
    %v3567 = vadd.f32 %v3565, %v3566
    %v3568 = vsel %vm42, %v3548, 0.0
    %v3569 = vadd.f32 %v3567, %v3568
    %v3570 = vsel %vm42, %v3549, 0.0
    %v3571 = vadd.f32 %v3569, %v3570
    %v3572 = vsel %vm42, %v3550, 0.0
    %v3573 = vadd.f32 %v3571, %v3572
    %v3574 = vsel %vm42, %v3551, 0.0
    %v3575 = vadd.f32 %v3573, %v3574
    %v3576 = vsel %vm42, %v3552, 0.0
    %v3577 = vadd.f32 %v3575, %v3576
    %v3578 = vsel %vm42, %v3553, 0.0
    %v3579 = vadd.f32 %v3577, %v3578
    %v3580 = vsel %vm42, %v3554, 0.0
    %v3581 = vadd.f32 %v3579, %v3580
    %v3582 = vsel %vm42, %v3555, 0.0
    %v3583 = vadd.f32 %v3581, %v3582
    %v3584 = vsel %vm42, %v3556, 0.0
    %v3585 = vadd.f32 %v3583, %v3584
    %v3586 = vsel %vm42, %v3557, 0.0
    %v3587 = vadd.f32 %v3585, %v3586
    %v3588 = vsel %vm42, %v3558, 0.0
    %v3589 = vadd.f32 %v3587, %v3588
    %v3590 = vrot.slane %v3589, 4
    %v3591 = vadd.f32 %v3589, %v3590
    %v3592 = vrot.slane %v3591, 2
    %v3593 = vadd.f32 %v3591, %v3592
    %v3594 = vrot.slane %v3593, 1
    %v3595 = vadd.f32 %v3593, %v3594
    %v3596 = vmul.f32 %v3543, %v3543
    %v3597 = vmul.f32 %v3544, %v3544
    %v3598 = vmul.f32 %v3545, %v3545
    %v3599 = vmul.f32 %v3546, %v3546
    %v3600 = vmul.f32 %v3547, %v3547
    %v3601 = vmul.f32 %v3548, %v3548
    %v3602 = vmul.f32 %v3549, %v3549
    %v3603 = vmul.f32 %v3550, %v3550
    %v3604 = vmul.f32 %v3551, %v3551
    %v3605 = vmul.f32 %v3552, %v3552
    %v3606 = vmul.f32 %v3553, %v3553
    %v3607 = vmul.f32 %v3554, %v3554
    %v3608 = vmul.f32 %v3555, %v3555
    %v3609 = vmul.f32 %v3556, %v3556
    %v3610 = vmul.f32 %v3557, %v3557
    %v3611 = vmul.f32 %v3558, %v3558
    %v3612 = vsel %vm42, %v3596, 0.0
    %v3613 = vsel %vm42, %v3597, 0.0
    %v3614 = vadd.f32 %v3612, %v3613
    %v3615 = vsel %vm42, %v3598, 0.0
    %v3616 = vadd.f32 %v3614, %v3615
    %v3617 = vsel %vm42, %v3599, 0.0
    %v3618 = vadd.f32 %v3616, %v3617
    %v3619 = vsel %vm42, %v3600, 0.0
    %v3620 = vadd.f32 %v3618, %v3619
    %v3621 = vsel %vm42, %v3601, 0.0
    %v3622 = vadd.f32 %v3620, %v3621
    %v3623 = vsel %vm42, %v3602, 0.0
    %v3624 = vadd.f32 %v3622, %v3623
    %v3625 = vsel %vm42, %v3603, 0.0
    %v3626 = vadd.f32 %v3624, %v3625
    %v3627 = vsel %vm42, %v3604, 0.0
    %v3628 = vadd.f32 %v3626, %v3627
    %v3629 = vsel %vm42, %v3605, 0.0
    %v3630 = vadd.f32 %v3628, %v3629
    %v3631 = vsel %vm42, %v3606, 0.0
    %v3632 = vadd.f32 %v3630, %v3631
    %v3633 = vsel %vm42, %v3607, 0.0
    %v3634 = vadd.f32 %v3632, %v3633
    %v3635 = vsel %vm42, %v3608, 0.0
    %v3636 = vadd.f32 %v3634, %v3635
    %v3637 = vsel %vm42, %v3609, 0.0
    %v3638 = vadd.f32 %v3636, %v3637
    %v3639 = vsel %vm42, %v3610, 0.0
    %v3640 = vadd.f32 %v3638, %v3639
    %v3641 = vsel %vm42, %v3611, 0.0
    %v3642 = vadd.f32 %v3640, %v3641
    %v3643 = vrot.slane %v3642, 4
    %v3644 = vadd.f32 %v3642, %v3643
    %v3645 = vrot.slane %v3644, 2
    %v3646 = vadd.f32 %v3644, %v3645
    %v3647 = vrot.slane %v3646, 1
    %v3648 = vadd.f32 %v3646, %v3647
    %v3649 = vmul.f32 %v3595, 0.0078125
    %v3650 = vmul.f32 %v3648, 0.0078125
    %v3651 = vmul.f32 %v3649, %v3649
    %v3652 = vsub.f32 %v3650, %v3651
    %v3653 = vmax.f32 %v3652, 0.0
    %v3654 = vadd.f32 %v3653, 1e-05
    %v3655 = vrsqrt.pop %v3654
    %v3656 = vld [vmem:[%s3054 + $0x1] sm:$0x1]
    %v3657 = vmul.f32 %v3655, %v3656
    %v3658 = vld [vmem:[%s3054 + $0x2] sm:$0x1]
    %v3659 = vmul.f32 %v3649, %v3657
    %v3660 = vsub.f32 %v3658, %v3659
    %v3661 = vlaneseq
    %v3662 = vshrl.u32 %v3661, 7
    %v3663 = vsub.s32 0, %v3662
    %v3664 = vrot.slane %v3657, %v3663
    %v3665 = vmul.f32 %v3543, %v3664
    %v3666 = vmul.f32 %v3544, %v3664
    %v3667 = vmul.f32 %v3545, %v3664
    %v3668 = vmul.f32 %v3546, %v3664
    %v3669 = vmul.f32 %v3547, %v3664
    %v3670 = vmul.f32 %v3548, %v3664
    %v3671 = vmul.f32 %v3549, %v3664
    %v3672 = vmul.f32 %v3550, %v3664
    %v3673 = vmul.f32 %v3551, %v3664
    %v3674 = vmul.f32 %v3552, %v3664
    %v3675 = vmul.f32 %v3553, %v3664
    %v3676 = vmul.f32 %v3554, %v3664
    %v3677 = vmul.f32 %v3555, %v3664
    %v3678 = vmul.f32 %v3556, %v3664
    %v3679 = vmul.f32 %v3557, %v3664
    %v3680 = vmul.f32 %v3558, %v3664
    %v3681 = vlaneseq
    %v3682 = vshrl.u32 %v3681, 7
    %v3683 = vsub.s32 0, %v3682
    %v3684 = vrot.slane %v3660, %v3683
    %v3685 = vadd.f32 %v3665, %v3684
    %v3686 = vadd.f32 %v3666, %v3684
    %v3687 = vadd.f32 %v3667, %v3684
    %v3688 = vadd.f32 %v3668, %v3684
    %v3689 = vadd.f32 %v3669, %v3684
    %v3690 = vadd.f32 %v3670, %v3684
    %v3691 = vadd.f32 %v3671, %v3684
    %v3692 = vadd.f32 %v3672, %v3684
    %v3693 = vadd.f32 %v3673, %v3684
    %v3694 = vadd.f32 %v3674, %v3684
    %v3695 = vadd.f32 %v3675, %v3684
    %v3696 = vadd.f32 %v3676, %v3684
    %v3697 = vadd.f32 %v3677, %v3684
    %v3698 = vadd.f32 %v3678, %v3684
    %v3699 = vadd.f32 %v3679, %v3684
    %v3700 = vadd.f32 %v3680, %v3684
    %3701 = vst.msk [vmem:[%s100 + $0x1] sm:$0xff] %vm42, %v3685
    %3702 = vst.msk [vmem:[%s100 + $0x11] sm:$0xff] %vm42, %v3686
    %3703 = vst.msk [vmem:[%s100 + $0x21] sm:$0xff] %vm42, %v3687
    %3704 = vst.msk [vmem:[%s100 + $0x31] sm:$0xff] %vm42, %v3688
    %3705 = vst.msk [vmem:[%s100 + $0x41] sm:$0xff] %vm42, %v3689
    %3706 = vst.msk [vmem:[%s100 + $0x51] sm:$0xff] %vm42, %v3690
    %3707 = vst.msk [vmem:[%s100 + $0x61] sm:$0xff] %vm42, %v3691
    %3708 = vst.msk [vmem:[%s100 + $0x71] sm:$0xff] %vm42, %v3692
    %3709 = vst.msk [vmem:[%s100 + $0xa1] sm:$0xff] %vm42, %v3693
    %3710 = vst.msk [vmem:[%s100 + $0xb1] sm:$0xff] %vm42, %v3694
    %3711 = vst.msk [vmem:[%s100 + $0xc1] sm:$0xff] %vm42, %v3695
    %3712 = vst.msk [vmem:[%s100 + $0xd1] sm:$0xff] %vm42, %v3696
    %3713 = vst.msk [vmem:[%s100 + $0xe1] sm:$0xff] %vm42, %v3697
    %3714 = vst.msk [vmem:[%s100 + $0xf1] sm:$0xff] %vm42, %v3698
    %3715 = vst.msk [vmem:[%s100 + $0x101] sm:$0xff] %vm42, %v3699
    %3716 = vst.msk [vmem:[%s100 + $0x111] sm:$0xff] %vm42, %v3700
    %v3717 = vld [vmem:[#allocation2] sm:$0xff]
    %v3718 = vld [vmem:[#allocation2 + $0x10] sm:$0xff]
    %v3719 = vld [vmem:[#allocation2 + $0x20] sm:$0xff]
    %v3720 = vld [vmem:[#allocation2 + $0x30] sm:$0xff]
    %v3721 = vld [vmem:[#allocation2 + $0x40] sm:$0xff]
    %v3722 = vld [vmem:[#allocation2 + $0x50] sm:$0xff]
    %v3723 = vld [vmem:[#allocation2 + $0x60] sm:$0xff]
    %v3724 = vld [vmem:[#allocation2 + $0x70] sm:$0xff]
    %v3725 = vld [vmem:[#allocation2 + $0xa0] sm:$0xff]
    %v3726 = vld [vmem:[#allocation2 + $0xb0] sm:$0xff]
    %v3727 = vld [vmem:[#allocation2 + $0xc0] sm:$0xff]
    %v3728 = vld [vmem:[#allocation2 + $0xd0] sm:$0xff]
    %v3729 = vld [vmem:[#allocation2 + $0xe0] sm:$0xff]
    %v3730 = vld [vmem:[#allocation2 + $0xf0] sm:$0xff]
    %v3731 = vld [vmem:[#allocation2 + $0x100] sm:$0xff]
    %v3732 = vld [vmem:[#allocation2 + $0x110] sm:$0xff]
    %v3733 = vld [vmem:[#allocation2 + $0x1] sm:$0xff]
    %v3734 = vld [vmem:[#allocation2 + $0x11] sm:$0xff]
    %v3735 = vld [vmem:[#allocation2 + $0x21] sm:$0xff]
    %v3736 = vld [vmem:[#allocation2 + $0x31] sm:$0xff]
    %v3737 = vld [vmem:[#allocation2 + $0x41] sm:$0xff]
    %v3738 = vld [vmem:[#allocation2 + $0x51] sm:$0xff]
    %v3739 = vld [vmem:[#allocation2 + $0x61] sm:$0xff]
    %v3740 = vld [vmem:[#allocation2 + $0x71] sm:$0xff]
    %v3741 = vld [vmem:[#allocation2 + $0xa1] sm:$0xff]
    %v3742 = vld [vmem:[#allocation2 + $0xb1] sm:$0xff]
    %v3743 = vld [vmem:[#allocation2 + $0xc1] sm:$0xff]
    %v3744 = vld [vmem:[#allocation2 + $0xd1] sm:$0xff]
    %v3745 = vld [vmem:[#allocation2 + $0xe1] sm:$0xff]
    %v3746 = vld [vmem:[#allocation2 + $0xf1] sm:$0xff]
    %v3747 = vld [vmem:[#allocation2 + $0x101] sm:$0xff]
    %v3748 = vld [vmem:[#allocation2 + $0x111] sm:$0xff]
    %v3749 = vld [vmem:[#allocation2 + $0x2] sm:$0xff]
    %v3750 = vld [vmem:[#allocation2 + $0x12] sm:$0xff]
    %v3751 = vld [vmem:[#allocation2 + $0x22] sm:$0xff]
    %v3752 = vld [vmem:[#allocation2 + $0x32] sm:$0xff]
    %v3753 = vld [vmem:[#allocation2 + $0x42] sm:$0xff]
    %v3754 = vld [vmem:[#allocation2 + $0x52] sm:$0xff]
    %v3755 = vld [vmem:[#allocation2 + $0x62] sm:$0xff]
    %v3756 = vld [vmem:[#allocation2 + $0x72] sm:$0xff]
    %v3757 = vld [vmem:[#allocation2 + $0xa2] sm:$0xff]
    %v3758 = vld [vmem:[#allocation2 + $0xb2] sm:$0xff]
    %v3759 = vld [vmem:[#allocation2 + $0xc2] sm:$0xff]
    %v3760 = vld [vmem:[#allocation2 + $0xd2] sm:$0xff]
    %v3761 = vld [vmem:[#allocation2 + $0xe2] sm:$0xff]
    %v3762 = vld [vmem:[#allocation2 + $0xf2] sm:$0xff]
    %v3763 = vld [vmem:[#allocation2 + $0x102] sm:$0xff]
    %v3764 = vld [vmem:[#allocation2 + $0x112] sm:$0xff]
    %v3765 = vld [vmem:[%s100] sm:$0xff]
    %v3766 = vld [vmem:[%s100 + $0x10] sm:$0xff]
    %v3767 = vld [vmem:[%s100 + $0x20] sm:$0xff]
    %v3768 = vld [vmem:[%s100 + $0x30] sm:$0xff]
    %v3769 = vld [vmem:[%s100 + $0x40] sm:$0xff]
    %v3770 = vld [vmem:[%s100 + $0x50] sm:$0xff]
    %v3771 = vld [vmem:[%s100 + $0x60] sm:$0xff]
    %v3772 = vld [vmem:[%s100 + $0x70] sm:$0xff]
    %v3773 = vld [vmem:[%s100 + $0xa0] sm:$0xff]
    %v3774 = vld [vmem:[%s100 + $0xb0] sm:$0xff]
    %v3775 = vld [vmem:[%s100 + $0xc0] sm:$0xff]
    %v3776 = vld [vmem:[%s100 + $0xd0] sm:$0xff]
    %v3777 = vld [vmem:[%s100 + $0xe0] sm:$0xff]
    %v3778 = vld [vmem:[%s100 + $0xf0] sm:$0xff]
    %v3779 = vld [vmem:[%s100 + $0x100] sm:$0xff]
    %v3780 = vld [vmem:[%s100 + $0x110] sm:$0xff]
    %v3781 = vld [vmem:[%s100 + $0x1] sm:$0xff]
    %v3782 = vld [vmem:[%s100 + $0x11] sm:$0xff]
    %v3783 = vld [vmem:[%s100 + $0x21] sm:$0xff]
    %v3784 = vld [vmem:[%s100 + $0x31] sm:$0xff]
    %v3785 = vld [vmem:[%s100 + $0x41] sm:$0xff]
    %v3786 = vld [vmem:[%s100 + $0x51] sm:$0xff]
    %v3787 = vld [vmem:[%s100 + $0x61] sm:$0xff]
    %v3788 = vld [vmem:[%s100 + $0x71] sm:$0xff]
    %v3789 = vld [vmem:[%s100 + $0xa1] sm:$0xff]
    %v3790 = vld [vmem:[%s100 + $0xb1] sm:$0xff]
    %v3791 = vld [vmem:[%s100 + $0xc1] sm:$0xff]
    %v3792 = vld [vmem:[%s100 + $0xd1] sm:$0xff]
    %v3793 = vld [vmem:[%s100 + $0xe1] sm:$0xff]
    %v3794 = vld [vmem:[%s100 + $0xf1] sm:$0xff]
    %v3795 = vld [vmem:[%s100 + $0x101] sm:$0xff]
    %v3796 = vld [vmem:[%s100 + $0x111] sm:$0xff]
    %v3797 = vld [vmem:[%s100 + $0x2] sm:$0xff]
    %v3798 = vld [vmem:[%s100 + $0x12] sm:$0xff]
    %v3799 = vld [vmem:[%s100 + $0x22] sm:$0xff]
    %v3800 = vld [vmem:[%s100 + $0x32] sm:$0xff]
    %v3801 = vld [vmem:[%s100 + $0x42] sm:$0xff]
    %v3802 = vld [vmem:[%s100 + $0x52] sm:$0xff]
    %v3803 = vld [vmem:[%s100 + $0x62] sm:$0xff]
    %v3804 = vld [vmem:[%s100 + $0x72] sm:$0xff]
    %v3805 = vld [vmem:[%s100 + $0xa2] sm:$0xff]
    %v3806 = vld [vmem:[%s100 + $0xb2] sm:$0xff]
    %v3807 = vld [vmem:[%s100 + $0xc2] sm:$0xff]
    %v3808 = vld [vmem:[%s100 + $0xd2] sm:$0xff]
    %v3809 = vld [vmem:[%s100 + $0xe2] sm:$0xff]
    %v3810 = vld [vmem:[%s100 + $0xf2] sm:$0xff]
    %v3811 = vld [vmem:[%s100 + $0x102] sm:$0xff]
    %v3812 = vld [vmem:[%s100 + $0x112] sm:$0xff]
    %v3813 = vld [vmem:[%s214] sm:$0xff]
    %v3814 = vld [vmem:[%s214 + $0x10] sm:$0xff]
    %v3815 = vld [vmem:[%s214 + $0x20] sm:$0xff]
    %v3816 = vld [vmem:[%s214 + $0x30] sm:$0xff]
    %v3817 = vld [vmem:[%s214 + $0x40] sm:$0xff]
    %v3818 = vld [vmem:[%s214 + $0x50] sm:$0xff]
    %v3819 = vld [vmem:[%s214 + $0x60] sm:$0xff]
    %v3820 = vld [vmem:[%s214 + $0x70] sm:$0xff]
    %v3821 = vld [vmem:[%s214 + $0xa0] sm:$0xff]
    %v3822 = vld [vmem:[%s214 + $0xb0] sm:$0xff]
    %v3823 = vld [vmem:[%s214 + $0xc0] sm:$0xff]
    %v3824 = vld [vmem:[%s214 + $0xd0] sm:$0xff]
    %v3825 = vld [vmem:[%s214 + $0xe0] sm:$0xff]
    %v3826 = vld [vmem:[%s214 + $0xf0] sm:$0xff]
    %v3827 = vld [vmem:[%s214 + $0x100] sm:$0xff]
    %v3828 = vld [vmem:[%s214 + $0x110] sm:$0xff]
    %v3829 = vld [vmem:[%s214 + $0x1] sm:$0xff]
    %v3830 = vld [vmem:[%s214 + $0x11] sm:$0xff]
    %v3831 = vld [vmem:[%s214 + $0x21] sm:$0xff]
    %v3832 = vld [vmem:[%s214 + $0x31] sm:$0xff]
    %v3833 = vld [vmem:[%s214 + $0x41] sm:$0xff]
    %v3834 = vld [vmem:[%s214 + $0x51] sm:$0xff]
    %v3835 = vld [vmem:[%s214 + $0x61] sm:$0xff]
    %v3836 = vld [vmem:[%s214 + $0x71] sm:$0xff]
    %v3837 = vld [vmem:[%s214 + $0xa1] sm:$0xff]
    %v3838 = vld [vmem:[%s214 + $0xb1] sm:$0xff]
    %v3839 = vld [vmem:[%s214 + $0xc1] sm:$0xff]
    %v3840 = vld [vmem:[%s214 + $0xd1] sm:$0xff]
    %v3841 = vld [vmem:[%s214 + $0xe1] sm:$0xff]
    %v3842 = vld [vmem:[%s214 + $0xf1] sm:$0xff]
    %v3843 = vld [vmem:[%s214 + $0x101] sm:$0xff]
    %v3844 = vld [vmem:[%s214 + $0x111] sm:$0xff]
    %v3845 = vld [vmem:[%s214 + $0x2] sm:$0xff]
    %v3846 = vld [vmem:[%s214 + $0x12] sm:$0xff]
    %v3847 = vld [vmem:[%s214 + $0x22] sm:$0xff]
    %v3848 = vld [vmem:[%s214 + $0x32] sm:$0xff]
    %v3849 = vld [vmem:[%s214 + $0x42] sm:$0xff]
    %v3850 = vld [vmem:[%s214 + $0x52] sm:$0xff]
    %v3851 = vld [vmem:[%s214 + $0x62] sm:$0xff]
    %v3852 = vld [vmem:[%s214 + $0x72] sm:$0xff]
    %v3853 = vld [vmem:[%s214 + $0xa2] sm:$0xff]
    %v3854 = vld [vmem:[%s214 + $0xb2] sm:$0xff]
    %v3855 = vld [vmem:[%s214 + $0xc2] sm:$0xff]
    %v3856 = vld [vmem:[%s214 + $0xd2] sm:$0xff]
    %v3857 = vld [vmem:[%s214 + $0xe2] sm:$0xff]
    %v3858 = vld [vmem:[%s214 + $0xf2] sm:$0xff]
    %v3859 = vld [vmem:[%s214 + $0x102] sm:$0xff]
    %v3860 = vld [vmem:[%s214 + $0x112] sm:$0xff]
    %3877 = vrot.lane.b32.xlu0 %v3733, 64
    %v3878 = vpop.permute.xlu0 %3877
    %3879 = vrot.lane.b32.xlu0 %v3734, 64
    %v3880 = vpop.permute.xlu0 %3879
    %3881 = vrot.lane.b32.xlu0 %v3735, 64
    %v3882 = vpop.permute.xlu0 %3881
    %3883 = vrot.lane.b32.xlu0 %v3736, 64
    %v3884 = vpop.permute.xlu0 %3883
    %3885 = vrot.lane.b32.xlu0 %v3737, 64
    %v3886 = vpop.permute.xlu0 %3885
    %3887 = vrot.lane.b32.xlu0 %v3738, 64
    %v3888 = vpop.permute.xlu0 %3887
    %3889 = vrot.lane.b32.xlu0 %v3739, 64
    %v3890 = vpop.permute.xlu0 %3889
    %3891 = vrot.lane.b32.xlu0 %v3740, 64
    %v3892 = vpop.permute.xlu0 %3891
    %3893 = vrot.lane.b32.xlu0 %v3741, 64
    %v3894 = vpop.permute.xlu0 %3893
    %3895 = vrot.lane.b32.xlu0 %v3742, 64
    %v3896 = vpop.permute.xlu0 %3895
    %3897 = vrot.lane.b32.xlu0 %v3743, 64
    %v3898 = vpop.permute.xlu0 %3897
    %3899 = vrot.lane.b32.xlu0 %v3744, 64
    %v3900 = vpop.permute.xlu0 %3899
    %3901 = vrot.lane.b32.xlu0 %v3745, 64
    %v3902 = vpop.permute.xlu0 %3901
    %3903 = vrot.lane.b32.xlu0 %v3746, 64
    %v3904 = vpop.permute.xlu0 %3903
    %3905 = vrot.lane.b32.xlu0 %v3747, 64
    %v3906 = vpop.permute.xlu0 %3905
    %3907 = vrot.lane.b32.xlu0 %v3748, 64
    %v3908 = vpop.permute.xlu0 %3907
    %3941 = vrot.lane.b32.xlu0 %v3765, 64
    %v3942 = vpop.permute.xlu0 %3941
    %3943 = vrot.lane.b32.xlu0 %v3766, 64
    %v3944 = vpop.permute.xlu0 %3943
    %3945 = vrot.lane.b32.xlu0 %v3767, 64
    %v3946 = vpop.permute.xlu0 %3945
    %3947 = vrot.lane.b32.xlu0 %v3768, 64
    %v3948 = vpop.permute.xlu0 %3947
    %3949 = vrot.lane.b32.xlu0 %v3769, 64
    %v3950 = vpop.permute.xlu0 %3949
    %3951 = vrot.lane.b32.xlu0 %v3770, 64
    %v3952 = vpop.permute.xlu0 %3951
    %3953 = vrot.lane.b32.xlu0 %v3771, 64
    %v3954 = vpop.permute.xlu0 %3953
    %3955 = vrot.lane.b32.xlu0 %v3772, 64
    %v3956 = vpop.permute.xlu0 %3955
    %3957 = vrot.lane.b32.xlu0 %v3773, 64
    %v3958 = vpop.permute.xlu0 %3957
    %3959 = vrot.lane.b32.xlu0 %v3774, 64
    %v3960 = vpop.permute.xlu0 %3959
    %3961 = vrot.lane.b32.xlu0 %v3775, 64
    %v3962 = vpop.permute.xlu0 %3961
    %3963 = vrot.lane.b32.xlu0 %v3776, 64
    %v3964 = vpop.permute.xlu0 %3963
    %3965 = vrot.lane.b32.xlu0 %v3777, 64
    %v3966 = vpop.permute.xlu0 %3965
    %3967 = vrot.lane.b32.xlu0 %v3778, 64
    %v3968 = vpop.permute.xlu0 %3967
    %3969 = vrot.lane.b32.xlu0 %v3779, 64
    %v3970 = vpop.permute.xlu0 %3969
    %3971 = vrot.lane.b32.xlu0 %v3780, 64
    %v3972 = vpop.permute.xlu0 %3971
    %4005 = vrot.lane.b32.xlu0 %v3797, 64
    %v4006 = vpop.permute.xlu0 %4005
    %4007 = vrot.lane.b32.xlu0 %v3798, 64
    %v4008 = vpop.permute.xlu0 %4007
    %4009 = vrot.lane.b32.xlu0 %v3799, 64
    %v4010 = vpop.permute.xlu0 %4009
    %4011 = vrot.lane.b32.xlu0 %v3800, 64
    %v4012 = vpop.permute.xlu0 %4011
    %4013 = vrot.lane.b32.xlu0 %v3801, 64
    %v4014 = vpop.permute.xlu0 %4013
    %4015 = vrot.lane.b32.xlu0 %v3802, 64
    %v4016 = vpop.permute.xlu0 %4015
    %4017 = vrot.lane.b32.xlu0 %v3803, 64
    %v4018 = vpop.permute.xlu0 %4017
    %4019 = vrot.lane.b32.xlu0 %v3804, 64
    %v4020 = vpop.permute.xlu0 %4019
    %4021 = vrot.lane.b32.xlu0 %v3805, 64
    %v4022 = vpop.permute.xlu0 %4021
    %4023 = vrot.lane.b32.xlu0 %v3806, 64
    %v4024 = vpop.permute.xlu0 %4023
    %4025 = vrot.lane.b32.xlu0 %v3807, 64
    %v4026 = vpop.permute.xlu0 %4025
    %4027 = vrot.lane.b32.xlu0 %v3808, 64
    %v4028 = vpop.permute.xlu0 %4027
    %4029 = vrot.lane.b32.xlu0 %v3809, 64
    %v4030 = vpop.permute.xlu0 %4029
    %4031 = vrot.lane.b32.xlu0 %v3810, 64
    %v4032 = vpop.permute.xlu0 %4031
    %4033 = vrot.lane.b32.xlu0 %v3811, 64
    %v4034 = vpop.permute.xlu0 %4033
    %4035 = vrot.lane.b32.xlu0 %v3812, 64
    %v4036 = vpop.permute.xlu0 %4035
    %4069 = vrot.lane.b32.xlu0 %v3829, 64
    %v4070 = vpop.permute.xlu0 %4069
    %4071 = vrot.lane.b32.xlu0 %v3830, 64
    %v4072 = vpop.permute.xlu0 %4071
    %4073 = vrot.lane.b32.xlu0 %v3831, 64
    %v4074 = vpop.permute.xlu0 %4073
    %4075 = vrot.lane.b32.xlu0 %v3832, 64
    %v4076 = vpop.permute.xlu0 %4075
    %4077 = vrot.lane.b32.xlu0 %v3833, 64
    %v4078 = vpop.permute.xlu0 %4077
    %4079 = vrot.lane.b32.xlu0 %v3834, 64
    %v4080 = vpop.permute.xlu0 %4079
    %4081 = vrot.lane.b32.xlu0 %v3835, 64
    %v4082 = vpop.permute.xlu0 %4081
    %4083 = vrot.lane.b32.xlu0 %v3836, 64
    %v4084 = vpop.permute.xlu0 %4083
    %4085 = vrot.lane.b32.xlu0 %v3837, 64
    %v4086 = vpop.permute.xlu0 %4085
    %4087 = vrot.lane.b32.xlu0 %v3838, 64
    %v4088 = vpop.permute.xlu0 %4087
    %4089 = vrot.lane.b32.xlu0 %v3839, 64
    %v4090 = vpop.permute.xlu0 %4089
    %4091 = vrot.lane.b32.xlu0 %v3840, 64
    %v4092 = vpop.permute.xlu0 %4091
    %4093 = vrot.lane.b32.xlu0 %v3841, 64
    %v4094 = vpop.permute.xlu0 %4093
    %4095 = vrot.lane.b32.xlu0 %v3842, 64
    %v4096 = vpop.permute.xlu0 %4095
    %4097 = vrot.lane.b32.xlu0 %v3843, 64
    %v4098 = vpop.permute.xlu0 %4097
    %4099 = vrot.lane.b32.xlu0 %v3844, 64
    %v4100 = vpop.permute.xlu0 %4099
    %v4117 = vsel %vm42, %v3717, %v3878
    %v4118 = vsel %vm42, %v3718, %v3880
    %v4119 = vsel %vm42, %v3719, %v3882
    %v4120 = vsel %vm42, %v3720, %v3884
    %v4121 = vsel %vm42, %v3721, %v3886
    %v4122 = vsel %vm42, %v3722, %v3888
    %v4123 = vsel %vm42, %v3723, %v3890
    %v4124 = vsel %vm42, %v3724, %v3892
    %v4125 = vsel %vm42, %v3725, %v3894
    %v4126 = vsel %vm42, %v3726, %v3896
    %v4127 = vsel %vm42, %v3727, %v3898
    %v4128 = vsel %vm42, %v3728, %v3900
    %v4129 = vsel %vm42, %v3729, %v3902
    %v4130 = vsel %vm42, %v3730, %v3904
    %v4131 = vsel %vm42, %v3731, %v3906
    %v4132 = vsel %vm42, %v3732, %v3908
    %v4133 = vsel %vm42, %v3749, %v3942
    %v4134 = vsel %vm42, %v3750, %v3944
    %v4135 = vsel %vm42, %v3751, %v3946
    %v4136 = vsel %vm42, %v3752, %v3948
    %v4137 = vsel %vm42, %v3753, %v3950
    %v4138 = vsel %vm42, %v3754, %v3952
    %v4139 = vsel %vm42, %v3755, %v3954
    %v4140 = vsel %vm42, %v3756, %v3956
    %v4141 = vsel %vm42, %v3757, %v3958
    %v4142 = vsel %vm42, %v3758, %v3960
    %v4143 = vsel %vm42, %v3759, %v3962
    %v4144 = vsel %vm42, %v3760, %v3964
    %v4145 = vsel %vm42, %v3761, %v3966
    %v4146 = vsel %vm42, %v3762, %v3968
    %v4147 = vsel %vm42, %v3763, %v3970
    %v4148 = vsel %vm42, %v3764, %v3972
    %v4149 = vsel %vm42, %v3781, %v4006
    %v4150 = vsel %vm42, %v3782, %v4008
    %v4151 = vsel %vm42, %v3783, %v4010
    %v4152 = vsel %vm42, %v3784, %v4012
    %v4153 = vsel %vm42, %v3785, %v4014
    %v4154 = vsel %vm42, %v3786, %v4016
    %v4155 = vsel %vm42, %v3787, %v4018
    %v4156 = vsel %vm42, %v3788, %v4020
    %v4157 = vsel %vm42, %v3789, %v4022
    %v4158 = vsel %vm42, %v3790, %v4024
    %v4159 = vsel %vm42, %v3791, %v4026
    %v4160 = vsel %vm42, %v3792, %v4028
    %v4161 = vsel %vm42, %v3793, %v4030
    %v4162 = vsel %vm42, %v3794, %v4032
    %v4163 = vsel %vm42, %v3795, %v4034
    %v4164 = vsel %vm42, %v3796, %v4036
    %v4165 = vsel %vm42, %v3813, %v4070
    %v4166 = vsel %vm42, %v3814, %v4072
    %v4167 = vsel %vm42, %v3815, %v4074
    %v4168 = vsel %vm42, %v3816, %v4076
    %v4169 = vsel %vm42, %v3817, %v4078
    %v4170 = vsel %vm42, %v3818, %v4080
    %v4171 = vsel %vm42, %v3819, %v4082
    %v4172 = vsel %vm42, %v3820, %v4084
    %v4173 = vsel %vm42, %v3821, %v4086
    %v4174 = vsel %vm42, %v3822, %v4088
    %v4175 = vsel %vm42, %v3823, %v4090
    %v4176 = vsel %vm42, %v3824, %v4092
    %v4177 = vsel %vm42, %v3825, %v4094
    %v4178 = vsel %vm42, %v3826, %v4096
    %v4179 = vsel %vm42, %v3827, %v4098
    %v4180 = vsel %vm42, %v3828, %v4100
    %s4181 = scalar_lea.vmem [#allocation6], 1728
    %v4182 = vld [vmem:[%s4181] sm:$0xff]
    %v4183 = vld [vmem:[%s4181 + $0x8] sm:$0xff]
    %v4184 = vld [vmem:[%s4181 + $0x10] sm:$0xff]
    %v4185 = vld [vmem:[%s4181 + $0x18] sm:$0xff]
    %v4186 = vld [vmem:[%s4181 + $0x20] sm:$0xff]
    %v4187 = vld [vmem:[%s4181 + $0x28] sm:$0xff]
    %v4188 = vld [vmem:[%s4181 + $0x30] sm:$0xff]
    %v4189 = vld [vmem:[%s4181 + $0x38] sm:$0xff]
    %v4190 = vld [vmem:[%s4181 + $0x40] sm:$0xff]
    %v4191 = vld [vmem:[%s4181 + $0x48] sm:$0xff]
    %v4192 = vld [vmem:[%s4181 + $0x50] sm:$0xff]
    %v4193 = vld [vmem:[%s4181 + $0x58] sm:$0xff]
    %v4194 = vld [vmem:[%s4181 + $0x60] sm:$0xff]
    %v4195 = vld [vmem:[%s4181 + $0x68] sm:$0xff]
    %v4196 = vld [vmem:[%s4181 + $0x70] sm:$0xff]
    %v4197 = vld [vmem:[%s4181 + $0x78] sm:$0xff]
    %v4198 = vld [vmem:[%s4181 + $0x80] sm:$0xff]
    %v4199 = vld [vmem:[%s4181 + $0x88] sm:$0xff]
    %v4200 = vld [vmem:[%s4181 + $0x90] sm:$0xff]
    %v4201 = vld [vmem:[%s4181 + $0x98] sm:$0xff]
    %v4202 = vld [vmem:[%s4181 + $0xa0] sm:$0xff]
    %v4203 = vld [vmem:[%s4181 + $0xa8] sm:$0xff]
    %v4204 = vld [vmem:[%s4181 + $0xb0] sm:$0xff]
    %v4205 = vld [vmem:[%s4181 + $0xb8] sm:$0xff]
    %v4206 = vld [vmem:[%s4181 + $0xc0] sm:$0xff]
    %v4207 = vld [vmem:[%s4181 + $0xc8] sm:$0xff]
    %v4208 = vld [vmem:[%s4181 + $0xd0] sm:$0xff]
    %v4209 = vld [vmem:[%s4181 + $0xd8] sm:$0xff]
    %v4210 = vld [vmem:[%s4181 + $0xe0] sm:$0xff]
    %v4211 = vld [vmem:[%s4181 + $0xe8] sm:$0xff]
    %v4212 = vld [vmem:[%s4181 + $0xf0] sm:$0xff]
    %v4213 = vld [vmem:[%s4181 + $0xf8] sm:$0xff]
    %v4214 = vld [vmem:[%s4181 + $0x100] sm:$0xff]
    %v4215 = vld [vmem:[%s4181 + $0x108] sm:$0xff]
    %v4216 = vld [vmem:[%s4181 + $0x110] sm:$0xff]
    %v4217 = vld [vmem:[%s4181 + $0x118] sm:$0xff]
    %v4218 = vld [vmem:[%s4181 + $0x120] sm:$0xff]
    %v4219 = vld [vmem:[%s4181 + $0x128] sm:$0xff]
    %v4220 = vld [vmem:[%s4181 + $0x130] sm:$0xff]
    %v4221 = vld [vmem:[%s4181 + $0x138] sm:$0xff]
    %v4222 = vld [vmem:[%s4181 + $0x140] sm:$0xff]
    %v4223 = vld [vmem:[%s4181 + $0x148] sm:$0xff]
    %v4224 = vld [vmem:[%s4181 + $0x150] sm:$0xff]
    %v4225 = vld [vmem:[%s4181 + $0x158] sm:$0xff]
    %v4226 = vld [vmem:[%s4181 + $0x160] sm:$0xff]
    %v4227 = vld [vmem:[%s4181 + $0x168] sm:$0xff]
    %v4228 = vld [vmem:[%s4181 + $0x170] sm:$0xff]
    %v4229 = vld [vmem:[%s4181 + $0x178] sm:$0xff]
    %v4230 = vld [vmem:[%s4181 + $0x180] sm:$0xff]
    %v4231 = vld [vmem:[%s4181 + $0x188] sm:$0xff]
    %v4232 = vld [vmem:[%s4181 + $0x190] sm:$0xff]
    %v4233 = vld [vmem:[%s4181 + $0x198] sm:$0xff]
    %v4234 = vld [vmem:[%s4181 + $0x1a0] sm:$0xff]
    %v4235 = vld [vmem:[%s4181 + $0x1a8] sm:$0xff]
    %v4236 = vld [vmem:[%s4181 + $0x1b0] sm:$0xff]
    %v4237 = vld [vmem:[%s4181 + $0x1b8] sm:$0xff]
    %v4238 = vld [vmem:[%s4181 + $0x1c0] sm:$0xff]
    %v4239 = vld [vmem:[%s4181 + $0x1c8] sm:$0xff]
    %v4240 = vld [vmem:[%s4181 + $0x1d0] sm:$0xff]
    %v4241 = vld [vmem:[%s4181 + $0x1d8] sm:$0xff]
    %v4242 = vld [vmem:[%s4181 + $0x1e0] sm:$0xff]
    %v4243 = vld [vmem:[%s4181 + $0x1e8] sm:$0xff]
    %v4244 = vld [vmem:[%s4181 + $0x1f0] sm:$0xff]
    %v4245 = vld [vmem:[%s4181 + $0x1f8] sm:$0xff]
    %v4246 = vld [vmem:[%s4181 + $0x200] sm:$0xff]
    %v4247 = vld [vmem:[%s4181 + $0x208] sm:$0xff]
    %v4248 = vld [vmem:[%s4181 + $0x210] sm:$0xff]
    %v4249 = vld [vmem:[%s4181 + $0x218] sm:$0xff]
    %v4250 = vld [vmem:[%s4181 + $0x220] sm:$0xff]
    %v4251 = vld [vmem:[%s4181 + $0x228] sm:$0xff]
    %v4252 = vld [vmem:[%s4181 + $0x230] sm:$0xff]
    %v4253 = vld [vmem:[%s4181 + $0x238] sm:$0xff]
    %s4254 = scalar_lea.vmem %s2, 12
    %v4255 = vld [vmem:[%s4254] sm:$0x1]
    %v4256 = vlaneseq
    %v4257 = vshrl.u32 %v4256, 7
    %v4258 = vsub.s32 0, %v4257
    %v4259 = vrot.slane %v4255, %v4258
    %v4261 = vsel %vm42, %v3845, 0
    %v4264 = vsel %vm42, %v3846, 0
    %v4267 = vsel %vm42, %v3847, 0
    %v4270 = vsel %vm42, %v3848, 0
    %v4273 = vsel %vm42, %v3849, 0
    %v4276 = vsel %vm42, %v3850, 0
    %v4279 = vsel %vm42, %v3851, 0
    %v4282 = vsel %vm42, %v3852, 0
    %v4285 = vsel %vm42, %v3853, 0
    %v4288 = vsel %vm42, %v3854, 0
    %v4291 = vsel %vm42, %v3855, 0
    %v4294 = vsel %vm42, %v3856, 0
    %v4297 = vsel %vm42, %v3857, 0
    %v4300 = vsel %vm42, %v3858, 0
    %v4303 = vsel %vm42, %v3859, 0
    %v4306 = vsel %vm42, %v3860, 0
    %4308 = vmatprep.subr.mxu0 0.0
    %4309 = vmatpush1.msra.mxu0 %v4182
    %4310 = vmatprep.subr.mxu0 0.0
    %4311 = vmatpush1.msra.mxu0 %v4183
    %4312 = vmatprep.subr.mxu0 0.0
    %4313 = vmatpush1.msra.mxu0 %v4184
    %4314 = vmatprep.subr.mxu0 0.0
    %4315 = vmatpush1.msra.mxu0 %v4185
    %4316 = vmatprep.subr.mxu0 0.0
    %4317 = vmatpush1.msra.mxu0 %v4186
    %4318 = vmatprep.subr.mxu0 0.0
    %4319 = vmatpush1.msra.mxu0 %v4187
    %4320 = vmatprep.subr.mxu0 0.0
    %4321 = vmatpush1.msra.mxu0 %v4188
    %4322 = vmatprep.subr.mxu0 0.0
    %4323 = vmatpush1.msra.mxu0 %v4189
    %4324 = vmatprep.subr.mxu0 0.0
    %4325 = vmatpush1.msra.mxu0 %v4190
    %4326 = vmatprep.subr.mxu0 0.0
    %4327 = vmatpush1.msra.mxu0 %v4191
    %4328 = vmatprep.subr.mxu0 0.0
    %4329 = vmatpush1.msra.mxu0 %v4192
    %4330 = vmatprep.subr.mxu0 0.0
    %4331 = vmatpush1.msra.mxu0 %v4193
    %4332 = vmatprep.subr.mxu0 0.0
    %4333 = vmatpush1.msra.mxu0 %v4194
    %4334 = vmatprep.subr.mxu0 0.0
    %4335 = vmatpush1.msra.mxu0 %v4195
    %4336 = vmatprep.subr.mxu0 0.0
    %4337 = vmatpush1.msra.mxu0 %v4196
    %4338 = vmatprep.subr.mxu0 0.0
    %4339 = vmatpush1.msra.mxu0 %v4197
    %4340 = vmatprep.subr.mxu0 0.0
    %4341 = vmatpush1.msra.mxu0 %v4198
    %4342 = vmatprep.subr.mxu0 0.0
    %4343 = vmatpush1.msra.mxu0 %v4199
    %4344 = vmatprep.subr.mxu0 0.0
    %4345 = vmatpush1.msra.mxu0 %v4200
    %4346 = vmatprep.subr.mxu0 0.0
    %4347 = vmatpush1.msra.mxu0 %v4201
    %4348 = vmatprep.subr.mxu0 0.0
    %4349 = vmatpush1.msra.mxu0 %v4202
    %4350 = vmatprep.subr.mxu0 0.0
    %4351 = vmatpush1.msra.mxu0 %v4203
    %4352 = vmatprep.subr.mxu0 0.0
    %4353 = vmatpush1.msra.mxu0 %v4204
    %4354 = vmatprep.subr.mxu0 0.0
    %4355 = vmatpush1.msra.mxu0 %v4205
    %4356 = vmatprep.subr.mxu0 0.0
    %4357 = vmatpush1.msra.mxu0 %v4206
    %4358 = vmatprep.subr.mxu0 0.0
    %4359 = vmatpush1.msra.mxu0 %v4207
    %4360 = vmatprep.subr.mxu0 0.0
    %4361 = vmatpush1.msra.mxu0 %v4208
    %4362 = vmatprep.subr.mxu0 0.0
    %4363 = vmatpush1.msra.mxu0 %v4209
    %4364 = vmatprep.subr.mxu0 0.0
    %4365 = vmatpush1.msra.mxu0 %v4210
    %4366 = vmatprep.subr.mxu0 0.0
    %4367 = vmatpush1.msra.mxu0 %v4211
    %4368 = vmatprep.subr.mxu0 0.0
    %4369 = vmatpush1.msra.mxu0 %v4212
    %4370 = vmatprep.subr.mxu0 0.0
    %4371 = vmatpush1.msra.mxu0 %v4213
    %4372 = vmatprep.mubr.f32.mxu0 %v4133
    %4373 = vmatmul.mubr.f32.gmra.mrb[0].mxu0 %v4117
    %v4374 = vpop.f32.mrb[0].mxu0
    %v4375 = vadd.f32 %v4259, %v4374
    %v4376 = vpop.f32.mrb[0].mxu0
    %4377 = vmatprep.mubr.f32.mxu0 %v4134
    %4378 = vmatmul.mubr.f32.gmra.mrb[0].mxu0 %v4118
    %v4379 = vpop.f32.mrb[0].mxu0
    %v4380 = vadd.f32 %v4259, %v4379
    %v4381 = vpop.f32.mrb[0].mxu0
    %4382 = vmatprep.mubr.f32.mxu0 %v4135
    %4383 = vmatmul.mubr.f32.gmra.mrb[0].mxu0 %v4119
    %v4384 = vpop.f32.mrb[0].mxu0
    %v4385 = vadd.f32 %v4259, %v4384
    %v4386 = vpop.f32.mrb[0].mxu0
    %4387 = vmatprep.mubr.f32.mxu0 %v4136
    %4388 = vmatmul.mubr.f32.gmra.mrb[0].mxu0 %v4120
    %v4389 = vpop.f32.mrb[0].mxu0
    %v4390 = vadd.f32 %v4259, %v4389
    %v4391 = vpop.f32.mrb[0].mxu0
    %4392 = vmatprep.mubr.f32.mxu0 %v4137
    %4393 = vmatmul.mubr.f32.gmra.mrb[0].mxu0 %v4121
    %v4394 = vpop.f32.mrb[0].mxu0
    %v4395 = vadd.f32 %v4259, %v4394
    %v4396 = vpop.f32.mrb[0].mxu0
    %4397 = vmatprep.mubr.f32.mxu0 %v4138
    %4398 = vmatmul.mubr.f32.gmra.mrb[0].mxu0 %v4122
    %v4399 = vpop.f32.mrb[0].mxu0
    %v4400 = vadd.f32 %v4259, %v4399
    %v4401 = vpop.f32.mrb[0].mxu0
    %4402 = vmatprep.mubr.f32.mxu0 %v4139
    %4403 = vmatmul.mubr.f32.gmra.mrb[0].mxu0 %v4123
    %v4404 = vpop.f32.mrb[0].mxu0
    %v4405 = vadd.f32 %v4259, %v4404
    %v4406 = vpop.f32.mrb[0].mxu0
    %4407 = vmatprep.mubr.f32.mxu0 %v4140
    %4408 = vmatmul.mubr.f32.gmra.mrb[0].mxu0 %v4124
    %v4409 = vpop.f32.mrb[0].mxu0
    %v4410 = vadd.f32 %v4259, %v4409
    %v4411 = vpop.f32.mrb[0].mxu0
    %4412 = vmatprep.mubr.f32.mxu0 %v4141
    %4413 = vmatmul.mubr.f32.gmra.mrb[0].mxu0 %v4125
    %v4414 = vpop.f32.mrb[0].mxu0
    %v4415 = vadd.f32 %v4259, %v4414
    %v4416 = vpop.f32.mrb[0].mxu0
    %4417 = vmatprep.mubr.f32.mxu0 %v4142
    %4418 = vmatmul.mubr.f32.gmra.mrb[0].mxu0 %v4126
    %v4419 = vpop.f32.mrb[0].mxu0
    %v4420 = vadd.f32 %v4259, %v4419
    %v4421 = vpop.f32.mrb[0].mxu0
    %4422 = vmatprep.mubr.f32.mxu0 %v4143
    %4423 = vmatmul.mubr.f32.gmra.mrb[0].mxu0 %v4127
    %v4424 = vpop.f32.mrb[0].mxu0
    %v4425 = vadd.f32 %v4259, %v4424
    %v4426 = vpop.f32.mrb[0].mxu0
    %4427 = vmatprep.mubr.f32.mxu0 %v4144
    %4428 = vmatmul.mubr.f32.gmra.mrb[0].mxu0 %v4128
    %v4429 = vpop.f32.mrb[0].mxu0
    %v4430 = vadd.f32 %v4259, %v4429
    %v4431 = vpop.f32.mrb[0].mxu0
    %4432 = vmatprep.mubr.f32.mxu0 %v4145
    %4433 = vmatmul.mubr.f32.gmra.mrb[0].mxu0 %v4129
    %v4434 = vpop.f32.mrb[0].mxu0
    %v4435 = vadd.f32 %v4259, %v4434
    %v4436 = vpop.f32.mrb[0].mxu0
    %4437 = vmatprep.mubr.f32.mxu0 %v4146
    %4438 = vmatmul.mubr.f32.gmra.mrb[0].mxu0 %v4130
    %v4439 = vpop.f32.mrb[0].mxu0
    %v4440 = vadd.f32 %v4259, %v4439
    %v4441 = vpop.f32.mrb[0].mxu0
    %4442 = vmatprep.mubr.f32.mxu0 %v4147
    %4443 = vmatmul.mubr.f32.gmra.mrb[0].mxu0 %v4131
    %v4444 = vpop.f32.mrb[0].mxu0
    %v4445 = vadd.f32 %v4259, %v4444
    %v4446 = vpop.f32.mrb[0].mxu0
    %4447 = vmatprep.mubr.f32.mxu0 %v4148
    %4448 = vmatmul.mubr.f32.gmra.mrb[0].mxu0 %v4132
    %v4449 = vpop.f32.mrb[0].mxu0
    %v4450 = vadd.f32 %v4259, %v4449
    %v4451 = vpop.f32.mrb[0].mxu0
    %4452 = vdwg.mxu0
    %4453 = vmatprep.subr.mxu0 0.0
    %4454 = vmatpush1.msra.mxu0 %v4214
    %4455 = vmatprep.subr.mxu0 0.0
    %4456 = vmatpush1.msra.mxu0 %v4215
    %4457 = vmatprep.subr.mxu0 0.0
    %4458 = vmatpush1.msra.mxu0 %v4216
    %4459 = vmatprep.subr.mxu0 0.0
    %4460 = vmatpush1.msra.mxu0 %v4217
    %4461 = vmatprep.subr.mxu0 0.0
    %4462 = vmatpush1.msra.mxu0 %v4218
    %4463 = vmatprep.subr.mxu0 0.0
    %4464 = vmatpush1.msra.mxu0 %v4219
    %4465 = vmatprep.subr.mxu0 0.0
    %4466 = vmatpush1.msra.mxu0 %v4220
    %4467 = vmatprep.subr.mxu0 0.0
    %4468 = vmatpush1.msra.mxu0 %v4221
    %4469 = vmatprep.subr.mxu0 0.0
    %4470 = vmatpush1.msra.mxu0 %v4222
    %4471 = vmatprep.subr.mxu0 0.0
    %4472 = vmatpush1.msra.mxu0 %v4223
    %4473 = vmatprep.subr.mxu0 0.0
    %4474 = vmatpush1.msra.mxu0 %v4224
    %4475 = vmatprep.subr.mxu0 0.0
    %4476 = vmatpush1.msra.mxu0 %v4225
    %4477 = vmatprep.subr.mxu0 0.0
    %4478 = vmatpush1.msra.mxu0 %v4226
    %4479 = vmatprep.subr.mxu0 0.0
    %4480 = vmatpush1.msra.mxu0 %v4227
    %4481 = vmatprep.subr.mxu0 0.0
    %4482 = vmatpush1.msra.mxu0 %v4228
    %4483 = vmatprep.subr.mxu0 0.0
    %4484 = vmatpush1.msra.mxu0 %v4229
    %4485 = vmatprep.subr.mxu0 0.0
    %4486 = vmatpush1.msra.mxu0 %v4230
    %4487 = vmatprep.subr.mxu0 0.0
    %4488 = vmatpush1.msra.mxu0 %v4231
    %4489 = vmatprep.subr.mxu0 0.0
    %4490 = vmatpush1.msra.mxu0 %v4232
    %4491 = vmatprep.subr.mxu0 0.0
    %4492 = vmatpush1.msra.mxu0 %v4233
    %4493 = vmatprep.subr.mxu0 0.0
    %4494 = vmatpush1.msra.mxu0 %v4234
    %4495 = vmatprep.subr.mxu0 0.0
    %4496 = vmatpush1.msra.mxu0 %v4235
    %4497 = vmatprep.subr.mxu0 0.0
    %4498 = vmatpush1.msra.mxu0 %v4236
    %4499 = vmatprep.subr.mxu0 0.0
    %4500 = vmatpush1.msra.mxu0 %v4237
    %4501 = vmatprep.subr.mxu0 0.0
    %4502 = vmatpush1.msra.mxu0 %v4238
    %4503 = vmatprep.subr.mxu0 0.0
    %4504 = vmatpush1.msra.mxu0 %v4239
    %4505 = vmatprep.subr.mxu0 0.0
    %4506 = vmatpush1.msra.mxu0 %v4240
    %4507 = vmatprep.subr.mxu0 0.0
    %4508 = vmatpush1.msra.mxu0 %v4241
    %4509 = vmatprep.subr.mxu0 0.0
    %4510 = vmatpush1.msra.mxu0 %v4242
    %4511 = vmatprep.subr.mxu0 0.0
    %4512 = vmatpush1.msra.mxu0 %v4243
    %4513 = vmatprep.subr.mxu0 0.0
    %4514 = vmatpush1.msra.mxu0 %v4244
    %4515 = vmatprep.subr.mxu0 0.0
    %4516 = vmatpush1.msra.mxu0 %v4245
    %4517 = vmatprep.mubr.f32.mxu0 %v4165
    %4518 = vmatmul.mubr.f32.gmra.mrb[0].mxu0 %v4149
    %v4519 = vpop.f32.mrb[0].mxu0
    %v4520 = vadd.f32 %v4375, %v4519
    %v4521 = vpop.f32.mrb[0].mxu0
    %4522 = vmatprep.mubr.f32.mxu0 %v4166
    %4523 = vmatmul.mubr.f32.gmra.mrb[0].mxu0 %v4150
    %v4524 = vpop.f32.mrb[0].mxu0
    %v4525 = vadd.f32 %v4380, %v4524
    %v4526 = vpop.f32.mrb[0].mxu0
    %4527 = vmatprep.mubr.f32.mxu0 %v4167
    %4528 = vmatmul.mubr.f32.gmra.mrb[0].mxu0 %v4151
    %v4529 = vpop.f32.mrb[0].mxu0
    %v4530 = vadd.f32 %v4385, %v4529
    %v4531 = vpop.f32.mrb[0].mxu0
    %4532 = vmatprep.mubr.f32.mxu0 %v4168
    %4533 = vmatmul.mubr.f32.gmra.mrb[0].mxu0 %v4152
    %v4534 = vpop.f32.mrb[0].mxu0
    %v4535 = vadd.f32 %v4390, %v4534
    %v4536 = vpop.f32.mrb[0].mxu0
    %4537 = vmatprep.mubr.f32.mxu0 %v4169
    %4538 = vmatmul.mubr.f32.gmra.mrb[0].mxu0 %v4153
    %v4539 = vpop.f32.mrb[0].mxu0
    %v4540 = vadd.f32 %v4395, %v4539
    %v4541 = vpop.f32.mrb[0].mxu0
    %4542 = vmatprep.mubr.f32.mxu0 %v4170
    %4543 = vmatmul.mubr.f32.gmra.mrb[0].mxu0 %v4154
    %v4544 = vpop.f32.mrb[0].mxu0
    %v4545 = vadd.f32 %v4400, %v4544
    %v4546 = vpop.f32.mrb[0].mxu0
    %4547 = vmatprep.mubr.f32.mxu0 %v4171
    %4548 = vmatmul.mubr.f32.gmra.mrb[0].mxu0 %v4155
    %v4549 = vpop.f32.mrb[0].mxu0
    %v4550 = vadd.f32 %v4405, %v4549
    %v4551 = vpop.f32.mrb[0].mxu0
    %4552 = vmatprep.mubr.f32.mxu0 %v4172
    %4553 = vmatmul.mubr.f32.gmra.mrb[0].mxu0 %v4156
    %v4554 = vpop.f32.mrb[0].mxu0
    %v4555 = vadd.f32 %v4410, %v4554
    %v4556 = vpop.f32.mrb[0].mxu0
    %4557 = vmatprep.mubr.f32.mxu0 %v4173
    %4558 = vmatmul.mubr.f32.gmra.mrb[0].mxu0 %v4157
    %v4559 = vpop.f32.mrb[0].mxu0
    %v4560 = vadd.f32 %v4415, %v4559
    %v4561 = vpop.f32.mrb[0].mxu0
    %4562 = vmatprep.mubr.f32.mxu0 %v4174
    %4563 = vmatmul.mubr.f32.gmra.mrb[0].mxu0 %v4158
    %v4564 = vpop.f32.mrb[0].mxu0
    %v4565 = vadd.f32 %v4420, %v4564
    %v4566 = vpop.f32.mrb[0].mxu0
    %4567 = vmatprep.mubr.f32.mxu0 %v4175
    %4568 = vmatmul.mubr.f32.gmra.mrb[0].mxu0 %v4159
    %v4569 = vpop.f32.mrb[0].mxu0
    %v4570 = vadd.f32 %v4425, %v4569
    %v4571 = vpop.f32.mrb[0].mxu0
    %4572 = vmatprep.mubr.f32.mxu0 %v4176
    %4573 = vmatmul.mubr.f32.gmra.mrb[0].mxu0 %v4160
    %v4574 = vpop.f32.mrb[0].mxu0
    %v4575 = vadd.f32 %v4430, %v4574
    %v4576 = vpop.f32.mrb[0].mxu0
    %4577 = vmatprep.mubr.f32.mxu0 %v4177
    %4578 = vmatmul.mubr.f32.gmra.mrb[0].mxu0 %v4161
    %v4579 = vpop.f32.mrb[0].mxu0
    %v4580 = vadd.f32 %v4435, %v4579
    %v4581 = vpop.f32.mrb[0].mxu0
    %4582 = vmatprep.mubr.f32.mxu0 %v4178
    %4583 = vmatmul.mubr.f32.gmra.mrb[0].mxu0 %v4162
    %v4584 = vpop.f32.mrb[0].mxu0
    %v4585 = vadd.f32 %v4440, %v4584
    %v4586 = vpop.f32.mrb[0].mxu0
    %4587 = vmatprep.mubr.f32.mxu0 %v4179
    %4588 = vmatmul.mubr.f32.gmra.mrb[0].mxu0 %v4163
    %v4589 = vpop.f32.mrb[0].mxu0
    %v4590 = vadd.f32 %v4445, %v4589
    %v4591 = vpop.f32.mrb[0].mxu0
    %4592 = vmatprep.mubr.f32.mxu0 %v4180
    %4593 = vmatmul.mubr.f32.gmra.mrb[0].mxu0 %v4164
    %v4594 = vpop.f32.mrb[0].mxu0
    %v4595 = vadd.f32 %v4450, %v4594
    %v4596 = vpop.f32.mrb[0].mxu0
    %4597 = vdwg.mxu0
    %4598 = vmatprep.subr.mxu0 0.0
    %4599 = vmatpush1.msra.mxu0 %v4246
    %4600 = vmatprep.subr.mxu0 0.0
    %4601 = vmatpush1.msra.mxu0 %v4247
    %4602 = vmatprep.subr.mxu0 0.0
    %4603 = vmatpush1.msra.mxu0 %v4248
    %4604 = vmatprep.subr.mxu0 0.0
    %4605 = vmatpush1.msra.mxu0 %v4249
    %4606 = vmatprep.subr.mxu0 0.0
    %4607 = vmatpush1.msra.mxu0 %v4250
    %4608 = vmatprep.subr.mxu0 0.0
    %4609 = vmatpush1.msra.mxu0 %v4251
    %4610 = vmatprep.subr.mxu0 0.0
    %4611 = vmatpush1.msra.mxu0 %v4252
    %4612 = vmatprep.subr.mxu0 0.0
    %4613 = vmatpush1.msra.mxu0 %v4253
    %4614 = vmatprep.subr.mxu0 0.0
    %4615 = vmatpush1.msra.mxu0 0.0
    %4616 = vmatprep.subr.mxu0 0.0
    %4617 = vmatpush1.msra.mxu0 0.0
    %4618 = vmatprep.subr.mxu0 0.0
    %4619 = vmatpush1.msra.mxu0 0.0
    %4620 = vmatprep.subr.mxu0 0.0
    %4621 = vmatpush1.msra.mxu0 0.0
    %4622 = vmatprep.subr.mxu0 0.0
    %4623 = vmatpush1.msra.mxu0 0.0
    %4624 = vmatprep.subr.mxu0 0.0
    %4625 = vmatpush1.msra.mxu0 0.0
    %4626 = vmatprep.subr.mxu0 0.0
    %4627 = vmatpush1.msra.mxu0 0.0
    %4628 = vmatprep.subr.mxu0 0.0
    %4629 = vmatpush1.msra.mxu0 0.0
    %4630 = vmatprep.subr.mxu0 0.0
    %4631 = vmatpush1.msra.mxu0 0.0
    %4632 = vmatprep.subr.mxu0 0.0
    %4633 = vmatpush1.msra.mxu0 0.0
    %4634 = vmatprep.subr.mxu0 0.0
    %4635 = vmatpush1.msra.mxu0 0.0
    %4636 = vmatprep.subr.mxu0 0.0
    %4637 = vmatpush1.msra.mxu0 0.0
    %4638 = vmatprep.subr.mxu0 0.0
    %4639 = vmatpush1.msra.mxu0 0.0
    %4640 = vmatprep.subr.mxu0 0.0
    %4641 = vmatpush1.msra.mxu0 0.0
    %4642 = vmatprep.subr.mxu0 0.0
    %4643 = vmatpush1.msra.mxu0 0.0
    %4644 = vmatprep.subr.mxu0 0.0
    %4645 = vmatpush1.msra.mxu0 0.0
    %4646 = vmatprep.subr.mxu0 0.0
    %4647 = vmatpush1.msra.mxu0 0.0
    %4648 = vmatprep.subr.mxu0 0.0
    %4649 = vmatpush1.msra.mxu0 0.0
    %4650 = vmatprep.subr.mxu0 0.0
    %4651 = vmatpush1.msra.mxu0 0.0
    %4652 = vmatprep.subr.mxu0 0.0
    %4653 = vmatpush1.msra.mxu0 0.0
    %4654 = vmatprep.subr.mxu0 0.0
    %4655 = vmatpush1.msra.mxu0 0.0
    %4656 = vmatprep.subr.mxu0 0.0
    %4657 = vmatpush1.msra.mxu0 0.0
    %4658 = vmatprep.subr.mxu0 0.0
    %4659 = vmatpush1.msra.mxu0 0.0
    %4660 = vmatprep.subr.mxu0 0.0
    %4661 = vmatpush1.msra.mxu0 0.0
    %4662 = vmatprep.mubr.f32.mxu0 0.0
    %4663 = vmatmul.mubr.f32.gmra.mrb[0].mxu0 %v4261
    %v4664 = vpop.f32.mrb[0].mxu0
    %v4665 = vadd.f32 %v4520, %v4664
    %v4666 = vpop.f32.mrb[0].mxu0
    %4667 = vmatprep.mubr.f32.mxu0 0.0
    %4668 = vmatmul.mubr.f32.gmra.mrb[0].mxu0 %v4264
    %v4669 = vpop.f32.mrb[0].mxu0
    %v4670 = vadd.f32 %v4525, %v4669
    %v4671 = vpop.f32.mrb[0].mxu0
    %4672 = vmatprep.mubr.f32.mxu0 0.0
    %4673 = vmatmul.mubr.f32.gmra.mrb[0].mxu0 %v4267
    %v4674 = vpop.f32.mrb[0].mxu0
    %v4675 = vadd.f32 %v4530, %v4674
    %v4676 = vpop.f32.mrb[0].mxu0
    %4677 = vmatprep.mubr.f32.mxu0 0.0
    %4678 = vmatmul.mubr.f32.gmra.mrb[0].mxu0 %v4270
    %v4679 = vpop.f32.mrb[0].mxu0
    %v4680 = vadd.f32 %v4535, %v4679
    %v4681 = vpop.f32.mrb[0].mxu0
    %4682 = vmatprep.mubr.f32.mxu0 0.0
    %4683 = vmatmul.mubr.f32.gmra.mrb[0].mxu0 %v4273
    %v4684 = vpop.f32.mrb[0].mxu0
    %v4685 = vadd.f32 %v4540, %v4684
    %v4686 = vpop.f32.mrb[0].mxu0
    %4687 = vmatprep.mubr.f32.mxu0 0.0
    %4688 = vmatmul.mubr.f32.gmra.mrb[0].mxu0 %v4276
    %v4689 = vpop.f32.mrb[0].mxu0
    %v4690 = vadd.f32 %v4545, %v4689
    %v4691 = vpop.f32.mrb[0].mxu0
    %4692 = vmatprep.mubr.f32.mxu0 0.0
    %4693 = vmatmul.mubr.f32.gmra.mrb[0].mxu0 %v4279
    %v4694 = vpop.f32.mrb[0].mxu0
    %v4695 = vadd.f32 %v4550, %v4694
    %v4696 = vpop.f32.mrb[0].mxu0
    %4697 = vmatprep.mubr.f32.mxu0 0.0
    %4698 = vmatmul.mubr.f32.gmra.mrb[0].mxu0 %v4282
    %v4699 = vpop.f32.mrb[0].mxu0
    %v4700 = vadd.f32 %v4555, %v4699
    %v4701 = vpop.f32.mrb[0].mxu0
    %4702 = vmatprep.mubr.f32.mxu0 0.0
    %4703 = vmatmul.mubr.f32.gmra.mrb[0].mxu0 %v4285
    %v4704 = vpop.f32.mrb[0].mxu0
    %v4705 = vadd.f32 %v4560, %v4704
    %v4706 = vpop.f32.mrb[0].mxu0
    %4707 = vmatprep.mubr.f32.mxu0 0.0
    %4708 = vmatmul.mubr.f32.gmra.mrb[0].mxu0 %v4288
    %v4709 = vpop.f32.mrb[0].mxu0
    %v4710 = vadd.f32 %v4565, %v4709
    %v4711 = vpop.f32.mrb[0].mxu0
    %4712 = vmatprep.mubr.f32.mxu0 0.0
    %4713 = vmatmul.mubr.f32.gmra.mrb[0].mxu0 %v4291
    %v4714 = vpop.f32.mrb[0].mxu0
    %v4715 = vadd.f32 %v4570, %v4714
    %v4716 = vpop.f32.mrb[0].mxu0
    %4717 = vmatprep.mubr.f32.mxu0 0.0
    %4718 = vmatmul.mubr.f32.gmra.mrb[0].mxu0 %v4294
    %v4719 = vpop.f32.mrb[0].mxu0
    %v4720 = vadd.f32 %v4575, %v4719
    %v4721 = vpop.f32.mrb[0].mxu0
    %4722 = vmatprep.mubr.f32.mxu0 0.0
    %4723 = vmatmul.mubr.f32.gmra.mrb[0].mxu0 %v4297
    %v4724 = vpop.f32.mrb[0].mxu0
    %v4725 = vadd.f32 %v4580, %v4724
    %v4726 = vpop.f32.mrb[0].mxu0
    %4727 = vmatprep.mubr.f32.mxu0 0.0
    %4728 = vmatmul.mubr.f32.gmra.mrb[0].mxu0 %v4300
    %v4729 = vpop.f32.mrb[0].mxu0
    %v4730 = vadd.f32 %v4585, %v4729
    %v4731 = vpop.f32.mrb[0].mxu0
    %4732 = vmatprep.mubr.f32.mxu0 0.0
    %4733 = vmatmul.mubr.f32.gmra.mrb[0].mxu0 %v4303
    %v4734 = vpop.f32.mrb[0].mxu0
    %v4735 = vadd.f32 %v4590, %v4734
    %v4736 = vpop.f32.mrb[0].mxu0
    %4737 = vmatprep.mubr.f32.mxu0 0.0
    %4738 = vmatmul.mubr.f32.gmra.mrb[0].mxu0 %v4306
    %v4739 = vpop.f32.mrb[0].mxu0
    %v4740 = vadd.f32 %v4595, %v4739
    %v4741 = vpop.f32.mrb[0].mxu0
    %4742 = vdwg.mxu0
    %v4743 = vmax.f32 %v4665, 0.0
    %v4744 = vmax.f32 %v4670, 0.0
    %v4745 = vmax.f32 %v4675, 0.0
    %v4746 = vmax.f32 %v4680, 0.0
    %v4747 = vmax.f32 %v4685, 0.0
    %v4748 = vmax.f32 %v4690, 0.0
    %v4749 = vmax.f32 %v4695, 0.0
    %v4750 = vmax.f32 %v4700, 0.0
    %v4751 = vmax.f32 %v4705, 0.0
    %v4752 = vmax.f32 %v4710, 0.0
    %v4753 = vmax.f32 %v4715, 0.0
    %v4754 = vmax.f32 %v4720, 0.0
    %v4755 = vmax.f32 %v4725, 0.0
    %v4756 = vmax.f32 %v4730, 0.0
    %v4757 = vmax.f32 %v4735, 0.0
    %v4758 = vmax.f32 %v4740, 0.0
    %v4759 = vsel %vm42, %v4743, 0.0
    %v4760 = vsel %vm42, %v4744, 0.0
    %v4761 = vadd.f32 %v4759, %v4760
    %v4762 = vsel %vm42, %v4745, 0.0
    %v4763 = vadd.f32 %v4761, %v4762
    %v4764 = vsel %vm42, %v4746, 0.0
    %v4765 = vadd.f32 %v4763, %v4764
    %v4766 = vsel %vm42, %v4747, 0.0
    %v4767 = vadd.f32 %v4765, %v4766
    %v4768 = vsel %vm42, %v4748, 0.0
    %v4769 = vadd.f32 %v4767, %v4768
    %v4770 = vsel %vm42, %v4749, 0.0
    %v4771 = vadd.f32 %v4769, %v4770
    %v4772 = vsel %vm42, %v4750, 0.0
    %v4773 = vadd.f32 %v4771, %v4772
    %v4774 = vsel %vm42, %v4751, 0.0
    %v4775 = vadd.f32 %v4773, %v4774
    %v4776 = vsel %vm42, %v4752, 0.0
    %v4777 = vadd.f32 %v4775, %v4776
    %v4778 = vsel %vm42, %v4753, 0.0
    %v4779 = vadd.f32 %v4777, %v4778
    %v4780 = vsel %vm42, %v4754, 0.0
    %v4781 = vadd.f32 %v4779, %v4780
    %v4782 = vsel %vm42, %v4755, 0.0
    %v4783 = vadd.f32 %v4781, %v4782
    %v4784 = vsel %vm42, %v4756, 0.0
    %v4785 = vadd.f32 %v4783, %v4784
    %v4786 = vsel %vm42, %v4757, 0.0
    %v4787 = vadd.f32 %v4785, %v4786
    %v4788 = vsel %vm42, %v4758, 0.0
    %v4789 = vadd.f32 %v4787, %v4788
    %v4790 = vrot.slane %v4789, 4
    %v4791 = vadd.f32 %v4789, %v4790
    %v4792 = vrot.slane %v4791, 2
    %v4793 = vadd.f32 %v4791, %v4792
    %v4794 = vrot.slane %v4793, 1
    %v4795 = vadd.f32 %v4793, %v4794
    %v4796 = vmul.f32 %v4743, %v4743
    %v4797 = vmul.f32 %v4744, %v4744
    %v4798 = vmul.f32 %v4745, %v4745
    %v4799 = vmul.f32 %v4746, %v4746
    %v4800 = vmul.f32 %v4747, %v4747
    %v4801 = vmul.f32 %v4748, %v4748
    %v4802 = vmul.f32 %v4749, %v4749
    %v4803 = vmul.f32 %v4750, %v4750
    %v4804 = vmul.f32 %v4751, %v4751
    %v4805 = vmul.f32 %v4752, %v4752
    %v4806 = vmul.f32 %v4753, %v4753
    %v4807 = vmul.f32 %v4754, %v4754
    %v4808 = vmul.f32 %v4755, %v4755
    %v4809 = vmul.f32 %v4756, %v4756
    %v4810 = vmul.f32 %v4757, %v4757
    %v4811 = vmul.f32 %v4758, %v4758
    %v4812 = vsel %vm42, %v4796, 0.0
    %v4813 = vsel %vm42, %v4797, 0.0
    %v4814 = vadd.f32 %v4812, %v4813
    %v4815 = vsel %vm42, %v4798, 0.0
    %v4816 = vadd.f32 %v4814, %v4815
    %v4817 = vsel %vm42, %v4799, 0.0
    %v4818 = vadd.f32 %v4816, %v4817
    %v4819 = vsel %vm42, %v4800, 0.0
    %v4820 = vadd.f32 %v4818, %v4819
    %v4821 = vsel %vm42, %v4801, 0.0
    %v4822 = vadd.f32 %v4820, %v4821
    %v4823 = vsel %vm42, %v4802, 0.0
    %v4824 = vadd.f32 %v4822, %v4823
    %v4825 = vsel %vm42, %v4803, 0.0
    %v4826 = vadd.f32 %v4824, %v4825
    %v4827 = vsel %vm42, %v4804, 0.0
    %v4828 = vadd.f32 %v4826, %v4827
    %v4829 = vsel %vm42, %v4805, 0.0
    %v4830 = vadd.f32 %v4828, %v4829
    %v4831 = vsel %vm42, %v4806, 0.0
    %v4832 = vadd.f32 %v4830, %v4831
    %v4833 = vsel %vm42, %v4807, 0.0
    %v4834 = vadd.f32 %v4832, %v4833
    %v4835 = vsel %vm42, %v4808, 0.0
    %v4836 = vadd.f32 %v4834, %v4835
    %v4837 = vsel %vm42, %v4809, 0.0
    %v4838 = vadd.f32 %v4836, %v4837
    %v4839 = vsel %vm42, %v4810, 0.0
    %v4840 = vadd.f32 %v4838, %v4839
    %v4841 = vsel %vm42, %v4811, 0.0
    %v4842 = vadd.f32 %v4840, %v4841
    %v4843 = vrot.slane %v4842, 4
    %v4844 = vadd.f32 %v4842, %v4843
    %v4845 = vrot.slane %v4844, 2
    %v4846 = vadd.f32 %v4844, %v4845
    %v4847 = vrot.slane %v4846, 1
    %v4848 = vadd.f32 %v4846, %v4847
    %v4849 = vmul.f32 %v4795, 0.0078125
    %v4850 = vmul.f32 %v4848, 0.0078125
    %v4851 = vmul.f32 %v4849, %v4849
    %v4852 = vsub.f32 %v4850, %v4851
    %v4853 = vmax.f32 %v4852, 0.0
    %v4854 = vadd.f32 %v4853, 1e-05
    %v4855 = vrsqrt.pop %v4854
    %v4856 = vld [vmem:[%s4254 + $0x1] sm:$0x1]
    %v4857 = vmul.f32 %v4855, %v4856
    %v4858 = vld [vmem:[%s4254 + $0x2] sm:$0x1]
    %v4859 = vmul.f32 %v4849, %v4857
    %v4860 = vsub.f32 %v4858, %v4859
    %v4861 = vlaneseq
    %v4862 = vshrl.u32 %v4861, 7
    %v4863 = vsub.s32 0, %v4862
    %v4864 = vrot.slane %v4857, %v4863
    %v4865 = vmul.f32 %v4743, %v4864
    %v4866 = vmul.f32 %v4744, %v4864
    %v4867 = vmul.f32 %v4745, %v4864
    %v4868 = vmul.f32 %v4746, %v4864
    %v4869 = vmul.f32 %v4747, %v4864
    %v4870 = vmul.f32 %v4748, %v4864
    %v4871 = vmul.f32 %v4749, %v4864
    %v4872 = vmul.f32 %v4750, %v4864
    %v4873 = vmul.f32 %v4751, %v4864
    %v4874 = vmul.f32 %v4752, %v4864
    %v4875 = vmul.f32 %v4753, %v4864
    %v4876 = vmul.f32 %v4754, %v4864
    %v4877 = vmul.f32 %v4755, %v4864
    %v4878 = vmul.f32 %v4756, %v4864
    %v4879 = vmul.f32 %v4757, %v4864
    %v4880 = vmul.f32 %v4758, %v4864
    %v4881 = vlaneseq
    %v4882 = vshrl.u32 %v4881, 7
    %v4883 = vsub.s32 0, %v4882
    %v4884 = vrot.slane %v4860, %v4883
    %v4885 = vadd.f32 %v4865, %v4884
    %v4886 = vadd.f32 %v4866, %v4884
    %v4887 = vadd.f32 %v4867, %v4884
    %v4888 = vadd.f32 %v4868, %v4884
    %v4889 = vadd.f32 %v4869, %v4884
    %v4890 = vadd.f32 %v4870, %v4884
    %v4891 = vadd.f32 %v4871, %v4884
    %v4892 = vadd.f32 %v4872, %v4884
    %v4893 = vadd.f32 %v4873, %v4884
    %v4894 = vadd.f32 %v4874, %v4884
    %v4895 = vadd.f32 %v4875, %v4884
    %v4896 = vadd.f32 %v4876, %v4884
    %v4897 = vadd.f32 %v4877, %v4884
    %v4898 = vadd.f32 %v4878, %v4884
    %v4899 = vadd.f32 %v4879, %v4884
    %v4900 = vadd.f32 %v4880, %v4884
    %4901 = vst.msk [vmem:[%s100 + $0x1] sm:$0xff] %vm42, %v4885
    %4902 = vst.msk [vmem:[%s100 + $0x11] sm:$0xff] %vm42, %v4886
    %4903 = vst.msk [vmem:[%s100 + $0x21] sm:$0xff] %vm42, %v4887
    %4904 = vst.msk [vmem:[%s100 + $0x31] sm:$0xff] %vm42, %v4888
    %4905 = vst.msk [vmem:[%s100 + $0x41] sm:$0xff] %vm42, %v4889
    %4906 = vst.msk [vmem:[%s100 + $0x51] sm:$0xff] %vm42, %v4890
    %4907 = vst.msk [vmem:[%s100 + $0x61] sm:$0xff] %vm42, %v4891
    %4908 = vst.msk [vmem:[%s100 + $0x71] sm:$0xff] %vm42, %v4892
    %4909 = vst.msk [vmem:[%s100 + $0xa1] sm:$0xff] %vm42, %v4893
    %4910 = vst.msk [vmem:[%s100 + $0xb1] sm:$0xff] %vm42, %v4894
    %4911 = vst.msk [vmem:[%s100 + $0xc1] sm:$0xff] %vm42, %v4895
    %4912 = vst.msk [vmem:[%s100 + $0xd1] sm:$0xff] %vm42, %v4896
    %4913 = vst.msk [vmem:[%s100 + $0xe1] sm:$0xff] %vm42, %v4897
    %4914 = vst.msk [vmem:[%s100 + $0xf1] sm:$0xff] %vm42, %v4898
    %4915 = vst.msk [vmem:[%s100 + $0x101] sm:$0xff] %vm42, %v4899
    %4916 = vst.msk [vmem:[%s100 + $0x111] sm:$0xff] %vm42, %v4900
    %v4917 = vld [vmem:[#allocation2] sm:$0xff]
    %v4918 = vld [vmem:[#allocation2 + $0x10] sm:$0xff]
    %v4919 = vld [vmem:[#allocation2 + $0x20] sm:$0xff]
    %v4920 = vld [vmem:[#allocation2 + $0x30] sm:$0xff]
    %v4921 = vld [vmem:[#allocation2 + $0x40] sm:$0xff]
    %v4922 = vld [vmem:[#allocation2 + $0x50] sm:$0xff]
    %v4923 = vld [vmem:[#allocation2 + $0x60] sm:$0xff]
    %v4924 = vld [vmem:[#allocation2 + $0x70] sm:$0xff]
    %v4925 = vld [vmem:[#allocation2 + $0xa0] sm:$0xff]
    %v4926 = vld [vmem:[#allocation2 + $0xb0] sm:$0xff]
    %v4927 = vld [vmem:[#allocation2 + $0xc0] sm:$0xff]
    %v4928 = vld [vmem:[#allocation2 + $0xd0] sm:$0xff]
    %v4929 = vld [vmem:[#allocation2 + $0xe0] sm:$0xff]
    %v4930 = vld [vmem:[#allocation2 + $0xf0] sm:$0xff]
    %v4931 = vld [vmem:[#allocation2 + $0x100] sm:$0xff]
    %v4932 = vld [vmem:[#allocation2 + $0x110] sm:$0xff]
    %v4933 = vld [vmem:[#allocation2 + $0x1] sm:$0xff]
    %v4934 = vld [vmem:[#allocation2 + $0x11] sm:$0xff]
    %v4935 = vld [vmem:[#allocation2 + $0x21] sm:$0xff]
    %v4936 = vld [vmem:[#allocation2 + $0x31] sm:$0xff]
    %v4937 = vld [vmem:[#allocation2 + $0x41] sm:$0xff]
    %v4938 = vld [vmem:[#allocation2 + $0x51] sm:$0xff]
    %v4939 = vld [vmem:[#allocation2 + $0x61] sm:$0xff]
    %v4940 = vld [vmem:[#allocation2 + $0x71] sm:$0xff]
    %v4941 = vld [vmem:[#allocation2 + $0xa1] sm:$0xff]
    %v4942 = vld [vmem:[#allocation2 + $0xb1] sm:$0xff]
    %v4943 = vld [vmem:[#allocation2 + $0xc1] sm:$0xff]
    %v4944 = vld [vmem:[#allocation2 + $0xd1] sm:$0xff]
    %v4945 = vld [vmem:[#allocation2 + $0xe1] sm:$0xff]
    %v4946 = vld [vmem:[#allocation2 + $0xf1] sm:$0xff]
    %v4947 = vld [vmem:[#allocation2 + $0x101] sm:$0xff]
    %v4948 = vld [vmem:[#allocation2 + $0x111] sm:$0xff]
    %v4949 = vld [vmem:[#allocation2 + $0x2] sm:$0xff]
    %v4950 = vld [vmem:[#allocation2 + $0x12] sm:$0xff]
    %v4951 = vld [vmem:[#allocation2 + $0x22] sm:$0xff]
    %v4952 = vld [vmem:[#allocation2 + $0x32] sm:$0xff]
    %v4953 = vld [vmem:[#allocation2 + $0x42] sm:$0xff]
    %v4954 = vld [vmem:[#allocation2 + $0x52] sm:$0xff]
    %v4955 = vld [vmem:[#allocation2 + $0x62] sm:$0xff]
    %v4956 = vld [vmem:[#allocation2 + $0x72] sm:$0xff]
    %v4957 = vld [vmem:[#allocation2 + $0xa2] sm:$0xff]
    %v4958 = vld [vmem:[#allocation2 + $0xb2] sm:$0xff]
    %v4959 = vld [vmem:[#allocation2 + $0xc2] sm:$0xff]
    %v4960 = vld [vmem:[#allocation2 + $0xd2] sm:$0xff]
    %v4961 = vld [vmem:[#allocation2 + $0xe2] sm:$0xff]
    %v4962 = vld [vmem:[#allocation2 + $0xf2] sm:$0xff]
    %v4963 = vld [vmem:[#allocation2 + $0x102] sm:$0xff]
    %v4964 = vld [vmem:[#allocation2 + $0x112] sm:$0xff]
    %v4965 = vld [vmem:[%s100] sm:$0xff]
    %v4966 = vld [vmem:[%s100 + $0x10] sm:$0xff]
    %v4967 = vld [vmem:[%s100 + $0x20] sm:$0xff]
    %v4968 = vld [vmem:[%s100 + $0x30] sm:$0xff]
    %v4969 = vld [vmem:[%s100 + $0x40] sm:$0xff]
    %v4970 = vld [vmem:[%s100 + $0x50] sm:$0xff]
    %v4971 = vld [vmem:[%s100 + $0x60] sm:$0xff]
    %v4972 = vld [vmem:[%s100 + $0x70] sm:$0xff]
    %v4973 = vld [vmem:[%s100 + $0xa0] sm:$0xff]
    %v4974 = vld [vmem:[%s100 + $0xb0] sm:$0xff]
    %v4975 = vld [vmem:[%s100 + $0xc0] sm:$0xff]
    %v4976 = vld [vmem:[%s100 + $0xd0] sm:$0xff]
    %v4977 = vld [vmem:[%s100 + $0xe0] sm:$0xff]
    %v4978 = vld [vmem:[%s100 + $0xf0] sm:$0xff]
    %v4979 = vld [vmem:[%s100 + $0x100] sm:$0xff]
    %v4980 = vld [vmem:[%s100 + $0x110] sm:$0xff]
    %v4981 = vld [vmem:[%s100 + $0x1] sm:$0xff]
    %v4982 = vld [vmem:[%s100 + $0x11] sm:$0xff]
    %v4983 = vld [vmem:[%s100 + $0x21] sm:$0xff]
    %v4984 = vld [vmem:[%s100 + $0x31] sm:$0xff]
    %v4985 = vld [vmem:[%s100 + $0x41] sm:$0xff]
    %v4986 = vld [vmem:[%s100 + $0x51] sm:$0xff]
    %v4987 = vld [vmem:[%s100 + $0x61] sm:$0xff]
    %v4988 = vld [vmem:[%s100 + $0x71] sm:$0xff]
    %v4989 = vld [vmem:[%s100 + $0xa1] sm:$0xff]
    %v4990 = vld [vmem:[%s100 + $0xb1] sm:$0xff]
    %v4991 = vld [vmem:[%s100 + $0xc1] sm:$0xff]
    %v4992 = vld [vmem:[%s100 + $0xd1] sm:$0xff]
    %v4993 = vld [vmem:[%s100 + $0xe1] sm:$0xff]
    %v4994 = vld [vmem:[%s100 + $0xf1] sm:$0xff]
    %v4995 = vld [vmem:[%s100 + $0x101] sm:$0xff]
    %v4996 = vld [vmem:[%s100 + $0x111] sm:$0xff]
    %v4997 = vld [vmem:[%s100 + $0x2] sm:$0xff]
    %v4998 = vld [vmem:[%s100 + $0x12] sm:$0xff]
    %v4999 = vld [vmem:[%s100 + $0x22] sm:$0xff]
    %v5000 = vld [vmem:[%s100 + $0x32] sm:$0xff]
    %v5001 = vld [vmem:[%s100 + $0x42] sm:$0xff]
    %v5002 = vld [vmem:[%s100 + $0x52] sm:$0xff]
    %v5003 = vld [vmem:[%s100 + $0x62] sm:$0xff]
    %v5004 = vld [vmem:[%s100 + $0x72] sm:$0xff]
    %v5005 = vld [vmem:[%s100 + $0xa2] sm:$0xff]
    %v5006 = vld [vmem:[%s100 + $0xb2] sm:$0xff]
    %v5007 = vld [vmem:[%s100 + $0xc2] sm:$0xff]
    %v5008 = vld [vmem:[%s100 + $0xd2] sm:$0xff]
    %v5009 = vld [vmem:[%s100 + $0xe2] sm:$0xff]
    %v5010 = vld [vmem:[%s100 + $0xf2] sm:$0xff]
    %v5011 = vld [vmem:[%s100 + $0x102] sm:$0xff]
    %v5012 = vld [vmem:[%s100 + $0x112] sm:$0xff]
    %v5013 = vld [vmem:[%s214] sm:$0xff]
    %v5014 = vld [vmem:[%s214 + $0x10] sm:$0xff]
    %v5015 = vld [vmem:[%s214 + $0x20] sm:$0xff]
    %v5016 = vld [vmem:[%s214 + $0x30] sm:$0xff]
    %v5017 = vld [vmem:[%s214 + $0x40] sm:$0xff]
    %v5018 = vld [vmem:[%s214 + $0x50] sm:$0xff]
    %v5019 = vld [vmem:[%s214 + $0x60] sm:$0xff]
    %v5020 = vld [vmem:[%s214 + $0x70] sm:$0xff]
    %v5021 = vld [vmem:[%s214 + $0xa0] sm:$0xff]
    %v5022 = vld [vmem:[%s214 + $0xb0] sm:$0xff]
    %v5023 = vld [vmem:[%s214 + $0xc0] sm:$0xff]
    %v5024 = vld [vmem:[%s214 + $0xd0] sm:$0xff]
    %v5025 = vld [vmem:[%s214 + $0xe0] sm:$0xff]
    %v5026 = vld [vmem:[%s214 + $0xf0] sm:$0xff]
    %v5027 = vld [vmem:[%s214 + $0x100] sm:$0xff]
    %v5028 = vld [vmem:[%s214 + $0x110] sm:$0xff]
    %v5029 = vld [vmem:[%s214 + $0x1] sm:$0xff]
    %v5030 = vld [vmem:[%s214 + $0x11] sm:$0xff]
    %v5031 = vld [vmem:[%s214 + $0x21] sm:$0xff]
    %v5032 = vld [vmem:[%s214 + $0x31] sm:$0xff]
    %v5033 = vld [vmem:[%s214 + $0x41] sm:$0xff]
    %v5034 = vld [vmem:[%s214 + $0x51] sm:$0xff]
    %v5035 = vld [vmem:[%s214 + $0x61] sm:$0xff]
    %v5036 = vld [vmem:[%s214 + $0x71] sm:$0xff]
    %v5037 = vld [vmem:[%s214 + $0xa1] sm:$0xff]
    %v5038 = vld [vmem:[%s214 + $0xb1] sm:$0xff]
    %v5039 = vld [vmem:[%s214 + $0xc1] sm:$0xff]
    %v5040 = vld [vmem:[%s214 + $0xd1] sm:$0xff]
    %v5041 = vld [vmem:[%s214 + $0xe1] sm:$0xff]
    %v5042 = vld [vmem:[%s214 + $0xf1] sm:$0xff]
    %v5043 = vld [vmem:[%s214 + $0x101] sm:$0xff]
    %v5044 = vld [vmem:[%s214 + $0x111] sm:$0xff]
    %v5045 = vld [vmem:[%s214 + $0x2] sm:$0xff]
    %v5046 = vld [vmem:[%s214 + $0x12] sm:$0xff]
    %v5047 = vld [vmem:[%s214 + $0x22] sm:$0xff]
    %v5048 = vld [vmem:[%s214 + $0x32] sm:$0xff]
    %v5049 = vld [vmem:[%s214 + $0x42] sm:$0xff]
    %v5050 = vld [vmem:[%s214 + $0x52] sm:$0xff]
    %v5051 = vld [vmem:[%s214 + $0x62] sm:$0xff]
    %v5052 = vld [vmem:[%s214 + $0x72] sm:$0xff]
    %v5053 = vld [vmem:[%s214 + $0xa2] sm:$0xff]
    %v5054 = vld [vmem:[%s214 + $0xb2] sm:$0xff]
    %v5055 = vld [vmem:[%s214 + $0xc2] sm:$0xff]
    %v5056 = vld [vmem:[%s214 + $0xd2] sm:$0xff]
    %v5057 = vld [vmem:[%s214 + $0xe2] sm:$0xff]
    %v5058 = vld [vmem:[%s214 + $0xf2] sm:$0xff]
    %v5059 = vld [vmem:[%s214 + $0x102] sm:$0xff]
    %v5060 = vld [vmem:[%s214 + $0x112] sm:$0xff]
    %5077 = vrot.lane.b32.xlu0 %v4933, 64
    %v5078 = vpop.permute.xlu0 %5077
    %5079 = vrot.lane.b32.xlu0 %v4934, 64
    %v5080 = vpop.permute.xlu0 %5079
    %5081 = vrot.lane.b32.xlu0 %v4935, 64
    %v5082 = vpop.permute.xlu0 %5081
    %5083 = vrot.lane.b32.xlu0 %v4936, 64
    %v5084 = vpop.permute.xlu0 %5083
    %5085 = vrot.lane.b32.xlu0 %v4937, 64
    %v5086 = vpop.permute.xlu0 %5085
    %5087 = vrot.lane.b32.xlu0 %v4938, 64
    %v5088 = vpop.permute.xlu0 %5087
    %5089 = vrot.lane.b32.xlu0 %v4939, 64
    %v5090 = vpop.permute.xlu0 %5089
    %5091 = vrot.lane.b32.xlu0 %v4940, 64
    %v5092 = vpop.permute.xlu0 %5091
    %5093 = vrot.lane.b32.xlu0 %v4941, 64
    %v5094 = vpop.permute.xlu0 %5093
    %5095 = vrot.lane.b32.xlu0 %v4942, 64
    %v5096 = vpop.permute.xlu0 %5095
    %5097 = vrot.lane.b32.xlu0 %v4943, 64
    %v5098 = vpop.permute.xlu0 %5097
    %5099 = vrot.lane.b32.xlu0 %v4944, 64
    %v5100 = vpop.permute.xlu0 %5099
    %5101 = vrot.lane.b32.xlu0 %v4945, 64
    %v5102 = vpop.permute.xlu0 %5101
    %5103 = vrot.lane.b32.xlu0 %v4946, 64
    %v5104 = vpop.permute.xlu0 %5103
    %5105 = vrot.lane.b32.xlu0 %v4947, 64
    %v5106 = vpop.permute.xlu0 %5105
    %5107 = vrot.lane.b32.xlu0 %v4948, 64
    %v5108 = vpop.permute.xlu0 %5107
    %5141 = vrot.lane.b32.xlu0 %v4965, 64
    %v5142 = vpop.permute.xlu0 %5141
    %5143 = vrot.lane.b32.xlu0 %v4966, 64
    %v5144 = vpop.permute.xlu0 %5143
    %5145 = vrot.lane.b32.xlu0 %v4967, 64
    %v5146 = vpop.permute.xlu0 %5145
    %5147 = vrot.lane.b32.xlu0 %v4968, 64
    %v5148 = vpop.permute.xlu0 %5147
    %5149 = vrot.lane.b32.xlu0 %v4969, 64
    %v5150 = vpop.permute.xlu0 %5149
    %5151 = vrot.lane.b32.xlu0 %v4970, 64
    %v5152 = vpop.permute.xlu0 %5151
    %5153 = vrot.lane.b32.xlu0 %v4971, 64
    %v5154 = vpop.permute.xlu0 %5153
    %5155 = vrot.lane.b32.xlu0 %v4972, 64
    %v5156 = vpop.permute.xlu0 %5155
    %5157 = vrot.lane.b32.xlu0 %v4973, 64
    %v5158 = vpop.permute.xlu0 %5157
    %5159 = vrot.lane.b32.xlu0 %v4974, 64
    %v5160 = vpop.permute.xlu0 %5159
    %5161 = vrot.lane.b32.xlu0 %v4975, 64
    %v5162 = vpop.permute.xlu0 %5161
    %5163 = vrot.lane.b32.xlu0 %v4976, 64
    %v5164 = vpop.permute.xlu0 %5163
    %5165 = vrot.lane.b32.xlu0 %v4977, 64
    %v5166 = vpop.permute.xlu0 %5165
    %5167 = vrot.lane.b32.xlu0 %v4978, 64
    %v5168 = vpop.permute.xlu0 %5167
    %5169 = vrot.lane.b32.xlu0 %v4979, 64
    %v5170 = vpop.permute.xlu0 %5169
    %5171 = vrot.lane.b32.xlu0 %v4980, 64
    %v5172 = vpop.permute.xlu0 %5171
    %5205 = vrot.lane.b32.xlu0 %v4997, 64
    %v5206 = vpop.permute.xlu0 %5205
    %5207 = vrot.lane.b32.xlu0 %v4998, 64
    %v5208 = vpop.permute.xlu0 %5207
    %5209 = vrot.lane.b32.xlu0 %v4999, 64
    %v5210 = vpop.permute.xlu0 %5209
    %5211 = vrot.lane.b32.xlu0 %v5000, 64
    %v5212 = vpop.permute.xlu0 %5211
    %5213 = vrot.lane.b32.xlu0 %v5001, 64
    %v5214 = vpop.permute.xlu0 %5213
    %5215 = vrot.lane.b32.xlu0 %v5002, 64
    %v5216 = vpop.permute.xlu0 %5215
    %5217 = vrot.lane.b32.xlu0 %v5003, 64
    %v5218 = vpop.permute.xlu0 %5217
    %5219 = vrot.lane.b32.xlu0 %v5004, 64
    %v5220 = vpop.permute.xlu0 %5219
    %5221 = vrot.lane.b32.xlu0 %v5005, 64
    %v5222 = vpop.permute.xlu0 %5221
    %5223 = vrot.lane.b32.xlu0 %v5006, 64
    %v5224 = vpop.permute.xlu0 %5223
    %5225 = vrot.lane.b32.xlu0 %v5007, 64
    %v5226 = vpop.permute.xlu0 %5225
    %5227 = vrot.lane.b32.xlu0 %v5008, 64
    %v5228 = vpop.permute.xlu0 %5227
    %5229 = vrot.lane.b32.xlu0 %v5009, 64
    %v5230 = vpop.permute.xlu0 %5229
    %5231 = vrot.lane.b32.xlu0 %v5010, 64
    %v5232 = vpop.permute.xlu0 %5231
    %5233 = vrot.lane.b32.xlu0 %v5011, 64
    %v5234 = vpop.permute.xlu0 %5233
    %5235 = vrot.lane.b32.xlu0 %v5012, 64
    %v5236 = vpop.permute.xlu0 %5235
    %5269 = vrot.lane.b32.xlu0 %v5029, 64
    %v5270 = vpop.permute.xlu0 %5269
    %5271 = vrot.lane.b32.xlu0 %v5030, 64
    %v5272 = vpop.permute.xlu0 %5271
    %5273 = vrot.lane.b32.xlu0 %v5031, 64
    %v5274 = vpop.permute.xlu0 %5273
    %5275 = vrot.lane.b32.xlu0 %v5032, 64
    %v5276 = vpop.permute.xlu0 %5275
    %5277 = vrot.lane.b32.xlu0 %v5033, 64
    %v5278 = vpop.permute.xlu0 %5277
    %5279 = vrot.lane.b32.xlu0 %v5034, 64
    %v5280 = vpop.permute.xlu0 %5279
    %5281 = vrot.lane.b32.xlu0 %v5035, 64
    %v5282 = vpop.permute.xlu0 %5281
    %5283 = vrot.lane.b32.xlu0 %v5036, 64
    %v5284 = vpop.permute.xlu0 %5283
    %5285 = vrot.lane.b32.xlu0 %v5037, 64
    %v5286 = vpop.permute.xlu0 %5285
    %5287 = vrot.lane.b32.xlu0 %v5038, 64
    %v5288 = vpop.permute.xlu0 %5287
    %5289 = vrot.lane.b32.xlu0 %v5039, 64
    %v5290 = vpop.permute.xlu0 %5289
    %5291 = vrot.lane.b32.xlu0 %v5040, 64
    %v5292 = vpop.permute.xlu0 %5291
    %5293 = vrot.lane.b32.xlu0 %v5041, 64
    %v5294 = vpop.permute.xlu0 %5293
    %5295 = vrot.lane.b32.xlu0 %v5042, 64
    %v5296 = vpop.permute.xlu0 %5295
    %5297 = vrot.lane.b32.xlu0 %v5043, 64
    %v5298 = vpop.permute.xlu0 %5297
    %5299 = vrot.lane.b32.xlu0 %v5044, 64
    %v5300 = vpop.permute.xlu0 %5299
    %v5317 = vsel %vm42, %v4917, %v5078
    %v5318 = vsel %vm42, %v4918, %v5080
    %v5319 = vsel %vm42, %v4919, %v5082
    %v5320 = vsel %vm42, %v4920, %v5084
    %v5321 = vsel %vm42, %v4921, %v5086
    %v5322 = vsel %vm42, %v4922, %v5088
    %v5323 = vsel %vm42, %v4923, %v5090
    %v5324 = vsel %vm42, %v4924, %v5092
    %v5325 = vsel %vm42, %v4925, %v5094
    %v5326 = vsel %vm42, %v4926, %v5096
    %v5327 = vsel %vm42, %v4927, %v5098
    %v5328 = vsel %vm42, %v4928, %v5100
    %v5329 = vsel %vm42, %v4929, %v5102
    %v5330 = vsel %vm42, %v4930, %v5104
    %v5331 = vsel %vm42, %v4931, %v5106
    %v5332 = vsel %vm42, %v4932, %v5108
    %v5333 = vsel %vm42, %v4949, %v5142
    %v5334 = vsel %vm42, %v4950, %v5144
    %v5335 = vsel %vm42, %v4951, %v5146
    %v5336 = vsel %vm42, %v4952, %v5148
    %v5337 = vsel %vm42, %v4953, %v5150
    %v5338 = vsel %vm42, %v4954, %v5152
    %v5339 = vsel %vm42, %v4955, %v5154
    %v5340 = vsel %vm42, %v4956, %v5156
    %v5341 = vsel %vm42, %v4957, %v5158
    %v5342 = vsel %vm42, %v4958, %v5160
    %v5343 = vsel %vm42, %v4959, %v5162
    %v5344 = vsel %vm42, %v4960, %v5164
    %v5345 = vsel %vm42, %v4961, %v5166
    %v5346 = vsel %vm42, %v4962, %v5168
    %v5347 = vsel %vm42, %v4963, %v5170
    %v5348 = vsel %vm42, %v4964, %v5172
    %v5349 = vsel %vm42, %v4981, %v5206
    %v5350 = vsel %vm42, %v4982, %v5208
    %v5351 = vsel %vm42, %v4983, %v5210
    %v5352 = vsel %vm42, %v4984, %v5212
    %v5353 = vsel %vm42, %v4985, %v5214
    %v5354 = vsel %vm42, %v4986, %v5216
    %v5355 = vsel %vm42, %v4987, %v5218
    %v5356 = vsel %vm42, %v4988, %v5220
    %v5357 = vsel %vm42, %v4989, %v5222
    %v5358 = vsel %vm42, %v4990, %v5224
    %v5359 = vsel %vm42, %v4991, %v5226
    %v5360 = vsel %vm42, %v4992, %v5228
    %v5361 = vsel %vm42, %v4993, %v5230
    %v5362 = vsel %vm42, %v4994, %v5232
    %v5363 = vsel %vm42, %v4995, %v5234
    %v5364 = vsel %vm42, %v4996, %v5236
    %v5365 = vsel %vm42, %v5013, %v5270
    %v5366 = vsel %vm42, %v5014, %v5272
    %v5367 = vsel %vm42, %v5015, %v5274
    %v5368 = vsel %vm42, %v5016, %v5276
    %v5369 = vsel %vm42, %v5017, %v5278
    %v5370 = vsel %vm42, %v5018, %v5280
    %v5371 = vsel %vm42, %v5019, %v5282
    %v5372 = vsel %vm42, %v5020, %v5284
    %v5373 = vsel %vm42, %v5021, %v5286
    %v5374 = vsel %vm42, %v5022, %v5288
    %v5375 = vsel %vm42, %v5023, %v5290
    %v5376 = vsel %vm42, %v5024, %v5292
    %v5377 = vsel %vm42, %v5025, %v5294
    %v5378 = vsel %vm42, %v5026, %v5296
    %v5379 = vsel %vm42, %v5027, %v5298
    %v5380 = vsel %vm42, %v5028, %v5300
    %s5381 = scalar_lea.vmem [#allocation6], 2304
    %v5382 = vld [vmem:[%s5381] sm:$0xff]
    %v5383 = vld [vmem:[%s5381 + $0x8] sm:$0xff]
    %v5384 = vld [vmem:[%s5381 + $0x10] sm:$0xff]
    %v5385 = vld [vmem:[%s5381 + $0x18] sm:$0xff]
    %v5386 = vld [vmem:[%s5381 + $0x20] sm:$0xff]
    %v5387 = vld [vmem:[%s5381 + $0x28] sm:$0xff]
    %v5388 = vld [vmem:[%s5381 + $0x30] sm:$0xff]
    %v5389 = vld [vmem:[%s5381 + $0x38] sm:$0xff]
    %v5390 = vld [vmem:[%s5381 + $0x40] sm:$0xff]
    %v5391 = vld [vmem:[%s5381 + $0x48] sm:$0xff]
    %v5392 = vld [vmem:[%s5381 + $0x50] sm:$0xff]
    %v5393 = vld [vmem:[%s5381 + $0x58] sm:$0xff]
    %v5394 = vld [vmem:[%s5381 + $0x60] sm:$0xff]
    %v5395 = vld [vmem:[%s5381 + $0x68] sm:$0xff]
    %v5396 = vld [vmem:[%s5381 + $0x70] sm:$0xff]
    %v5397 = vld [vmem:[%s5381 + $0x78] sm:$0xff]
    %v5398 = vld [vmem:[%s5381 + $0x80] sm:$0xff]
    %v5399 = vld [vmem:[%s5381 + $0x88] sm:$0xff]
    %v5400 = vld [vmem:[%s5381 + $0x90] sm:$0xff]
    %v5401 = vld [vmem:[%s5381 + $0x98] sm:$0xff]
    %v5402 = vld [vmem:[%s5381 + $0xa0] sm:$0xff]
    %v5403 = vld [vmem:[%s5381 + $0xa8] sm:$0xff]
    %v5404 = vld [vmem:[%s5381 + $0xb0] sm:$0xff]
    %v5405 = vld [vmem:[%s5381 + $0xb8] sm:$0xff]
    %v5406 = vld [vmem:[%s5381 + $0xc0] sm:$0xff]
    %v5407 = vld [vmem:[%s5381 + $0xc8] sm:$0xff]
    %v5408 = vld [vmem:[%s5381 + $0xd0] sm:$0xff]
    %v5409 = vld [vmem:[%s5381 + $0xd8] sm:$0xff]
    %v5410 = vld [vmem:[%s5381 + $0xe0] sm:$0xff]
    %v5411 = vld [vmem:[%s5381 + $0xe8] sm:$0xff]
    %v5412 = vld [vmem:[%s5381 + $0xf0] sm:$0xff]
    %v5413 = vld [vmem:[%s5381 + $0xf8] sm:$0xff]
    %v5414 = vld [vmem:[%s5381 + $0x100] sm:$0xff]
    %v5415 = vld [vmem:[%s5381 + $0x108] sm:$0xff]
    %v5416 = vld [vmem:[%s5381 + $0x110] sm:$0xff]
    %v5417 = vld [vmem:[%s5381 + $0x118] sm:$0xff]
    %v5418 = vld [vmem:[%s5381 + $0x120] sm:$0xff]
    %v5419 = vld [vmem:[%s5381 + $0x128] sm:$0xff]
    %v5420 = vld [vmem:[%s5381 + $0x130] sm:$0xff]
    %v5421 = vld [vmem:[%s5381 + $0x138] sm:$0xff]
    %v5422 = vld [vmem:[%s5381 + $0x140] sm:$0xff]
    %v5423 = vld [vmem:[%s5381 + $0x148] sm:$0xff]
    %v5424 = vld [vmem:[%s5381 + $0x150] sm:$0xff]
    %v5425 = vld [vmem:[%s5381 + $0x158] sm:$0xff]
    %v5426 = vld [vmem:[%s5381 + $0x160] sm:$0xff]
    %v5427 = vld [vmem:[%s5381 + $0x168] sm:$0xff]
    %v5428 = vld [vmem:[%s5381 + $0x170] sm:$0xff]
    %v5429 = vld [vmem:[%s5381 + $0x178] sm:$0xff]
    %v5430 = vld [vmem:[%s5381 + $0x180] sm:$0xff]
    %v5431 = vld [vmem:[%s5381 + $0x188] sm:$0xff]
    %v5432 = vld [vmem:[%s5381 + $0x190] sm:$0xff]
    %v5433 = vld [vmem:[%s5381 + $0x198] sm:$0xff]
    %v5434 = vld [vmem:[%s5381 + $0x1a0] sm:$0xff]
    %v5435 = vld [vmem:[%s5381 + $0x1a8] sm:$0xff]
    %v5436 = vld [vmem:[%s5381 + $0x1b0] sm:$0xff]
    %v5437 = vld [vmem:[%s5381 + $0x1b8] sm:$0xff]
    %v5438 = vld [vmem:[%s5381 + $0x1c0] sm:$0xff]
    %v5439 = vld [vmem:[%s5381 + $0x1c8] sm:$0xff]
    %v5440 = vld [vmem:[%s5381 + $0x1d0] sm:$0xff]
    %v5441 = vld [vmem:[%s5381 + $0x1d8] sm:$0xff]
    %v5442 = vld [vmem:[%s5381 + $0x1e0] sm:$0xff]
    %v5443 = vld [vmem:[%s5381 + $0x1e8] sm:$0xff]
    %v5444 = vld [vmem:[%s5381 + $0x1f0] sm:$0xff]
    %v5445 = vld [vmem:[%s5381 + $0x1f8] sm:$0xff]
    %v5446 = vld [vmem:[%s5381 + $0x200] sm:$0xff]
    %v5447 = vld [vmem:[%s5381 + $0x208] sm:$0xff]
    %v5448 = vld [vmem:[%s5381 + $0x210] sm:$0xff]
    %v5449 = vld [vmem:[%s5381 + $0x218] sm:$0xff]
    %v5450 = vld [vmem:[%s5381 + $0x220] sm:$0xff]
    %v5451 = vld [vmem:[%s5381 + $0x228] sm:$0xff]
    %v5452 = vld [vmem:[%s5381 + $0x230] sm:$0xff]
    %v5453 = vld [vmem:[%s5381 + $0x238] sm:$0xff]
    %s5454 = scalar_lea.vmem %s2, 16
    %v5455 = vld [vmem:[%s5454] sm:$0x1]
    %v5456 = vlaneseq
    %v5457 = vshrl.u32 %v5456, 7
    %v5458 = vsub.s32 0, %v5457
    %v5459 = vrot.slane %v5455, %v5458
    %v5461 = vsel %vm42, %v5045, 0
    %v5464 = vsel %vm42, %v5046, 0
    %v5467 = vsel %vm42, %v5047, 0
    %v5470 = vsel %vm42, %v5048, 0
    %v5473 = vsel %vm42, %v5049, 0
    %v5476 = vsel %vm42, %v5050, 0
    %v5479 = vsel %vm42, %v5051, 0
    %v5482 = vsel %vm42, %v5052, 0
    %v5485 = vsel %vm42, %v5053, 0
    %v5488 = vsel %vm42, %v5054, 0
    %v5491 = vsel %vm42, %v5055, 0
    %v5494 = vsel %vm42, %v5056, 0
    %v5497 = vsel %vm42, %v5057, 0
    %v5500 = vsel %vm42, %v5058, 0
    %v5503 = vsel %vm42, %v5059, 0
    %v5506 = vsel %vm42, %v5060, 0
    %5508 = vmatprep.subr.mxu0 0.0
    %5509 = vmatpush1.msra.mxu0 %v5382
    %5510 = vmatprep.subr.mxu0 0.0
    %5511 = vmatpush1.msra.mxu0 %v5383
    %5512 = vmatprep.subr.mxu0 0.0
    %5513 = vmatpush1.msra.mxu0 %v5384
    %5514 = vmatprep.subr.mxu0 0.0
    %5515 = vmatpush1.msra.mxu0 %v5385
    %5516 = vmatprep.subr.mxu0 0.0
    %5517 = vmatpush1.msra.mxu0 %v5386
    %5518 = vmatprep.subr.mxu0 0.0
    %5519 = vmatpush1.msra.mxu0 %v5387
    %5520 = vmatprep.subr.mxu0 0.0
    %5521 = vmatpush1.msra.mxu0 %v5388
    %5522 = vmatprep.subr.mxu0 0.0
    %5523 = vmatpush1.msra.mxu0 %v5389
    %5524 = vmatprep.subr.mxu0 0.0
    %5525 = vmatpush1.msra.mxu0 %v5390
    %5526 = vmatprep.subr.mxu0 0.0
    %5527 = vmatpush1.msra.mxu0 %v5391
    %5528 = vmatprep.subr.mxu0 0.0
    %5529 = vmatpush1.msra.mxu0 %v5392
    %5530 = vmatprep.subr.mxu0 0.0
    %5531 = vmatpush1.msra.mxu0 %v5393
    %5532 = vmatprep.subr.mxu0 0.0
    %5533 = vmatpush1.msra.mxu0 %v5394
    %5534 = vmatprep.subr.mxu0 0.0
    %5535 = vmatpush1.msra.mxu0 %v5395
    %5536 = vmatprep.subr.mxu0 0.0
    %5537 = vmatpush1.msra.mxu0 %v5396
    %5538 = vmatprep.subr.mxu0 0.0
    %5539 = vmatpush1.msra.mxu0 %v5397
    %5540 = vmatprep.subr.mxu0 0.0
    %5541 = vmatpush1.msra.mxu0 %v5398
    %5542 = vmatprep.subr.mxu0 0.0
    %5543 = vmatpush1.msra.mxu0 %v5399
    %5544 = vmatprep.subr.mxu0 0.0
    %5545 = vmatpush1.msra.mxu0 %v5400
    %5546 = vmatprep.subr.mxu0 0.0
    %5547 = vmatpush1.msra.mxu0 %v5401
    %5548 = vmatprep.subr.mxu0 0.0
    %5549 = vmatpush1.msra.mxu0 %v5402
    %5550 = vmatprep.subr.mxu0 0.0
    %5551 = vmatpush1.msra.mxu0 %v5403
    %5552 = vmatprep.subr.mxu0 0.0
    %5553 = vmatpush1.msra.mxu0 %v5404
    %5554 = vmatprep.subr.mxu0 0.0
    %5555 = vmatpush1.msra.mxu0 %v5405
    %5556 = vmatprep.subr.mxu0 0.0
    %5557 = vmatpush1.msra.mxu0 %v5406
    %5558 = vmatprep.subr.mxu0 0.0
    %5559 = vmatpush1.msra.mxu0 %v5407
    %5560 = vmatprep.subr.mxu0 0.0
    %5561 = vmatpush1.msra.mxu0 %v5408
    %5562 = vmatprep.subr.mxu0 0.0
    %5563 = vmatpush1.msra.mxu0 %v5409
    %5564 = vmatprep.subr.mxu0 0.0
    %5565 = vmatpush1.msra.mxu0 %v5410
    %5566 = vmatprep.subr.mxu0 0.0
    %5567 = vmatpush1.msra.mxu0 %v5411
    %5568 = vmatprep.subr.mxu0 0.0
    %5569 = vmatpush1.msra.mxu0 %v5412
    %5570 = vmatprep.subr.mxu0 0.0
    %5571 = vmatpush1.msra.mxu0 %v5413
    %5572 = vmatprep.mubr.f32.mxu0 %v5333
    %5573 = vmatmul.mubr.f32.gmra.mrb[0].mxu0 %v5317
    %v5574 = vpop.f32.mrb[0].mxu0
    %v5575 = vadd.f32 %v5459, %v5574
    %v5576 = vpop.f32.mrb[0].mxu0
    %5577 = vmatprep.mubr.f32.mxu0 %v5334
    %5578 = vmatmul.mubr.f32.gmra.mrb[0].mxu0 %v5318
    %v5579 = vpop.f32.mrb[0].mxu0
    %v5580 = vadd.f32 %v5459, %v5579
    %v5581 = vpop.f32.mrb[0].mxu0
    %5582 = vmatprep.mubr.f32.mxu0 %v5335
    %5583 = vmatmul.mubr.f32.gmra.mrb[0].mxu0 %v5319
    %v5584 = vpop.f32.mrb[0].mxu0
    %v5585 = vadd.f32 %v5459, %v5584
    %v5586 = vpop.f32.mrb[0].mxu0
    %5587 = vmatprep.mubr.f32.mxu0 %v5336
    %5588 = vmatmul.mubr.f32.gmra.mrb[0].mxu0 %v5320
    %v5589 = vpop.f32.mrb[0].mxu0
    %v5590 = vadd.f32 %v5459, %v5589
    %v5591 = vpop.f32.mrb[0].mxu0
    %5592 = vmatprep.mubr.f32.mxu0 %v5337
    %5593 = vmatmul.mubr.f32.gmra.mrb[0].mxu0 %v5321
    %v5594 = vpop.f32.mrb[0].mxu0
    %v5595 = vadd.f32 %v5459, %v5594
    %v5596 = vpop.f32.mrb[0].mxu0
    %5597 = vmatprep.mubr.f32.mxu0 %v5338
    %5598 = vmatmul.mubr.f32.gmra.mrb[0].mxu0 %v5322
    %v5599 = vpop.f32.mrb[0].mxu0
    %v5600 = vadd.f32 %v5459, %v5599
    %v5601 = vpop.f32.mrb[0].mxu0
    %5602 = vmatprep.mubr.f32.mxu0 %v5339
    %5603 = vmatmul.mubr.f32.gmra.mrb[0].mxu0 %v5323
    %v5604 = vpop.f32.mrb[0].mxu0
    %v5605 = vadd.f32 %v5459, %v5604
    %v5606 = vpop.f32.mrb[0].mxu0
    %5607 = vmatprep.mubr.f32.mxu0 %v5340
    %5608 = vmatmul.mubr.f32.gmra.mrb[0].mxu0 %v5324
    %v5609 = vpop.f32.mrb[0].mxu0
    %v5610 = vadd.f32 %v5459, %v5609
    %v5611 = vpop.f32.mrb[0].mxu0
    %5612 = vmatprep.mubr.f32.mxu0 %v5341
    %5613 = vmatmul.mubr.f32.gmra.mrb[0].mxu0 %v5325
    %v5614 = vpop.f32.mrb[0].mxu0
    %v5615 = vadd.f32 %v5459, %v5614
    %v5616 = vpop.f32.mrb[0].mxu0
    %5617 = vmatprep.mubr.f32.mxu0 %v5342
    %5618 = vmatmul.mubr.f32.gmra.mrb[0].mxu0 %v5326
    %v5619 = vpop.f32.mrb[0].mxu0
    %v5620 = vadd.f32 %v5459, %v5619
    %v5621 = vpop.f32.mrb[0].mxu0
    %5622 = vmatprep.mubr.f32.mxu0 %v5343
    %5623 = vmatmul.mubr.f32.gmra.mrb[0].mxu0 %v5327
    %v5624 = vpop.f32.mrb[0].mxu0
    %v5625 = vadd.f32 %v5459, %v5624
    %v5626 = vpop.f32.mrb[0].mxu0
    %5627 = vmatprep.mubr.f32.mxu0 %v5344
    %5628 = vmatmul.mubr.f32.gmra.mrb[0].mxu0 %v5328
    %v5629 = vpop.f32.mrb[0].mxu0
    %v5630 = vadd.f32 %v5459, %v5629
    %v5631 = vpop.f32.mrb[0].mxu0
    %5632 = vmatprep.mubr.f32.mxu0 %v5345
    %5633 = vmatmul.mubr.f32.gmra.mrb[0].mxu0 %v5329
    %v5634 = vpop.f32.mrb[0].mxu0
    %v5635 = vadd.f32 %v5459, %v5634
    %v5636 = vpop.f32.mrb[0].mxu0
    %5637 = vmatprep.mubr.f32.mxu0 %v5346
    %5638 = vmatmul.mubr.f32.gmra.mrb[0].mxu0 %v5330
    %v5639 = vpop.f32.mrb[0].mxu0
    %v5640 = vadd.f32 %v5459, %v5639
    %v5641 = vpop.f32.mrb[0].mxu0
    %5642 = vmatprep.mubr.f32.mxu0 %v5347
    %5643 = vmatmul.mubr.f32.gmra.mrb[0].mxu0 %v5331
    %v5644 = vpop.f32.mrb[0].mxu0
    %v5645 = vadd.f32 %v5459, %v5644
    %v5646 = vpop.f32.mrb[0].mxu0
    %5647 = vmatprep.mubr.f32.mxu0 %v5348
    %5648 = vmatmul.mubr.f32.gmra.mrb[0].mxu0 %v5332
    %v5649 = vpop.f32.mrb[0].mxu0
    %v5650 = vadd.f32 %v5459, %v5649
    %v5651 = vpop.f32.mrb[0].mxu0
    %5652 = vdwg.mxu0
    %5653 = vmatprep.subr.mxu0 0.0
    %5654 = vmatpush1.msra.mxu0 %v5414
    %5655 = vmatprep.subr.mxu0 0.0
    %5656 = vmatpush1.msra.mxu0 %v5415
    %5657 = vmatprep.subr.mxu0 0.0
    %5658 = vmatpush1.msra.mxu0 %v5416
    %5659 = vmatprep.subr.mxu0 0.0
    %5660 = vmatpush1.msra.mxu0 %v5417
    %5661 = vmatprep.subr.mxu0 0.0
    %5662 = vmatpush1.msra.mxu0 %v5418
    %5663 = vmatprep.subr.mxu0 0.0
    %5664 = vmatpush1.msra.mxu0 %v5419
    %5665 = vmatprep.subr.mxu0 0.0
    %5666 = vmatpush1.msra.mxu0 %v5420
    %5667 = vmatprep.subr.mxu0 0.0
    %5668 = vmatpush1.msra.mxu0 %v5421
    %5669 = vmatprep.subr.mxu0 0.0
    %5670 = vmatpush1.msra.mxu0 %v5422
    %5671 = vmatprep.subr.mxu0 0.0
    %5672 = vmatpush1.msra.mxu0 %v5423
    %5673 = vmatprep.subr.mxu0 0.0
    %5674 = vmatpush1.msra.mxu0 %v5424
    %5675 = vmatprep.subr.mxu0 0.0
    %5676 = vmatpush1.msra.mxu0 %v5425
    %5677 = vmatprep.subr.mxu0 0.0
    %5678 = vmatpush1.msra.mxu0 %v5426
    %5679 = vmatprep.subr.mxu0 0.0
    %5680 = vmatpush1.msra.mxu0 %v5427
    %5681 = vmatprep.subr.mxu0 0.0
    %5682 = vmatpush1.msra.mxu0 %v5428
    %5683 = vmatprep.subr.mxu0 0.0
    %5684 = vmatpush1.msra.mxu0 %v5429
    %5685 = vmatprep.subr.mxu0 0.0
    %5686 = vmatpush1.msra.mxu0 %v5430
    %5687 = vmatprep.subr.mxu0 0.0
    %5688 = vmatpush1.msra.mxu0 %v5431
    %5689 = vmatprep.subr.mxu0 0.0
    %5690 = vmatpush1.msra.mxu0 %v5432
    %5691 = vmatprep.subr.mxu0 0.0
    %5692 = vmatpush1.msra.mxu0 %v5433
    %5693 = vmatprep.subr.mxu0 0.0
    %5694 = vmatpush1.msra.mxu0 %v5434
    %5695 = vmatprep.subr.mxu0 0.0
    %5696 = vmatpush1.msra.mxu0 %v5435
    %5697 = vmatprep.subr.mxu0 0.0
    %5698 = vmatpush1.msra.mxu0 %v5436
    %5699 = vmatprep.subr.mxu0 0.0
    %5700 = vmatpush1.msra.mxu0 %v5437
    %5701 = vmatprep.subr.mxu0 0.0
    %5702 = vmatpush1.msra.mxu0 %v5438
    %5703 = vmatprep.subr.mxu0 0.0
    %5704 = vmatpush1.msra.mxu0 %v5439
    %5705 = vmatprep.subr.mxu0 0.0
    %5706 = vmatpush1.msra.mxu0 %v5440
    %5707 = vmatprep.subr.mxu0 0.0
    %5708 = vmatpush1.msra.mxu0 %v5441
    %5709 = vmatprep.subr.mxu0 0.0
    %5710 = vmatpush1.msra.mxu0 %v5442
    %5711 = vmatprep.subr.mxu0 0.0
    %5712 = vmatpush1.msra.mxu0 %v5443
    %5713 = vmatprep.subr.mxu0 0.0
    %5714 = vmatpush1.msra.mxu0 %v5444
    %5715 = vmatprep.subr.mxu0 0.0
    %5716 = vmatpush1.msra.mxu0 %v5445
    %5717 = vmatprep.mubr.f32.mxu0 %v5365
    %5718 = vmatmul.mubr.f32.gmra.mrb[0].mxu0 %v5349
    %v5719 = vpop.f32.mrb[0].mxu0
    %v5720 = vadd.f32 %v5575, %v5719
    %v5721 = vpop.f32.mrb[0].mxu0
    %5722 = vmatprep.mubr.f32.mxu0 %v5366
    %5723 = vmatmul.mubr.f32.gmra.mrb[0].mxu0 %v5350
    %v5724 = vpop.f32.mrb[0].mxu0
    %v5725 = vadd.f32 %v5580, %v5724
    %v5726 = vpop.f32.mrb[0].mxu0
    %5727 = vmatprep.mubr.f32.mxu0 %v5367
    %5728 = vmatmul.mubr.f32.gmra.mrb[0].mxu0 %v5351
    %v5729 = vpop.f32.mrb[0].mxu0
    %v5730 = vadd.f32 %v5585, %v5729
    %v5731 = vpop.f32.mrb[0].mxu0
    %5732 = vmatprep.mubr.f32.mxu0 %v5368
    %5733 = vmatmul.mubr.f32.gmra.mrb[0].mxu0 %v5352
    %v5734 = vpop.f32.mrb[0].mxu0
    %v5735 = vadd.f32 %v5590, %v5734
    %v5736 = vpop.f32.mrb[0].mxu0
    %5737 = vmatprep.mubr.f32.mxu0 %v5369
    %5738 = vmatmul.mubr.f32.gmra.mrb[0].mxu0 %v5353
    %v5739 = vpop.f32.mrb[0].mxu0
    %v5740 = vadd.f32 %v5595, %v5739
    %v5741 = vpop.f32.mrb[0].mxu0
    %5742 = vmatprep.mubr.f32.mxu0 %v5370
    %5743 = vmatmul.mubr.f32.gmra.mrb[0].mxu0 %v5354
    %v5744 = vpop.f32.mrb[0].mxu0
    %v5745 = vadd.f32 %v5600, %v5744
    %v5746 = vpop.f32.mrb[0].mxu0
    %5747 = vmatprep.mubr.f32.mxu0 %v5371
    %5748 = vmatmul.mubr.f32.gmra.mrb[0].mxu0 %v5355
    %v5749 = vpop.f32.mrb[0].mxu0
    %v5750 = vadd.f32 %v5605, %v5749
    %v5751 = vpop.f32.mrb[0].mxu0
    %5752 = vmatprep.mubr.f32.mxu0 %v5372
    %5753 = vmatmul.mubr.f32.gmra.mrb[0].mxu0 %v5356
    %v5754 = vpop.f32.mrb[0].mxu0
    %v5755 = vadd.f32 %v5610, %v5754
    %v5756 = vpop.f32.mrb[0].mxu0
    %5757 = vmatprep.mubr.f32.mxu0 %v5373
    %5758 = vmatmul.mubr.f32.gmra.mrb[0].mxu0 %v5357
    %v5759 = vpop.f32.mrb[0].mxu0
    %v5760 = vadd.f32 %v5615, %v5759
    %v5761 = vpop.f32.mrb[0].mxu0
    %5762 = vmatprep.mubr.f32.mxu0 %v5374
    %5763 = vmatmul.mubr.f32.gmra.mrb[0].mxu0 %v5358
    %v5764 = vpop.f32.mrb[0].mxu0
    %v5765 = vadd.f32 %v5620, %v5764
    %v5766 = vpop.f32.mrb[0].mxu0
    %5767 = vmatprep.mubr.f32.mxu0 %v5375
    %5768 = vmatmul.mubr.f32.gmra.mrb[0].mxu0 %v5359
    %v5769 = vpop.f32.mrb[0].mxu0
    %v5770 = vadd.f32 %v5625, %v5769
    %v5771 = vpop.f32.mrb[0].mxu0
    %5772 = vmatprep.mubr.f32.mxu0 %v5376
    %5773 = vmatmul.mubr.f32.gmra.mrb[0].mxu0 %v5360
    %v5774 = vpop.f32.mrb[0].mxu0
    %v5775 = vadd.f32 %v5630, %v5774
    %v5776 = vpop.f32.mrb[0].mxu0
    %5777 = vmatprep.mubr.f32.mxu0 %v5377
    %5778 = vmatmul.mubr.f32.gmra.mrb[0].mxu0 %v5361
    %v5779 = vpop.f32.mrb[0].mxu0
    %v5780 = vadd.f32 %v5635, %v5779
    %v5781 = vpop.f32.mrb[0].mxu0
    %5782 = vmatprep.mubr.f32.mxu0 %v5378
    %5783 = vmatmul.mubr.f32.gmra.mrb[0].mxu0 %v5362
    %v5784 = vpop.f32.mrb[0].mxu0
    %v5785 = vadd.f32 %v5640, %v5784
    %v5786 = vpop.f32.mrb[0].mxu0
    %5787 = vmatprep.mubr.f32.mxu0 %v5379
    %5788 = vmatmul.mubr.f32.gmra.mrb[0].mxu0 %v5363
    %v5789 = vpop.f32.mrb[0].mxu0
    %v5790 = vadd.f32 %v5645, %v5789
    %v5791 = vpop.f32.mrb[0].mxu0
    %5792 = vmatprep.mubr.f32.mxu0 %v5380
    %5793 = vmatmul.mubr.f32.gmra.mrb[0].mxu0 %v5364
    %v5794 = vpop.f32.mrb[0].mxu0
    %v5795 = vadd.f32 %v5650, %v5794
    %v5796 = vpop.f32.mrb[0].mxu0
    %5797 = vdwg.mxu0
    %5798 = vmatprep.subr.mxu0 0.0
    %5799 = vmatpush1.msra.mxu0 %v5446
    %5800 = vmatprep.subr.mxu0 0.0
    %5801 = vmatpush1.msra.mxu0 %v5447
    %5802 = vmatprep.subr.mxu0 0.0
    %5803 = vmatpush1.msra.mxu0 %v5448
    %5804 = vmatprep.subr.mxu0 0.0
    %5805 = vmatpush1.msra.mxu0 %v5449
    %5806 = vmatprep.subr.mxu0 0.0
    %5807 = vmatpush1.msra.mxu0 %v5450
    %5808 = vmatprep.subr.mxu0 0.0
    %5809 = vmatpush1.msra.mxu0 %v5451
    %5810 = vmatprep.subr.mxu0 0.0
    %5811 = vmatpush1.msra.mxu0 %v5452
    %5812 = vmatprep.subr.mxu0 0.0
    %5813 = vmatpush1.msra.mxu0 %v5453
    %5814 = vmatprep.subr.mxu0 0.0
    %5815 = vmatpush1.msra.mxu0 0.0
    %5816 = vmatprep.subr.mxu0 0.0
    %5817 = vmatpush1.msra.mxu0 0.0
    %5818 = vmatprep.subr.mxu0 0.0
    %5819 = vmatpush1.msra.mxu0 0.0
    %5820 = vmatprep.subr.mxu0 0.0
    %5821 = vmatpush1.msra.mxu0 0.0
    %5822 = vmatprep.subr.mxu0 0.0
    %5823 = vmatpush1.msra.mxu0 0.0
    %5824 = vmatprep.subr.mxu0 0.0
    %5825 = vmatpush1.msra.mxu0 0.0
    %5826 = vmatprep.subr.mxu0 0.0
    %5827 = vmatpush1.msra.mxu0 0.0
    %5828 = vmatprep.subr.mxu0 0.0
    %5829 = vmatpush1.msra.mxu0 0.0
    %5830 = vmatprep.subr.mxu0 0.0
    %5831 = vmatpush1.msra.mxu0 0.0
    %5832 = vmatprep.subr.mxu0 0.0
    %5833 = vmatpush1.msra.mxu0 0.0
    %5834 = vmatprep.subr.mxu0 0.0
    %5835 = vmatpush1.msra.mxu0 0.0
    %5836 = vmatprep.subr.mxu0 0.0
    %5837 = vmatpush1.msra.mxu0 0.0
    %5838 = vmatprep.subr.mxu0 0.0
    %5839 = vmatpush1.msra.mxu0 0.0
    %5840 = vmatprep.subr.mxu0 0.0
    %5841 = vmatpush1.msra.mxu0 0.0
    %5842 = vmatprep.subr.mxu0 0.0
    %5843 = vmatpush1.msra.mxu0 0.0
    %5844 = vmatprep.subr.mxu0 0.0
    %5845 = vmatpush1.msra.mxu0 0.0
    %5846 = vmatprep.subr.mxu0 0.0
    %5847 = vmatpush1.msra.mxu0 0.0
    %5848 = vmatprep.subr.mxu0 0.0
    %5849 = vmatpush1.msra.mxu0 0.0
    %5850 = vmatprep.subr.mxu0 0.0
    %5851 = vmatpush1.msra.mxu0 0.0
    %5852 = vmatprep.subr.mxu0 0.0
    %5853 = vmatpush1.msra.mxu0 0.0
    %5854 = vmatprep.subr.mxu0 0.0
    %5855 = vmatpush1.msra.mxu0 0.0
    %5856 = vmatprep.subr.mxu0 0.0
    %5857 = vmatpush1.msra.mxu0 0.0
    %5858 = vmatprep.subr.mxu0 0.0
    %5859 = vmatpush1.msra.mxu0 0.0
    %5860 = vmatprep.subr.mxu0 0.0
    %5861 = vmatpush1.msra.mxu0 0.0
    %5862 = vmatprep.mubr.f32.mxu0 0.0
    %5863 = vmatmul.mubr.f32.gmra.mrb[0].mxu0 %v5461
    %v5864 = vpop.f32.mrb[0].mxu0
    %v5865 = vadd.f32 %v5720, %v5864
    %v5866 = vpop.f32.mrb[0].mxu0
    %5867 = vmatprep.mubr.f32.mxu0 0.0
    %5868 = vmatmul.mubr.f32.gmra.mrb[0].mxu0 %v5464
    %v5869 = vpop.f32.mrb[0].mxu0
    %v5870 = vadd.f32 %v5725, %v5869
    %v5871 = vpop.f32.mrb[0].mxu0
    %5872 = vmatprep.mubr.f32.mxu0 0.0
    %5873 = vmatmul.mubr.f32.gmra.mrb[0].mxu0 %v5467
    %v5874 = vpop.f32.mrb[0].mxu0
    %v5875 = vadd.f32 %v5730, %v5874
    %v5876 = vpop.f32.mrb[0].mxu0
    %5877 = vmatprep.mubr.f32.mxu0 0.0
    %5878 = vmatmul.mubr.f32.gmra.mrb[0].mxu0 %v5470
    %v5879 = vpop.f32.mrb[0].mxu0
    %v5880 = vadd.f32 %v5735, %v5879
    %v5881 = vpop.f32.mrb[0].mxu0
    %5882 = vmatprep.mubr.f32.mxu0 0.0
    %5883 = vmatmul.mubr.f32.gmra.mrb[0].mxu0 %v5473
    %v5884 = vpop.f32.mrb[0].mxu0
    %v5885 = vadd.f32 %v5740, %v5884
    %v5886 = vpop.f32.mrb[0].mxu0
    %5887 = vmatprep.mubr.f32.mxu0 0.0
    %5888 = vmatmul.mubr.f32.gmra.mrb[0].mxu0 %v5476
    %v5889 = vpop.f32.mrb[0].mxu0
    %v5890 = vadd.f32 %v5745, %v5889
    %v5891 = vpop.f32.mrb[0].mxu0
    %5892 = vmatprep.mubr.f32.mxu0 0.0
    %5893 = vmatmul.mubr.f32.gmra.mrb[0].mxu0 %v5479
    %v5894 = vpop.f32.mrb[0].mxu0
    %v5895 = vadd.f32 %v5750, %v5894
    %v5896 = vpop.f32.mrb[0].mxu0
    %5897 = vmatprep.mubr.f32.mxu0 0.0
    %5898 = vmatmul.mubr.f32.gmra.mrb[0].mxu0 %v5482
    %v5899 = vpop.f32.mrb[0].mxu0
    %v5900 = vadd.f32 %v5755, %v5899
    %v5901 = vpop.f32.mrb[0].mxu0
    %5902 = vmatprep.mubr.f32.mxu0 0.0
    %5903 = vmatmul.mubr.f32.gmra.mrb[0].mxu0 %v5485
    %v5904 = vpop.f32.mrb[0].mxu0
    %v5905 = vadd.f32 %v5760, %v5904
    %v5906 = vpop.f32.mrb[0].mxu0
    %5907 = vmatprep.mubr.f32.mxu0 0.0
    %5908 = vmatmul.mubr.f32.gmra.mrb[0].mxu0 %v5488
    %v5909 = vpop.f32.mrb[0].mxu0
    %v5910 = vadd.f32 %v5765, %v5909
    %v5911 = vpop.f32.mrb[0].mxu0
    %5912 = vmatprep.mubr.f32.mxu0 0.0
    %5913 = vmatmul.mubr.f32.gmra.mrb[0].mxu0 %v5491
    %v5914 = vpop.f32.mrb[0].mxu0
    %v5915 = vadd.f32 %v5770, %v5914
    %v5916 = vpop.f32.mrb[0].mxu0
    %5917 = vmatprep.mubr.f32.mxu0 0.0
    %5918 = vmatmul.mubr.f32.gmra.mrb[0].mxu0 %v5494
    %v5919 = vpop.f32.mrb[0].mxu0
    %v5920 = vadd.f32 %v5775, %v5919
    %v5921 = vpop.f32.mrb[0].mxu0
    %5922 = vmatprep.mubr.f32.mxu0 0.0
    %5923 = vmatmul.mubr.f32.gmra.mrb[0].mxu0 %v5497
    %v5924 = vpop.f32.mrb[0].mxu0
    %v5925 = vadd.f32 %v5780, %v5924
    %v5926 = vpop.f32.mrb[0].mxu0
    %5927 = vmatprep.mubr.f32.mxu0 0.0
    %5928 = vmatmul.mubr.f32.gmra.mrb[0].mxu0 %v5500
    %v5929 = vpop.f32.mrb[0].mxu0
    %v5930 = vadd.f32 %v5785, %v5929
    %v5931 = vpop.f32.mrb[0].mxu0
    %5932 = vmatprep.mubr.f32.mxu0 0.0
    %5933 = vmatmul.mubr.f32.gmra.mrb[0].mxu0 %v5503
    %v5934 = vpop.f32.mrb[0].mxu0
    %v5935 = vadd.f32 %v5790, %v5934
    %v5936 = vpop.f32.mrb[0].mxu0
    %5937 = vmatprep.mubr.f32.mxu0 0.0
    %5938 = vmatmul.mubr.f32.gmra.mrb[0].mxu0 %v5506
    %v5939 = vpop.f32.mrb[0].mxu0
    %v5940 = vadd.f32 %v5795, %v5939
    %v5941 = vpop.f32.mrb[0].mxu0
    %5942 = vdwg.mxu0
    %v5943 = vmax.f32 %v5865, 0.0
    %v5944 = vmax.f32 %v5870, 0.0
    %v5945 = vmax.f32 %v5875, 0.0
    %v5946 = vmax.f32 %v5880, 0.0
    %v5947 = vmax.f32 %v5885, 0.0
    %v5948 = vmax.f32 %v5890, 0.0
    %v5949 = vmax.f32 %v5895, 0.0
    %v5950 = vmax.f32 %v5900, 0.0
    %v5951 = vmax.f32 %v5905, 0.0
    %v5952 = vmax.f32 %v5910, 0.0
    %v5953 = vmax.f32 %v5915, 0.0
    %v5954 = vmax.f32 %v5920, 0.0
    %v5955 = vmax.f32 %v5925, 0.0
    %v5956 = vmax.f32 %v5930, 0.0
    %v5957 = vmax.f32 %v5935, 0.0
    %v5958 = vmax.f32 %v5940, 0.0
    %v5959 = vsel %vm42, %v5943, 0.0
    %v5960 = vsel %vm42, %v5944, 0.0
    %v5961 = vadd.f32 %v5959, %v5960
    %v5962 = vsel %vm42, %v5945, 0.0
    %v5963 = vadd.f32 %v5961, %v5962
    %v5964 = vsel %vm42, %v5946, 0.0
    %v5965 = vadd.f32 %v5963, %v5964
    %v5966 = vsel %vm42, %v5947, 0.0
    %v5967 = vadd.f32 %v5965, %v5966
    %v5968 = vsel %vm42, %v5948, 0.0
    %v5969 = vadd.f32 %v5967, %v5968
    %v5970 = vsel %vm42, %v5949, 0.0
    %v5971 = vadd.f32 %v5969, %v5970
    %v5972 = vsel %vm42, %v5950, 0.0
    %v5973 = vadd.f32 %v5971, %v5972
    %v5974 = vsel %vm42, %v5951, 0.0
    %v5975 = vadd.f32 %v5973, %v5974
    %v5976 = vsel %vm42, %v5952, 0.0
    %v5977 = vadd.f32 %v5975, %v5976
    %v5978 = vsel %vm42, %v5953, 0.0
    %v5979 = vadd.f32 %v5977, %v5978
    %v5980 = vsel %vm42, %v5954, 0.0
    %v5981 = vadd.f32 %v5979, %v5980
    %v5982 = vsel %vm42, %v5955, 0.0
    %v5983 = vadd.f32 %v5981, %v5982
    %v5984 = vsel %vm42, %v5956, 0.0
    %v5985 = vadd.f32 %v5983, %v5984
    %v5986 = vsel %vm42, %v5957, 0.0
    %v5987 = vadd.f32 %v5985, %v5986
    %v5988 = vsel %vm42, %v5958, 0.0
    %v5989 = vadd.f32 %v5987, %v5988
    %v5990 = vrot.slane %v5989, 4
    %v5991 = vadd.f32 %v5989, %v5990
    %v5992 = vrot.slane %v5991, 2
    %v5993 = vadd.f32 %v5991, %v5992
    %v5994 = vrot.slane %v5993, 1
    %v5995 = vadd.f32 %v5993, %v5994
    %v5996 = vmul.f32 %v5943, %v5943
    %v5997 = vmul.f32 %v5944, %v5944
    %v5998 = vmul.f32 %v5945, %v5945
    %v5999 = vmul.f32 %v5946, %v5946
    %v6000 = vmul.f32 %v5947, %v5947
    %v6001 = vmul.f32 %v5948, %v5948
    %v6002 = vmul.f32 %v5949, %v5949
    %v6003 = vmul.f32 %v5950, %v5950
    %v6004 = vmul.f32 %v5951, %v5951
    %v6005 = vmul.f32 %v5952, %v5952
    %v6006 = vmul.f32 %v5953, %v5953
    %v6007 = vmul.f32 %v5954, %v5954
    %v6008 = vmul.f32 %v5955, %v5955
    %v6009 = vmul.f32 %v5956, %v5956
    %v6010 = vmul.f32 %v5957, %v5957
    %v6011 = vmul.f32 %v5958, %v5958
    %v6012 = vsel %vm42, %v5996, 0.0
    %v6013 = vsel %vm42, %v5997, 0.0
    %v6014 = vadd.f32 %v6012, %v6013
    %v6015 = vsel %vm42, %v5998, 0.0
    %v6016 = vadd.f32 %v6014, %v6015
    %v6017 = vsel %vm42, %v5999, 0.0
    %v6018 = vadd.f32 %v6016, %v6017
    %v6019 = vsel %vm42, %v6000, 0.0
    %v6020 = vadd.f32 %v6018, %v6019
    %v6021 = vsel %vm42, %v6001, 0.0
    %v6022 = vadd.f32 %v6020, %v6021
    %v6023 = vsel %vm42, %v6002, 0.0
    %v6024 = vadd.f32 %v6022, %v6023
    %v6025 = vsel %vm42, %v6003, 0.0
    %v6026 = vadd.f32 %v6024, %v6025
    %v6027 = vsel %vm42, %v6004, 0.0
    %v6028 = vadd.f32 %v6026, %v6027
    %v6029 = vsel %vm42, %v6005, 0.0
    %v6030 = vadd.f32 %v6028, %v6029
    %v6031 = vsel %vm42, %v6006, 0.0
    %v6032 = vadd.f32 %v6030, %v6031
    %v6033 = vsel %vm42, %v6007, 0.0
    %v6034 = vadd.f32 %v6032, %v6033
    %v6035 = vsel %vm42, %v6008, 0.0
    %v6036 = vadd.f32 %v6034, %v6035
    %v6037 = vsel %vm42, %v6009, 0.0
    %v6038 = vadd.f32 %v6036, %v6037
    %v6039 = vsel %vm42, %v6010, 0.0
    %v6040 = vadd.f32 %v6038, %v6039
    %v6041 = vsel %vm42, %v6011, 0.0
    %v6042 = vadd.f32 %v6040, %v6041
    %v6043 = vrot.slane %v6042, 4
    %v6044 = vadd.f32 %v6042, %v6043
    %v6045 = vrot.slane %v6044, 2
    %v6046 = vadd.f32 %v6044, %v6045
    %v6047 = vrot.slane %v6046, 1
    %v6048 = vadd.f32 %v6046, %v6047
    %v6049 = vmul.f32 %v5995, 0.0078125
    %v6050 = vmul.f32 %v6048, 0.0078125
    %v6051 = vmul.f32 %v6049, %v6049
    %v6052 = vsub.f32 %v6050, %v6051
    %v6053 = vmax.f32 %v6052, 0.0
    %v6054 = vadd.f32 %v6053, 1e-05
    %v6055 = vrsqrt.pop %v6054
    %v6056 = vld [vmem:[%s5454 + $0x1] sm:$0x1]
    %v6057 = vmul.f32 %v6055, %v6056
    %v6058 = vld [vmem:[%s5454 + $0x2] sm:$0x1]
    %v6059 = vmul.f32 %v6049, %v6057
    %v6060 = vsub.f32 %v6058, %v6059
    %v6061 = vlaneseq
    %v6062 = vshrl.u32 %v6061, 7
    %v6063 = vsub.s32 0, %v6062
    %v6064 = vrot.slane %v6057, %v6063
    %v6065 = vmul.f32 %v5943, %v6064
    %v6066 = vmul.f32 %v5944, %v6064
    %v6067 = vmul.f32 %v5945, %v6064
    %v6068 = vmul.f32 %v5946, %v6064
    %v6069 = vmul.f32 %v5947, %v6064
    %v6070 = vmul.f32 %v5948, %v6064
    %v6071 = vmul.f32 %v5949, %v6064
    %v6072 = vmul.f32 %v5950, %v6064
    %v6073 = vmul.f32 %v5951, %v6064
    %v6074 = vmul.f32 %v5952, %v6064
    %v6075 = vmul.f32 %v5953, %v6064
    %v6076 = vmul.f32 %v5954, %v6064
    %v6077 = vmul.f32 %v5955, %v6064
    %v6078 = vmul.f32 %v5956, %v6064
    %v6079 = vmul.f32 %v5957, %v6064
    %v6080 = vmul.f32 %v5958, %v6064
    %v6081 = vlaneseq
    %v6082 = vshrl.u32 %v6081, 7
    %v6083 = vsub.s32 0, %v6082
    %v6084 = vrot.slane %v6060, %v6083
    %v6085 = vadd.f32 %v6065, %v6084
    %v6086 = vadd.f32 %v6066, %v6084
    %v6087 = vadd.f32 %v6067, %v6084
    %v6088 = vadd.f32 %v6068, %v6084
    %v6089 = vadd.f32 %v6069, %v6084
    %v6090 = vadd.f32 %v6070, %v6084
    %v6091 = vadd.f32 %v6071, %v6084
    %v6092 = vadd.f32 %v6072, %v6084
    %v6093 = vadd.f32 %v6073, %v6084
    %v6094 = vadd.f32 %v6074, %v6084
    %v6095 = vadd.f32 %v6075, %v6084
    %v6096 = vadd.f32 %v6076, %v6084
    %v6097 = vadd.f32 %v6077, %v6084
    %v6098 = vadd.f32 %v6078, %v6084
    %v6099 = vadd.f32 %v6079, %v6084
    %v6100 = vadd.f32 %v6080, %v6084
    %6101 = vst.msk [vmem:[%s100 + $0x1] sm:$0xff] %vm42, %v6085
    %6102 = vst.msk [vmem:[%s100 + $0x11] sm:$0xff] %vm42, %v6086
    %6103 = vst.msk [vmem:[%s100 + $0x21] sm:$0xff] %vm42, %v6087
    %6104 = vst.msk [vmem:[%s100 + $0x31] sm:$0xff] %vm42, %v6088
    %6105 = vst.msk [vmem:[%s100 + $0x41] sm:$0xff] %vm42, %v6089
    %6106 = vst.msk [vmem:[%s100 + $0x51] sm:$0xff] %vm42, %v6090
    %6107 = vst.msk [vmem:[%s100 + $0x61] sm:$0xff] %vm42, %v6091
    %6108 = vst.msk [vmem:[%s100 + $0x71] sm:$0xff] %vm42, %v6092
    %6109 = vst.msk [vmem:[%s100 + $0xa1] sm:$0xff] %vm42, %v6093
    %6110 = vst.msk [vmem:[%s100 + $0xb1] sm:$0xff] %vm42, %v6094
    %6111 = vst.msk [vmem:[%s100 + $0xc1] sm:$0xff] %vm42, %v6095
    %6112 = vst.msk [vmem:[%s100 + $0xd1] sm:$0xff] %vm42, %v6096
    %6113 = vst.msk [vmem:[%s100 + $0xe1] sm:$0xff] %vm42, %v6097
    %6114 = vst.msk [vmem:[%s100 + $0xf1] sm:$0xff] %vm42, %v6098
    %6115 = vst.msk [vmem:[%s100 + $0x101] sm:$0xff] %vm42, %v6099
    %6116 = vst.msk [vmem:[%s100 + $0x111] sm:$0xff] %vm42, %v6100
    %v6117 = vld [vmem:[%s100 + $0x1] sm:$0xff]
    %v6118 = vld [vmem:[%s100 + $0x11] sm:$0xff]
    %v6119 = vld [vmem:[%s100 + $0x21] sm:$0xff]
    %v6120 = vld [vmem:[%s100 + $0x31] sm:$0xff]
    %v6121 = vld [vmem:[%s100 + $0x41] sm:$0xff]
    %v6122 = vld [vmem:[%s100 + $0x51] sm:$0xff]
    %v6123 = vld [vmem:[%s100 + $0x61] sm:$0xff]
    %v6124 = vld [vmem:[%s100 + $0x71] sm:$0xff]
    %v6125 = vld [vmem:[%s100 + $0xa1] sm:$0xff]
    %v6126 = vld [vmem:[%s100 + $0xb1] sm:$0xff]
    %v6127 = vld [vmem:[%s100 + $0xc1] sm:$0xff]
    %v6128 = vld [vmem:[%s100 + $0xd1] sm:$0xff]
    %v6129 = vld [vmem:[%s100 + $0xe1] sm:$0xff]
    %v6130 = vld [vmem:[%s100 + $0xf1] sm:$0xff]
    %v6131 = vld [vmem:[%s100 + $0x101] sm:$0xff]
    %v6132 = vld [vmem:[%s100 + $0x111] sm:$0xff]
    %v6133 = vld [vmem:[%s100 + $0x2] sm:$0xff]
    %v6134 = vld [vmem:[%s100 + $0x12] sm:$0xff]
    %v6135 = vld [vmem:[%s100 + $0x22] sm:$0xff]
    %v6136 = vld [vmem:[%s100 + $0x32] sm:$0xff]
    %v6137 = vld [vmem:[%s100 + $0x42] sm:$0xff]
    %v6138 = vld [vmem:[%s100 + $0x52] sm:$0xff]
    %v6139 = vld [vmem:[%s100 + $0x62] sm:$0xff]
    %v6140 = vld [vmem:[%s100 + $0x72] sm:$0xff]
    %v6141 = vld [vmem:[%s100 + $0xa2] sm:$0xff]
    %v6142 = vld [vmem:[%s100 + $0xb2] sm:$0xff]
    %v6143 = vld [vmem:[%s100 + $0xc2] sm:$0xff]
    %v6144 = vld [vmem:[%s100 + $0xd2] sm:$0xff]
    %v6145 = vld [vmem:[%s100 + $0xe2] sm:$0xff]
    %v6146 = vld [vmem:[%s100 + $0xf2] sm:$0xff]
    %v6147 = vld [vmem:[%s100 + $0x102] sm:$0xff]
    %v6148 = vld [vmem:[%s100 + $0x112] sm:$0xff]
    %v6149 = vld [vmem:[%s214 + $0x1] sm:$0xff]
    %v6150 = vld [vmem:[%s214 + $0x11] sm:$0xff]
    %v6151 = vld [vmem:[%s214 + $0x21] sm:$0xff]
    %v6152 = vld [vmem:[%s214 + $0x31] sm:$0xff]
    %v6153 = vld [vmem:[%s214 + $0x41] sm:$0xff]
    %v6154 = vld [vmem:[%s214 + $0x51] sm:$0xff]
    %v6155 = vld [vmem:[%s214 + $0x61] sm:$0xff]
    %v6156 = vld [vmem:[%s214 + $0x71] sm:$0xff]
    %v6157 = vld [vmem:[%s214 + $0xa1] sm:$0xff]
    %v6158 = vld [vmem:[%s214 + $0xb1] sm:$0xff]
    %v6159 = vld [vmem:[%s214 + $0xc1] sm:$0xff]
    %v6160 = vld [vmem:[%s214 + $0xd1] sm:$0xff]
    %v6161 = vld [vmem:[%s214 + $0xe1] sm:$0xff]
    %v6162 = vld [vmem:[%s214 + $0xf1] sm:$0xff]
    %v6163 = vld [vmem:[%s214 + $0x101] sm:$0xff]
    %v6164 = vld [vmem:[%s214 + $0x111] sm:$0xff]
    %v6165 = vld [vmem:[%s214 + $0x2] sm:$0xff]
    %v6166 = vld [vmem:[%s214 + $0x12] sm:$0xff]
    %v6167 = vld [vmem:[%s214 + $0x22] sm:$0xff]
    %v6168 = vld [vmem:[%s214 + $0x32] sm:$0xff]
    %v6169 = vld [vmem:[%s214 + $0x42] sm:$0xff]
    %v6170 = vld [vmem:[%s214 + $0x52] sm:$0xff]
    %v6171 = vld [vmem:[%s214 + $0x62] sm:$0xff]
    %v6172 = vld [vmem:[%s214 + $0x72] sm:$0xff]
    %v6173 = vld [vmem:[%s214 + $0xa2] sm:$0xff]
    %v6174 = vld [vmem:[%s214 + $0xb2] sm:$0xff]
    %v6175 = vld [vmem:[%s214 + $0xc2] sm:$0xff]
    %v6176 = vld [vmem:[%s214 + $0xd2] sm:$0xff]
    %v6177 = vld [vmem:[%s214 + $0xe2] sm:$0xff]
    %v6178 = vld [vmem:[%s214 + $0xf2] sm:$0xff]
    %v6179 = vld [vmem:[%s214 + $0x102] sm:$0xff]
    %v6180 = vld [vmem:[%s214 + $0x112] sm:$0xff]
    %6197 = vrot.lane.b32.xlu0 %v6133, 64
    %v6198 = vpop.permute.xlu0 %6197
    %6199 = vrot.lane.b32.xlu0 %v6134, 64
    %v6200 = vpop.permute.xlu0 %6199
    %6201 = vrot.lane.b32.xlu0 %v6135, 64
    %v6202 = vpop.permute.xlu0 %6201
    %6203 = vrot.lane.b32.xlu0 %v6136, 64
    %v6204 = vpop.permute.xlu0 %6203
    %6205 = vrot.lane.b32.xlu0 %v6137, 64
    %v6206 = vpop.permute.xlu0 %6205
    %6207 = vrot.lane.b32.xlu0 %v6138, 64
    %v6208 = vpop.permute.xlu0 %6207
    %6209 = vrot.lane.b32.xlu0 %v6139, 64
    %v6210 = vpop.permute.xlu0 %6209
    %6211 = vrot.lane.b32.xlu0 %v6140, 64
    %v6212 = vpop.permute.xlu0 %6211
    %6213 = vrot.lane.b32.xlu0 %v6141, 64
    %v6214 = vpop.permute.xlu0 %6213
    %6215 = vrot.lane.b32.xlu0 %v6142, 64
    %v6216 = vpop.permute.xlu0 %6215
    %6217 = vrot.lane.b32.xlu0 %v6143, 64
    %v6218 = vpop.permute.xlu0 %6217
    %6219 = vrot.lane.b32.xlu0 %v6144, 64
    %v6220 = vpop.permute.xlu0 %6219
    %6221 = vrot.lane.b32.xlu0 %v6145, 64
    %v6222 = vpop.permute.xlu0 %6221
    %6223 = vrot.lane.b32.xlu0 %v6146, 64
    %v6224 = vpop.permute.xlu0 %6223
    %6225 = vrot.lane.b32.xlu0 %v6147, 64
    %v6226 = vpop.permute.xlu0 %6225
    %6227 = vrot.lane.b32.xlu0 %v6148, 64
    %v6228 = vpop.permute.xlu0 %6227
    %6261 = vrot.lane.b32.xlu0 %v6165, 64
    %v6262 = vpop.permute.xlu0 %6261
    %6263 = vrot.lane.b32.xlu0 %v6166, 64
    %v6264 = vpop.permute.xlu0 %6263
    %6265 = vrot.lane.b32.xlu0 %v6167, 64
    %v6266 = vpop.permute.xlu0 %6265
    %6267 = vrot.lane.b32.xlu0 %v6168, 64
    %v6268 = vpop.permute.xlu0 %6267
    %6269 = vrot.lane.b32.xlu0 %v6169, 64
    %v6270 = vpop.permute.xlu0 %6269
    %6271 = vrot.lane.b32.xlu0 %v6170, 64
    %v6272 = vpop.permute.xlu0 %6271
    %6273 = vrot.lane.b32.xlu0 %v6171, 64
    %v6274 = vpop.permute.xlu0 %6273
    %6275 = vrot.lane.b32.xlu0 %v6172, 64
    %v6276 = vpop.permute.xlu0 %6275
    %6277 = vrot.lane.b32.xlu0 %v6173, 64
    %v6278 = vpop.permute.xlu0 %6277
    %6279 = vrot.lane.b32.xlu0 %v6174, 64
    %v6280 = vpop.permute.xlu0 %6279
    %6281 = vrot.lane.b32.xlu0 %v6175, 64
    %v6282 = vpop.permute.xlu0 %6281
    %6283 = vrot.lane.b32.xlu0 %v6176, 64
    %v6284 = vpop.permute.xlu0 %6283
    %6285 = vrot.lane.b32.xlu0 %v6177, 64
    %v6286 = vpop.permute.xlu0 %6285
    %6287 = vrot.lane.b32.xlu0 %v6178, 64
    %v6288 = vpop.permute.xlu0 %6287
    %6289 = vrot.lane.b32.xlu0 %v6179, 64
    %v6290 = vpop.permute.xlu0 %6289
    %6291 = vrot.lane.b32.xlu0 %v6180, 64
    %v6292 = vpop.permute.xlu0 %6291
    %v6309 = vsel %vm42, %v6117, %v6198
    %v6310 = vsel %vm42, %v6118, %v6200
    %v6311 = vsel %vm42, %v6119, %v6202
    %v6312 = vsel %vm42, %v6120, %v6204
    %v6313 = vsel %vm42, %v6121, %v6206
    %v6314 = vsel %vm42, %v6122, %v6208
    %v6315 = vsel %vm42, %v6123, %v6210
    %v6316 = vsel %vm42, %v6124, %v6212
    %v6317 = vsel %vm42, %v6125, %v6214
    %v6318 = vsel %vm42, %v6126, %v6216
    %v6319 = vsel %vm42, %v6127, %v6218
    %v6320 = vsel %vm42, %v6128, %v6220
    %v6321 = vsel %vm42, %v6129, %v6222
    %v6322 = vsel %vm42, %v6130, %v6224
    %v6323 = vsel %vm42, %v6131, %v6226
    %v6324 = vsel %vm42, %v6132, %v6228
    %v6325 = vsel %vm42, %v6149, %v6262
    %v6326 = vsel %vm42, %v6150, %v6264
    %v6327 = vsel %vm42, %v6151, %v6266
    %v6328 = vsel %vm42, %v6152, %v6268
    %v6329 = vsel %vm42, %v6153, %v6270
    %v6330 = vsel %vm42, %v6154, %v6272
    %v6331 = vsel %vm42, %v6155, %v6274
    %v6332 = vsel %vm42, %v6156, %v6276
    %v6333 = vsel %vm42, %v6157, %v6278
    %v6334 = vsel %vm42, %v6158, %v6280
    %v6335 = vsel %vm42, %v6159, %v6282
    %v6336 = vsel %vm42, %v6160, %v6284
    %v6337 = vsel %vm42, %v6161, %v6286
    %v6338 = vsel %vm42, %v6162, %v6288
    %v6339 = vsel %vm42, %v6163, %v6290
    %v6340 = vsel %vm42, %v6164, %v6292
    %s6341 = scalar_lea.vmem [#allocation6], 2880
    %v6342 = vld [vmem:[%s6341] sm:$0xff]
    %v6343 = vld [vmem:[%s6341 + $0x8] sm:$0xff]
    %v6344 = vld [vmem:[%s6341 + $0x10] sm:$0xff]
    %v6345 = vld [vmem:[%s6341 + $0x18] sm:$0xff]
    %v6346 = vld [vmem:[%s6341 + $0x20] sm:$0xff]
    %v6347 = vld [vmem:[%s6341 + $0x28] sm:$0xff]
    %v6348 = vld [vmem:[%s6341 + $0x30] sm:$0xff]
    %v6349 = vld [vmem:[%s6341 + $0x38] sm:$0xff]
    %v6350 = vld [vmem:[%s6341 + $0x40] sm:$0xff]
    %v6351 = vld [vmem:[%s6341 + $0x48] sm:$0xff]
    %v6352 = vld [vmem:[%s6341 + $0x50] sm:$0xff]
    %v6353 = vld [vmem:[%s6341 + $0x58] sm:$0xff]
    %v6354 = vld [vmem:[%s6341 + $0x60] sm:$0xff]
    %v6355 = vld [vmem:[%s6341 + $0x68] sm:$0xff]
    %v6356 = vld [vmem:[%s6341 + $0x70] sm:$0xff]
    %v6357 = vld [vmem:[%s6341 + $0x78] sm:$0xff]
    %v6358 = vld [vmem:[%s6341 + $0x80] sm:$0xff]
    %v6359 = vld [vmem:[%s6341 + $0x88] sm:$0xff]
    %v6360 = vld [vmem:[%s6341 + $0x90] sm:$0xff]
    %v6361 = vld [vmem:[%s6341 + $0x98] sm:$0xff]
    %v6362 = vld [vmem:[%s6341 + $0xa0] sm:$0xff]
    %v6363 = vld [vmem:[%s6341 + $0xa8] sm:$0xff]
    %v6364 = vld [vmem:[%s6341 + $0xb0] sm:$0xff]
    %v6365 = vld [vmem:[%s6341 + $0xb8] sm:$0xff]
    %v6366 = vld [vmem:[%s6341 + $0xc0] sm:$0xff]
    %v6367 = vld [vmem:[%s6341 + $0xc8] sm:$0xff]
    %v6368 = vld [vmem:[%s6341 + $0xd0] sm:$0xff]
    %v6369 = vld [vmem:[%s6341 + $0xd8] sm:$0xff]
    %v6370 = vld [vmem:[%s6341 + $0xe0] sm:$0xff]
    %v6371 = vld [vmem:[%s6341 + $0xe8] sm:$0xff]
    %v6372 = vld [vmem:[%s6341 + $0xf0] sm:$0xff]
    %v6373 = vld [vmem:[%s6341 + $0xf8] sm:$0xff]
    %s6374 = scalar_lea.vmem %s2, 20
    %v6375 = vld [vmem:[%s6374] sm:$0x1]
    %v6376 = vlaneseq
    %v6377 = vshrl.u32 %v6376, 7
    %v6378 = vsub.s32 0, %v6377
    %v6379 = vrot.slane %v6375, %v6378
    %6380 = vmatprep.subr.mxu0 0.0
    %6381 = vmatpush1.msra.mxu0 %v6342
    %6382 = vmatprep.subr.mxu0 0.0
    %6383 = vmatpush1.msra.mxu0 %v6343
    %6384 = vmatprep.subr.mxu0 0.0
    %6385 = vmatpush1.msra.mxu0 %v6344
    %6386 = vmatprep.subr.mxu0 0.0
    %6387 = vmatpush1.msra.mxu0 %v6345
    %6388 = vmatprep.subr.mxu0 0.0
    %6389 = vmatpush1.msra.mxu0 %v6346
    %6390 = vmatprep.subr.mxu0 0.0
    %6391 = vmatpush1.msra.mxu0 %v6347
    %6392 = vmatprep.subr.mxu0 0.0
    %6393 = vmatpush1.msra.mxu0 %v6348
    %6394 = vmatprep.subr.mxu0 0.0
    %6395 = vmatpush1.msra.mxu0 %v6349
    %6396 = vmatprep.subr.mxu0 0.0
    %6397 = vmatpush1.msra.mxu0 %v6350
    %6398 = vmatprep.subr.mxu0 0.0
    %6399 = vmatpush1.msra.mxu0 %v6351
    %6400 = vmatprep.subr.mxu0 0.0
    %6401 = vmatpush1.msra.mxu0 %v6352
    %6402 = vmatprep.subr.mxu0 0.0
    %6403 = vmatpush1.msra.mxu0 %v6353
    %6404 = vmatprep.subr.mxu0 0.0
    %6405 = vmatpush1.msra.mxu0 %v6354
    %6406 = vmatprep.subr.mxu0 0.0
    %6407 = vmatpush1.msra.mxu0 %v6355
    %6408 = vmatprep.subr.mxu0 0.0
    %6409 = vmatpush1.msra.mxu0 %v6356
    %6410 = vmatprep.subr.mxu0 0.0
    %6411 = vmatpush1.msra.mxu0 %v6357
    %6412 = vmatprep.subr.mxu0 0.0
    %6413 = vmatpush1.msra.mxu0 %v6358
    %6414 = vmatprep.subr.mxu0 0.0
    %6415 = vmatpush1.msra.mxu0 %v6359
    %6416 = vmatprep.subr.mxu0 0.0
    %6417 = vmatpush1.msra.mxu0 %v6360
    %6418 = vmatprep.subr.mxu0 0.0
    %6419 = vmatpush1.msra.mxu0 %v6361
    %6420 = vmatprep.subr.mxu0 0.0
    %6421 = vmatpush1.msra.mxu0 %v6362
    %6422 = vmatprep.subr.mxu0 0.0
    %6423 = vmatpush1.msra.mxu0 %v6363
    %6424 = vmatprep.subr.mxu0 0.0
    %6425 = vmatpush1.msra.mxu0 %v6364
    %6426 = vmatprep.subr.mxu0 0.0
    %6427 = vmatpush1.msra.mxu0 %v6365
    %6428 = vmatprep.subr.mxu0 0.0
    %6429 = vmatpush1.msra.mxu0 %v6366
    %6430 = vmatprep.subr.mxu0 0.0
    %6431 = vmatpush1.msra.mxu0 %v6367
    %6432 = vmatprep.subr.mxu0 0.0
    %6433 = vmatpush1.msra.mxu0 %v6368
    %6434 = vmatprep.subr.mxu0 0.0
    %6435 = vmatpush1.msra.mxu0 %v6369
    %6436 = vmatprep.subr.mxu0 0.0
    %6437 = vmatpush1.msra.mxu0 %v6370
    %6438 = vmatprep.subr.mxu0 0.0
    %6439 = vmatpush1.msra.mxu0 %v6371
    %6440 = vmatprep.subr.mxu0 0.0
    %6441 = vmatpush1.msra.mxu0 %v6372
    %6442 = vmatprep.subr.mxu0 0.0
    %6443 = vmatpush1.msra.mxu0 %v6373
    %6444 = vmatprep.mubr.f32.mxu0 %v6325
    %6445 = vmatmul.mubr.f32.gmra.mrb[0].mxu0 %v6309
    %v6446 = vpop.f32.mrb[0].mxu0
    %v6447 = vadd.f32 %v6379, %v6446
    %v6448 = vpop.f32.mrb[0].mxu0
    %6449 = vmatprep.mubr.f32.mxu0 %v6326
    %6450 = vmatmul.mubr.f32.gmra.mrb[0].mxu0 %v6310
    %v6451 = vpop.f32.mrb[0].mxu0
    %v6452 = vadd.f32 %v6379, %v6451
    %v6453 = vpop.f32.mrb[0].mxu0
    %6454 = vmatprep.mubr.f32.mxu0 %v6327
    %6455 = vmatmul.mubr.f32.gmra.mrb[0].mxu0 %v6311
    %v6456 = vpop.f32.mrb[0].mxu0
    %v6457 = vadd.f32 %v6379, %v6456
    %v6458 = vpop.f32.mrb[0].mxu0
    %6459 = vmatprep.mubr.f32.mxu0 %v6328
    %6460 = vmatmul.mubr.f32.gmra.mrb[0].mxu0 %v6312
    %v6461 = vpop.f32.mrb[0].mxu0
    %v6462 = vadd.f32 %v6379, %v6461
    %v6463 = vpop.f32.mrb[0].mxu0
    %6464 = vmatprep.mubr.f32.mxu0 %v6329
    %6465 = vmatmul.mubr.f32.gmra.mrb[0].mxu0 %v6313
    %v6466 = vpop.f32.mrb[0].mxu0
    %v6467 = vadd.f32 %v6379, %v6466
    %v6468 = vpop.f32.mrb[0].mxu0
    %6469 = vmatprep.mubr.f32.mxu0 %v6330
    %6470 = vmatmul.mubr.f32.gmra.mrb[0].mxu0 %v6314
    %v6471 = vpop.f32.mrb[0].mxu0
    %v6472 = vadd.f32 %v6379, %v6471
    %v6473 = vpop.f32.mrb[0].mxu0
    %6474 = vmatprep.mubr.f32.mxu0 %v6331
    %6475 = vmatmul.mubr.f32.gmra.mrb[0].mxu0 %v6315
    %v6476 = vpop.f32.mrb[0].mxu0
    %v6477 = vadd.f32 %v6379, %v6476
    %v6478 = vpop.f32.mrb[0].mxu0
    %6479 = vmatprep.mubr.f32.mxu0 %v6332
    %6480 = vmatmul.mubr.f32.gmra.mrb[0].mxu0 %v6316
    %v6481 = vpop.f32.mrb[0].mxu0
    %v6482 = vadd.f32 %v6379, %v6481
    %v6483 = vpop.f32.mrb[0].mxu0
    %6484 = vmatprep.mubr.f32.mxu0 %v6333
    %6485 = vmatmul.mubr.f32.gmra.mrb[0].mxu0 %v6317
    %v6486 = vpop.f32.mrb[0].mxu0
    %v6487 = vadd.f32 %v6379, %v6486
    %v6488 = vpop.f32.mrb[0].mxu0
    %6489 = vmatprep.mubr.f32.mxu0 %v6334
    %6490 = vmatmul.mubr.f32.gmra.mrb[0].mxu0 %v6318
    %v6491 = vpop.f32.mrb[0].mxu0
    %v6492 = vadd.f32 %v6379, %v6491
    %v6493 = vpop.f32.mrb[0].mxu0
    %6494 = vmatprep.mubr.f32.mxu0 %v6335
    %6495 = vmatmul.mubr.f32.gmra.mrb[0].mxu0 %v6319
    %v6496 = vpop.f32.mrb[0].mxu0
    %v6497 = vadd.f32 %v6379, %v6496
    %v6498 = vpop.f32.mrb[0].mxu0
    %6499 = vmatprep.mubr.f32.mxu0 %v6336
    %6500 = vmatmul.mubr.f32.gmra.mrb[0].mxu0 %v6320
    %v6501 = vpop.f32.mrb[0].mxu0
    %v6502 = vadd.f32 %v6379, %v6501
    %v6503 = vpop.f32.mrb[0].mxu0
    %6504 = vmatprep.mubr.f32.mxu0 %v6337
    %6505 = vmatmul.mubr.f32.gmra.mrb[0].mxu0 %v6321
    %v6506 = vpop.f32.mrb[0].mxu0
    %v6507 = vadd.f32 %v6379, %v6506
    %v6508 = vpop.f32.mrb[0].mxu0
    %6509 = vmatprep.mubr.f32.mxu0 %v6338
    %6510 = vmatmul.mubr.f32.gmra.mrb[0].mxu0 %v6322
    %v6511 = vpop.f32.mrb[0].mxu0
    %v6512 = vadd.f32 %v6379, %v6511
    %v6513 = vpop.f32.mrb[0].mxu0
    %6514 = vmatprep.mubr.f32.mxu0 %v6339
    %6515 = vmatmul.mubr.f32.gmra.mrb[0].mxu0 %v6323
    %v6516 = vpop.f32.mrb[0].mxu0
    %v6517 = vadd.f32 %v6379, %v6516
    %v6518 = vpop.f32.mrb[0].mxu0
    %6519 = vmatprep.mubr.f32.mxu0 %v6340
    %6520 = vmatmul.mubr.f32.gmra.mrb[0].mxu0 %v6324
    %v6521 = vpop.f32.mrb[0].mxu0
    %v6522 = vadd.f32 %v6379, %v6521
    %v6523 = vpop.f32.mrb[0].mxu0
    %6524 = vdwg.mxu0
    %v6525 = vmax.f32 %v6447, 0.0
    %v6526 = vmax.f32 %v6452, 0.0
    %v6527 = vmax.f32 %v6457, 0.0
    %v6528 = vmax.f32 %v6462, 0.0
    %v6529 = vmax.f32 %v6467, 0.0
    %v6530 = vmax.f32 %v6472, 0.0
    %v6531 = vmax.f32 %v6477, 0.0
    %v6532 = vmax.f32 %v6482, 0.0
    %v6533 = vmax.f32 %v6487, 0.0
    %v6534 = vmax.f32 %v6492, 0.0
    %v6535 = vmax.f32 %v6497, 0.0
    %v6536 = vmax.f32 %v6502, 0.0
    %v6537 = vmax.f32 %v6507, 0.0
    %v6538 = vmax.f32 %v6512, 0.0
    %v6539 = vmax.f32 %v6517, 0.0
    %v6540 = vmax.f32 %v6522, 0.0
    %v6541 = vadd.f32 %v6525, %v6526
    %v6542 = vadd.f32 %v6541, %v6527
    %v6543 = vadd.f32 %v6542, %v6528
    %v6544 = vadd.f32 %v6543, %v6529
    %v6545 = vadd.f32 %v6544, %v6530
    %v6546 = vadd.f32 %v6545, %v6531
    %v6547 = vadd.f32 %v6546, %v6532
    %v6548 = vadd.f32 %v6547, %v6533
    %v6549 = vadd.f32 %v6548, %v6534
    %v6550 = vadd.f32 %v6549, %v6535
    %v6551 = vadd.f32 %v6550, %v6536
    %v6552 = vadd.f32 %v6551, %v6537
    %v6553 = vadd.f32 %v6552, %v6538
    %v6554 = vadd.f32 %v6553, %v6539
    %v6555 = vadd.f32 %v6554, %v6540
    %v6556 = vrot.slane %v6555, 4
    %v6557 = vadd.f32 %v6555, %v6556
    %v6558 = vrot.slane %v6557, 2
    %v6559 = vadd.f32 %v6557, %v6558
    %v6560 = vrot.slane %v6559, 1
    %v6561 = vadd.f32 %v6559, %v6560
    %v6562 = vmul.f32 %v6525, %v6525
    %v6563 = vmul.f32 %v6526, %v6526
    %v6564 = vmul.f32 %v6527, %v6527
    %v6565 = vmul.f32 %v6528, %v6528
    %v6566 = vmul.f32 %v6529, %v6529
    %v6567 = vmul.f32 %v6530, %v6530
    %v6568 = vmul.f32 %v6531, %v6531
    %v6569 = vmul.f32 %v6532, %v6532
    %v6570 = vmul.f32 %v6533, %v6533
    %v6571 = vmul.f32 %v6534, %v6534
    %v6572 = vmul.f32 %v6535, %v6535
    %v6573 = vmul.f32 %v6536, %v6536
    %v6574 = vmul.f32 %v6537, %v6537
    %v6575 = vmul.f32 %v6538, %v6538
    %v6576 = vmul.f32 %v6539, %v6539
    %v6577 = vmul.f32 %v6540, %v6540
    %v6578 = vadd.f32 %v6562, %v6563
    %v6579 = vadd.f32 %v6578, %v6564
    %v6580 = vadd.f32 %v6579, %v6565
    %v6581 = vadd.f32 %v6580, %v6566
    %v6582 = vadd.f32 %v6581, %v6567
    %v6583 = vadd.f32 %v6582, %v6568
    %v6584 = vadd.f32 %v6583, %v6569
    %v6585 = vadd.f32 %v6584, %v6570
    %v6586 = vadd.f32 %v6585, %v6571
    %v6587 = vadd.f32 %v6586, %v6572
    %v6588 = vadd.f32 %v6587, %v6573
    %v6589 = vadd.f32 %v6588, %v6574
    %v6590 = vadd.f32 %v6589, %v6575
    %v6591 = vadd.f32 %v6590, %v6576
    %v6592 = vadd.f32 %v6591, %v6577
    %v6593 = vrot.slane %v6592, 4
    %v6594 = vadd.f32 %v6592, %v6593
    %v6595 = vrot.slane %v6594, 2
    %v6596 = vadd.f32 %v6594, %v6595
    %v6597 = vrot.slane %v6596, 1
    %v6598 = vadd.f32 %v6596, %v6597
    %vm6599 = vcmask 1040384
    %v6600 = vsel %vm6599, %v6561, %v6598
    %s6601 = scalar_lea.vmem [#allocation6], 4032
    %v6602 = vld [vmem:[%s6601] sm:$0xff]
    %v6603 = vld [vmem:[%s6601 + $0x8] sm:$0xff]
    %v6604 = vld [vmem:[%s6601 + $0x10] sm:$0xff]
    %v6605 = vld [vmem:[%s6601 + $0x18] sm:$0xff]
    %v6606 = vld [vmem:[%s6601 + $0x20] sm:$0xff]
    %v6607 = vld [vmem:[%s6601 + $0x28] sm:$0xff]
    %v6608 = vld [vmem:[%s6601 + $0x30] sm:$0xff]
    %v6609 = vld [vmem:[%s6601 + $0x38] sm:$0xff]
    %v6610 = vld [vmem:[%s6601 + $0x40] sm:$0xff]
    %v6611 = vld [vmem:[%s6601 + $0x48] sm:$0xff]
    %v6612 = vld [vmem:[%s6601 + $0x50] sm:$0xff]
    %v6613 = vld [vmem:[%s6601 + $0x58] sm:$0xff]
    %v6614 = vld [vmem:[%s6601 + $0x60] sm:$0xff]
    %v6615 = vld [vmem:[%s6601 + $0x68] sm:$0xff]
    %v6616 = vld [vmem:[%s6601 + $0x70] sm:$0xff]
    %v6617 = vld [vmem:[%s6601 + $0x78] sm:$0xff]
    %6618 = vmatprep.subr.mxu0 0.0
    %6619 = vmatpush1.msra.mxu0 %v6602
    %6620 = vmatprep.subr.mxu0 0.0
    %6621 = vmatpush1.msra.mxu0 %v6603
    %6622 = vmatprep.subr.mxu0 0.0
    %6623 = vmatpush1.msra.mxu0 %v6604
    %6624 = vmatprep.subr.mxu0 0.0
    %6625 = vmatpush1.msra.mxu0 %v6605
    %6626 = vmatprep.subr.mxu0 0.0
    %6627 = vmatpush1.msra.mxu0 %v6606
    %6628 = vmatprep.subr.mxu0 0.0
    %6629 = vmatpush1.msra.mxu0 %v6607
    %6630 = vmatprep.subr.mxu0 0.0
    %6631 = vmatpush1.msra.mxu0 %v6608
    %6632 = vmatprep.subr.mxu0 0.0
    %6633 = vmatpush1.msra.mxu0 %v6609
    %6634 = vmatprep.subr.mxu0 0.0
    %6635 = vmatpush1.msra.mxu0 %v6610
    %6636 = vmatprep.subr.mxu0 0.0
    %6637 = vmatpush1.msra.mxu0 %v6611
    %6638 = vmatprep.subr.mxu0 0.0
    %6639 = vmatpush1.msra.mxu0 %v6612
    %6640 = vmatprep.subr.mxu0 0.0
    %6641 = vmatpush1.msra.mxu0 %v6613
    %6642 = vmatprep.subr.mxu0 0.0
    %6643 = vmatpush1.msra.mxu0 %v6614
    %6644 = vmatprep.subr.mxu0 0.0
    %6645 = vmatpush1.msra.mxu0 %v6615
    %6646 = vmatprep.subr.mxu0 0.0
    %6647 = vmatpush1.msra.mxu0 %v6616
    %6648 = vmatprep.subr.mxu0 0.0
    %6649 = vmatpush1.msra.mxu0 %v6617
    %6650 = vmatprep.subr.mxu0 0.0
    %6651 = vmatpush1.msra.mxu0 0.0
    %6652 = vmatprep.subr.mxu0 0.0
    %6653 = vmatpush1.msra.mxu0 0.0
    %6654 = vmatprep.subr.mxu0 0.0
    %6655 = vmatpush1.msra.mxu0 0.0
    %6656 = vmatprep.subr.mxu0 0.0
    %6657 = vmatpush1.msra.mxu0 0.0
    %6658 = vmatprep.subr.mxu0 0.0
    %6659 = vmatpush1.msra.mxu0 0.0
    %6660 = vmatprep.subr.mxu0 0.0
    %6661 = vmatpush1.msra.mxu0 0.0
    %6662 = vmatprep.subr.mxu0 0.0
    %6663 = vmatpush1.msra.mxu0 0.0
    %6664 = vmatprep.subr.mxu0 0.0
    %6665 = vmatpush1.msra.mxu0 0.0
    %6666 = vmatprep.subr.mxu0 0.0
    %6667 = vmatpush1.msra.mxu0 0.0
    %6668 = vmatprep.subr.mxu0 0.0
    %6669 = vmatpush1.msra.mxu0 0.0
    %6670 = vmatprep.subr.mxu0 0.0
    %6671 = vmatpush1.msra.mxu0 0.0
    %6672 = vmatprep.subr.mxu0 0.0
    %6673 = vmatpush1.msra.mxu0 0.0
    %6674 = vmatprep.subr.mxu0 0.0
    %6675 = vmatpush1.msra.mxu0 0.0
    %6676 = vmatprep.subr.mxu0 0.0
    %6677 = vmatpush1.msra.mxu0 0.0
    %6678 = vmatprep.subr.mxu0 0.0
    %6679 = vmatpush1.msra.mxu0 0.0
    %6680 = vmatprep.subr.mxu0 0.0
    %6681 = vmatpush1.msra.mxu0 0.0
    %6682 = vmatprep.mubr.f32.mxu0 0.0
    %6683 = vmatmul.mubr.f32.gmra.mrb[0].mxu0 %v6600
    %v6684 = vpop.f32.mrb[0].mxu0
    %v6685 = vadd.f32 0.0, %v6684
    %v6686 = vpop.f32.mrb[0].mxu0
    %6687 = vdwg.mxu0
    %v6688 = vmul.f32 %v6685, 0.001953125
    %v6689 = vmul.f32 %v6688, %v6688
    %v6691 = vrot.slane %v6689, 7
    %v6693 = vsub.f32 %v6688, %v6691
    %v6694 = vmax.f32 %v6693, 0.0
    %v6695 = vadd.f32 %v6694, 1e-05
    %v6696 = vrsqrt.pop %v6695
    %v6697 = vld [vmem:[%s6374 + $0x1] sm:$0x1]
    %v6699 = vrot.slane %v6697, 7
    %v6701 = vmul.f32 %v6696, %v6699
    %v6702 = vld [vmem:[%s6374 + $0x2] sm:$0x1]
    %v6704 = vrot.slane %v6701, 1
    %v6706 = vmul.f32 %v6688, %v6704
    %v6707 = vsub.f32 %v6702, %v6706
    %v6708 = vlaneseq
    %v6709 = vshrl.u32 %v6708, 7
    %v6710 = vsub.s32 1, %v6709
    %v6711 = vrot.slane %v6701, %v6710
    %v6712 = vmul.f32 %v6525, %v6711
    %v6713 = vmul.f32 %v6526, %v6711
    %v6714 = vmul.f32 %v6527, %v6711
    %v6715 = vmul.f32 %v6528, %v6711
    %v6716 = vmul.f32 %v6529, %v6711
    %v6717 = vmul.f32 %v6530, %v6711
    %v6718 = vmul.f32 %v6531, %v6711
    %v6719 = vmul.f32 %v6532, %v6711
    %v6720 = vmul.f32 %v6533, %v6711
    %v6721 = vmul.f32 %v6534, %v6711
    %v6722 = vmul.f32 %v6535, %v6711
    %v6723 = vmul.f32 %v6536, %v6711
    %v6724 = vmul.f32 %v6537, %v6711
    %v6725 = vmul.f32 %v6538, %v6711
    %v6726 = vmul.f32 %v6539, %v6711
    %v6727 = vmul.f32 %v6540, %v6711
    %v6728 = vlaneseq
    %v6729 = vshrl.u32 %v6728, 7
    %v6730 = vsub.s32 0, %v6729
    %v6731 = vrot.slane %v6707, %v6730
    %v6732 = vadd.f32 %v6712, %v6731
    %v6733 = vadd.f32 %v6713, %v6731
    %v6734 = vadd.f32 %v6714, %v6731
    %v6735 = vadd.f32 %v6715, %v6731
    %v6736 = vadd.f32 %v6716, %v6731
    %v6737 = vadd.f32 %v6717, %v6731
    %v6738 = vadd.f32 %v6718, %v6731
    %v6739 = vadd.f32 %v6719, %v6731
    %v6740 = vadd.f32 %v6720, %v6731
    %v6741 = vadd.f32 %v6721, %v6731
    %v6742 = vadd.f32 %v6722, %v6731
    %v6743 = vadd.f32 %v6723, %v6731
    %v6744 = vadd.f32 %v6724, %v6731
    %v6745 = vadd.f32 %v6725, %v6731
    %v6746 = vadd.f32 %v6726, %v6731
    %v6747 = vadd.f32 %v6727, %v6731
    %s6748 = scalar_lea.vmem [#allocation3], 128
    %6749 = vst [vmem:[%s6748] sm:$0xff] 0.0
    %6750 = vst [vmem:[%s6748 + $0x8] sm:$0x1] 0.0
    %6751 = vst [vmem:[%s6748 + $0x90] sm:$0xff] 0.0
    %6752 = vst [vmem:[%s6748 + $0x98] sm:$0x1] 0.0
    %6753 = vst [vmem:[#allocation3 + $0x8] sm:$0x1] 0.0
    %6754 = vst [vmem:[#allocation3 + $0x18] sm:$0x1] 0.0
    %6755 = vst [vmem:[#allocation3 + $0x28] sm:$0x1] 0.0
    %6756 = vst [vmem:[#allocation3 + $0x38] sm:$0x1] 0.0
    %6757 = vst [vmem:[#allocation3 + $0x48] sm:$0x1] 0.0
    %6758 = vst [vmem:[#allocation3 + $0x58] sm:$0x1] 0.0
    %6759 = vst [vmem:[#allocation3 + $0x68] sm:$0x1] 0.0
    %6760 = vst [vmem:[#allocation3 + $0x78] sm:$0x1] 0.0
    %6761 = vst [vmem:[#allocation3 + $0x98] sm:$0x1] 0.0
    %6762 = vst [vmem:[#allocation3 + $0xa8] sm:$0x1] 0.0
    %6763 = vst [vmem:[#allocation3 + $0xb8] sm:$0x1] 0.0
    %6764 = vst [vmem:[#allocation3 + $0xc8] sm:$0x1] 0.0
    %6765 = vst [vmem:[#allocation3 + $0xd8] sm:$0x1] 0.0
    %6766 = vst [vmem:[#allocation3 + $0xe8] sm:$0x1] 0.0
    %6767 = vst [vmem:[#allocation3 + $0xf8] sm:$0x1] 0.0
    %6768 = vst [vmem:[#allocation3 + $0x108] sm:$0x1] 0.0
    %6769 = vst [vmem:[#allocation3] sm:$0xff] %v6732
    %6770 = vst [vmem:[#allocation3 + $0x10] sm:$0xff] %v6733
    %6771 = vst [vmem:[#allocation3 + $0x20] sm:$0xff] %v6734
    %6772 = vst [vmem:[#allocation3 + $0x30] sm:$0xff] %v6735
    %6773 = vst [vmem:[#allocation3 + $0x40] sm:$0xff] %v6736
    %6774 = vst [vmem:[#allocation3 + $0x50] sm:$0xff] %v6737
    %6775 = vst [vmem:[#allocation3 + $0x60] sm:$0xff] %v6738
    %6776 = vst [vmem:[#allocation3 + $0x70] sm:$0xff] %v6739
    %6777 = vst [vmem:[#allocation3 + $0x90] sm:$0xff] %v6740
    %6778 = vst [vmem:[#allocation3 + $0xa0] sm:$0xff] %v6741
    %6779 = vst [vmem:[#allocation3 + $0xb0] sm:$0xff] %v6742
    %6780 = vst [vmem:[#allocation3 + $0xc0] sm:$0xff] %v6743
    %6781 = vst [vmem:[#allocation3 + $0xd0] sm:$0xff] %v6744
    %6782 = vst [vmem:[#allocation3 + $0xe0] sm:$0xff] %v6745
    %6783 = vst [vmem:[#allocation3 + $0xf0] sm:$0xff] %v6746
    %6784 = vst [vmem:[#allocation3 + $0x100] sm:$0xff] %v6747
    %v6785 = vld [vmem:[#allocation3] sm:$0xff]
    %v6786 = vld [vmem:[#allocation3 + $0x10] sm:$0xff]
    %v6787 = vld [vmem:[#allocation3 + $0x20] sm:$0xff]
    %v6788 = vld [vmem:[#allocation3 + $0x30] sm:$0xff]
    %v6789 = vld [vmem:[#allocation3 + $0x40] sm:$0xff]
    %v6790 = vld [vmem:[#allocation3 + $0x50] sm:$0xff]
    %v6791 = vld [vmem:[#allocation3 + $0x60] sm:$0xff]
    %v6792 = vld [vmem:[#allocation3 + $0x70] sm:$0xff]
    %v6793 = vld [vmem:[#allocation3 + $0x90] sm:$0xff]
    %v6794 = vld [vmem:[#allocation3 + $0xa0] sm:$0xff]
    %v6795 = vld [vmem:[#allocation3 + $0xb0] sm:$0xff]
    %v6796 = vld [vmem:[#allocation3 + $0xc0] sm:$0xff]
    %v6797 = vld [vmem:[#allocation3 + $0xd0] sm:$0xff]
    %v6798 = vld [vmem:[#allocation3 + $0xe0] sm:$0xff]
    %v6799 = vld [vmem:[#allocation3 + $0xf0] sm:$0xff]
    %v6800 = vld [vmem:[#allocation3 + $0x100] sm:$0xff]
    %v6801 = vld [vmem:[#allocation3 + $0x1] sm:$0xff]
    %v6802 = vld [vmem:[#allocation3 + $0x11] sm:$0xff]
    %v6803 = vld [vmem:[#allocation3 + $0x21] sm:$0xff]
    %v6804 = vld [vmem:[#allocation3 + $0x31] sm:$0xff]
    %v6805 = vld [vmem:[#allocation3 + $0x41] sm:$0xff]
    %v6806 = vld [vmem:[#allocation3 + $0x51] sm:$0xff]
    %v6807 = vld [vmem:[#allocation3 + $0x61] sm:$0xff]
    %v6808 = vld [vmem:[#allocation3 + $0x71] sm:$0xff]
    %v6809 = vld [vmem:[#allocation3 + $0x91] sm:$0xff]
    %v6810 = vld [vmem:[#allocation3 + $0xa1] sm:$0xff]
    %v6811 = vld [vmem:[#allocation3 + $0xb1] sm:$0xff]
    %v6812 = vld [vmem:[#allocation3 + $0xc1] sm:$0xff]
    %v6813 = vld [vmem:[#allocation3 + $0xd1] sm:$0xff]
    %v6814 = vld [vmem:[#allocation3 + $0xe1] sm:$0xff]
    %v6815 = vld [vmem:[#allocation3 + $0xf1] sm:$0xff]
    %v6816 = vld [vmem:[#allocation3 + $0x101] sm:$0xff]
    %s6817 = scalar_lea.vmem [#allocation3], 16
    %v6818 = vld [vmem:[%s6817] sm:$0xff]
    %v6819 = vld [vmem:[%s6817 + $0x10] sm:$0xff]
    %v6820 = vld [vmem:[%s6817 + $0x20] sm:$0xff]
    %v6821 = vld [vmem:[%s6817 + $0x30] sm:$0xff]
    %v6822 = vld [vmem:[%s6817 + $0x40] sm:$0xff]
    %v6823 = vld [vmem:[%s6817 + $0x50] sm:$0xff]
    %v6824 = vld [vmem:[%s6817 + $0x60] sm:$0xff]
    %v6825 = vld [vmem:[%s6817 + $0x70] sm:$0xff]
    %v6826 = vld [vmem:[%s6817 + $0x90] sm:$0xff]
    %v6827 = vld [vmem:[%s6817 + $0xa0] sm:$0xff]
    %v6828 = vld [vmem:[%s6817 + $0xb0] sm:$0xff]
    %v6829 = vld [vmem:[%s6817 + $0xc0] sm:$0xff]
    %v6830 = vld [vmem:[%s6817 + $0xd0] sm:$0xff]
    %v6831 = vld [vmem:[%s6817 + $0xe0] sm:$0xff]
    %v6832 = vld [vmem:[%s6817 + $0xf0] sm:$0xff]
    %v6833 = vld [vmem:[%s6817 + $0x100] sm:$0xff]
    %v6834 = vld [vmem:[%s6817 + $0x1] sm:$0xff]
    %v6835 = vld [vmem:[%s6817 + $0x11] sm:$0xff]
    %v6836 = vld [vmem:[%s6817 + $0x21] sm:$0xff]
    %v6837 = vld [vmem:[%s6817 + $0x31] sm:$0xff]
    %v6838 = vld [vmem:[%s6817 + $0x41] sm:$0xff]
    %v6839 = vld [vmem:[%s6817 + $0x51] sm:$0xff]
    %v6840 = vld [vmem:[%s6817 + $0x61] sm:$0xff]
    %v6841 = vld [vmem:[%s6817 + $0x71] sm:$0xff]
    %v6842 = vld [vmem:[%s6817 + $0x91] sm:$0xff]
    %v6843 = vld [vmem:[%s6817 + $0xa1] sm:$0xff]
    %v6844 = vld [vmem:[%s6817 + $0xb1] sm:$0xff]
    %v6845 = vld [vmem:[%s6817 + $0xc1] sm:$0xff]
    %v6846 = vld [vmem:[%s6817 + $0xd1] sm:$0xff]
    %v6847 = vld [vmem:[%s6817 + $0xe1] sm:$0xff]
    %v6848 = vld [vmem:[%s6817 + $0xf1] sm:$0xff]
    %v6849 = vld [vmem:[%s6817 + $0x101] sm:$0xff]
    %s6850 = scalar_lea.vmem [#allocation6], 3456
    %v6851 = vld [vmem:[%s6850] sm:$0xff]
    %v6852 = vld [vmem:[%s6850 + $0x8] sm:$0xff]
    %v6853 = vld [vmem:[%s6850 + $0x10] sm:$0xff]
    %v6854 = vld [vmem:[%s6850 + $0x18] sm:$0xff]
    %v6855 = vld [vmem:[%s6850 + $0x20] sm:$0xff]
    %v6856 = vld [vmem:[%s6850 + $0x28] sm:$0xff]
    %v6857 = vld [vmem:[%s6850 + $0x30] sm:$0xff]
    %v6858 = vld [vmem:[%s6850 + $0x38] sm:$0xff]
    %v6859 = vld [vmem:[%s6850 + $0x40] sm:$0xff]
    %v6860 = vld [vmem:[%s6850 + $0x48] sm:$0xff]
    %v6861 = vld [vmem:[%s6850 + $0x50] sm:$0xff]
    %v6862 = vld [vmem:[%s6850 + $0x58] sm:$0xff]
    %v6863 = vld [vmem:[%s6850 + $0x60] sm:$0xff]
    %v6864 = vld [vmem:[%s6850 + $0x68] sm:$0xff]
    %v6865 = vld [vmem:[%s6850 + $0x70] sm:$0xff]
    %v6866 = vld [vmem:[%s6850 + $0x78] sm:$0xff]
    %v6867 = vld [vmem:[%s6850 + $0x80] sm:$0xff]
    %v6868 = vld [vmem:[%s6850 + $0x88] sm:$0xff]
    %v6869 = vld [vmem:[%s6850 + $0x90] sm:$0xff]
    %v6870 = vld [vmem:[%s6850 + $0x98] sm:$0xff]
    %v6871 = vld [vmem:[%s6850 + $0xa0] sm:$0xff]
    %v6872 = vld [vmem:[%s6850 + $0xa8] sm:$0xff]
    %v6873 = vld [vmem:[%s6850 + $0xb0] sm:$0xff]
    %v6874 = vld [vmem:[%s6850 + $0xb8] sm:$0xff]
    %v6875 = vld [vmem:[%s6850 + $0xc0] sm:$0xff]
    %v6876 = vld [vmem:[%s6850 + $0xc8] sm:$0xff]
    %v6877 = vld [vmem:[%s6850 + $0xd0] sm:$0xff]
    %v6878 = vld [vmem:[%s6850 + $0xd8] sm:$0xff]
    %v6879 = vld [vmem:[%s6850 + $0xe0] sm:$0xff]
    %v6880 = vld [vmem:[%s6850 + $0xe8] sm:$0xff]
    %v6881 = vld [vmem:[%s6850 + $0xf0] sm:$0xff]
    %v6882 = vld [vmem:[%s6850 + $0xf8] sm:$0xff]
    %v6883 = vld [vmem:[%s6850 + $0x100] sm:$0xff]
    %v6884 = vld [vmem:[%s6850 + $0x108] sm:$0xff]
    %v6885 = vld [vmem:[%s6850 + $0x110] sm:$0xff]
    %v6886 = vld [vmem:[%s6850 + $0x118] sm:$0xff]
    %v6887 = vld [vmem:[%s6850 + $0x120] sm:$0xff]
    %v6888 = vld [vmem:[%s6850 + $0x128] sm:$0xff]
    %v6889 = vld [vmem:[%s6850 + $0x130] sm:$0xff]
    %v6890 = vld [vmem:[%s6850 + $0x138] sm:$0xff]
    %v6891 = vld [vmem:[%s6850 + $0x140] sm:$0xff]
    %v6892 = vld [vmem:[%s6850 + $0x148] sm:$0xff]
    %v6893 = vld [vmem:[%s6850 + $0x150] sm:$0xff]
    %v6894 = vld [vmem:[%s6850 + $0x158] sm:$0xff]
    %v6895 = vld [vmem:[%s6850 + $0x160] sm:$0xff]
    %v6896 = vld [vmem:[%s6850 + $0x168] sm:$0xff]
    %v6897 = vld [vmem:[%s6850 + $0x170] sm:$0xff]
    %v6898 = vld [vmem:[%s6850 + $0x178] sm:$0xff]
    %v6899 = vld [vmem:[%s6850 + $0x180] sm:$0xff]
    %v6900 = vld [vmem:[%s6850 + $0x188] sm:$0xff]
    %v6901 = vld [vmem:[%s6850 + $0x190] sm:$0xff]
    %v6902 = vld [vmem:[%s6850 + $0x198] sm:$0xff]
    %v6903 = vld [vmem:[%s6850 + $0x1a0] sm:$0xff]
    %v6904 = vld [vmem:[%s6850 + $0x1a8] sm:$0xff]
    %v6905 = vld [vmem:[%s6850 + $0x1b0] sm:$0xff]
    %v6906 = vld [vmem:[%s6850 + $0x1b8] sm:$0xff]
    %v6907 = vld [vmem:[%s6850 + $0x1c0] sm:$0xff]
    %v6908 = vld [vmem:[%s6850 + $0x1c8] sm:$0xff]
    %v6909 = vld [vmem:[%s6850 + $0x1d0] sm:$0xff]
    %v6910 = vld [vmem:[%s6850 + $0x1d8] sm:$0xff]
    %v6911 = vld [vmem:[%s6850 + $0x1e0] sm:$0xff]
    %v6912 = vld [vmem:[%s6850 + $0x1e8] sm:$0xff]
    %v6913 = vld [vmem:[%s6850 + $0x1f0] sm:$0xff]
    %v6914 = vld [vmem:[%s6850 + $0x1f8] sm:$0xff]
    %s6915 = scalar_lea.vmem %s2, 24
    %v6916 = vld [vmem:[%s6915] sm:$0x1]
    %v6917 = vlaneseq
    %v6918 = vshrl.u32 %v6917, 7
    %v6919 = vsub.s32 0, %v6918
    %v6920 = vrot.slane %v6916, %v6919
    %6921 = vmatprep.subr.mxu0 0.0
    %6922 = vmatpush1.msra.mxu0 %v6851
    %6923 = vmatprep.subr.mxu0 0.0
    %6924 = vmatpush1.msra.mxu0 %v6852
    %6925 = vmatprep.subr.mxu0 0.0
    %6926 = vmatpush1.msra.mxu0 %v6853
    %6927 = vmatprep.subr.mxu0 0.0
    %6928 = vmatpush1.msra.mxu0 %v6854
    %6929 = vmatprep.subr.mxu0 0.0
    %6930 = vmatpush1.msra.mxu0 %v6855
    %6931 = vmatprep.subr.mxu0 0.0
    %6932 = vmatpush1.msra.mxu0 %v6856
    %6933 = vmatprep.subr.mxu0 0.0
    %6934 = vmatpush1.msra.mxu0 %v6857
    %6935 = vmatprep.subr.mxu0 0.0
    %6936 = vmatpush1.msra.mxu0 %v6858
    %6937 = vmatprep.subr.mxu0 0.0
    %6938 = vmatpush1.msra.mxu0 %v6859
    %6939 = vmatprep.subr.mxu0 0.0
    %6940 = vmatpush1.msra.mxu0 %v6860
    %6941 = vmatprep.subr.mxu0 0.0
    %6942 = vmatpush1.msra.mxu0 %v6861
    %6943 = vmatprep.subr.mxu0 0.0
    %6944 = vmatpush1.msra.mxu0 %v6862
    %6945 = vmatprep.subr.mxu0 0.0
    %6946 = vmatpush1.msra.mxu0 %v6863
    %6947 = vmatprep.subr.mxu0 0.0
    %6948 = vmatpush1.msra.mxu0 %v6864
    %6949 = vmatprep.subr.mxu0 0.0
    %6950 = vmatpush1.msra.mxu0 %v6865
    %6951 = vmatprep.subr.mxu0 0.0
    %6952 = vmatpush1.msra.mxu0 %v6866
    %6953 = vmatprep.subr.mxu0 0.0
    %6954 = vmatpush1.msra.mxu0 %v6867
    %6955 = vmatprep.subr.mxu0 0.0
    %6956 = vmatpush1.msra.mxu0 %v6868
    %6957 = vmatprep.subr.mxu0 0.0
    %6958 = vmatpush1.msra.mxu0 %v6869
    %6959 = vmatprep.subr.mxu0 0.0
    %6960 = vmatpush1.msra.mxu0 %v6870
    %6961 = vmatprep.subr.mxu0 0.0
    %6962 = vmatpush1.msra.mxu0 %v6871
    %6963 = vmatprep.subr.mxu0 0.0
    %6964 = vmatpush1.msra.mxu0 %v6872
    %6965 = vmatprep.subr.mxu0 0.0
    %6966 = vmatpush1.msra.mxu0 %v6873
    %6967 = vmatprep.subr.mxu0 0.0
    %6968 = vmatpush1.msra.mxu0 %v6874
    %6969 = vmatprep.subr.mxu0 0.0
    %6970 = vmatpush1.msra.mxu0 %v6875
    %6971 = vmatprep.subr.mxu0 0.0
    %6972 = vmatpush1.msra.mxu0 %v6876
    %6973 = vmatprep.subr.mxu0 0.0
    %6974 = vmatpush1.msra.mxu0 %v6877
    %6975 = vmatprep.subr.mxu0 0.0
    %6976 = vmatpush1.msra.mxu0 %v6878
    %6977 = vmatprep.subr.mxu0 0.0
    %6978 = vmatpush1.msra.mxu0 %v6879
    %6979 = vmatprep.subr.mxu0 0.0
    %6980 = vmatpush1.msra.mxu0 %v6880
    %6981 = vmatprep.subr.mxu0 0.0
    %6982 = vmatpush1.msra.mxu0 %v6881
    %6983 = vmatprep.subr.mxu0 0.0
    %6984 = vmatpush1.msra.mxu0 %v6882
    %6985 = vmatprep.mubr.f32.mxu0 %v6801
    %6986 = vmatmul.mubr.f32.gmra.mrb[0].mxu0 %v6785
    %v6987 = vpop.f32.mrb[0].mxu0
    %v6988 = vadd.f32 %v6920, %v6987
    %v6989 = vpop.f32.mrb[0].mxu0
    %6990 = vmatprep.mubr.f32.mxu0 %v6802
    %6991 = vmatmul.mubr.f32.gmra.mrb[0].mxu0 %v6786
    %v6992 = vpop.f32.mrb[0].mxu0
    %v6993 = vadd.f32 %v6920, %v6992
    %v6994 = vpop.f32.mrb[0].mxu0
    %6995 = vmatprep.mubr.f32.mxu0 %v6803
    %6996 = vmatmul.mubr.f32.gmra.mrb[0].mxu0 %v6787
    %v6997 = vpop.f32.mrb[0].mxu0
    %v6998 = vadd.f32 %v6920, %v6997
    %v6999 = vpop.f32.mrb[0].mxu0
    %7000 = vmatprep.mubr.f32.mxu0 %v6804
    %7001 = vmatmul.mubr.f32.gmra.mrb[0].mxu0 %v6788
    %v7002 = vpop.f32.mrb[0].mxu0
    %v7003 = vadd.f32 %v6920, %v7002
    %v7004 = vpop.f32.mrb[0].mxu0
    %7005 = vmatprep.mubr.f32.mxu0 %v6805
    %7006 = vmatmul.mubr.f32.gmra.mrb[0].mxu0 %v6789
    %v7007 = vpop.f32.mrb[0].mxu0
    %v7008 = vadd.f32 %v6920, %v7007
    %v7009 = vpop.f32.mrb[0].mxu0
    %7010 = vmatprep.mubr.f32.mxu0 %v6806
    %7011 = vmatmul.mubr.f32.gmra.mrb[0].mxu0 %v6790
    %v7012 = vpop.f32.mrb[0].mxu0
    %v7013 = vadd.f32 %v6920, %v7012
    %v7014 = vpop.f32.mrb[0].mxu0
    %7015 = vmatprep.mubr.f32.mxu0 %v6807
    %7016 = vmatmul.mubr.f32.gmra.mrb[0].mxu0 %v6791
    %v7017 = vpop.f32.mrb[0].mxu0
    %v7018 = vadd.f32 %v6920, %v7017
    %v7019 = vpop.f32.mrb[0].mxu0
    %7020 = vmatprep.mubr.f32.mxu0 %v6808
    %7021 = vmatmul.mubr.f32.gmra.mrb[0].mxu0 %v6792
    %v7022 = vpop.f32.mrb[0].mxu0
    %v7023 = vadd.f32 %v6920, %v7022
    %v7024 = vpop.f32.mrb[0].mxu0
    %7025 = vmatprep.mubr.f32.mxu0 %v6809
    %7026 = vmatmul.mubr.f32.gmra.mrb[0].mxu0 %v6793
    %v7027 = vpop.f32.mrb[0].mxu0
    %v7028 = vadd.f32 %v6920, %v7027
    %v7029 = vpop.f32.mrb[0].mxu0
    %7030 = vmatprep.mubr.f32.mxu0 %v6810
    %7031 = vmatmul.mubr.f32.gmra.mrb[0].mxu0 %v6794
    %v7032 = vpop.f32.mrb[0].mxu0
    %v7033 = vadd.f32 %v6920, %v7032
    %v7034 = vpop.f32.mrb[0].mxu0
    %7035 = vmatprep.mubr.f32.mxu0 %v6811
    %7036 = vmatmul.mubr.f32.gmra.mrb[0].mxu0 %v6795
    %v7037 = vpop.f32.mrb[0].mxu0
    %v7038 = vadd.f32 %v6920, %v7037
    %v7039 = vpop.f32.mrb[0].mxu0
    %7040 = vmatprep.mubr.f32.mxu0 %v6812
    %7041 = vmatmul.mubr.f32.gmra.mrb[0].mxu0 %v6796
    %v7042 = vpop.f32.mrb[0].mxu0
    %v7043 = vadd.f32 %v6920, %v7042
    %v7044 = vpop.f32.mrb[0].mxu0
    %7045 = vmatprep.mubr.f32.mxu0 %v6813
    %7046 = vmatmul.mubr.f32.gmra.mrb[0].mxu0 %v6797
    %v7047 = vpop.f32.mrb[0].mxu0
    %v7048 = vadd.f32 %v6920, %v7047
    %v7049 = vpop.f32.mrb[0].mxu0
    %7050 = vmatprep.mubr.f32.mxu0 %v6814
    %7051 = vmatmul.mubr.f32.gmra.mrb[0].mxu0 %v6798
    %v7052 = vpop.f32.mrb[0].mxu0
    %v7053 = vadd.f32 %v6920, %v7052
    %v7054 = vpop.f32.mrb[0].mxu0
    %7055 = vmatprep.mubr.f32.mxu0 %v6815
    %7056 = vmatmul.mubr.f32.gmra.mrb[0].mxu0 %v6799
    %v7057 = vpop.f32.mrb[0].mxu0
    %v7058 = vadd.f32 %v6920, %v7057
    %v7059 = vpop.f32.mrb[0].mxu0
    %7060 = vmatprep.mubr.f32.mxu0 %v6816
    %7061 = vmatmul.mubr.f32.gmra.mrb[0].mxu0 %v6800
    %v7062 = vpop.f32.mrb[0].mxu0
    %v7063 = vadd.f32 %v6920, %v7062
    %v7064 = vpop.f32.mrb[0].mxu0
    %7065 = vdwg.mxu0
    %7066 = vmatprep.subr.mxu0 0.0
    %7067 = vmatpush1.msra.mxu0 %v6883
    %7068 = vmatprep.subr.mxu0 0.0
    %7069 = vmatpush1.msra.mxu0 %v6884
    %7070 = vmatprep.subr.mxu0 0.0
    %7071 = vmatpush1.msra.mxu0 %v6885
    %7072 = vmatprep.subr.mxu0 0.0
    %7073 = vmatpush1.msra.mxu0 %v6886
    %7074 = vmatprep.subr.mxu0 0.0
    %7075 = vmatpush1.msra.mxu0 %v6887
    %7076 = vmatprep.subr.mxu0 0.0
    %7077 = vmatpush1.msra.mxu0 %v6888
    %7078 = vmatprep.subr.mxu0 0.0
    %7079 = vmatpush1.msra.mxu0 %v6889
    %7080 = vmatprep.subr.mxu0 0.0
    %7081 = vmatpush1.msra.mxu0 %v6890
    %7082 = vmatprep.subr.mxu0 0.0
    %7083 = vmatpush1.msra.mxu0 %v6891
    %7084 = vmatprep.subr.mxu0 0.0
    %7085 = vmatpush1.msra.mxu0 %v6892
    %7086 = vmatprep.subr.mxu0 0.0
    %7087 = vmatpush1.msra.mxu0 %v6893
    %7088 = vmatprep.subr.mxu0 0.0
    %7089 = vmatpush1.msra.mxu0 %v6894
    %7090 = vmatprep.subr.mxu0 0.0
    %7091 = vmatpush1.msra.mxu0 %v6895
    %7092 = vmatprep.subr.mxu0 0.0
    %7093 = vmatpush1.msra.mxu0 %v6896
    %7094 = vmatprep.subr.mxu0 0.0
    %7095 = vmatpush1.msra.mxu0 %v6897
    %7096 = vmatprep.subr.mxu0 0.0
    %7097 = vmatpush1.msra.mxu0 %v6898
    %7098 = vmatprep.subr.mxu0 0.0
    %7099 = vmatpush1.msra.mxu0 %v6899
    %7100 = vmatprep.subr.mxu0 0.0
    %7101 = vmatpush1.msra.mxu0 %v6900
    %7102 = vmatprep.subr.mxu0 0.0
    %7103 = vmatpush1.msra.mxu0 %v6901
    %7104 = vmatprep.subr.mxu0 0.0
    %7105 = vmatpush1.msra.mxu0 %v6902
    %7106 = vmatprep.subr.mxu0 0.0
    %7107 = vmatpush1.msra.mxu0 %v6903
    %7108 = vmatprep.subr.mxu0 0.0
    %7109 = vmatpush1.msra.mxu0 %v6904
    %7110 = vmatprep.subr.mxu0 0.0
    %7111 = vmatpush1.msra.mxu0 %v6905
    %7112 = vmatprep.subr.mxu0 0.0
    %7113 = vmatpush1.msra.mxu0 %v6906
    %7114 = vmatprep.subr.mxu0 0.0
    %7115 = vmatpush1.msra.mxu0 %v6907
    %7116 = vmatprep.subr.mxu0 0.0
    %7117 = vmatpush1.msra.mxu0 %v6908
    %7118 = vmatprep.subr.mxu0 0.0
    %7119 = vmatpush1.msra.mxu0 %v6909
    %7120 = vmatprep.subr.mxu0 0.0
    %7121 = vmatpush1.msra.mxu0 %v6910
    %7122 = vmatprep.subr.mxu0 0.0
    %7123 = vmatpush1.msra.mxu0 %v6911
    %7124 = vmatprep.subr.mxu0 0.0
    %7125 = vmatpush1.msra.mxu0 %v6912
    %7126 = vmatprep.subr.mxu0 0.0
    %7127 = vmatpush1.msra.mxu0 %v6913
    %7128 = vmatprep.subr.mxu0 0.0
    %7129 = vmatpush1.msra.mxu0 %v6914
    %7130 = vmatprep.mubr.f32.mxu0 %v6834
    %7131 = vmatmul.mubr.f32.gmra.mrb[0].mxu0 %v6818
    %v7132 = vpop.f32.mrb[0].mxu0
    %v7133 = vadd.f32 %v6988, %v7132
    %v7134 = vpop.f32.mrb[0].mxu0
    %7135 = vmatprep.mubr.f32.mxu0 %v6835
    %7136 = vmatmul.mubr.f32.gmra.mrb[0].mxu0 %v6819
    %v7137 = vpop.f32.mrb[0].mxu0
    %v7138 = vadd.f32 %v6993, %v7137
    %v7139 = vpop.f32.mrb[0].mxu0
    %7140 = vmatprep.mubr.f32.mxu0 %v6836
    %7141 = vmatmul.mubr.f32.gmra.mrb[0].mxu0 %v6820
    %v7142 = vpop.f32.mrb[0].mxu0
    %v7143 = vadd.f32 %v6998, %v7142
    %v7144 = vpop.f32.mrb[0].mxu0
    %7145 = vmatprep.mubr.f32.mxu0 %v6837
    %7146 = vmatmul.mubr.f32.gmra.mrb[0].mxu0 %v6821
    %v7147 = vpop.f32.mrb[0].mxu0
    %v7148 = vadd.f32 %v7003, %v7147
    %v7149 = vpop.f32.mrb[0].mxu0
    %7150 = vmatprep.mubr.f32.mxu0 %v6838
    %7151 = vmatmul.mubr.f32.gmra.mrb[0].mxu0 %v6822
    %v7152 = vpop.f32.mrb[0].mxu0
    %v7153 = vadd.f32 %v7008, %v7152
    %v7154 = vpop.f32.mrb[0].mxu0
    %7155 = vmatprep.mubr.f32.mxu0 %v6839
    %7156 = vmatmul.mubr.f32.gmra.mrb[0].mxu0 %v6823
    %v7157 = vpop.f32.mrb[0].mxu0
    %v7158 = vadd.f32 %v7013, %v7157
    %v7159 = vpop.f32.mrb[0].mxu0
    %7160 = vmatprep.mubr.f32.mxu0 %v6840
    %7161 = vmatmul.mubr.f32.gmra.mrb[0].mxu0 %v6824
    %v7162 = vpop.f32.mrb[0].mxu0
    %v7163 = vadd.f32 %v7018, %v7162
    %v7164 = vpop.f32.mrb[0].mxu0
    %7165 = vmatprep.mubr.f32.mxu0 %v6841
    %7166 = vmatmul.mubr.f32.gmra.mrb[0].mxu0 %v6825
    %v7167 = vpop.f32.mrb[0].mxu0
    %v7168 = vadd.f32 %v7023, %v7167
    %v7169 = vpop.f32.mrb[0].mxu0
    %7170 = vmatprep.mubr.f32.mxu0 %v6842
    %7171 = vmatmul.mubr.f32.gmra.mrb[0].mxu0 %v6826
    %v7172 = vpop.f32.mrb[0].mxu0
    %v7173 = vadd.f32 %v7028, %v7172
    %v7174 = vpop.f32.mrb[0].mxu0
    %7175 = vmatprep.mubr.f32.mxu0 %v6843
    %7176 = vmatmul.mubr.f32.gmra.mrb[0].mxu0 %v6827
    %v7177 = vpop.f32.mrb[0].mxu0
    %v7178 = vadd.f32 %v7033, %v7177
    %v7179 = vpop.f32.mrb[0].mxu0
    %7180 = vmatprep.mubr.f32.mxu0 %v6844
    %7181 = vmatmul.mubr.f32.gmra.mrb[0].mxu0 %v6828
    %v7182 = vpop.f32.mrb[0].mxu0
    %v7183 = vadd.f32 %v7038, %v7182
    %v7184 = vpop.f32.mrb[0].mxu0
    %7185 = vmatprep.mubr.f32.mxu0 %v6845
    %7186 = vmatmul.mubr.f32.gmra.mrb[0].mxu0 %v6829
    %v7187 = vpop.f32.mrb[0].mxu0
    %v7188 = vadd.f32 %v7043, %v7187
    %v7189 = vpop.f32.mrb[0].mxu0
    %7190 = vmatprep.mubr.f32.mxu0 %v6846
    %7191 = vmatmul.mubr.f32.gmra.mrb[0].mxu0 %v6830
    %v7192 = vpop.f32.mrb[0].mxu0
    %v7193 = vadd.f32 %v7048, %v7192
    %v7194 = vpop.f32.mrb[0].mxu0
    %7195 = vmatprep.mubr.f32.mxu0 %v6847
    %7196 = vmatmul.mubr.f32.gmra.mrb[0].mxu0 %v6831
    %v7197 = vpop.f32.mrb[0].mxu0
    %v7198 = vadd.f32 %v7053, %v7197
    %v7199 = vpop.f32.mrb[0].mxu0
    %7200 = vmatprep.mubr.f32.mxu0 %v6848
    %7201 = vmatmul.mubr.f32.gmra.mrb[0].mxu0 %v6832
    %v7202 = vpop.f32.mrb[0].mxu0
    %v7203 = vadd.f32 %v7058, %v7202
    %v7204 = vpop.f32.mrb[0].mxu0
    %7205 = vmatprep.mubr.f32.mxu0 %v6849
    %7206 = vmatmul.mubr.f32.gmra.mrb[0].mxu0 %v6833
    %v7207 = vpop.f32.mrb[0].mxu0
    %v7208 = vadd.f32 %v7063, %v7207
    %v7209 = vpop.f32.mrb[0].mxu0
    %7210 = vdwg.mxu0
    %v7211 = vmax.f32 %v7133, 0.0
    %v7212 = vmax.f32 %v7138, 0.0
    %v7213 = vmax.f32 %v7143, 0.0
    %v7214 = vmax.f32 %v7148, 0.0
    %v7215 = vmax.f32 %v7153, 0.0
    %v7216 = vmax.f32 %v7158, 0.0
    %v7217 = vmax.f32 %v7163, 0.0
    %v7218 = vmax.f32 %v7168, 0.0
    %v7219 = vmax.f32 %v7173, 0.0
    %v7220 = vmax.f32 %v7178, 0.0
    %v7221 = vmax.f32 %v7183, 0.0
    %v7222 = vmax.f32 %v7188, 0.0
    %v7223 = vmax.f32 %v7193, 0.0
    %v7224 = vmax.f32 %v7198, 0.0
    %v7225 = vmax.f32 %v7203, 0.0
    %v7226 = vmax.f32 %v7208, 0.0
    %vm7227 = vcmask 392192
    %7228 = vst.msk [vmem:[%s3] sm:$0xff] %vm7227, %v7211
    %7229 = vst.msk [vmem:[%s3 + $0x8] sm:$0xff] %vm7227, %v7212
    %7230 = vst.msk [vmem:[%s3 + $0x10] sm:$0xff] %vm7227, %v7213
    %7231 = vst.msk [vmem:[%s3 + $0x18] sm:$0xff] %vm7227, %v7214
    %7232 = vst.msk [vmem:[%s3 + $0x20] sm:$0xff] %vm7227, %v7215
    %7233 = vst.msk [vmem:[%s3 + $0x28] sm:$0xff] %vm7227, %v7216
    %7234 = vst.msk [vmem:[%s3 + $0x30] sm:$0xff] %vm7227, %v7217
    %7235 = vst.msk [vmem:[%s3 + $0x38] sm:$0xff] %vm7227, %v7218
    %7236 = vst.msk [vmem:[%s3 + $0x40] sm:$0xff] %vm7227, %v7219
    %7237 = vst.msk [vmem:[%s3 + $0x48] sm:$0xff] %vm7227, %v7220
    %7238 = vst.msk [vmem:[%s3 + $0x50] sm:$0xff] %vm7227, %v7221
    %7239 = vst.msk [vmem:[%s3 + $0x58] sm:$0xff] %vm7227, %v7222
    %7240 = vst.msk [vmem:[%s3 + $0x60] sm:$0xff] %vm7227, %v7223
    %7241 = vst.msk [vmem:[%s3 + $0x68] sm:$0xff] %vm7227, %v7224
    %7242 = vst.msk [vmem:[%s3 + $0x70] sm:$0xff] %vm7227, %v7225
    %7243 = vst.msk [vmem:[%s3 + $0x78] sm:$0xff] %vm7227, %v7226
    // Predicated region
    $region22: #{decoder_forward.1} parent=1 // pred_check
      _
    $region23: #{decoder_forward.1} parent=1 // pred_check_branch
      %7245 = sbr.rel (0) target = $region25
    $region24: #{decoder_forward.1} parent=1 // pred_region
      _
    $region25: #{decoder_forward.1} parent=1 // pred_fallthru
      _
    // Predicated region
    $region26: #{decoder_forward.1} parent=1 // pred_check
      _
    $region27: #{decoder_forward.1} parent=1 // pred_check_branch
      %7247 = sbr.rel (0) target = $region29
    $region28: #{decoder_forward.1} parent=1 // pred_region
      _
    $region29: #{decoder_forward.1} parent=1 // pred_fallthru
      _
    %7248 = vsyncpa [#allocation5], 1
    %7249 = vsyncpa [#allocation7], 1

</llo_original>
